<compile_context>
chip_gen: v6e
topology: v6e:2x2x1
jax: 0.10.0
libtpu: 0.0.40
codegen_flags: <defaults>
</compile_context>

<pallas_src>
import functools

import numpy as np
import jax
import jax.numpy as jnp
from jax.experimental import pallas as pl
from jax.experimental.pallas import tpu as pltpu


# ----------------------------------------------------------------------------------
# Block-Toeplitz RHS: fold the kw/ci reduction of a KxK conv into a single matmul
# along the W axis.  R[(kh*Wp + wp)*Cin + ci, w*Cout + co] = w[kh, wp-w, ci, co]
# when 0 <= wp - w < K, else 0.
# ----------------------------------------------------------------------------------
def _toeplitz_rhs(w_hwio, W):
    K, _, Cin, Cout = w_hwio.shape
    p = K // 2
    Wp = W + 2 * p
    kw = np.arange(K)[:, None, None]
    wp = np.arange(Wp)[None, :, None]
    wo = np.arange(W)[None, None, :]
    sel = (wp == wo + kw).astype(np.float32)                    # (K, Wp, W) 0/1
    r = jnp.einsum("abio,bpw->apiwo", w_hwio, jnp.asarray(sel))  # (K, Wp, Cin, W, Cout)
    return r.reshape(K * Wp * Cin, W * Cout)


# ----------------------------------------------------------------------------------
# Fused Pallas kernel: bb batch elements per grid step, all three convs in one body.
# ----------------------------------------------------------------------------------
def _make_fused_kernel(H, W, Cin, C1, C2, C3, K1, K2, K3, bb, compute_dtype):
    P1, P2, P3 = K1 // 2, K2 // 2, K3 // 2
    Wp1, Wp2, Wp3 = W + 2 * P1, W + 2 * P2, W + 2 * P3
    S1, S2, S3 = Wp1 * Cin, Wp2 * C1, Wp3 * C2      # lane width of one kh-segment
    Hp1 = H + 2 * P1
    ROW0 = 8                                        # sublane-aligned interior row start
    R2rows = ROW0 + H + P2                          # rows per image in pad2
    R3rows = ROW0 + H + P3
    f32 = jnp.float32
    # f32 path: ask for full-precision MXU passes; bf16 path uses the native bf16 MXU.
    prec = (jax.lax.Precision.HIGHEST
            if jnp.dtype(compute_dtype) == jnp.dtype(jnp.float32)
            else jax.lax.Precision.DEFAULT)

    def build_lhs(slab_ref, src_ref, K, seg, src_rows, row_off):
        # kh-only im2col: per image, K row-shifted FULL-lane-width copies.  kw and the
        # channel reduction live in the Toeplitz RHS, so there is no K*K scatter of
        # narrow lane groups.
        for b in range(bb):
            for kh in range(K):
                r0 = b * src_rows + row_off + kh
                slab_ref[b * H:(b + 1) * H, kh * seg:(kh + 1) * seg] = src_ref[r0:r0 + H, :]

    def dense(slab_ref, r_ref, bvec_ref):
        # One explicit 2-D MXU matmul per layer: (bb*H, K*Wp*Cin) @ (K*Wp*Cin, W*Cout),
        # f32 accumulation; bias (pre-tiled to (1, W*Cout)) added once.
        acc = jnp.dot(slab_ref[...], r_ref[...],
                      preferred_element_type=f32, precision=prec)
        return acc + bvec_ref[...]

    def write_padded(pad_ref, act, P, C, rows):
        # Zero ONLY the halo ring, every grid step (megacore-safe: no program_id guard);
        # the interior is fully overwritten right below.  Interior rows start at ROW0
        # (8-aligned sublane offset), and (W, C) sit on lanes, so the activation write
        # is one wide dense store per image.  Rows [0, ROW0-P) are never read.
        Wp = W + 2 * P
        dt = pad_ref.dtype
        pad_ref[:, :P * C] = jnp.zeros((bb * rows, P * C), dt)            # left halo cols
        pad_ref[:, (P + W) * C:] = jnp.zeros((bb * rows, P * C), dt)      # right halo cols
        for b in range(bb):
            r0 = b * rows + ROW0
            pad_ref[r0 - P:r0, :] = jnp.zeros((P, Wp * C), dt)            # top halo rows
            pad_ref[r0 + H:r0 + H + P, :] = jnp.zeros((P, Wp * C), dt)    # bottom halo rows
            pad_ref[r0:r0 + H, P * C:(P + W) * C] = act[b * H:(b + 1) * H, :].astype(dt)

    def kernel(xp_ref, r1_ref, b1_ref, r2_ref, b2_ref, r3_ref, b3_ref, o_ref,
               pad2, pad3, slab1, slab2, slab3):
        # conv1 (5x5) + tanh: input was zero-padded and (W,C)->lane flattened in XLA.
        build_lhs(slab1, xp_ref, K1, S1, Hp1, 0)
        a1 = jnp.tanh(dense(slab1, r1_ref, b1_ref))            # (bb*H, W*C1) f32

        # conv2 (3x3) + tanh: activation never leaves VMEM.
        write_padded(pad2, a1, P2, C1, R2rows)
        build_lhs(slab2, pad2, K2, S2, R2rows, ROW0 - P2)
        a2 = jnp.tanh(dense(slab2, r2_ref, b2_ref))            # (bb*H, W*C2) f32

        # conv3 (3x3), no tanh.
        write_padded(pad3, a2, P3, C2, R3rows)
        build_lhs(slab3, pad3, K3, S3, R3rows, ROW0 - P3)
        a3 = dense(slab3, r3_ref, b3_ref)                       # (bb*H, W*C3) f32

        # Lane-dense output store: last dim W*C3 (= 256 here), no masked vst, wide
        # writeback DMA rows.  (B*H, W*C3) has identical HBM bytes to NHWC.
        o_ref[...] = a3.astype(o_ref.dtype)

    return kernel


def subpixel_conv_stack(x_nchw, params, *, compute_dtype=jnp.float32, batch_block=None):
    """Fused conv5x5-tanh-conv3x3-tanh-conv3x3. Returns (B, H, W, C3) NHWC activations."""
    B, Cin, H, W = x_nchw.shape
    w1, b1 = params["w1"], params["b1"]
    w2, b2 = params["w2"], params["b2"]
    w3, b3 = params["w3"], params["b3"]
    K1, _, _, C1 = w1.shape
    K2, _, _, C2 = w2.shape
    K3, _, _, C3 = w3.shape
    P1, P2, P3 = K1 // 2, K2 // 2, K3 // 2
    Wp1, Wp2, Wp3 = W + 2 * P1, W + 2 * P2, W + 2 * P3
    Hp1 = H + 2 * P1
    ROW0 = 8

    if batch_block is None:  # several images per grid step, folded into the matmul M dim
        batch_block = next(bbv for bbv in (8, 4, 2, 1) if B % bbv == 0)
    bb = batch_block
    assert B % bb == 0, (B, bb)

    # NCHW -> NHWC, zero-pad the 5x5 halo once in XLA, flatten (W, C) onto the lane axis,
    # then merge (B, Hp1) so everything in-kernel is plain 2-D.
    x_nhwc = jnp.transpose(x_nchw, (0, 2, 3, 1))
    xp = jnp.pad(x_nhwc, ((0, 0), (P1, P1), (P1, P1), (0, 0)))
    xp = xp.reshape(B * Hp1, Wp1 * Cin).astype(compute_dtype)

    # Block-Toeplitz weights (built once per call in XLA) + lane-tiled biases.
    r1 = _toeplitz_rhs(w1, W).astype(compute_dtype)     # (K1*Wp1*Cin, W*C1)
    r2 = _toeplitz_rhs(w2, W).astype(compute_dtype)     # (K2*Wp2*C1,  W*C2)
    r3 = _toeplitz_rhs(w3, W).astype(compute_dtype)     # (K3*Wp3*C2,  W*C3)
    bv1 = jnp.tile(b1, W).reshape(1, W * C1).astype(jnp.float32)
    bv2 = jnp.tile(b2, W).reshape(1, W * C2).astype(jnp.float32)
    bv3 = jnp.tile(b3, W).reshape(1, W * C3).astype(jnp.float32)

    kernel = _make_fused_kernel(H, W, Cin, C1, C2, C3, K1, K2, K3, bb, compute_dtype)

    out = pl.pallas_call(
        kernel,
        out_shape=jax.ShapeDtypeStruct((B * H, W * C3), x_nchw.dtype),
        grid=(B // bb,),
        in_specs=[
            pl.BlockSpec((bb * Hp1, Wp1 * Cin), lambda i: (i, 0)),   # padded input
            pl.BlockSpec(r1.shape, lambda i: (0, 0)),
            pl.BlockSpec(bv1.shape, lambda i: (0, 0)),
            pl.BlockSpec(r2.shape, lambda i: (0, 0)),
            pl.BlockSpec(bv2.shape, lambda i: (0, 0)),
            pl.BlockSpec(r3.shape, lambda i: (0, 0)),
            pl.BlockSpec(bv3.shape, lambda i: (0, 0)),
        ],
        out_specs=pl.BlockSpec((bb * H, W * C3), lambda i: (i, 0)),
        scratch_shapes=[
            pltpu.VMEM((bb * (ROW0 + H + P2), Wp2 * C1), compute_dtype),  # pad2
            pltpu.VMEM((bb * (ROW0 + H + P3), Wp3 * C2), compute_dtype),  # pad3
            pltpu.VMEM((bb * H, K1 * Wp1 * Cin), compute_dtype),          # slab1 (LHS l1)
            pltpu.VMEM((bb * H, K2 * Wp2 * C1), compute_dtype),           # slab2 (LHS l2)
            pltpu.VMEM((bb * H, K3 * Wp3 * C2), compute_dtype),           # slab3 (LHS l3)
        ],
        compiler_params=pltpu.CompilerParams(dimension_semantics=("parallel",)),
    )(xp, r1, bv1, r2, bv2, r3, bv3)

    return out.reshape(B, H, W, C3)     # metadata-only: same HBM layout


def pixel_shuffle_nhwc_to_nchw(x_nhwc, r):
    """PyTorch-equivalent PixelShuffle. x_nhwc: (B,H,W,C*r*r) -> (B,C,H*r,W*r) NCHW."""
    B, H, W, Crr = x_nhwc.shape
    C = Crr // (r * r)
    x = x_nhwc.reshape(B, H, W, C, r, r)            # chan = c*r*r + i*r + j
    x = jnp.transpose(x, (0, 3, 1, 4, 2, 5))        # (B,C,H,i,W,j)
    return x.reshape(B, C, H * r, W * r)


# ----------------------------------------------------------------------------------
# SubPixel module: parameters + forward
# ----------------------------------------------------------------------------------
def init_subpixel_params(key, in_channels, channels, upscale_factor):
    hidden = channels // 2
    out_channels = int(in_channels * upscale_factor ** 2)

    def conv_init(k, kh, kw, cin, cout):
        kw_key, kb_key = jax.random.split(k)
        fan_in = cin * kh * kw
        bound = 1.0 / jnp.sqrt(fan_in)
        w = jax.random.uniform(kw_key, (kh, kw, cin, cout), jnp.float32, -bound, bound)
        b = jax.random.uniform(kb_key, (cout,), jnp.float32, -bound, bound)
        return w, b

    k1, k2, k3 = jax.random.split(key, 3)
    p = {}
    p["w1"], p["b1"] = conv_init(k1, 5, 5, in_channels, channels)
    p["w2"], p["b2"] = conv_init(k2, 3, 3, channels, hidden)
    p["w3"], p["b3"] = conv_init(k3, 3, 3, hidden, out_channels)
    return p


@functools.partial(jax.jit, static_argnames=("upscale_factor", "compute_dtype", "batch_block"))
def subpixel_forward(params, x_nchw, upscale_factor,
                     compute_dtype=jnp.float32, batch_block=None):
    out_nhwc = subpixel_conv_stack(x_nchw, params, compute_dtype=compute_dtype,
                                   batch_block=batch_block)   # single fused pallas_call
    return pixel_shuffle_nhwc_to_nchw(out_nhwc, upscale_factor)


# ----------------------------------------------------------------------------------
# Pure-JAX reference (lax conv, HIGHEST precision) for the correctness check
# ----------------------------------------------------------------------------------
def _ref_conv(x_nchw, w_hwio, b, pad):
    return jax.lax.conv_general_dilated(
        x_nchw, w_hwio, window_strides=(1, 1),
        padding=((pad, pad), (pad, pad)),
        dimension_numbers=("NCHW", "HWIO", "NCHW"),
        precision=jax.lax.Precision.HIGHEST,
    ) + b.reshape(1, -1, 1, 1)


def _ref_forward(params, x_nchw, r):
    out = jnp.tanh(_ref_conv(x_nchw, params["w1"], params["b1"], 2))
    out = jnp.tanh(_ref_conv(out, params["w2"], params["b2"], 1))
    out = _ref_conv(out, params["w3"], params["b3"], 1)
    B, Crr, H, W = out.shape
    C = Crr // (r * r)
    out = out.reshape(B, C, r, r, H, W)
    out = jnp.transpose(out, (0, 1, 4, 2, 5, 3))
    return out.reshape(B, C, H * r, W * r)


if __name__ == "__main__":
    in_channels, channels, upscale = 4, 8, 2
    B, H, W = 2, 16, 16

    key = jax.random.PRNGKey(0)
    pkey, xkey = jax.random.split(key)
    params = init_subpixel_params(pkey, in_channels, channels, upscale)
    x = jax.random.normal(xkey, (B, in_channels, H, W), jnp.float32)

    y = subpixel_forward(params, x, upscale)
    y = jax.block_until_ready(y)

    expected_shape = (B, in_channels, H * upscale, W * upscale)
    assert y.shape == expected_shape, (y.shape, expected_shape)

    y_ref = _ref_forward(params, x, upscale)
    max_err = float(jnp.max(jnp.abs(y - y_ref)))
    assert jnp.allclose(y, y_ref, atol=1e-4, rtol=1e-4), ("mismatch vs reference", max_err)

    print("KERNEL_OK")
</pallas_src>

<mosaic_0001>
module attributes {stable_mosaic.version = 11 : i64} {
  func.func @kernel(%arg0: i32, %arg1: memref<40x80xf32, #tpu.memory_space<vmem>>, %arg2: memref<400x128xf32, #tpu.memory_space<vmem>>, %arg3: memref<1x128xf32, #tpu.memory_space<vmem>>, %arg4: memref<432x64xf32, #tpu.memory_space<vmem>>, %arg5: memref<1x64xf32, #tpu.memory_space<vmem>>, %arg6: memref<216x256xf32, #tpu.memory_space<vmem>>, %arg7: memref<1x256xf32, #tpu.memory_space<vmem>>, %arg8: memref<32x256xf32, #tpu.memory_space<vmem>>, %arg9: memref<50x144xf32, #tpu.memory_space<vmem>>, %arg10: memref<50x72xf32, #tpu.memory_space<vmem>>, %arg11: memref<32x400xf32, #tpu.memory_space<vmem>>, %arg12: memref<32x432xf32, #tpu.memory_space<vmem>>, %arg13: memref<32x216xf32, #tpu.memory_space<vmem>>) attributes {dimension_semantics = [#tpu.dimension_semantics<parallel>], iteration_bounds = array<i64: 1>, scalar_prefetch = 0 : i64, scratch_operands = 5 : i64, tpu.core_type = #tpu.core_type<tc>, window_params = [{transform_indices = @transform_0, window_bounds = array<i64: 40, 80>}, {pipeline_mode = #tpu.pipeline_mode<synchronous>, transform_indices = @transform_1, window_bounds = array<i64: 400, 128>}, {pipeline_mode = #tpu.pipeline_mode<synchronous>, transform_indices = @transform_2, window_bounds = array<i64: 1, 128>}, {pipeline_mode = #tpu.pipeline_mode<synchronous>, transform_indices = @transform_3, window_bounds = array<i64: 432, 64>}, {pipeline_mode = #tpu.pipeline_mode<synchronous>, transform_indices = @transform_4, window_bounds = array<i64: 1, 64>}, {pipeline_mode = #tpu.pipeline_mode<synchronous>, transform_indices = @transform_5, window_bounds = array<i64: 216, 256>}, {pipeline_mode = #tpu.pipeline_mode<synchronous>, transform_indices = @transform_6, window_bounds = array<i64: 1, 256>}, {transform_indices = @transform_7, window_bounds = array<i64: 32, 256>}]} {
    %c0 = arith.constant 0 : index
    %c0_0 = arith.constant 0 : index
    %0 = vector.load %arg1[%c0, %c0_0] : memref<40x80xf32, #tpu.memory_space<vmem>>, vector<16x80xf32>
    %c0_1 = arith.constant 0 : index
    %c0_2 = arith.constant 0 : index
    %1 = vector.load %arg11[%c0_1, %c0_2] : memref<32x400xf32, #tpu.memory_space<vmem>>, vector<16x80xf32>
    tpu.vector_store %arg11[%c0_1, %c0_2], %0 {strides = array<i32>} : memref<32x400xf32, #tpu.memory_space<vmem>>, vector<16x80xf32>,
    %c1 = arith.constant 1 : index
    %c0_3 = arith.constant 0 : index
    %2 = vector.load %arg1[%c1, %c0_3] : memref<40x80xf32, #tpu.memory_space<vmem>>, vector<16x80xf32>
    %c0_4 = arith.constant 0 : index
    %c80 = arith.constant 80 : index
    %3 = vector.load %arg11[%c0_4, %c80] : memref<32x400xf32, #tpu.memory_space<vmem>>, vector<16x80xf32>
    tpu.vector_store %arg11[%c0_4, %c80], %2 {strides = array<i32>} : memref<32x400xf32, #tpu.memory_space<vmem>>, vector<16x80xf32>,
    %c2 = arith.constant 2 : index
    %c0_5 = arith.constant 0 : index
    %4 = vector.load %arg1[%c2, %c0_5] : memref<40x80xf32, #tpu.memory_space<vmem>>, vector<16x80xf32>
    %c0_6 = arith.constant 0 : index
    %c160 = arith.constant 160 : index
    %5 = vector.load %arg11[%c0_6, %c160] : memref<32x400xf32, #tpu.memory_space<vmem>>, vector<16x80xf32>
    tpu.vector_store %arg11[%c0_6, %c160], %4 {strides = array<i32>} : memref<32x400xf32, #tpu.memory_space<vmem>>, vector<16x80xf32>,
    %c3 = arith.constant 3 : index
    %c0_7 = arith.constant 0 : index
    %6 = vector.load %arg1[%c3, %c0_7] : memref<40x80xf32, #tpu.memory_space<vmem>>, vector<16x80xf32>
    %c0_8 = arith.constant 0 : index
    %c240 = arith.constant 240 : index
    %7 = vector.load %arg11[%c0_8, %c240] : memref<32x400xf32, #tpu.memory_space<vmem>>, vector<16x80xf32>
    tpu.vector_store %arg11[%c0_8, %c240], %6 {strides = array<i32>} : memref<32x400xf32, #tpu.memory_space<vmem>>, vector<16x80xf32>,
    %c4 = arith.constant 4 : index
    %c0_9 = arith.constant 0 : index
    %8 = vector.load %arg1[%c4, %c0_9] : memref<40x80xf32, #tpu.memory_space<vmem>>, vector<16x80xf32>
    %c0_10 = arith.constant 0 : index
    %c320 = arith.constant 320 : index
    %9 = vector.load %arg11[%c0_10, %c320] : memref<32x400xf32, #tpu.memory_space<vmem>>, vector<16x80xf32>
    tpu.vector_store %arg11[%c0_10, %c320], %8 {strides = array<i32>} : memref<32x400xf32, #tpu.memory_space<vmem>>, vector<16x80xf32>,
    %c20 = arith.constant 20 : index
    %c0_11 = arith.constant 0 : index
    %10 = vector.load %arg1[%c20, %c0_11] : memref<40x80xf32, #tpu.memory_space<vmem>>, vector<16x80xf32>
    %c16 = arith.constant 16 : index
    %c0_12 = arith.constant 0 : index
    %11 = vector.load %arg11[%c16, %c0_12] : memref<32x400xf32, #tpu.memory_space<vmem>>, vector<16x80xf32>
    tpu.vector_store %arg11[%c16, %c0_12], %10 {strides = array<i32>} : memref<32x400xf32, #tpu.memory_space<vmem>>, vector<16x80xf32>,
    %c21 = arith.constant 21 : index
    %c0_13 = arith.constant 0 : index
    %12 = vector.load %arg1[%c21, %c0_13] : memref<40x80xf32, #tpu.memory_space<vmem>>, vector<16x80xf32>
    %c16_14 = arith.constant 16 : index
    %c80_15 = arith.constant 80 : index
    %13 = vector.load %arg11[%c16_14, %c80_15] : memref<32x400xf32, #tpu.memory_space<vmem>>, vector<16x80xf32>
    tpu.vector_store %arg11[%c16_14, %c80_15], %12 {strides = array<i32>} : memref<32x400xf32, #tpu.memory_space<vmem>>, vector<16x80xf32>,
    %c22 = arith.constant 22 : index
    %c0_16 = arith.constant 0 : index
    %14 = vector.load %arg1[%c22, %c0_16] : memref<40x80xf32, #tpu.memory_space<vmem>>, vector<16x80xf32>
    %c16_17 = arith.constant 16 : index
    %c160_18 = arith.constant 160 : index
    %15 = vector.load %arg11[%c16_17, %c160_18] : memref<32x400xf32, #tpu.memory_space<vmem>>, vector<16x80xf32>
    tpu.vector_store %arg11[%c16_17, %c160_18], %14 {strides = array<i32>} : memref<32x400xf32, #tpu.memory_space<vmem>>, vector<16x80xf32>,
    %c23 = arith.constant 23 : index
    %c0_19 = arith.constant 0 : index
    %16 = vector.load %arg1[%c23, %c0_19] : memref<40x80xf32, #tpu.memory_space<vmem>>, vector<16x80xf32>
    %c16_20 = arith.constant 16 : index
    %c240_21 = arith.constant 240 : index
    %17 = vector.load %arg11[%c16_20, %c240_21] : memref<32x400xf32, #tpu.memory_space<vmem>>, vector<16x80xf32>
    tpu.vector_store %arg11[%c16_20, %c240_21], %16 {strides = array<i32>} : memref<32x400xf32, #tpu.memory_space<vmem>>, vector<16x80xf32>,
    %c24 = arith.constant 24 : index
    %c0_22 = arith.constant 0 : index
    %18 = vector.load %arg1[%c24, %c0_22] : memref<40x80xf32, #tpu.memory_space<vmem>>, vector<16x80xf32>
    %c16_23 = arith.constant 16 : index
    %c320_24 = arith.constant 320 : index
    %19 = vector.load %arg11[%c16_23, %c320_24] : memref<32x400xf32, #tpu.memory_space<vmem>>, vector<16x80xf32>
    tpu.vector_store %arg11[%c16_23, %c320_24], %18 {strides = array<i32>} : memref<32x400xf32, #tpu.memory_space<vmem>>, vector<16x80xf32>,
    %c0_25 = arith.constant 0 : index
    %c0_26 = arith.constant 0 : index
    %20 = vector.load %arg11[%c0_25, %c0_26] : memref<32x400xf32, #tpu.memory_space<vmem>>, vector<32x400xf32>
    %c0_27 = arith.constant 0 : index
    %c0_28 = arith.constant 0 : index
    %21 = vector.load %arg2[%c0_27, %c0_28] : memref<400x128xf32, #tpu.memory_space<vmem>>, vector<400x128xf32>
    %cst = arith.constant dense<0.000000e+00> : vector<32x128xf32>
    %22 = tpu.matmul %20, %21, %cst {dimension_numbers = #tpu.dot_dimension_numbers<[1], [0], [0], [1], [0, 0, 1, 1], [], []>, precision = #tpu.contract_precision<fp32>} : vector<32x400xf32>, vector<400x128xf32>, vector<32x128xf32> -> vector<32x128xf32>
    %c0_29 = arith.constant 0 : index
    %c0_30 = arith.constant 0 : index
    %23 = vector.load %arg3[%c0_29, %c0_30] : memref<1x128xf32, #tpu.memory_space<vmem>>, vector<1x128xf32>
    %24 = vector.broadcast %23 : vector<1x128xf32> to vector<32x128xf32>
    %25 = arith.addf %22, %24 : vector<32x128xf32>
    %26 = math.tanh %25 : vector<32x128xf32>
    %cst_31 = arith.constant 0.000000e+00 : f32
    %27 = vector.broadcast %cst_31 : f32 to vector<50x8xf32>
    %c0_32 = arith.constant 0 : index
    %c0_33 = arith.constant 0 : index
    %28 = vector.load %arg9[%c0_32, %c0_33] : memref<50x144xf32, #tpu.memory_space<vmem>>, vector<50x8xf32>
    tpu.vector_store %arg9[%c0_32, %c0_33], %27 {strides = array<i32>} : memref<50x144xf32, #tpu.memory_space<vmem>>, vector<50x8xf32>,
    %cst_34 = arith.constant 0.000000e+00 : f32
    %29 = vector.broadcast %cst_34 : f32 to vector<50x8xf32>
    %c0_35 = arith.constant 0 : index
    %c136 = arith.constant 136 : index
    %30 = vector.load %arg9[%c0_35, %c136] : memref<50x144xf32, #tpu.memory_space<vmem>>, vector<50x8xf32>
    tpu.vector_store %arg9[%c0_35, %c136], %29 {strides = array<i32>} : memref<50x144xf32, #tpu.memory_space<vmem>>, vector<50x8xf32>,
    %cst_36 = arith.constant 0.000000e+00 : f32
    %31 = vector.broadcast %cst_36 : f32 to vector<1x144xf32>
    %c7 = arith.constant 7 : index
    %c0_37 = arith.constant 0 : index
    %32 = vector.load %arg9[%c7, %c0_37] : memref<50x144xf32, #tpu.memory_space<vmem>>, vector<1x144xf32>
    tpu.vector_store %arg9[%c7, %c0_37], %31 {strides = array<i32>} : memref<50x144xf32, #tpu.memory_space<vmem>>, vector<1x144xf32>,
    %cst_38 = arith.constant 0.000000e+00 : f32
    %33 = vector.broadcast %cst_38 : f32 to vector<1x144xf32>
    %c24_39 = arith.constant 24 : index
    %c0_40 = arith.constant 0 : index
    %34 = vector.load %arg9[%c24_39, %c0_40] : memref<50x144xf32, #tpu.memory_space<vmem>>, vector<1x144xf32>
    tpu.vector_store %arg9[%c24_39, %c0_40], %33 {strides = array<i32>} : memref<50x144xf32, #tpu.memory_space<vmem>>, vector<1x144xf32>,
    %35 = vector.extract_strided_slice %26 {offsets = [0, 0], sizes = [16, 128], strides = [1, 1]} : vector<32x128xf32> to vector<16x128xf32>
    %c8 = arith.constant 8 : index
    %c8_41 = arith.constant 8 : index
    %36 = vector.load %arg9[%c8, %c8_41] : memref<50x144xf32, #tpu.memory_space<vmem>>, vector<16x128xf32>
    tpu.vector_store %arg9[%c8, %c8_41], %35 {strides = array<i32>} : memref<50x144xf32, #tpu.memory_space<vmem>>, vector<16x128xf32>,
    %cst_42 = arith.constant 0.000000e+00 : f32
    %37 = vector.broadcast %cst_42 : f32 to vector<1x144xf32>
    %c32 = arith.constant 32 : index
    %c0_43 = arith.constant 0 : index
    %38 = vector.load %arg9[%c32, %c0_43] : memref<50x144xf32, #tpu.memory_space<vmem>>, vector<1x144xf32>
    tpu.vector_store %arg9[%c32, %c0_43], %37 {strides = array<i32>} : memref<50x144xf32, #tpu.memory_space<vmem>>, vector<1x144xf32>,
    %cst_44 = arith.constant 0.000000e+00 : f32
    %39 = vector.broadcast %cst_44 : f32 to vector<1x144xf32>
    %c49 = arith.constant 49 : index
    %c0_45 = arith.constant 0 : index
    %40 = vector.load %arg9[%c49, %c0_45] : memref<50x144xf32, #tpu.memory_space<vmem>>, vector<1x144xf32>
    tpu.vector_store %arg9[%c49, %c0_45], %39 {strides = array<i32>} : memref<50x144xf32, #tpu.memory_space<vmem>>, vector<1x144xf32>,
    %41 = vector.extract_strided_slice %26 {offsets = [16, 0], sizes = [16, 128], strides = [1, 1]} : vector<32x128xf32> to vector<16x128xf32>
    %c33 = arith.constant 33 : index
    %c8_46 = arith.constant 8 : index
    %42 = vector.load %arg9[%c33, %c8_46] : memref<50x144xf32, #tpu.memory_space<vmem>>, vector<16x128xf32>
    tpu.vector_store %arg9[%c33, %c8_46], %41 {strides = array<i32>} : memref<50x144xf32, #tpu.memory_space<vmem>>, vector<16x128xf32>,
    %c7_47 = arith.constant 7 : index
    %c0_48 = arith.constant 0 : index
    %43 = vector.load %arg9[%c7_47, %c0_48] : memref<50x144xf32, #tpu.memory_space<vmem>>, vector<16x144xf32>
    %c0_49 = arith.constant 0 : index
    %c0_50 = arith.constant 0 : index
    %44 = vector.load %arg12[%c0_49, %c0_50] : memref<32x432xf32, #tpu.memory_space<vmem>>, vector<16x144xf32>
    tpu.vector_store %arg12[%c0_49, %c0_50], %43 {strides = array<i32>} : memref<32x432xf32, #tpu.memory_space<vmem>>, vector<16x144xf32>,
    %c8_51 = arith.constant 8 : index
    %c0_52 = arith.constant 0 : index
    %45 = vector.load %arg9[%c8_51, %c0_52] : memref<50x144xf32, #tpu.memory_space<vmem>>, vector<16x144xf32>
    %c0_53 = arith.constant 0 : index
    %c144 = arith.constant 144 : index
    %46 = vector.load %arg12[%c0_53, %c144] : memref<32x432xf32, #tpu.memory_space<vmem>>, vector<16x144xf32>
    tpu.vector_store %arg12[%c0_53, %c144], %45 {strides = array<i32>} : memref<32x432xf32, #tpu.memory_space<vmem>>, vector<16x144xf32>,
    %c9 = arith.constant 9 : index
    %c0_54 = arith.constant 0 : index
    %47 = vector.load %arg9[%c9, %c0_54] : memref<50x144xf32, #tpu.memory_space<vmem>>, vector<16x144xf32>
    %c0_55 = arith.constant 0 : index
    %c288 = arith.constant 288 : index
    %48 = vector.load %arg12[%c0_55, %c288] : memref<32x432xf32, #tpu.memory_space<vmem>>, vector<16x144xf32>
    tpu.vector_store %arg12[%c0_55, %c288], %47 {strides = array<i32>} : memref<32x432xf32, #tpu.memory_space<vmem>>, vector<16x144xf32>,
    %c32_56 = arith.constant 32 : index
    %c0_57 = arith.constant 0 : index
    %49 = vector.load %arg9[%c32_56, %c0_57] : memref<50x144xf32, #tpu.memory_space<vmem>>, vector<16x144xf32>
    %c16_58 = arith.constant 16 : index
    %c0_59 = arith.constant 0 : index
    %50 = vector.load %arg12[%c16_58, %c0_59] : memref<32x432xf32, #tpu.memory_space<vmem>>, vector<16x144xf32>
    tpu.vector_store %arg12[%c16_58, %c0_59], %49 {strides = array<i32>} : memref<32x432xf32, #tpu.memory_space<vmem>>, vector<16x144xf32>,
    %c33_60 = arith.constant 33 : index
    %c0_61 = arith.constant 0 : index
    %51 = vector.load %arg9[%c33_60, %c0_61] : memref<50x144xf32, #tpu.memory_space<vmem>>, vector<16x144xf32>
    %c16_62 = arith.constant 16 : index
    %c144_63 = arith.constant 144 : index
    %52 = vector.load %arg12[%c16_62, %c144_63] : memref<32x432xf32, #tpu.memory_space<vmem>>, vector<16x144xf32>
    tpu.vector_store %arg12[%c16_62, %c144_63], %51 {strides = array<i32>} : memref<32x432xf32, #tpu.memory_space<vmem>>, vector<16x144xf32>,
    %c34 = arith.constant 34 : index
    %c0_64 = arith.constant 0 : index
    %53 = vector.load %arg9[%c34, %c0_64] : memref<50x144xf32, #tpu.memory_space<vmem>>, vector<16x144xf32>
    %c16_65 = arith.constant 16 : index
    %c288_66 = arith.constant 288 : index
    %54 = vector.load %arg12[%c16_65, %c288_66] : memref<32x432xf32, #tpu.memory_space<vmem>>, vector<16x144xf32>
    tpu.vector_store %arg12[%c16_65, %c288_66], %53 {strides = array<i32>} : memref<32x432xf32, #tpu.memory_space<vmem>>, vector<16x144xf32>,
    %c0_67 = arith.constant 0 : index
    %c0_68 = arith.constant 0 : index
    %55 = vector.load %arg12[%c0_67, %c0_68] : memref<32x432xf32, #tpu.memory_space<vmem>>, vector<32x432xf32>
    %c0_69 = arith.constant 0 : index
    %c0_70 = arith.constant 0 : index
    %56 = vector.load %arg4[%c0_69, %c0_70] : memref<432x64xf32, #tpu.memory_space<vmem>>, vector<432x64xf32>
    %cst_71 = arith.constant dense<0.000000e+00> : vector<32x64xf32>
    %57 = tpu.matmul %55, %56, %cst_71 {dimension_numbers = #tpu.dot_dimension_numbers<[1], [0], [0], [1], [0, 0, 1, 1], [], []>, precision = #tpu.contract_precision<fp32>} : vector<32x432xf32>, vector<432x64xf32>, vector<32x64xf32> -> vector<32x64xf32>
    %c0_72 = arith.constant 0 : index
    %c0_73 = arith.constant 0 : index
    %58 = vector.load %arg5[%c0_72, %c0_73] : memref<1x64xf32, #tpu.memory_space<vmem>>, vector<1x64xf32>
    %59 = vector.broadcast %58 : vector<1x64xf32> to vector<32x64xf32>
    %60 = arith.addf %57, %59 : vector<32x64xf32>
    %61 = math.tanh %60 : vector<32x64xf32>
    %cst_74 = arith.constant 0.000000e+00 : f32
    %62 = vector.broadcast %cst_74 : f32 to vector<50x4xf32>
    %c0_75 = arith.constant 0 : index
    %c0_76 = arith.constant 0 : index
    %63 = vector.load %arg10[%c0_75, %c0_76] : memref<50x72xf32, #tpu.memory_space<vmem>>, vector<50x4xf32>
    tpu.vector_store %arg10[%c0_75, %c0_76], %62 {strides = array<i32>} : memref<50x72xf32, #tpu.memory_space<vmem>>, vector<50x4xf32>,
    %cst_77 = arith.constant 0.000000e+00 : f32
    %64 = vector.broadcast %cst_77 : f32 to vector<50x4xf32>
    %c0_78 = arith.constant 0 : index
    %c68 = arith.constant 68 : index
    %65 = vector.load %arg10[%c0_78, %c68] : memref<50x72xf32, #tpu.memory_space<vmem>>, vector<50x4xf32>
    tpu.vector_store %arg10[%c0_78, %c68], %64 {strides = array<i32>} : memref<50x72xf32, #tpu.memory_space<vmem>>, vector<50x4xf32>,
    %cst_79 = arith.constant 0.000000e+00 : f32
    %66 = vector.broadcast %cst_79 : f32 to vector<1x72xf32>
    %c7_80 = arith.constant 7 : index
    %c0_81 = arith.constant 0 : index
    %67 = vector.load %arg10[%c7_80, %c0_81] : memref<50x72xf32, #tpu.memory_space<vmem>>, vector<1x72xf32>
    tpu.vector_store %arg10[%c7_80, %c0_81], %66 {strides = array<i32>} : memref<50x72xf32, #tpu.memory_space<vmem>>, vector<1x72xf32>,
    %cst_82 = arith.constant 0.000000e+00 : f32
    %68 = vector.broadcast %cst_82 : f32 to vector<1x72xf32>
    %c24_83 = arith.constant 24 : index
    %c0_84 = arith.constant 0 : index
    %69 = vector.load %arg10[%c24_83, %c0_84] : memref<50x72xf32, #tpu.memory_space<vmem>>, vector<1x72xf32>
    tpu.vector_store %arg10[%c24_83, %c0_84], %68 {strides = array<i32>} : memref<50x72xf32, #tpu.memory_space<vmem>>, vector<1x72xf32>,
    %70 = vector.extract_strided_slice %61 {offsets = [0, 0], sizes = [16, 64], strides = [1, 1]} : vector<32x64xf32> to vector<16x64xf32>
    %c8_85 = arith.constant 8 : index
    %c4_86 = arith.constant 4 : index
    %71 = vector.load %arg10[%c8_85, %c4_86] : memref<50x72xf32, #tpu.memory_space<vmem>>, vector<16x64xf32>
    tpu.vector_store %arg10[%c8_85, %c4_86], %70 {strides = array<i32>} : memref<50x72xf32, #tpu.memory_space<vmem>>, vector<16x64xf32>,
    %cst_87 = arith.constant 0.000000e+00 : f32
    %72 = vector.broadcast %cst_87 : f32 to vector<1x72xf32>
    %c32_88 = arith.constant 32 : index
    %c0_89 = arith.constant 0 : index
    %73 = vector.load %arg10[%c32_88, %c0_89] : memref<50x72xf32, #tpu.memory_space<vmem>>, vector<1x72xf32>
    tpu.vector_store %arg10[%c32_88, %c0_89], %72 {strides = array<i32>} : memref<50x72xf32, #tpu.memory_space<vmem>>, vector<1x72xf32>,
    %cst_90 = arith.constant 0.000000e+00 : f32
    %74 = vector.broadcast %cst_90 : f32 to vector<1x72xf32>
    %c49_91 = arith.constant 49 : index
    %c0_92 = arith.constant 0 : index
    %75 = vector.load %arg10[%c49_91, %c0_92] : memref<50x72xf32, #tpu.memory_space<vmem>>, vector<1x72xf32>
    tpu.vector_store %arg10[%c49_91, %c0_92], %74 {strides = array<i32>} : memref<50x72xf32, #tpu.memory_space<vmem>>, vector<1x72xf32>,
    %76 = vector.extract_strided_slice %61 {offsets = [16, 0], sizes = [16, 64], strides = [1, 1]} : vector<32x64xf32> to vector<16x64xf32>
    %c33_93 = arith.constant 33 : index
    %c4_94 = arith.constant 4 : index
    %77 = vector.load %arg10[%c33_93, %c4_94] : memref<50x72xf32, #tpu.memory_space<vmem>>, vector<16x64xf32>
    tpu.vector_store %arg10[%c33_93, %c4_94], %76 {strides = array<i32>} : memref<50x72xf32, #tpu.memory_space<vmem>>, vector<16x64xf32>,
    %c7_95 = arith.constant 7 : index
    %c0_96 = arith.constant 0 : index
    %78 = vector.load %arg10[%c7_95, %c0_96] : memref<50x72xf32, #tpu.memory_space<vmem>>, vector<16x72xf32>
    %c0_97 = arith.constant 0 : index
    %c0_98 = arith.constant 0 : index
    %79 = vector.load %arg13[%c0_97, %c0_98] : memref<32x216xf32, #tpu.memory_space<vmem>>, vector<16x72xf32>
    tpu.vector_store %arg13[%c0_97, %c0_98], %78 {strides = array<i32>} : memref<32x216xf32, #tpu.memory_space<vmem>>, vector<16x72xf32>,
    %c8_99 = arith.constant 8 : index
    %c0_100 = arith.constant 0 : index
    %80 = vector.load %arg10[%c8_99, %c0_100] : memref<50x72xf32, #tpu.memory_space<vmem>>, vector<16x72xf32>
    %c0_101 = arith.constant 0 : index
    %c72 = arith.constant 72 : index
    %81 = vector.load %arg13[%c0_101, %c72] : memref<32x216xf32, #tpu.memory_space<vmem>>, vector<16x72xf32>
    tpu.vector_store %arg13[%c0_101, %c72], %80 {strides = array<i32>} : memref<32x216xf32, #tpu.memory_space<vmem>>, vector<16x72xf32>,
    %c9_102 = arith.constant 9 : index
    %c0_103 = arith.constant 0 : index
    %82 = vector.load %arg10[%c9_102, %c0_103] : memref<50x72xf32, #tpu.memory_space<vmem>>, vector<16x72xf32>
    %c0_104 = arith.constant 0 : index
    %c144_105 = arith.constant 144 : index
    %83 = vector.load %arg13[%c0_104, %c144_105] : memref<32x216xf32, #tpu.memory_space<vmem>>, vector<16x72xf32>
    tpu.vector_store %arg13[%c0_104, %c144_105], %82 {strides = array<i32>} : memref<32x216xf32, #tpu.memory_space<vmem>>, vector<16x72xf32>,
    %c32_106 = arith.constant 32 : index
    %c0_107 = arith.constant 0 : index
    %84 = vector.load %arg10[%c32_106, %c0_107] : memref<50x72xf32, #tpu.memory_space<vmem>>, vector<16x72xf32>
    %c16_108 = arith.constant 16 : index
    %c0_109 = arith.constant 0 : index
    %85 = vector.load %arg13[%c16_108, %c0_109] : memref<32x216xf32, #tpu.memory_space<vmem>>, vector<16x72xf32>
    tpu.vector_store %arg13[%c16_108, %c0_109], %84 {strides = array<i32>} : memref<32x216xf32, #tpu.memory_space<vmem>>, vector<16x72xf32>,
    %c33_110 = arith.constant 33 : index
    %c0_111 = arith.constant 0 : index
    %86 = vector.load %arg10[%c33_110, %c0_111] : memref<50x72xf32, #tpu.memory_space<vmem>>, vector<16x72xf32>
    %c16_112 = arith.constant 16 : index
    %c72_113 = arith.constant 72 : index
    %87 = vector.load %arg13[%c16_112, %c72_113] : memref<32x216xf32, #tpu.memory_space<vmem>>, vector<16x72xf32>
    tpu.vector_store %arg13[%c16_112, %c72_113], %86 {strides = array<i32>} : memref<32x216xf32, #tpu.memory_space<vmem>>, vector<16x72xf32>,
    %c34_114 = arith.constant 34 : index
    %c0_115 = arith.constant 0 : index
    %88 = vector.load %arg10[%c34_114, %c0_115] : memref<50x72xf32, #tpu.memory_space<vmem>>, vector<16x72xf32>
    %c16_116 = arith.constant 16 : index
    %c144_117 = arith.constant 144 : index
    %89 = vector.load %arg13[%c16_116, %c144_117] : memref<32x216xf32, #tpu.memory_space<vmem>>, vector<16x72xf32>
    tpu.vector_store %arg13[%c16_116, %c144_117], %88 {strides = array<i32>} : memref<32x216xf32, #tpu.memory_space<vmem>>, vector<16x72xf32>,
    %c0_118 = arith.constant 0 : index
    %c0_119 = arith.constant 0 : index
    %90 = vector.load %arg13[%c0_118, %c0_119] : memref<32x216xf32, #tpu.memory_space<vmem>>, vector<32x216xf32>
    %c0_120 = arith.constant 0 : index
    %c0_121 = arith.constant 0 : index
    %91 = vector.load %arg6[%c0_120, %c0_121] : memref<216x256xf32, #tpu.memory_space<vmem>>, vector<216x256xf32>
    %cst_122 = arith.constant dense<0.000000e+00> : vector<32x256xf32>
    %92 = tpu.matmul %90, %91, %cst_122 {dimension_numbers = #tpu.dot_dimension_numbers<[1], [0], [0], [1], [0, 0, 1, 1], [], []>, precision = #tpu.contract_precision<fp32>} : vector<32x216xf32>, vector<216x256xf32>, vector<32x256xf32> -> vector<32x256xf32>
    %c0_123 = arith.constant 0 : index
    %c0_124 = arith.constant 0 : index
    %93 = vector.load %arg7[%c0_123, %c0_124] : memref<1x256xf32, #tpu.memory_space<vmem>>, vector<1x256xf32>
    %94 = vector.broadcast %93 : vector<1x256xf32> to vector<32x256xf32>
    %95 = arith.addf %92, %94 : vector<32x256xf32>
    %c0_125 = arith.constant 0 : index
    %c0_126 = arith.constant 0 : index
    %96 = vector.load %arg8[%c0_125, %c0_126] : memref<32x256xf32, #tpu.memory_space<vmem>>, vector<32x256xf32>
    tpu.vector_store %arg8[%c0_125, %c0_126], %95 {strides = array<i32>} : memref<32x256xf32, #tpu.memory_space<vmem>>, vector<32x256xf32>,
    return
  }
  func.func @transform_0(%arg0: i32) -> (i32, i32) {
    %c0_i32 = arith.constant 0 : i32
    %c0_i32_0 = arith.constant 0 : i32
    return %arg0, %c0_i32 : i32, i32
  }
  func.func @transform_1(%arg0: i32) -> (i32, i32) {
    %c0_i32 = arith.constant 0 : i32
    %c0_i32_0 = arith.constant 0 : i32
    %c0_i32_1 = arith.constant 0 : i32
    return %c0_i32, %c0_i32_0 : i32, i32
  }
  func.func @transform_2(%arg0: i32) -> (i32, i32) {
    %c0_i32 = arith.constant 0 : i32
    %c0_i32_0 = arith.constant 0 : i32
    %c0_i32_1 = arith.constant 0 : i32
    return %c0_i32, %c0_i32_0 : i32, i32
  }
  func.func @transform_3(%arg0: i32) -> (i32, i32) {
    %c0_i32 = arith.constant 0 : i32
    %c0_i32_0 = arith.constant 0 : i32
    %c0_i32_1 = arith.constant 0 : i32
    return %c0_i32, %c0_i32_0 : i32, i32
  }
  func.func @transform_4(%arg0: i32) -> (i32, i32) {
    %c0_i32 = arith.constant 0 : i32
    %c0_i32_0 = arith.constant 0 : i32
    %c0_i32_1 = arith.constant 0 : i32
    return %c0_i32, %c0_i32_0 : i32, i32
  }
  func.func @transform_5(%arg0: i32) -> (i32, i32) {
    %c0_i32 = arith.constant 0 : i32
    %c0_i32_0 = arith.constant 0 : i32
    %c0_i32_1 = arith.constant 0 : i32
    return %c0_i32, %c0_i32_0 : i32, i32
  }
  func.func @transform_6(%arg0: i32) -> (i32, i32) {
    %c0_i32 = arith.constant 0 : i32
    %c0_i32_0 = arith.constant 0 : i32
    %c0_i32_1 = arith.constant 0 : i32
    return %c0_i32, %c0_i32_0 : i32, i32
  }
  func.func @transform_7(%arg0: i32) -> (i32, i32) {
    %c0_i32 = arith.constant 0 : i32
    %c0_i32_0 = arith.constant 0 : i32
    return %arg0, %c0_i32 : i32, i32
  }
}

</mosaic_0001>

<llo_original>
// kernel: tile.28
$region0: #{tile.28}
  #allocation0 [shape = 's32[1]{0}', space=sflag, size = 0x4, scoped, tag = 'scoped memory for tile.28']
  %s0 = inlined_call_operand.vmem [shape: f32[16], index: 0, kind: input, shape index: {}]
  %s1 = inlined_call_operand.vmem [shape: f32[16,16], index: 1, kind: output, shape index: {}]
  // Predicated region
  $region2: #{tile.28} parent=0 // pred_check
    _
  $region3: #{tile.28} parent=0 // pred_check_branch
    %3 = sbr.rel (0) target = $region5
  $region4: #{tile.28} parent=0 // pred_region
    _
  $region5: #{tile.28} parent=0 // pred_fallthru
    _
  %v4 = vld [vmem:[%s0] ss:$0 sm:$0xff]
  %5 = vst [vmem:[%s1] sm:$0xff] %v4
  %s6 = scalar_lea.vmem %s1, 8
  %7 = vst [vmem:[%s6] sm:$0xff] %v4

// kernel: tile.29
$region0: #{tile.29}
  %s0 = inlined_call_operand.vmem [shape: f32[16,16], index: 0, kind: input, shape index: {}]
  %s1 = inlined_call_operand.vmem [shape: f32[1,256], index: 1, kind: output, shape index: {}]
  $region1: #{tile.29} parent=0
    #allocation0 [shape = 'u8[8192]{0}', space=vmem, size = 0x2000, scoped, tag = 'scoped mem for output reshape']
    %s2 = smov 3
    %v3 = vld [vmem:[%s0] ss:$8 sm:%s2]
    %vm4 = vcmask 130048
    %5 = vst.msk [vmem:[#allocation0] ss:$8 sm:$0x3] %vm4, %v3
    %s6 = scalar_lea.vmem %s0, 7
    %s7 = smov 3
    %v8 = vld [vmem:[%s6] ss:$8 sm:%s7]
    %9 = vrot.lane.b32.xlu0 %v8, 112
    %v10 = vpop.permute.xlu0 %9
    %vm11 = vcmask 1048448
    %12 = vst.msk [vmem:[#allocation0] ss:$8 sm:$0x3] %vm11, %v10
    %s13 = scalar_lea.vmem %s0, 6
    %s14 = smov 3
    %v15 = vld [vmem:[%s13] ss:$8 sm:%s14]
    %16 = vrot.lane.b32.xlu0 %v15, 96
    %v17 = vpop.permute.xlu0 %16
    %vm18 = vcmask 917248
    %19 = vst.msk [vmem:[#allocation0] ss:$8 sm:$0x3] %vm18, %v17
    %s20 = scalar_lea.vmem %s0, 5
    %s21 = smov 3
    %v22 = vld [vmem:[%s20] ss:$8 sm:%s21]
    %23 = vrot.lane.b32.xlu0 %v22, 80
    %v24 = vpop.permute.xlu0 %23
    %vm25 = vcmask 786048
    %26 = vst.msk [vmem:[#allocation0] ss:$8 sm:$0x3] %vm25, %v24
    %s27 = scalar_lea.vmem %s0, 4
    %s28 = smov 3
    %v29 = vld [vmem:[%s27] ss:$8 sm:%s28]
    %30 = vrot.lane.b32.xlu0 %v29, 64
    %v31 = vpop.permute.xlu0 %30
    %vm32 = vcmask 654848
    %33 = vst.msk [vmem:[#allocation0] ss:$8 sm:$0x3] %vm32, %v31
    %s34 = scalar_lea.vmem %s0, 3
    %s35 = smov 3
    %v36 = vld [vmem:[%s34] ss:$8 sm:%s35]
    %37 = vrot.lane.b32.xlu0 %v36, 48
    %v38 = vpop.permute.xlu0 %37
    %vm39 = vcmask 523648
    %40 = vst.msk [vmem:[#allocation0] ss:$8 sm:$0x3] %vm39, %v38
    %s41 = scalar_lea.vmem %s0, 2
    %s42 = smov 3
    %v43 = vld [vmem:[%s41] ss:$8 sm:%s42]
    %44 = vrot.lane.b32.xlu0 %v43, 32
    %v45 = vpop.permute.xlu0 %44
    %vm46 = vcmask 392448
    %47 = vst.msk [vmem:[#allocation0] ss:$8 sm:$0x3] %vm46, %v45
    %s48 = scalar_lea.vmem %s0, 1
    %s49 = smov 3
    %v50 = vld [vmem:[%s48] ss:$8 sm:%s49]
    %51 = vrot.lane.b32.xlu0 %v50, 16
    %v52 = vpop.permute.xlu0 %51
    %vm53 = vcmask 261248
    %54 = vst.msk [vmem:[#allocation0] ss:$8 sm:$0x3] %vm53, %v52
    %s56 = sshll.u32 1, 1
    %s57 = ssub.s32 %s56, 1
    %v59 = vld [vmem:[#allocation0] sm:%s57]
    %s60 = sshll.u32 1, 1
    %s61 = ssub.s32 %s60, 1
    %62 = vst [vmem:[%s1] sm:%s61] %v59
    %s63 = scalar_lea.vmem [#allocation0], 8
    %v64 = vld [vmem:[%s63] sm:%s57]
    %s65 = sshll.u32 1, 1
    %s66 = ssub.s32 %s65, 1
    %s67 = scalar_lea.vmem %s1, 1
    %68 = vst [vmem:[%s67] sm:%s66] %v64

// kernel: tile.18
$region0: #{tile.18}
  #allocation0 [shape = 's32[1]{0}', space=sflag, size = 0x4, scoped, tag = 'scoped memory for tile.18']
  %s0 = inlined_call_operand.vmem [shape: f32[8], index: 0, kind: input, shape index: {}]
  %s1 = inlined_call_operand.vmem [shape: f32[16,8], index: 1, kind: output, shape index: {}]
  // Predicated region
  $region2: #{tile.18} parent=0 // pred_check
    _
  $region3: #{tile.18} parent=0 // pred_check_branch
    %3 = sbr.rel (0) target = $region5
  $region4: #{tile.18} parent=0 // pred_region
    _
  $region5: #{tile.18} parent=0 // pred_fallthru
    _
  %v4 = vld [vmem:[%s0] ss:$0 sm:$0xff]
  %5 = vst [vmem:[%s1] sm:$0xff] %v4
  %s6 = scalar_lea.vmem %s1, 8
  %7 = vst [vmem:[%s6] sm:$0xff] %v4

// kernel: tile.19
$region0: #{tile.19}
  %s0 = inlined_call_operand.vmem [shape: f32[16,8], index: 0, kind: input, shape index: {}]
  %s1 = inlined_call_operand.vmem [shape: f32[1,128], index: 1, kind: output, shape index: {}]
  $region1: #{tile.19} parent=0
    #allocation0 [shape = 'u8[4096]{0}', space=vmem, size = 0x1000, scoped, tag = 'scoped mem for output reshape']
    %v2 = vld [vmem:[%s0] sm:$0x1]
    %vm3 = vcmask 64512
    %4 = vst.msk [vmem:[#allocation0] sm:$0x1] %vm3, %v2
    %s5 = scalar_lea.vmem %s0, 15
    %v6 = vld [vmem:[%s5] sm:$0x1]
    %7 = vrot.lane.b32.xlu0 %v6, 120
    %v8 = vpop.permute.xlu0 %7
    %vm9 = vcmask 1048512
    %10 = vst.msk [vmem:[#allocation0] sm:$0x1] %vm9, %v8
    %s11 = scalar_lea.vmem %s0, 14
    %v12 = vld [vmem:[%s11] sm:$0x1]
    %13 = vrot.lane.b32.xlu0 %v12, 112
    %v14 = vpop.permute.xlu0 %13
    %vm15 = vcmask 982912
    %16 = vst.msk [vmem:[#allocation0] sm:$0x1] %vm15, %v14
    %s17 = scalar_lea.vmem %s0, 13
    %v18 = vld [vmem:[%s17] sm:$0x1]
    %19 = vrot.lane.b32.xlu0 %v18, 104
    %v20 = vpop.permute.xlu0 %19
    %vm21 = vcmask 917312
    %22 = vst.msk [vmem:[#allocation0] sm:$0x1] %vm21, %v20
    %s23 = scalar_lea.vmem %s0, 12
    %v24 = vld [vmem:[%s23] sm:$0x1]
    %25 = vrot.lane.b32.xlu0 %v24, 96
    %v26 = vpop.permute.xlu0 %25
    %vm27 = vcmask 851712
    %28 = vst.msk [vmem:[#allocation0] sm:$0x1] %vm27, %v26
    %s29 = scalar_lea.vmem %s0, 11
    %v30 = vld [vmem:[%s29] sm:$0x1]
    %31 = vrot.lane.b32.xlu0 %v30, 88
    %v32 = vpop.permute.xlu0 %31
    %vm33 = vcmask 786112
    %34 = vst.msk [vmem:[#allocation0] sm:$0x1] %vm33, %v32
    %s35 = scalar_lea.vmem %s0, 10
    %v36 = vld [vmem:[%s35] sm:$0x1]
    %37 = vrot.lane.b32.xlu0 %v36, 80
    %v38 = vpop.permute.xlu0 %37
    %vm39 = vcmask 720512
    %40 = vst.msk [vmem:[#allocation0] sm:$0x1] %vm39, %v38
    %s41 = scalar_lea.vmem %s0, 9
    %v42 = vld [vmem:[%s41] sm:$0x1]
    %43 = vrot.lane.b32.xlu0 %v42, 72
    %v44 = vpop.permute.xlu0 %43
    %vm45 = vcmask 654912
    %46 = vst.msk [vmem:[#allocation0] sm:$0x1] %vm45, %v44
    %s47 = scalar_lea.vmem %s0, 8
    %v48 = vld [vmem:[%s47] sm:$0x1]
    %49 = vrot.lane.b32.xlu0 %v48, 64
    %v50 = vpop.permute.xlu0 %49
    %vm51 = vcmask 589312
    %52 = vst.msk [vmem:[#allocation0] sm:$0x1] %vm51, %v50
    %s53 = scalar_lea.vmem %s0, 7
    %v54 = vld [vmem:[%s53] sm:$0x1]
    %55 = vrot.lane.b32.xlu0 %v54, 56
    %v56 = vpop.permute.xlu0 %55
    %vm57 = vcmask 523712
    %58 = vst.msk [vmem:[#allocation0] sm:$0x1] %vm57, %v56
    %s59 = scalar_lea.vmem %s0, 6
    %v60 = vld [vmem:[%s59] sm:$0x1]
    %61 = vrot.lane.b32.xlu0 %v60, 48
    %v62 = vpop.permute.xlu0 %61
    %vm63 = vcmask 458112
    %64 = vst.msk [vmem:[#allocation0] sm:$0x1] %vm63, %v62
    %s65 = scalar_lea.vmem %s0, 5
    %v66 = vld [vmem:[%s65] sm:$0x1]
    %67 = vrot.lane.b32.xlu0 %v66, 40
    %v68 = vpop.permute.xlu0 %67
    %vm69 = vcmask 392512
    %70 = vst.msk [vmem:[#allocation0] sm:$0x1] %vm69, %v68
    %s71 = scalar_lea.vmem %s0, 4
    %v72 = vld [vmem:[%s71] sm:$0x1]
    %73 = vrot.lane.b32.xlu0 %v72, 32
    %v74 = vpop.permute.xlu0 %73
    %vm75 = vcmask 326912
    %76 = vst.msk [vmem:[#allocation0] sm:$0x1] %vm75, %v74
    %s77 = scalar_lea.vmem %s0, 3
    %v78 = vld [vmem:[%s77] sm:$0x1]
    %79 = vrot.lane.b32.xlu0 %v78, 24
    %v80 = vpop.permute.xlu0 %79
    %vm81 = vcmask 261312
    %82 = vst.msk [vmem:[#allocation0] sm:$0x1] %vm81, %v80
    %s83 = scalar_lea.vmem %s0, 2
    %v84 = vld [vmem:[%s83] sm:$0x1]
    %85 = vrot.lane.b32.xlu0 %v84, 16
    %v86 = vpop.permute.xlu0 %85
    %vm87 = vcmask 195712
    %88 = vst.msk [vmem:[#allocation0] sm:$0x1] %vm87, %v86
    %s89 = scalar_lea.vmem %s0, 1
    %v90 = vld [vmem:[%s89] sm:$0x1]
    %91 = vrot.lane.b32.xlu0 %v90, 8
    %v92 = vpop.permute.xlu0 %91
    %vm93 = vcmask 130112
    %94 = vst.msk [vmem:[#allocation0] sm:$0x1] %vm93, %v92
    %s96 = sshll.u32 1, 1
    %s97 = ssub.s32 %s96, 1
    %v99 = vld [vmem:[#allocation0] sm:%s97]
    %s100 = sshll.u32 1, 1
    %s101 = ssub.s32 %s100, 1
    %102 = vst [vmem:[%s1] sm:%s101] %v99

// kernel: tile.23
$region0: #{tile.23}
  #allocation0 [shape = 's32[1]{0}', space=sflag, size = 0x4, scoped, tag = 'scoped memory for tile.23']
  %s0 = inlined_call_operand.vmem [shape: f32[4], index: 0, kind: input, shape index: {}]
  %s1 = inlined_call_operand.vmem [shape: f32[16,4], index: 1, kind: output, shape index: {}]
  // Predicated region
  $region2: #{tile.23} parent=0 // pred_check
    _
  $region3: #{tile.23} parent=0 // pred_check_branch
    %3 = sbr.rel (0) target = $region5
  $region4: #{tile.23} parent=0 // pred_region
    _
  $region5: #{tile.23} parent=0 // pred_fallthru
    _
  %v4 = vld [vmem:[%s0] ss:$0 sm:$0xff]
  %5 = vst [vmem:[%s1] sm:$0xff] %v4
  %s6 = scalar_lea.vmem %s1, 8
  %7 = vst [vmem:[%s6] sm:$0xff] %v4

// kernel: tile.24
$region0: #{tile.24}
  %s0 = inlined_call_operand.vmem [shape: f32[16,4], index: 0, kind: input, shape index: {}]
  %s1 = inlined_call_operand.vmem [shape: f32[1,64], index: 1, kind: output, shape index: {}]
  $region1: #{tile.24} parent=0
    #allocation0 [shape = 'u8[4096]{0}', space=vmem, size = 0x1000, scoped, tag = 'scoped mem for output reshape']
    %v2 = vld [vmem:[%s0] sm:$0x1]
    %vm3 = vcmask 31744
    %4 = vst.msk [vmem:[#allocation0] sm:$0x1] %vm3, %v2
    %s5 = scalar_lea.vmem %s0, 15
    %v6 = vld [vmem:[%s5] sm:$0x1]
    %7 = vrot.lane.b32.xlu0 %v6, 60
    %v8 = vpop.permute.xlu0 %7
    %vm9 = vcmask 523744
    %10 = vst.msk [vmem:[#allocation0] sm:$0x1] %vm9, %v8
    %s11 = scalar_lea.vmem %s0, 14
    %v12 = vld [vmem:[%s11] sm:$0x1]
    %13 = vrot.lane.b32.xlu0 %v12, 56
    %v14 = vpop.permute.xlu0 %13
    %vm15 = vcmask 490944
    %16 = vst.msk [vmem:[#allocation0] sm:$0x1] %vm15, %v14
    %s17 = scalar_lea.vmem %s0, 13
    %v18 = vld [vmem:[%s17] sm:$0x1]
    %19 = vrot.lane.b32.xlu0 %v18, 52
    %v20 = vpop.permute.xlu0 %19
    %vm21 = vcmask 458144
    %22 = vst.msk [vmem:[#allocation0] sm:$0x1] %vm21, %v20
    %s23 = scalar_lea.vmem %s0, 12
    %v24 = vld [vmem:[%s23] sm:$0x1]
    %25 = vrot.lane.b32.xlu0 %v24, 48
    %v26 = vpop.permute.xlu0 %25
    %vm27 = vcmask 425344
    %28 = vst.msk [vmem:[#allocation0] sm:$0x1] %vm27, %v26
    %s29 = scalar_lea.vmem %s0, 11
    %v30 = vld [vmem:[%s29] sm:$0x1]
    %31 = vrot.lane.b32.xlu0 %v30, 44
    %v32 = vpop.permute.xlu0 %31
    %vm33 = vcmask 392544
    %34 = vst.msk [vmem:[#allocation0] sm:$0x1] %vm33, %v32
    %s35 = scalar_lea.vmem %s0, 10
    %v36 = vld [vmem:[%s35] sm:$0x1]
    %37 = vrot.lane.b32.xlu0 %v36, 40
    %v38 = vpop.permute.xlu0 %37
    %vm39 = vcmask 359744
    %40 = vst.msk [vmem:[#allocation0] sm:$0x1] %vm39, %v38
    %s41 = scalar_lea.vmem %s0, 9
    %v42 = vld [vmem:[%s41] sm:$0x1]
    %43 = vrot.lane.b32.xlu0 %v42, 36
    %v44 = vpop.permute.xlu0 %43
    %vm45 = vcmask 326944
    %46 = vst.msk [vmem:[#allocation0] sm:$0x1] %vm45, %v44
    %s47 = scalar_lea.vmem %s0, 8
    %v48 = vld [vmem:[%s47] sm:$0x1]
    %49 = vrot.lane.b32.xlu0 %v48, 32
    %v50 = vpop.permute.xlu0 %49
    %vm51 = vcmask 294144
    %52 = vst.msk [vmem:[#allocation0] sm:$0x1] %vm51, %v50
    %s53 = scalar_lea.vmem %s0, 7
    %v54 = vld [vmem:[%s53] sm:$0x1]
    %55 = vrot.lane.b32.xlu0 %v54, 28
    %v56 = vpop.permute.xlu0 %55
    %vm57 = vcmask 261344
    %58 = vst.msk [vmem:[#allocation0] sm:$0x1] %vm57, %v56
    %s59 = scalar_lea.vmem %s0, 6
    %v60 = vld [vmem:[%s59] sm:$0x1]
    %61 = vrot.lane.b32.xlu0 %v60, 24
    %v62 = vpop.permute.xlu0 %61
    %vm63 = vcmask 228544
    %64 = vst.msk [vmem:[#allocation0] sm:$0x1] %vm63, %v62
    %s65 = scalar_lea.vmem %s0, 5
    %v66 = vld [vmem:[%s65] sm:$0x1]
    %67 = vrot.lane.b32.xlu0 %v66, 20
    %v68 = vpop.permute.xlu0 %67
    %vm69 = vcmask 195744
    %70 = vst.msk [vmem:[#allocation0] sm:$0x1] %vm69, %v68
    %s71 = scalar_lea.vmem %s0, 4
    %v72 = vld [vmem:[%s71] sm:$0x1]
    %73 = vrot.lane.b32.xlu0 %v72, 16
    %v74 = vpop.permute.xlu0 %73
    %vm75 = vcmask 162944
    %76 = vst.msk [vmem:[#allocation0] sm:$0x1] %vm75, %v74
    %s77 = scalar_lea.vmem %s0, 3
    %v78 = vld [vmem:[%s77] sm:$0x1]
    %79 = vrot.lane.b32.xlu0 %v78, 12
    %v80 = vpop.permute.xlu0 %79
    %vm81 = vcmask 130144
    %82 = vst.msk [vmem:[#allocation0] sm:$0x1] %vm81, %v80
    %s83 = scalar_lea.vmem %s0, 2
    %v84 = vld [vmem:[%s83] sm:$0x1]
    %85 = vrot.lane.b32.xlu0 %v84, 8
    %v86 = vpop.permute.xlu0 %85
    %vm87 = vcmask 97344
    %88 = vst.msk [vmem:[#allocation0] sm:$0x1] %vm87, %v86
    %s89 = scalar_lea.vmem %s0, 1
    %v90 = vld [vmem:[%s89] sm:$0x1]
    %91 = vrot.lane.b32.xlu0 %v90, 4
    %v92 = vpop.permute.xlu0 %91
    %vm93 = vcmask 64544
    %94 = vst.msk [vmem:[#allocation0] sm:$0x1] %vm93, %v92
    %s96 = sshll.u32 1, 1
    %s97 = ssub.s32 %s96, 1
    %v99 = vld [vmem:[#allocation0] sm:%s97]
    %s100 = sshll.u32 1, 1
    %s101 = ssub.s32 %s100, 1
    %102 = vst [vmem:[%s1] sm:%s101] %v99

// kernel: subpixel_forward.1
$region0: #{subpixel_forward.1}
  #allocation0 [shape = 'u32[]', space=smem, size = 0x4, offset = 0x4, fixed_abs, tag = 'smem constant byte address 0x4 - core index']
  #allocation1 [shape = 'u32[144,128]{1,0:T(1,128)}', space=vmem, size = 0x12000, scoped, tag = 'internal scratch']
  #allocation2 [shape = 'f32[50,144]{1,0:T(8,128)}', space=vmem, size = 0xe000, scoped, tag = 'scratch operand']
  #allocation3 [shape = 'f32[50,72]{1,0:T(8,128)}', space=vmem, size = 0x7000, scoped, tag = 'scratch operand']
  #allocation4 [shape = 'f32[32,400]{1,0:T(8,128)}', space=vmem, size = 0x10000, scoped, tag = 'scratch operand']
  #allocation5 [shape = 'f32[32,432]{1,0:T(8,128)}', space=vmem, size = 0x10000, scoped, tag = 'scratch operand']
  #allocation6 [shape = 'f32[32,216]{1,0:T(8,128)}', space=vmem, size = 0x8000, scoped, tag = 'scratch operand']
  %s0 = inlined_call_operand.vmem [shape: f32[40,80], index: 0, kind: input, shape index: {}]
  %s1 = inlined_call_operand.vmem [shape: f32[400,128], index: 1, kind: input, shape index: {}]
  %s2 = inlined_call_operand.vmem [shape: f32[1,128], index: 2, kind: input, shape index: {}]
  %s3 = inlined_call_operand.vmem [shape: f32[432,64], index: 3, kind: input, shape index: {}]
  %s4 = inlined_call_operand.vmem [shape: f32[1,64], index: 4, kind: input, shape index: {}]
  %s5 = inlined_call_operand.vmem [shape: f32[216,256], index: 5, kind: input, shape index: {}]
  %s6 = inlined_call_operand.vmem [shape: f32[1,256], index: 6, kind: input, shape index: {}]
  %s7 = inlined_call_operand.vmem [shape: f32[32,256], index: 7, kind: output, shape index: {}]
  %s8 = sld [smem:[#allocation0]]
  $region38: #{subpixel_forward.1} parent=0
    _
  %s10 = ssub.s32 1, %s8
  %s11 = scalar_select 0, %s10, %s8
  // Predicated region
  $region2: #{subpixel_forward.1} parent=0 // pred_check
    _
  $region3: #{subpixel_forward.1} parent=0 // pred_check_branch
    %13 = sbr.rel (0) target = $region5
  $region4: #{subpixel_forward.1} parent=0 // pred_region
    _
  $region5: #{subpixel_forward.1} parent=0 // pred_fallthru
    _
  // Predicated region
  $region6: #{subpixel_forward.1} parent=0 // pred_check
    _
  $region7: #{subpixel_forward.1} parent=0 // pred_check_branch
    %15 = sbr.rel (0) target = $region9
  $region8: #{subpixel_forward.1} parent=0 // pred_region
    _
  $region9: #{subpixel_forward.1} parent=0 // pred_fallthru
    _
  // Predicated region
  $region10: #{subpixel_forward.1} parent=0 // pred_check
    _
  $region11: #{subpixel_forward.1} parent=0 // pred_check_branch
    %17 = sbr.rel (0) target = $region13
  $region12: #{subpixel_forward.1} parent=0 // pred_region
    _
  $region13: #{subpixel_forward.1} parent=0 // pred_fallthru
    _
  // Predicated region
  $region14: #{subpixel_forward.1} parent=0 // pred_check
    _
  $region15: #{subpixel_forward.1} parent=0 // pred_check_branch
    %19 = sbr.rel (0) target = $region17
  $region16: #{subpixel_forward.1} parent=0 // pred_region
    _
  $region17: #{subpixel_forward.1} parent=0 // pred_fallthru
    _
  // Predicated region
  $region18: #{subpixel_forward.1} parent=0 // pred_check
    _
  $region19: #{subpixel_forward.1} parent=0 // pred_check_branch
    %21 = sbr.rel (0) target = $region21
  $region20: #{subpixel_forward.1} parent=0 // pred_region
    _
  $region21: #{subpixel_forward.1} parent=0 // pred_fallthru
    _
  // Predicated region
  $region22: #{subpixel_forward.1} parent=0 // pred_check
    _
  $region23: #{subpixel_forward.1} parent=0 // pred_check_branch
    %23 = sbr.rel (0) target = $region25
  $region24: #{subpixel_forward.1} parent=0 // pred_region
    _
  $region25: #{subpixel_forward.1} parent=0 // pred_fallthru
    _
  // Predicated region
  $region26: #{subpixel_forward.1} parent=0 // pred_check
    _
  $region27: #{subpixel_forward.1} parent=0 // pred_check_branch
    %25 = sbr.rel (0) target = $region29
  $region28: #{subpixel_forward.1} parent=0 // pred_region
    _
  $region29: #{subpixel_forward.1} parent=0 // pred_fallthru
    _
  %v26 = vld [vmem:[%s0] sm:$0xff]
  %v27 = vld [vmem:[%s0 + $0x8] sm:$0xff]
  %vm28 = vcmask 654336
  %29 = vst.msk [vmem:[#allocation4] sm:$0xff] %vm28, %v26
  %30 = vst.msk [vmem:[#allocation4 + $0x20] sm:$0xff] %vm28, %v27
  %v31 = vld [vmem:[%s0 + $0x1] sm:$0xff]
  %v32 = vld [vmem:[%s0 + $0x9] sm:$0xff]
  %35 = vrot.lane.b32.xlu0 %v31, 80
  %v36 = vpop.permute.xlu0 %35
  %37 = vrot.lane.b32.xlu0 %v32, 80
  %v38 = vpop.permute.xlu0 %37
  %vm41 = vcmask 1048192
  %42 = vst.msk [vmem:[#allocation4] sm:$0xff] %vm41, %v36
  %vm43 = vcmask 261120
  %44 = vst.msk [vmem:[#allocation4 + $0x8] sm:$0xff] %vm43, %v36
  %45 = vst.msk [vmem:[#allocation4 + $0x20] sm:$0xff] %vm41, %v38
  %46 = vst.msk [vmem:[#allocation4 + $0x28] sm:$0xff] %vm43, %v38
  %v47 = vld [vmem:[%s0 + $0x2] sm:$0xff]
  %v48 = vld [vmem:[%s0 + $0xa] sm:$0xff]
  %51 = vrot.lane.b32.xlu0 %v47, 32
  %v52 = vpop.permute.xlu0 %51
  %53 = vrot.lane.b32.xlu0 %v48, 32
  %v54 = vpop.permute.xlu0 %53
  %vm57 = vcmask 916736
  %58 = vst.msk [vmem:[#allocation4 + $0x8] sm:$0xff] %vm57, %v52
  %59 = vst.msk [vmem:[#allocation4 + $0x28] sm:$0xff] %vm57, %v54
  %v60 = vld [vmem:[%s0 + $0x3] sm:$0xff]
  %v61 = vld [vmem:[%s0 + $0xb] sm:$0xff]
  %64 = vrot.lane.b32.xlu0 %v60, 112
  %v65 = vpop.permute.xlu0 %64
  %66 = vrot.lane.b32.xlu0 %v61, 112
  %v67 = vpop.permute.xlu0 %66
  %vm70 = vcmask 1048448
  %71 = vst.msk [vmem:[#allocation4 + $0x8] sm:$0xff] %vm70, %v65
  %vm72 = vcmask 523264
  %73 = vst.msk [vmem:[#allocation4 + $0x10] sm:$0xff] %vm72, %v65
  %74 = vst.msk [vmem:[#allocation4 + $0x28] sm:$0xff] %vm70, %v67
  %75 = vst.msk [vmem:[#allocation4 + $0x30] sm:$0xff] %vm72, %v67
  %v76 = vld [vmem:[%s0 + $0x4] sm:$0xff]
  %v77 = vld [vmem:[%s0 + $0xc] sm:$0xff]
  %80 = vrot.lane.b32.xlu0 %v76, 64
  %v81 = vpop.permute.xlu0 %80
  %82 = vrot.lane.b32.xlu0 %v77, 64
  %v83 = vpop.permute.xlu0 %82
  %vm86 = vcmask 1048064
  %87 = vst.msk [vmem:[#allocation4 + $0x10] sm:$0xff] %vm86, %v81
  %vm88 = vcmask 130048
  %89 = vst.msk [vmem:[#allocation4 + $0x18] sm:$0xff] %vm88, %v81
  %90 = vst.msk [vmem:[#allocation4 + $0x30] sm:$0xff] %vm86, %v83
  %91 = vst.msk [vmem:[#allocation4 + $0x38] sm:$0xff] %vm88, %v83
  %v92 = vld [vmem:[%s0 + $0x14] sm:$0xff]
  %v93 = vld [vmem:[%s0 + $0x1c] sm:$0xff]
  %94 = vst.msk [vmem:[#allocation4 + $0x40] sm:$0xff] %vm28, %v92
  %95 = vst.msk [vmem:[#allocation4 + $0x60] sm:$0xff] %vm28, %v93
  %v96 = vld [vmem:[%s0 + $0x15] sm:$0xff]
  %v97 = vld [vmem:[%s0 + $0x1d] sm:$0xff]
  %100 = vrot.lane.b32.xlu0 %v96, 80
  %v101 = vpop.permute.xlu0 %100
  %102 = vrot.lane.b32.xlu0 %v97, 80
  %v103 = vpop.permute.xlu0 %102
  %106 = vst.msk [vmem:[#allocation4 + $0x40] sm:$0xff] %vm41, %v101
  %107 = vst.msk [vmem:[#allocation4 + $0x48] sm:$0xff] %vm43, %v101
  %108 = vst.msk [vmem:[#allocation4 + $0x60] sm:$0xff] %vm41, %v103
  %109 = vst.msk [vmem:[#allocation4 + $0x68] sm:$0xff] %vm43, %v103
  %v110 = vld [vmem:[%s0 + $0x16] sm:$0xff]
  %v111 = vld [vmem:[%s0 + $0x1e] sm:$0xff]
  %114 = vrot.lane.b32.xlu0 %v110, 32
  %v115 = vpop.permute.xlu0 %114
  %116 = vrot.lane.b32.xlu0 %v111, 32
  %v117 = vpop.permute.xlu0 %116
  %120 = vst.msk [vmem:[#allocation4 + $0x48] sm:$0xff] %vm57, %v115
  %121 = vst.msk [vmem:[#allocation4 + $0x68] sm:$0xff] %vm57, %v117
  %v122 = vld [vmem:[%s0 + $0x17] sm:$0xff]
  %v123 = vld [vmem:[%s0 + $0x1f] sm:$0xff]
  %126 = vrot.lane.b32.xlu0 %v122, 112
  %v127 = vpop.permute.xlu0 %126
  %128 = vrot.lane.b32.xlu0 %v123, 112
  %v129 = vpop.permute.xlu0 %128
  %132 = vst.msk [vmem:[#allocation4 + $0x48] sm:$0xff] %vm70, %v127
  %133 = vst.msk [vmem:[#allocation4 + $0x50] sm:$0xff] %vm72, %v127
  %134 = vst.msk [vmem:[#allocation4 + $0x68] sm:$0xff] %vm70, %v129
  %135 = vst.msk [vmem:[#allocation4 + $0x70] sm:$0xff] %vm72, %v129
  %v136 = vld [vmem:[%s0 + $0x18] sm:$0xff]
  %v137 = vld [vmem:[%s0 + $0x20] sm:$0xff]
  %140 = vrot.lane.b32.xlu0 %v136, 64
  %v141 = vpop.permute.xlu0 %140
  %142 = vrot.lane.b32.xlu0 %v137, 64
  %v143 = vpop.permute.xlu0 %142
  %146 = vst.msk [vmem:[#allocation4 + $0x50] sm:$0xff] %vm86, %v141
  %147 = vst.msk [vmem:[#allocation4 + $0x58] sm:$0xff] %vm88, %v141
  %148 = vst.msk [vmem:[#allocation4 + $0x70] sm:$0xff] %vm86, %v143
  %149 = vst.msk [vmem:[#allocation4 + $0x78] sm:$0xff] %vm88, %v143
  %v150 = vld [vmem:[#allocation4] sm:$0xff]
  %v151 = vld [vmem:[#allocation4 + $0x8] sm:$0xff]
  %v152 = vld [vmem:[#allocation4 + $0x10] sm:$0xff]
  %v153 = vld [vmem:[#allocation4 + $0x18] sm:$0xff]
  %v154 = vld [vmem:[#allocation4 + $0x20] sm:$0xff]
  %v155 = vld [vmem:[#allocation4 + $0x28] sm:$0xff]
  %v156 = vld [vmem:[#allocation4 + $0x30] sm:$0xff]
  %v157 = vld [vmem:[#allocation4 + $0x38] sm:$0xff]
  %v158 = vld [vmem:[#allocation4 + $0x40] sm:$0xff]
  %v159 = vld [vmem:[#allocation4 + $0x48] sm:$0xff]
  %v160 = vld [vmem:[#allocation4 + $0x50] sm:$0xff]
  %v161 = vld [vmem:[#allocation4 + $0x58] sm:$0xff]
  %v162 = vld [vmem:[#allocation4 + $0x60] sm:$0xff]
  %v163 = vld [vmem:[#allocation4 + $0x68] sm:$0xff]
  %v164 = vld [vmem:[#allocation4 + $0x70] sm:$0xff]
  %v165 = vld [vmem:[#allocation4 + $0x78] sm:$0xff]
  %v166 = vld [vmem:[%s1] sm:$0xff]
  %v167 = vld [vmem:[%s1 + $0x8] sm:$0xff]
  %v168 = vld [vmem:[%s1 + $0x10] sm:$0xff]
  %v169 = vld [vmem:[%s1 + $0x18] sm:$0xff]
  %v170 = vld [vmem:[%s1 + $0x20] sm:$0xff]
  %v171 = vld [vmem:[%s1 + $0x28] sm:$0xff]
  %v172 = vld [vmem:[%s1 + $0x30] sm:$0xff]
  %v173 = vld [vmem:[%s1 + $0x38] sm:$0xff]
  %v174 = vld [vmem:[%s1 + $0x40] sm:$0xff]
  %v175 = vld [vmem:[%s1 + $0x48] sm:$0xff]
  %v176 = vld [vmem:[%s1 + $0x50] sm:$0xff]
  %v177 = vld [vmem:[%s1 + $0x58] sm:$0xff]
  %v178 = vld [vmem:[%s1 + $0x60] sm:$0xff]
  %v179 = vld [vmem:[%s1 + $0x68] sm:$0xff]
  %v180 = vld [vmem:[%s1 + $0x70] sm:$0xff]
  %v181 = vld [vmem:[%s1 + $0x78] sm:$0xff]
  %v182 = vld [vmem:[%s1 + $0x80] sm:$0xff]
  %v183 = vld [vmem:[%s1 + $0x88] sm:$0xff]
  %v184 = vld [vmem:[%s1 + $0x90] sm:$0xff]
  %v185 = vld [vmem:[%s1 + $0x98] sm:$0xff]
  %v186 = vld [vmem:[%s1 + $0xa0] sm:$0xff]
  %v187 = vld [vmem:[%s1 + $0xa8] sm:$0xff]
  %v188 = vld [vmem:[%s1 + $0xb0] sm:$0xff]
  %v189 = vld [vmem:[%s1 + $0xb8] sm:$0xff]
  %v190 = vld [vmem:[%s1 + $0xc0] sm:$0xff]
  %v191 = vld [vmem:[%s1 + $0xc8] sm:$0xff]
  %v192 = vld [vmem:[%s1 + $0xd0] sm:$0xff]
  %v193 = vld [vmem:[%s1 + $0xd8] sm:$0xff]
  %v194 = vld [vmem:[%s1 + $0xe0] sm:$0xff]
  %v195 = vld [vmem:[%s1 + $0xe8] sm:$0xff]
  %v196 = vld [vmem:[%s1 + $0xf0] sm:$0xff]
  %v197 = vld [vmem:[%s1 + $0xf8] sm:$0xff]
  %v198 = vld [vmem:[%s1 + $0x100] sm:$0xff]
  %v199 = vld [vmem:[%s1 + $0x108] sm:$0xff]
  %v200 = vld [vmem:[%s1 + $0x110] sm:$0xff]
  %v201 = vld [vmem:[%s1 + $0x118] sm:$0xff]
  %v202 = vld [vmem:[%s1 + $0x120] sm:$0xff]
  %v203 = vld [vmem:[%s1 + $0x128] sm:$0xff]
  %v204 = vld [vmem:[%s1 + $0x130] sm:$0xff]
  %v205 = vld [vmem:[%s1 + $0x138] sm:$0xff]
  %v206 = vld [vmem:[%s1 + $0x140] sm:$0xff]
  %v207 = vld [vmem:[%s1 + $0x148] sm:$0xff]
  %v208 = vld [vmem:[%s1 + $0x150] sm:$0xff]
  %v209 = vld [vmem:[%s1 + $0x158] sm:$0xff]
  %v210 = vld [vmem:[%s1 + $0x160] sm:$0xff]
  %v211 = vld [vmem:[%s1 + $0x168] sm:$0xff]
  %v212 = vld [vmem:[%s1 + $0x170] sm:$0xff]
  %v213 = vld [vmem:[%s1 + $0x178] sm:$0xff]
  %v214 = vld [vmem:[%s1 + $0x180] sm:$0xff]
  %v215 = vld [vmem:[%s1 + $0x188] sm:$0xff]
  %v216 = vld [vmem:[%s2] sm:$0x1]
  %v218 = vlaneseq
  %v219 = vshrl.u32 %v218, 7
  %v220 = vsub.s32 0, %v219
  %v221 = vrot.slane %v216, %v220
  %v224 = vsel %vm88, %v153, 0
  %v227 = vsel %vm88, %v157, 0
  %v230 = vsel %vm88, %v161, 0
  %v233 = vsel %vm88, %v165, 0
  %235 = vmatprep.subr.mxu0 0.0
  %v236 = vand.u32 %v181, 4294901760
  %237 = vmatpush1.msra.mxu0 %v236
  %238 = vmatprep.subr.mxu0 0.0
  %v239 = vand.u32 %v180, 4294901760
  %240 = vmatpush1.msra.mxu0 %v239
  %241 = vmatprep.subr.mxu0 0.0
  %v242 = vand.u32 %v179, 4294901760
  %243 = vmatpush1.msra.mxu0 %v242
  %244 = vmatprep.subr.mxu0 0.0
  %v245 = vand.u32 %v178, 4294901760
  %246 = vmatpush1.msra.mxu0 %v245
  %247 = vmatprep.subr.mxu0 0.0
  %v248 = vand.u32 %v177, 4294901760
  %249 = vmatpush1.msra.mxu0 %v248
  %250 = vmatprep.subr.mxu0 0.0
  %v251 = vand.u32 %v176, 4294901760
  %252 = vmatpush1.msra.mxu0 %v251
  %253 = vmatprep.subr.mxu0 0.0
  %v254 = vand.u32 %v175, 4294901760
  %255 = vmatpush1.msra.mxu0 %v254
  %256 = vmatprep.subr.mxu0 0.0
  %v257 = vand.u32 %v174, 4294901760
  %258 = vmatpush1.msra.mxu0 %v257
  %259 = vmatprep.subr.mxu0 0.0
  %v260 = vand.u32 %v173, 4294901760
  %261 = vmatpush1.msra.mxu0 %v260
  %262 = vmatprep.subr.mxu0 0.0
  %v263 = vand.u32 %v172, 4294901760
  %264 = vmatpush1.msra.mxu0 %v263
  %265 = vmatprep.subr.mxu0 0.0
  %v266 = vand.u32 %v171, 4294901760
  %267 = vmatpush1.msra.mxu0 %v266
  %268 = vmatprep.subr.mxu0 0.0
  %v269 = vand.u32 %v170, 4294901760
  %270 = vmatpush1.msra.mxu0 %v269
  %271 = vmatprep.subr.mxu0 0.0
  %v272 = vand.u32 %v169, 4294901760
  %273 = vmatpush1.msra.mxu0 %v272
  %274 = vmatprep.subr.mxu0 0.0
  %v275 = vand.u32 %v168, 4294901760
  %276 = vmatpush1.msra.mxu0 %v275
  %277 = vmatprep.subr.mxu0 0.0
  %v278 = vand.u32 %v167, 4294901760
  %279 = vmatpush1.msra.mxu0 %v278
  %280 = vmatprep.subr.mxu0 0.0
  %v281 = vand.u32 %v166, 4294901760
  %282 = vmatpush1.msra.mxu0 %v281
  %283 = vmatprep.subr.mxu0 0.0
  %v284 = vand.u32 %v197, 4294901760
  %285 = vmatpush2.msra.mxu0 %v284
  %286 = vmatprep.subr.mxu0 0.0
  %v287 = vand.u32 %v196, 4294901760
  %288 = vmatpush2.msra.mxu0 %v287
  %289 = vmatprep.subr.mxu0 0.0
  %v290 = vand.u32 %v195, 4294901760
  %291 = vmatpush2.msra.mxu0 %v290
  %292 = vmatprep.subr.mxu0 0.0
  %v293 = vand.u32 %v194, 4294901760
  %294 = vmatpush2.msra.mxu0 %v293
  %295 = vmatprep.subr.mxu0 0.0
  %v296 = vand.u32 %v193, 4294901760
  %297 = vmatpush2.msra.mxu0 %v296
  %298 = vmatprep.subr.mxu0 0.0
  %v299 = vand.u32 %v192, 4294901760
  %300 = vmatpush2.msra.mxu0 %v299
  %301 = vmatprep.subr.mxu0 0.0
  %v302 = vand.u32 %v191, 4294901760
  %303 = vmatpush2.msra.mxu0 %v302
  %304 = vmatprep.subr.mxu0 0.0
  %v305 = vand.u32 %v190, 4294901760
  %306 = vmatpush2.msra.mxu0 %v305
  %307 = vmatprep.subr.mxu0 0.0
  %v308 = vand.u32 %v189, 4294901760
  %309 = vmatpush2.msra.mxu0 %v308
  %310 = vmatprep.subr.mxu0 0.0
  %v311 = vand.u32 %v188, 4294901760
  %312 = vmatpush2.msra.mxu0 %v311
  %313 = vmatprep.subr.mxu0 0.0
  %v314 = vand.u32 %v187, 4294901760
  %315 = vmatpush2.msra.mxu0 %v314
  %316 = vmatprep.subr.mxu0 0.0
  %v317 = vand.u32 %v186, 4294901760
  %318 = vmatpush2.msra.mxu0 %v317
  %319 = vmatprep.subr.mxu0 0.0
  %v320 = vand.u32 %v185, 4294901760
  %321 = vmatpush2.msra.mxu0 %v320
  %322 = vmatprep.subr.mxu0 0.0
  %v323 = vand.u32 %v184, 4294901760
  %324 = vmatpush2.msra.mxu0 %v323
  %325 = vmatprep.subr.mxu0 0.0
  %v326 = vand.u32 %v183, 4294901760
  %327 = vmatpush2.msra.mxu0 %v326
  %328 = vmatprep.subr.mxu0 0.0
  %v329 = vand.u32 %v182, 4294901760
  %330 = vmatpush2.msra.mxu0 %v329
  %v331 = vand.u32 %v151, 4294901760
  %v332 = vsub.f32 %v151, %v331
  %v333 = vand.u32 %v332, 4294901760
  %v334 = vsub.f32 %v332, %v333
  %v335 = vand.u32 %v334, 4294901760
  %336 = vmatprep.mubr.f32.mxu0 %v335
  %v337 = vand.u32 %v150, 4294901760
  %v338 = vsub.f32 %v150, %v337
  %v339 = vand.u32 %v338, 4294901760
  %v340 = vsub.f32 %v338, %v339
  %v341 = vand.u32 %v340, 4294901760
  %342 = vmatmul.mubr.f32.gmra.mxu0 %v341
  %v343 = vpop.f32.mrf.mxu0
  %v344 = vadd.f32 %v221, %v343
  %v345 = vpop.f32.mrf.mxu0
  %v346 = vand.u32 %v155, 4294901760
  %v347 = vsub.f32 %v155, %v346
  %v348 = vand.u32 %v347, 4294901760
  %v349 = vsub.f32 %v347, %v348
  %v350 = vand.u32 %v349, 4294901760
  %351 = vmatprep.mubr.f32.mxu0 %v350
  %v352 = vand.u32 %v154, 4294901760
  %v353 = vsub.f32 %v154, %v352
  %v354 = vand.u32 %v353, 4294901760
  %v355 = vsub.f32 %v353, %v354
  %v356 = vand.u32 %v355, 4294901760
  %357 = vmatmul.mubr.f32.gmra.mxu0 %v356
  %v358 = vpop.f32.mrf.mxu0
  %v359 = vadd.f32 %v221, %v358
  %v360 = vpop.f32.mrf.mxu0
  %v361 = vand.u32 %v159, 4294901760
  %v362 = vsub.f32 %v159, %v361
  %v363 = vand.u32 %v362, 4294901760
  %v364 = vsub.f32 %v362, %v363
  %v365 = vand.u32 %v364, 4294901760
  %366 = vmatprep.mubr.f32.mxu0 %v365
  %v367 = vand.u32 %v158, 4294901760
  %v368 = vsub.f32 %v158, %v367
  %v369 = vand.u32 %v368, 4294901760
  %v370 = vsub.f32 %v368, %v369
  %v371 = vand.u32 %v370, 4294901760
  %372 = vmatmul.mubr.f32.gmra.mxu0 %v371
  %v373 = vpop.f32.mrf.mxu0
  %v374 = vadd.f32 %v221, %v373
  %v375 = vpop.f32.mrf.mxu0
  %v376 = vand.u32 %v163, 4294901760
  %v377 = vsub.f32 %v163, %v376
  %v378 = vand.u32 %v377, 4294901760
  %v379 = vsub.f32 %v377, %v378
  %v380 = vand.u32 %v379, 4294901760
  %381 = vmatprep.mubr.f32.mxu0 %v380
  %v382 = vand.u32 %v162, 4294901760
  %v383 = vsub.f32 %v162, %v382
  %v384 = vand.u32 %v383, 4294901760
  %v385 = vsub.f32 %v383, %v384
  %v386 = vand.u32 %v385, 4294901760
  %387 = vmatmul.mubr.f32.gmra.mxu0 %v386
  %v388 = vpop.f32.mrf.mxu0
  %v389 = vadd.f32 %v221, %v388
  %v390 = vpop.f32.mrf.mxu0
  %391 = vdwg.mxu0
  %392 = vmatprep.subr.mxu0 0.0
  %v393 = vand.u32 %v181, 4294901760
  %v394 = vsub.f32 %v181, %v393
  %v395 = vand.u32 %v394, 4294901760
  %v396 = vsub.f32 %v394, %v395
  %v397 = vand.u32 %v396, 4294901760
  %398 = vmatpush1.msra.mxu0 %v397
  %399 = vmatprep.subr.mxu0 0.0
  %v400 = vand.u32 %v180, 4294901760
  %v401 = vsub.f32 %v180, %v400
  %v402 = vand.u32 %v401, 4294901760
  %v403 = vsub.f32 %v401, %v402
  %v404 = vand.u32 %v403, 4294901760
  %405 = vmatpush1.msra.mxu0 %v404
  %406 = vmatprep.subr.mxu0 0.0
  %v407 = vand.u32 %v179, 4294901760
  %v408 = vsub.f32 %v179, %v407
  %v409 = vand.u32 %v408, 4294901760
  %v410 = vsub.f32 %v408, %v409
  %v411 = vand.u32 %v410, 4294901760
  %412 = vmatpush1.msra.mxu0 %v411
  %413 = vmatprep.subr.mxu0 0.0
  %v414 = vand.u32 %v178, 4294901760
  %v415 = vsub.f32 %v178, %v414
  %v416 = vand.u32 %v415, 4294901760
  %v417 = vsub.f32 %v415, %v416
  %v418 = vand.u32 %v417, 4294901760
  %419 = vmatpush1.msra.mxu0 %v418
  %420 = vmatprep.subr.mxu0 0.0
  %v421 = vand.u32 %v177, 4294901760
  %v422 = vsub.f32 %v177, %v421
  %v423 = vand.u32 %v422, 4294901760
  %v424 = vsub.f32 %v422, %v423
  %v425 = vand.u32 %v424, 4294901760
  %426 = vmatpush1.msra.mxu0 %v425
  %427 = vmatprep.subr.mxu0 0.0
  %v428 = vand.u32 %v176, 4294901760
  %v429 = vsub.f32 %v176, %v428
  %v430 = vand.u32 %v429, 4294901760
  %v431 = vsub.f32 %v429, %v430
  %v432 = vand.u32 %v431, 4294901760
  %433 = vmatpush1.msra.mxu0 %v432
  %434 = vmatprep.subr.mxu0 0.0
  %v435 = vand.u32 %v175, 4294901760
  %v436 = vsub.f32 %v175, %v435
  %v437 = vand.u32 %v436, 4294901760
  %v438 = vsub.f32 %v436, %v437
  %v439 = vand.u32 %v438, 4294901760
  %440 = vmatpush1.msra.mxu0 %v439
  %441 = vmatprep.subr.mxu0 0.0
  %v442 = vand.u32 %v174, 4294901760
  %v443 = vsub.f32 %v174, %v442
  %v444 = vand.u32 %v443, 4294901760
  %v445 = vsub.f32 %v443, %v444
  %v446 = vand.u32 %v445, 4294901760
  %447 = vmatpush1.msra.mxu0 %v446
  %448 = vmatprep.subr.mxu0 0.0
  %v449 = vand.u32 %v173, 4294901760
  %v450 = vsub.f32 %v173, %v449
  %v451 = vand.u32 %v450, 4294901760
  %v452 = vsub.f32 %v450, %v451
  %v453 = vand.u32 %v452, 4294901760
  %454 = vmatpush1.msra.mxu0 %v453
  %455 = vmatprep.subr.mxu0 0.0
  %v456 = vand.u32 %v172, 4294901760
  %v457 = vsub.f32 %v172, %v456
  %v458 = vand.u32 %v457, 4294901760
  %v459 = vsub.f32 %v457, %v458
  %v460 = vand.u32 %v459, 4294901760
  %461 = vmatpush1.msra.mxu0 %v460
  %462 = vmatprep.subr.mxu0 0.0
  %v463 = vand.u32 %v171, 4294901760
  %v464 = vsub.f32 %v171, %v463
  %v465 = vand.u32 %v464, 4294901760
  %v466 = vsub.f32 %v464, %v465
  %v467 = vand.u32 %v466, 4294901760
  %468 = vmatpush1.msra.mxu0 %v467
  %469 = vmatprep.subr.mxu0 0.0
  %v470 = vand.u32 %v170, 4294901760
  %v471 = vsub.f32 %v170, %v470
  %v472 = vand.u32 %v471, 4294901760
  %v473 = vsub.f32 %v471, %v472
  %v474 = vand.u32 %v473, 4294901760
  %475 = vmatpush1.msra.mxu0 %v474
  %476 = vmatprep.subr.mxu0 0.0
  %v477 = vand.u32 %v169, 4294901760
  %v478 = vsub.f32 %v169, %v477
  %v479 = vand.u32 %v478, 4294901760
  %v480 = vsub.f32 %v478, %v479
  %v481 = vand.u32 %v480, 4294901760
  %482 = vmatpush1.msra.mxu0 %v481
  %483 = vmatprep.subr.mxu0 0.0
  %v484 = vand.u32 %v168, 4294901760
  %v485 = vsub.f32 %v168, %v484
  %v486 = vand.u32 %v485, 4294901760
  %v487 = vsub.f32 %v485, %v486
  %v488 = vand.u32 %v487, 4294901760
  %489 = vmatpush1.msra.mxu0 %v488
  %490 = vmatprep.subr.mxu0 0.0
  %v491 = vand.u32 %v167, 4294901760
  %v492 = vsub.f32 %v167, %v491
  %v493 = vand.u32 %v492, 4294901760
  %v494 = vsub.f32 %v492, %v493
  %v495 = vand.u32 %v494, 4294901760
  %496 = vmatpush1.msra.mxu0 %v495
  %497 = vmatprep.subr.mxu0 0.0
  %v498 = vand.u32 %v166, 4294901760
  %v499 = vsub.f32 %v166, %v498
  %v500 = vand.u32 %v499, 4294901760
  %v501 = vsub.f32 %v499, %v500
  %v502 = vand.u32 %v501, 4294901760
  %503 = vmatpush1.msra.mxu0 %v502
  %504 = vmatprep.subr.mxu0 0.0
  %v505 = vand.u32 %v197, 4294901760
  %v506 = vsub.f32 %v197, %v505
  %v507 = vand.u32 %v506, 4294901760
  %v508 = vsub.f32 %v506, %v507
  %v509 = vand.u32 %v508, 4294901760
  %510 = vmatpush2.msra.mxu0 %v509
  %511 = vmatprep.subr.mxu0 0.0
  %v512 = vand.u32 %v196, 4294901760
  %v513 = vsub.f32 %v196, %v512
  %v514 = vand.u32 %v513, 4294901760
  %v515 = vsub.f32 %v513, %v514
  %v516 = vand.u32 %v515, 4294901760
  %517 = vmatpush2.msra.mxu0 %v516
  %518 = vmatprep.subr.mxu0 0.0
  %v519 = vand.u32 %v195, 4294901760
  %v520 = vsub.f32 %v195, %v519
  %v521 = vand.u32 %v520, 4294901760
  %v522 = vsub.f32 %v520, %v521
  %v523 = vand.u32 %v522, 4294901760
  %524 = vmatpush2.msra.mxu0 %v523
  %525 = vmatprep.subr.mxu0 0.0
  %v526 = vand.u32 %v194, 4294901760
  %v527 = vsub.f32 %v194, %v526
  %v528 = vand.u32 %v527, 4294901760
  %v529 = vsub.f32 %v527, %v528
  %v530 = vand.u32 %v529, 4294901760
  %531 = vmatpush2.msra.mxu0 %v530
  %532 = vmatprep.subr.mxu0 0.0
  %v533 = vand.u32 %v193, 4294901760
  %v534 = vsub.f32 %v193, %v533
  %v535 = vand.u32 %v534, 4294901760
  %v536 = vsub.f32 %v534, %v535
  %v537 = vand.u32 %v536, 4294901760
  %538 = vmatpush2.msra.mxu0 %v537
  %539 = vmatprep.subr.mxu0 0.0
  %v540 = vand.u32 %v192, 4294901760
  %v541 = vsub.f32 %v192, %v540
  %v542 = vand.u32 %v541, 4294901760
  %v543 = vsub.f32 %v541, %v542
  %v544 = vand.u32 %v543, 4294901760
  %545 = vmatpush2.msra.mxu0 %v544
  %546 = vmatprep.subr.mxu0 0.0
  %v547 = vand.u32 %v191, 4294901760
  %v548 = vsub.f32 %v191, %v547
  %v549 = vand.u32 %v548, 4294901760
  %v550 = vsub.f32 %v548, %v549
  %v551 = vand.u32 %v550, 4294901760
  %552 = vmatpush2.msra.mxu0 %v551
  %553 = vmatprep.subr.mxu0 0.0
  %v554 = vand.u32 %v190, 4294901760
  %v555 = vsub.f32 %v190, %v554
  %v556 = vand.u32 %v555, 4294901760
  %v557 = vsub.f32 %v555, %v556
  %v558 = vand.u32 %v557, 4294901760
  %559 = vmatpush2.msra.mxu0 %v558
  %560 = vmatprep.subr.mxu0 0.0
  %v561 = vand.u32 %v189, 4294901760
  %v562 = vsub.f32 %v189, %v561
  %v563 = vand.u32 %v562, 4294901760
  %v564 = vsub.f32 %v562, %v563
  %v565 = vand.u32 %v564, 4294901760
  %566 = vmatpush2.msra.mxu0 %v565
  %567 = vmatprep.subr.mxu0 0.0
  %v568 = vand.u32 %v188, 4294901760
  %v569 = vsub.f32 %v188, %v568
  %v570 = vand.u32 %v569, 4294901760
  %v571 = vsub.f32 %v569, %v570
  %v572 = vand.u32 %v571, 4294901760
  %573 = vmatpush2.msra.mxu0 %v572
  %574 = vmatprep.subr.mxu0 0.0
  %v575 = vand.u32 %v187, 4294901760
  %v576 = vsub.f32 %v187, %v575
  %v577 = vand.u32 %v576, 4294901760
  %v578 = vsub.f32 %v576, %v577
  %v579 = vand.u32 %v578, 4294901760
  %580 = vmatpush2.msra.mxu0 %v579
  %581 = vmatprep.subr.mxu0 0.0
  %v582 = vand.u32 %v186, 4294901760
  %v583 = vsub.f32 %v186, %v582
  %v584 = vand.u32 %v583, 4294901760
  %v585 = vsub.f32 %v583, %v584
  %v586 = vand.u32 %v585, 4294901760
  %587 = vmatpush2.msra.mxu0 %v586
  %588 = vmatprep.subr.mxu0 0.0
  %v589 = vand.u32 %v185, 4294901760
  %v590 = vsub.f32 %v185, %v589
  %v591 = vand.u32 %v590, 4294901760
  %v592 = vsub.f32 %v590, %v591
  %v593 = vand.u32 %v592, 4294901760
  %594 = vmatpush2.msra.mxu0 %v593
  %595 = vmatprep.subr.mxu0 0.0
  %v596 = vand.u32 %v184, 4294901760
  %v597 = vsub.f32 %v184, %v596
  %v598 = vand.u32 %v597, 4294901760
  %v599 = vsub.f32 %v597, %v598
  %v600 = vand.u32 %v599, 4294901760
  %601 = vmatpush2.msra.mxu0 %v600
  %602 = vmatprep.subr.mxu0 0.0
  %v603 = vand.u32 %v183, 4294901760
  %v604 = vsub.f32 %v183, %v603
  %v605 = vand.u32 %v604, 4294901760
  %v606 = vsub.f32 %v604, %v605
  %v607 = vand.u32 %v606, 4294901760
  %608 = vmatpush2.msra.mxu0 %v607
  %609 = vmatprep.subr.mxu0 0.0
  %v610 = vand.u32 %v182, 4294901760
  %v611 = vsub.f32 %v182, %v610
  %v612 = vand.u32 %v611, 4294901760
  %v613 = vsub.f32 %v611, %v612
  %v614 = vand.u32 %v613, 4294901760
  %615 = vmatpush2.msra.mxu0 %v614
  %v616 = vand.u32 %v151, 4294901760
  %617 = vmatprep.mubr.f32.mxu0 %v616
  %v618 = vand.u32 %v150, 4294901760
  %619 = vmatmul.mubr.f32.gmra.mxu0 %v618
  %v620 = vpop.f32.mrf.mxu0
  %v621 = vadd.f32 %v344, %v620
  %v622 = vpop.f32.mrf.mxu0
  %v623 = vand.u32 %v155, 4294901760
  %624 = vmatprep.mubr.f32.mxu0 %v623
  %v625 = vand.u32 %v154, 4294901760
  %626 = vmatmul.mubr.f32.gmra.mxu0 %v625
  %v627 = vpop.f32.mrf.mxu0
  %v628 = vadd.f32 %v359, %v627
  %v629 = vpop.f32.mrf.mxu0
  %v630 = vand.u32 %v159, 4294901760
  %631 = vmatprep.mubr.f32.mxu0 %v630
  %v632 = vand.u32 %v158, 4294901760
  %633 = vmatmul.mubr.f32.gmra.mxu0 %v632
  %v634 = vpop.f32.mrf.mxu0
  %v635 = vadd.f32 %v374, %v634
  %v636 = vpop.f32.mrf.mxu0
  %v637 = vand.u32 %v163, 4294901760
  %638 = vmatprep.mubr.f32.mxu0 %v637
  %v639 = vand.u32 %v162, 4294901760
  %640 = vmatmul.mubr.f32.gmra.mxu0 %v639
  %v641 = vpop.f32.mrf.mxu0
  %v642 = vadd.f32 %v389, %v641
  %v643 = vpop.f32.mrf.mxu0
  %644 = vdwg.mxu0
  %645 = vmatprep.subr.mxu0 0.0
  %v646 = vand.u32 %v181, 4294901760
  %v647 = vsub.f32 %v181, %v646
  %648 = vmatpush1.msra.mxu0 %v647
  %649 = vmatprep.subr.mxu0 0.0
  %v650 = vand.u32 %v180, 4294901760
  %v651 = vsub.f32 %v180, %v650
  %652 = vmatpush1.msra.mxu0 %v651
  %653 = vmatprep.subr.mxu0 0.0
  %v654 = vand.u32 %v179, 4294901760
  %v655 = vsub.f32 %v179, %v654
  %656 = vmatpush1.msra.mxu0 %v655
  %657 = vmatprep.subr.mxu0 0.0
  %v658 = vand.u32 %v178, 4294901760
  %v659 = vsub.f32 %v178, %v658
  %660 = vmatpush1.msra.mxu0 %v659
  %661 = vmatprep.subr.mxu0 0.0
  %v662 = vand.u32 %v177, 4294901760
  %v663 = vsub.f32 %v177, %v662
  %664 = vmatpush1.msra.mxu0 %v663
  %665 = vmatprep.subr.mxu0 0.0
  %v666 = vand.u32 %v176, 4294901760
  %v667 = vsub.f32 %v176, %v666
  %668 = vmatpush1.msra.mxu0 %v667
  %669 = vmatprep.subr.mxu0 0.0
  %v670 = vand.u32 %v175, 4294901760
  %v671 = vsub.f32 %v175, %v670
  %672 = vmatpush1.msra.mxu0 %v671
  %673 = vmatprep.subr.mxu0 0.0
  %v674 = vand.u32 %v174, 4294901760
  %v675 = vsub.f32 %v174, %v674
  %676 = vmatpush1.msra.mxu0 %v675
  %677 = vmatprep.subr.mxu0 0.0
  %v678 = vand.u32 %v173, 4294901760
  %v679 = vsub.f32 %v173, %v678
  %680 = vmatpush1.msra.mxu0 %v679
  %681 = vmatprep.subr.mxu0 0.0
  %v682 = vand.u32 %v172, 4294901760
  %v683 = vsub.f32 %v172, %v682
  %684 = vmatpush1.msra.mxu0 %v683
  %685 = vmatprep.subr.mxu0 0.0
  %v686 = vand.u32 %v171, 4294901760
  %v687 = vsub.f32 %v171, %v686
  %688 = vmatpush1.msra.mxu0 %v687
  %689 = vmatprep.subr.mxu0 0.0
  %v690 = vand.u32 %v170, 4294901760
  %v691 = vsub.f32 %v170, %v690
  %692 = vmatpush1.msra.mxu0 %v691
  %693 = vmatprep.subr.mxu0 0.0
  %v694 = vand.u32 %v169, 4294901760
  %v695 = vsub.f32 %v169, %v694
  %696 = vmatpush1.msra.mxu0 %v695
  %697 = vmatprep.subr.mxu0 0.0
  %v698 = vand.u32 %v168, 4294901760
  %v699 = vsub.f32 %v168, %v698
  %700 = vmatpush1.msra.mxu0 %v699
  %701 = vmatprep.subr.mxu0 0.0
  %v702 = vand.u32 %v167, 4294901760
  %v703 = vsub.f32 %v167, %v702
  %704 = vmatpush1.msra.mxu0 %v703
  %705 = vmatprep.subr.mxu0 0.0
  %v706 = vand.u32 %v166, 4294901760
  %v707 = vsub.f32 %v166, %v706
  %708 = vmatpush1.msra.mxu0 %v707
  %709 = vmatprep.subr.mxu0 0.0
  %v710 = vand.u32 %v197, 4294901760
  %v711 = vsub.f32 %v197, %v710
  %712 = vmatpush2.msra.mxu0 %v711
  %713 = vmatprep.subr.mxu0 0.0
  %v714 = vand.u32 %v196, 4294901760
  %v715 = vsub.f32 %v196, %v714
  %716 = vmatpush2.msra.mxu0 %v715
  %717 = vmatprep.subr.mxu0 0.0
  %v718 = vand.u32 %v195, 4294901760
  %v719 = vsub.f32 %v195, %v718
  %720 = vmatpush2.msra.mxu0 %v719
  %721 = vmatprep.subr.mxu0 0.0
  %v722 = vand.u32 %v194, 4294901760
  %v723 = vsub.f32 %v194, %v722
  %724 = vmatpush2.msra.mxu0 %v723
  %725 = vmatprep.subr.mxu0 0.0
  %v726 = vand.u32 %v193, 4294901760
  %v727 = vsub.f32 %v193, %v726
  %728 = vmatpush2.msra.mxu0 %v727
  %729 = vmatprep.subr.mxu0 0.0
  %v730 = vand.u32 %v192, 4294901760
  %v731 = vsub.f32 %v192, %v730
  %732 = vmatpush2.msra.mxu0 %v731
  %733 = vmatprep.subr.mxu0 0.0
  %v734 = vand.u32 %v191, 4294901760
  %v735 = vsub.f32 %v191, %v734
  %736 = vmatpush2.msra.mxu0 %v735
  %737 = vmatprep.subr.mxu0 0.0
  %v738 = vand.u32 %v190, 4294901760
  %v739 = vsub.f32 %v190, %v738
  %740 = vmatpush2.msra.mxu0 %v739
  %741 = vmatprep.subr.mxu0 0.0
  %v742 = vand.u32 %v189, 4294901760
  %v743 = vsub.f32 %v189, %v742
  %744 = vmatpush2.msra.mxu0 %v743
  %745 = vmatprep.subr.mxu0 0.0
  %v746 = vand.u32 %v188, 4294901760
  %v747 = vsub.f32 %v188, %v746
  %748 = vmatpush2.msra.mxu0 %v747
  %749 = vmatprep.subr.mxu0 0.0
  %v750 = vand.u32 %v187, 4294901760
  %v751 = vsub.f32 %v187, %v750
  %752 = vmatpush2.msra.mxu0 %v751
  %753 = vmatprep.subr.mxu0 0.0
  %v754 = vand.u32 %v186, 4294901760
  %v755 = vsub.f32 %v186, %v754
  %756 = vmatpush2.msra.mxu0 %v755
  %757 = vmatprep.subr.mxu0 0.0
  %v758 = vand.u32 %v185, 4294901760
  %v759 = vsub.f32 %v185, %v758
  %760 = vmatpush2.msra.mxu0 %v759
  %761 = vmatprep.subr.mxu0 0.0
  %v762 = vand.u32 %v184, 4294901760
  %v763 = vsub.f32 %v184, %v762
  %764 = vmatpush2.msra.mxu0 %v763
  %765 = vmatprep.subr.mxu0 0.0
  %v766 = vand.u32 %v183, 4294901760
  %v767 = vsub.f32 %v183, %v766
  %768 = vmatpush2.msra.mxu0 %v767
  %769 = vmatprep.subr.mxu0 0.0
  %v770 = vand.u32 %v182, 4294901760
  %v771 = vsub.f32 %v182, %v770
  %772 = vmatpush2.msra.mxu0 %v771
  %v773 = vand.u32 %v151, 4294901760
  %v774 = vsub.f32 %v151, %v773
  %775 = vmatprep.mubr.f32.mxu0 %v774
  %v776 = vand.u32 %v150, 4294901760
  %v777 = vsub.f32 %v150, %v776
  %778 = vmatmul.mubr.f32.gmra.mxu0 %v777
  %v779 = vpop.f32.mrf.mxu0
  %v780 = vadd.f32 %v621, %v779
  %v781 = vpop.f32.mrf.mxu0
  %v782 = vand.u32 %v155, 4294901760
  %v783 = vsub.f32 %v155, %v782
  %784 = vmatprep.mubr.f32.mxu0 %v783
  %v785 = vand.u32 %v154, 4294901760
  %v786 = vsub.f32 %v154, %v785
  %787 = vmatmul.mubr.f32.gmra.mxu0 %v786
  %v788 = vpop.f32.mrf.mxu0
  %v789 = vadd.f32 %v628, %v788
  %v790 = vpop.f32.mrf.mxu0
  %v791 = vand.u32 %v159, 4294901760
  %v792 = vsub.f32 %v159, %v791
  %793 = vmatprep.mubr.f32.mxu0 %v792
  %v794 = vand.u32 %v158, 4294901760
  %v795 = vsub.f32 %v158, %v794
  %796 = vmatmul.mubr.f32.gmra.mxu0 %v795
  %v797 = vpop.f32.mrf.mxu0
  %v798 = vadd.f32 %v635, %v797
  %v799 = vpop.f32.mrf.mxu0
  %v800 = vand.u32 %v163, 4294901760
  %v801 = vsub.f32 %v163, %v800
  %802 = vmatprep.mubr.f32.mxu0 %v801
  %v803 = vand.u32 %v162, 4294901760
  %v804 = vsub.f32 %v162, %v803
  %805 = vmatmul.mubr.f32.gmra.mxu0 %v804
  %v806 = vpop.f32.mrf.mxu0
  %v807 = vadd.f32 %v642, %v806
  %v808 = vpop.f32.mrf.mxu0
  %809 = vdwg.mxu0
  %810 = vmatprep.subr.mxu0 0.0
  %v811 = vand.u32 %v181, 4294901760
  %812 = vmatpush1.msra.mxu0 %v811
  %813 = vmatprep.subr.mxu0 0.0
  %v814 = vand.u32 %v180, 4294901760
  %815 = vmatpush1.msra.mxu0 %v814
  %816 = vmatprep.subr.mxu0 0.0
  %v817 = vand.u32 %v179, 4294901760
  %818 = vmatpush1.msra.mxu0 %v817
  %819 = vmatprep.subr.mxu0 0.0
  %v820 = vand.u32 %v178, 4294901760
  %821 = vmatpush1.msra.mxu0 %v820
  %822 = vmatprep.subr.mxu0 0.0
  %v823 = vand.u32 %v177, 4294901760
  %824 = vmatpush1.msra.mxu0 %v823
  %825 = vmatprep.subr.mxu0 0.0
  %v826 = vand.u32 %v176, 4294901760
  %827 = vmatpush1.msra.mxu0 %v826
  %828 = vmatprep.subr.mxu0 0.0
  %v829 = vand.u32 %v175, 4294901760
  %830 = vmatpush1.msra.mxu0 %v829
  %831 = vmatprep.subr.mxu0 0.0
  %v832 = vand.u32 %v174, 4294901760
  %833 = vmatpush1.msra.mxu0 %v832
  %834 = vmatprep.subr.mxu0 0.0
  %v835 = vand.u32 %v173, 4294901760
  %836 = vmatpush1.msra.mxu0 %v835
  %837 = vmatprep.subr.mxu0 0.0
  %v838 = vand.u32 %v172, 4294901760
  %839 = vmatpush1.msra.mxu0 %v838
  %840 = vmatprep.subr.mxu0 0.0
  %v841 = vand.u32 %v171, 4294901760
  %842 = vmatpush1.msra.mxu0 %v841
  %843 = vmatprep.subr.mxu0 0.0
  %v844 = vand.u32 %v170, 4294901760
  %845 = vmatpush1.msra.mxu0 %v844
  %846 = vmatprep.subr.mxu0 0.0
  %v847 = vand.u32 %v169, 4294901760
  %848 = vmatpush1.msra.mxu0 %v847
  %849 = vmatprep.subr.mxu0 0.0
  %v850 = vand.u32 %v168, 4294901760
  %851 = vmatpush1.msra.mxu0 %v850
  %852 = vmatprep.subr.mxu0 0.0
  %v853 = vand.u32 %v167, 4294901760
  %854 = vmatpush1.msra.mxu0 %v853
  %855 = vmatprep.subr.mxu0 0.0
  %v856 = vand.u32 %v166, 4294901760
  %857 = vmatpush1.msra.mxu0 %v856
  %858 = vmatprep.subr.mxu0 0.0
  %v859 = vand.u32 %v197, 4294901760
  %860 = vmatpush2.msra.mxu0 %v859
  %861 = vmatprep.subr.mxu0 0.0
  %v862 = vand.u32 %v196, 4294901760
  %863 = vmatpush2.msra.mxu0 %v862
  %864 = vmatprep.subr.mxu0 0.0
  %v865 = vand.u32 %v195, 4294901760
  %866 = vmatpush2.msra.mxu0 %v865
  %867 = vmatprep.subr.mxu0 0.0
  %v868 = vand.u32 %v194, 4294901760
  %869 = vmatpush2.msra.mxu0 %v868
  %870 = vmatprep.subr.mxu0 0.0
  %v871 = vand.u32 %v193, 4294901760
  %872 = vmatpush2.msra.mxu0 %v871
  %873 = vmatprep.subr.mxu0 0.0
  %v874 = vand.u32 %v192, 4294901760
  %875 = vmatpush2.msra.mxu0 %v874
  %876 = vmatprep.subr.mxu0 0.0
  %v877 = vand.u32 %v191, 4294901760
  %878 = vmatpush2.msra.mxu0 %v877
  %879 = vmatprep.subr.mxu0 0.0
  %v880 = vand.u32 %v190, 4294901760
  %881 = vmatpush2.msra.mxu0 %v880
  %882 = vmatprep.subr.mxu0 0.0
  %v883 = vand.u32 %v189, 4294901760
  %884 = vmatpush2.msra.mxu0 %v883
  %885 = vmatprep.subr.mxu0 0.0
  %v886 = vand.u32 %v188, 4294901760
  %887 = vmatpush2.msra.mxu0 %v886
  %888 = vmatprep.subr.mxu0 0.0
  %v889 = vand.u32 %v187, 4294901760
  %890 = vmatpush2.msra.mxu0 %v889
  %891 = vmatprep.subr.mxu0 0.0
  %v892 = vand.u32 %v186, 4294901760
  %893 = vmatpush2.msra.mxu0 %v892
  %894 = vmatprep.subr.mxu0 0.0
  %v895 = vand.u32 %v185, 4294901760
  %896 = vmatpush2.msra.mxu0 %v895
  %897 = vmatprep.subr.mxu0 0.0
  %v898 = vand.u32 %v184, 4294901760
  %899 = vmatpush2.msra.mxu0 %v898
  %900 = vmatprep.subr.mxu0 0.0
  %v901 = vand.u32 %v183, 4294901760
  %902 = vmatpush2.msra.mxu0 %v901
  %903 = vmatprep.subr.mxu0 0.0
  %v904 = vand.u32 %v182, 4294901760
  %905 = vmatpush2.msra.mxu0 %v904
  %v906 = vand.u32 %v151, 4294901760
  %v907 = vsub.f32 %v151, %v906
  %v908 = vand.u32 %v907, 4294901760
  %909 = vmatprep.mubr.f32.mxu0 %v908
  %v910 = vand.u32 %v150, 4294901760
  %v911 = vsub.f32 %v150, %v910
  %v912 = vand.u32 %v911, 4294901760
  %913 = vmatmul.mubr.f32.gmra.mxu0 %v912
  %v914 = vpop.f32.mrf.mxu0
  %v915 = vadd.f32 %v780, %v914
  %v916 = vpop.f32.mrf.mxu0
  %v917 = vand.u32 %v155, 4294901760
  %v918 = vsub.f32 %v155, %v917
  %v919 = vand.u32 %v918, 4294901760
  %920 = vmatprep.mubr.f32.mxu0 %v919
  %v921 = vand.u32 %v154, 4294901760
  %v922 = vsub.f32 %v154, %v921
  %v923 = vand.u32 %v922, 4294901760
  %924 = vmatmul.mubr.f32.gmra.mxu0 %v923
  %v925 = vpop.f32.mrf.mxu0
  %v926 = vadd.f32 %v789, %v925
  %v927 = vpop.f32.mrf.mxu0
  %v928 = vand.u32 %v159, 4294901760
  %v929 = vsub.f32 %v159, %v928
  %v930 = vand.u32 %v929, 4294901760
  %931 = vmatprep.mubr.f32.mxu0 %v930
  %v932 = vand.u32 %v158, 4294901760
  %v933 = vsub.f32 %v158, %v932
  %v934 = vand.u32 %v933, 4294901760
  %935 = vmatmul.mubr.f32.gmra.mxu0 %v934
  %v936 = vpop.f32.mrf.mxu0
  %v937 = vadd.f32 %v798, %v936
  %v938 = vpop.f32.mrf.mxu0
  %v939 = vand.u32 %v163, 4294901760
  %v940 = vsub.f32 %v163, %v939
  %v941 = vand.u32 %v940, 4294901760
  %942 = vmatprep.mubr.f32.mxu0 %v941
  %v943 = vand.u32 %v162, 4294901760
  %v944 = vsub.f32 %v162, %v943
  %v945 = vand.u32 %v944, 4294901760
  %946 = vmatmul.mubr.f32.gmra.mxu0 %v945
  %v947 = vpop.f32.mrf.mxu0
  %v948 = vadd.f32 %v807, %v947
  %v949 = vpop.f32.mrf.mxu0
  %950 = vdwg.mxu0
  %951 = vmatprep.subr.mxu0 0.0
  %v952 = vand.u32 %v181, 4294901760
  %v953 = vsub.f32 %v181, %v952
  %v954 = vand.u32 %v953, 4294901760
  %955 = vmatpush1.msra.mxu0 %v954
  %956 = vmatprep.subr.mxu0 0.0
  %v957 = vand.u32 %v180, 4294901760
  %v958 = vsub.f32 %v180, %v957
  %v959 = vand.u32 %v958, 4294901760
  %960 = vmatpush1.msra.mxu0 %v959
  %961 = vmatprep.subr.mxu0 0.0
  %v962 = vand.u32 %v179, 4294901760
  %v963 = vsub.f32 %v179, %v962
  %v964 = vand.u32 %v963, 4294901760
  %965 = vmatpush1.msra.mxu0 %v964
  %966 = vmatprep.subr.mxu0 0.0
  %v967 = vand.u32 %v178, 4294901760
  %v968 = vsub.f32 %v178, %v967
  %v969 = vand.u32 %v968, 4294901760
  %970 = vmatpush1.msra.mxu0 %v969
  %971 = vmatprep.subr.mxu0 0.0
  %v972 = vand.u32 %v177, 4294901760
  %v973 = vsub.f32 %v177, %v972
  %v974 = vand.u32 %v973, 4294901760
  %975 = vmatpush1.msra.mxu0 %v974
  %976 = vmatprep.subr.mxu0 0.0
  %v977 = vand.u32 %v176, 4294901760
  %v978 = vsub.f32 %v176, %v977
  %v979 = vand.u32 %v978, 4294901760
  %980 = vmatpush1.msra.mxu0 %v979
  %981 = vmatprep.subr.mxu0 0.0
  %v982 = vand.u32 %v175, 4294901760
  %v983 = vsub.f32 %v175, %v982
  %v984 = vand.u32 %v983, 4294901760
  %985 = vmatpush1.msra.mxu0 %v984
  %986 = vmatprep.subr.mxu0 0.0
  %v987 = vand.u32 %v174, 4294901760
  %v988 = vsub.f32 %v174, %v987
  %v989 = vand.u32 %v988, 4294901760
  %990 = vmatpush1.msra.mxu0 %v989
  %991 = vmatprep.subr.mxu0 0.0
  %v992 = vand.u32 %v173, 4294901760
  %v993 = vsub.f32 %v173, %v992
  %v994 = vand.u32 %v993, 4294901760
  %995 = vmatpush1.msra.mxu0 %v994
  %996 = vmatprep.subr.mxu0 0.0
  %v997 = vand.u32 %v172, 4294901760
  %v998 = vsub.f32 %v172, %v997
  %v999 = vand.u32 %v998, 4294901760
  %1000 = vmatpush1.msra.mxu0 %v999
  %1001 = vmatprep.subr.mxu0 0.0
  %v1002 = vand.u32 %v171, 4294901760
  %v1003 = vsub.f32 %v171, %v1002
  %v1004 = vand.u32 %v1003, 4294901760
  %1005 = vmatpush1.msra.mxu0 %v1004
  %1006 = vmatprep.subr.mxu0 0.0
  %v1007 = vand.u32 %v170, 4294901760
  %v1008 = vsub.f32 %v170, %v1007
  %v1009 = vand.u32 %v1008, 4294901760
  %1010 = vmatpush1.msra.mxu0 %v1009
  %1011 = vmatprep.subr.mxu0 0.0
  %v1012 = vand.u32 %v169, 4294901760
  %v1013 = vsub.f32 %v169, %v1012
  %v1014 = vand.u32 %v1013, 4294901760
  %1015 = vmatpush1.msra.mxu0 %v1014
  %1016 = vmatprep.subr.mxu0 0.0
  %v1017 = vand.u32 %v168, 4294901760
  %v1018 = vsub.f32 %v168, %v1017
  %v1019 = vand.u32 %v1018, 4294901760
  %1020 = vmatpush1.msra.mxu0 %v1019
  %1021 = vmatprep.subr.mxu0 0.0
  %v1022 = vand.u32 %v167, 4294901760
  %v1023 = vsub.f32 %v167, %v1022
  %v1024 = vand.u32 %v1023, 4294901760
  %1025 = vmatpush1.msra.mxu0 %v1024
  %1026 = vmatprep.subr.mxu0 0.0
  %v1027 = vand.u32 %v166, 4294901760
  %v1028 = vsub.f32 %v166, %v1027
  %v1029 = vand.u32 %v1028, 4294901760
  %1030 = vmatpush1.msra.mxu0 %v1029
  %1031 = vmatprep.subr.mxu0 0.0
  %v1032 = vand.u32 %v197, 4294901760
  %v1033 = vsub.f32 %v197, %v1032
  %v1034 = vand.u32 %v1033, 4294901760
  %1035 = vmatpush2.msra.mxu0 %v1034
  %1036 = vmatprep.subr.mxu0 0.0
  %v1037 = vand.u32 %v196, 4294901760
  %v1038 = vsub.f32 %v196, %v1037
  %v1039 = vand.u32 %v1038, 4294901760
  %1040 = vmatpush2.msra.mxu0 %v1039
  %1041 = vmatprep.subr.mxu0 0.0
  %v1042 = vand.u32 %v195, 4294901760
  %v1043 = vsub.f32 %v195, %v1042
  %v1044 = vand.u32 %v1043, 4294901760
  %1045 = vmatpush2.msra.mxu0 %v1044
  %1046 = vmatprep.subr.mxu0 0.0
  %v1047 = vand.u32 %v194, 4294901760
  %v1048 = vsub.f32 %v194, %v1047
  %v1049 = vand.u32 %v1048, 4294901760
  %1050 = vmatpush2.msra.mxu0 %v1049
  %1051 = vmatprep.subr.mxu0 0.0
  %v1052 = vand.u32 %v193, 4294901760
  %v1053 = vsub.f32 %v193, %v1052
  %v1054 = vand.u32 %v1053, 4294901760
  %1055 = vmatpush2.msra.mxu0 %v1054
  %1056 = vmatprep.subr.mxu0 0.0
  %v1057 = vand.u32 %v192, 4294901760
  %v1058 = vsub.f32 %v192, %v1057
  %v1059 = vand.u32 %v1058, 4294901760
  %1060 = vmatpush2.msra.mxu0 %v1059
  %1061 = vmatprep.subr.mxu0 0.0
  %v1062 = vand.u32 %v191, 4294901760
  %v1063 = vsub.f32 %v191, %v1062
  %v1064 = vand.u32 %v1063, 4294901760
  %1065 = vmatpush2.msra.mxu0 %v1064
  %1066 = vmatprep.subr.mxu0 0.0
  %v1067 = vand.u32 %v190, 4294901760
  %v1068 = vsub.f32 %v190, %v1067
  %v1069 = vand.u32 %v1068, 4294901760
  %1070 = vmatpush2.msra.mxu0 %v1069
  %1071 = vmatprep.subr.mxu0 0.0
  %v1072 = vand.u32 %v189, 4294901760
  %v1073 = vsub.f32 %v189, %v1072
  %v1074 = vand.u32 %v1073, 4294901760
  %1075 = vmatpush2.msra.mxu0 %v1074
  %1076 = vmatprep.subr.mxu0 0.0
  %v1077 = vand.u32 %v188, 4294901760
  %v1078 = vsub.f32 %v188, %v1077
  %v1079 = vand.u32 %v1078, 4294901760
  %1080 = vmatpush2.msra.mxu0 %v1079
  %1081 = vmatprep.subr.mxu0 0.0
  %v1082 = vand.u32 %v187, 4294901760
  %v1083 = vsub.f32 %v187, %v1082
  %v1084 = vand.u32 %v1083, 4294901760
  %1085 = vmatpush2.msra.mxu0 %v1084
  %1086 = vmatprep.subr.mxu0 0.0
  %v1087 = vand.u32 %v186, 4294901760
  %v1088 = vsub.f32 %v186, %v1087
  %v1089 = vand.u32 %v1088, 4294901760
  %1090 = vmatpush2.msra.mxu0 %v1089
  %1091 = vmatprep.subr.mxu0 0.0
  %v1092 = vand.u32 %v185, 4294901760
  %v1093 = vsub.f32 %v185, %v1092
  %v1094 = vand.u32 %v1093, 4294901760
  %1095 = vmatpush2.msra.mxu0 %v1094
  %1096 = vmatprep.subr.mxu0 0.0
  %v1097 = vand.u32 %v184, 4294901760
  %v1098 = vsub.f32 %v184, %v1097
  %v1099 = vand.u32 %v1098, 4294901760
  %1100 = vmatpush2.msra.mxu0 %v1099
  %1101 = vmatprep.subr.mxu0 0.0
  %v1102 = vand.u32 %v183, 4294901760
  %v1103 = vsub.f32 %v183, %v1102
  %v1104 = vand.u32 %v1103, 4294901760
  %1105 = vmatpush2.msra.mxu0 %v1104
  %1106 = vmatprep.subr.mxu0 0.0
  %v1107 = vand.u32 %v182, 4294901760
  %v1108 = vsub.f32 %v182, %v1107
  %v1109 = vand.u32 %v1108, 4294901760
  %1110 = vmatpush2.msra.mxu0 %v1109
  %v1111 = vand.u32 %v151, 4294901760
  %1112 = vmatprep.mubr.f32.mxu0 %v1111
  %v1113 = vand.u32 %v150, 4294901760
  %1114 = vmatmul.mubr.f32.gmra.mxu0 %v1113
  %v1115 = vpop.f32.mrf.mxu0
  %v1116 = vadd.f32 %v915, %v1115
  %v1117 = vpop.f32.mrf.mxu0
  %v1118 = vand.u32 %v155, 4294901760
  %1119 = vmatprep.mubr.f32.mxu0 %v1118
  %v1120 = vand.u32 %v154, 4294901760
  %1121 = vmatmul.mubr.f32.gmra.mxu0 %v1120
  %v1122 = vpop.f32.mrf.mxu0
  %v1123 = vadd.f32 %v926, %v1122
  %v1124 = vpop.f32.mrf.mxu0
  %v1125 = vand.u32 %v159, 4294901760
  %1126 = vmatprep.mubr.f32.mxu0 %v1125
  %v1127 = vand.u32 %v158, 4294901760
  %1128 = vmatmul.mubr.f32.gmra.mxu0 %v1127
  %v1129 = vpop.f32.mrf.mxu0
  %v1130 = vadd.f32 %v937, %v1129
  %v1131 = vpop.f32.mrf.mxu0
  %v1132 = vand.u32 %v163, 4294901760
  %1133 = vmatprep.mubr.f32.mxu0 %v1132
  %v1134 = vand.u32 %v162, 4294901760
  %1135 = vmatmul.mubr.f32.gmra.mxu0 %v1134
  %v1136 = vpop.f32.mrf.mxu0
  %v1137 = vadd.f32 %v948, %v1136
  %v1138 = vpop.f32.mrf.mxu0
  %1139 = vdwg.mxu0
  %1140 = vmatprep.subr.mxu0 0.0
  %v1141 = vand.u32 %v181, 4294901760
  %1142 = vmatpush1.msra.mxu0 %v1141
  %1143 = vmatprep.subr.mxu0 0.0
  %v1144 = vand.u32 %v180, 4294901760
  %1145 = vmatpush1.msra.mxu0 %v1144
  %1146 = vmatprep.subr.mxu0 0.0
  %v1147 = vand.u32 %v179, 4294901760
  %1148 = vmatpush1.msra.mxu0 %v1147
  %1149 = vmatprep.subr.mxu0 0.0
  %v1150 = vand.u32 %v178, 4294901760
  %1151 = vmatpush1.msra.mxu0 %v1150
  %1152 = vmatprep.subr.mxu0 0.0
  %v1153 = vand.u32 %v177, 4294901760
  %1154 = vmatpush1.msra.mxu0 %v1153
  %1155 = vmatprep.subr.mxu0 0.0
  %v1156 = vand.u32 %v176, 4294901760
  %1157 = vmatpush1.msra.mxu0 %v1156
  %1158 = vmatprep.subr.mxu0 0.0
  %v1159 = vand.u32 %v175, 4294901760
  %1160 = vmatpush1.msra.mxu0 %v1159
  %1161 = vmatprep.subr.mxu0 0.0
  %v1162 = vand.u32 %v174, 4294901760
  %1163 = vmatpush1.msra.mxu0 %v1162
  %1164 = vmatprep.subr.mxu0 0.0
  %v1165 = vand.u32 %v173, 4294901760
  %1166 = vmatpush1.msra.mxu0 %v1165
  %1167 = vmatprep.subr.mxu0 0.0
  %v1168 = vand.u32 %v172, 4294901760
  %1169 = vmatpush1.msra.mxu0 %v1168
  %1170 = vmatprep.subr.mxu0 0.0
  %v1171 = vand.u32 %v171, 4294901760
  %1172 = vmatpush1.msra.mxu0 %v1171
  %1173 = vmatprep.subr.mxu0 0.0
  %v1174 = vand.u32 %v170, 4294901760
  %1175 = vmatpush1.msra.mxu0 %v1174
  %1176 = vmatprep.subr.mxu0 0.0
  %v1177 = vand.u32 %v169, 4294901760
  %1178 = vmatpush1.msra.mxu0 %v1177
  %1179 = vmatprep.subr.mxu0 0.0
  %v1180 = vand.u32 %v168, 4294901760
  %1181 = vmatpush1.msra.mxu0 %v1180
  %1182 = vmatprep.subr.mxu0 0.0
  %v1183 = vand.u32 %v167, 4294901760
  %1184 = vmatpush1.msra.mxu0 %v1183
  %1185 = vmatprep.subr.mxu0 0.0
  %v1186 = vand.u32 %v166, 4294901760
  %1187 = vmatpush1.msra.mxu0 %v1186
  %1188 = vmatprep.subr.mxu0 0.0
  %v1189 = vand.u32 %v197, 4294901760
  %1190 = vmatpush2.msra.mxu0 %v1189
  %1191 = vmatprep.subr.mxu0 0.0
  %v1192 = vand.u32 %v196, 4294901760
  %1193 = vmatpush2.msra.mxu0 %v1192
  %1194 = vmatprep.subr.mxu0 0.0
  %v1195 = vand.u32 %v195, 4294901760
  %1196 = vmatpush2.msra.mxu0 %v1195
  %1197 = vmatprep.subr.mxu0 0.0
  %v1198 = vand.u32 %v194, 4294901760
  %1199 = vmatpush2.msra.mxu0 %v1198
  %1200 = vmatprep.subr.mxu0 0.0
  %v1201 = vand.u32 %v193, 4294901760
  %1202 = vmatpush2.msra.mxu0 %v1201
  %1203 = vmatprep.subr.mxu0 0.0
  %v1204 = vand.u32 %v192, 4294901760
  %1205 = vmatpush2.msra.mxu0 %v1204
  %1206 = vmatprep.subr.mxu0 0.0
  %v1207 = vand.u32 %v191, 4294901760
  %1208 = vmatpush2.msra.mxu0 %v1207
  %1209 = vmatprep.subr.mxu0 0.0
  %v1210 = vand.u32 %v190, 4294901760
  %1211 = vmatpush2.msra.mxu0 %v1210
  %1212 = vmatprep.subr.mxu0 0.0
  %v1213 = vand.u32 %v189, 4294901760
  %1214 = vmatpush2.msra.mxu0 %v1213
  %1215 = vmatprep.subr.mxu0 0.0
  %v1216 = vand.u32 %v188, 4294901760
  %1217 = vmatpush2.msra.mxu0 %v1216
  %1218 = vmatprep.subr.mxu0 0.0
  %v1219 = vand.u32 %v187, 4294901760
  %1220 = vmatpush2.msra.mxu0 %v1219
  %1221 = vmatprep.subr.mxu0 0.0
  %v1222 = vand.u32 %v186, 4294901760
  %1223 = vmatpush2.msra.mxu0 %v1222
  %1224 = vmatprep.subr.mxu0 0.0
  %v1225 = vand.u32 %v185, 4294901760
  %1226 = vmatpush2.msra.mxu0 %v1225
  %1227 = vmatprep.subr.mxu0 0.0
  %v1228 = vand.u32 %v184, 4294901760
  %1229 = vmatpush2.msra.mxu0 %v1228
  %1230 = vmatprep.subr.mxu0 0.0
  %v1231 = vand.u32 %v183, 4294901760
  %1232 = vmatpush2.msra.mxu0 %v1231
  %1233 = vmatprep.subr.mxu0 0.0
  %v1234 = vand.u32 %v182, 4294901760
  %1235 = vmatpush2.msra.mxu0 %v1234
  %v1236 = vand.u32 %v151, 4294901760
  %1237 = vmatprep.mubr.f32.mxu0 %v1236
  %v1238 = vand.u32 %v150, 4294901760
  %1239 = vmatmul.mubr.f32.gmra.mxu0 %v1238
  %v1240 = vpop.f32.mrf.mxu0
  %v1241 = vadd.f32 %v1116, %v1240
  %v1242 = vpop.f32.mrf.mxu0
  %v1243 = vand.u32 %v155, 4294901760
  %1244 = vmatprep.mubr.f32.mxu0 %v1243
  %v1245 = vand.u32 %v154, 4294901760
  %1246 = vmatmul.mubr.f32.gmra.mxu0 %v1245
  %v1247 = vpop.f32.mrf.mxu0
  %v1248 = vadd.f32 %v1123, %v1247
  %v1249 = vpop.f32.mrf.mxu0
  %v1250 = vand.u32 %v159, 4294901760
  %1251 = vmatprep.mubr.f32.mxu0 %v1250
  %v1252 = vand.u32 %v158, 4294901760
  %1253 = vmatmul.mubr.f32.gmra.mxu0 %v1252
  %v1254 = vpop.f32.mrf.mxu0
  %v1255 = vadd.f32 %v1130, %v1254
  %v1256 = vpop.f32.mrf.mxu0
  %v1257 = vand.u32 %v163, 4294901760
  %1258 = vmatprep.mubr.f32.mxu0 %v1257
  %v1259 = vand.u32 %v162, 4294901760
  %1260 = vmatmul.mubr.f32.gmra.mxu0 %v1259
  %v1261 = vpop.f32.mrf.mxu0
  %v1262 = vadd.f32 %v1137, %v1261
  %v1263 = vpop.f32.mrf.mxu0
  %1264 = vdwg.mxu0
  %1265 = vmatprep.subr.mxu0 0.0
  %v1266 = vand.u32 %v213, 4294901760
  %1267 = vmatpush1.msra.mxu0 %v1266
  %1268 = vmatprep.subr.mxu0 0.0
  %v1269 = vand.u32 %v212, 4294901760
  %1270 = vmatpush1.msra.mxu0 %v1269
  %1271 = vmatprep.subr.mxu0 0.0
  %v1272 = vand.u32 %v211, 4294901760
  %1273 = vmatpush1.msra.mxu0 %v1272
  %1274 = vmatprep.subr.mxu0 0.0
  %v1275 = vand.u32 %v210, 4294901760
  %1276 = vmatpush1.msra.mxu0 %v1275
  %1277 = vmatprep.subr.mxu0 0.0
  %v1278 = vand.u32 %v209, 4294901760
  %1279 = vmatpush1.msra.mxu0 %v1278
  %1280 = vmatprep.subr.mxu0 0.0
  %v1281 = vand.u32 %v208, 4294901760
  %1282 = vmatpush1.msra.mxu0 %v1281
  %1283 = vmatprep.subr.mxu0 0.0
  %v1284 = vand.u32 %v207, 4294901760
  %1285 = vmatpush1.msra.mxu0 %v1284
  %1286 = vmatprep.subr.mxu0 0.0
  %v1287 = vand.u32 %v206, 4294901760
  %1288 = vmatpush1.msra.mxu0 %v1287
  %1289 = vmatprep.subr.mxu0 0.0
  %v1290 = vand.u32 %v205, 4294901760
  %1291 = vmatpush1.msra.mxu0 %v1290
  %1292 = vmatprep.subr.mxu0 0.0
  %v1293 = vand.u32 %v204, 4294901760
  %1294 = vmatpush1.msra.mxu0 %v1293
  %1295 = vmatprep.subr.mxu0 0.0
  %v1296 = vand.u32 %v203, 4294901760
  %1297 = vmatpush1.msra.mxu0 %v1296
  %1298 = vmatprep.subr.mxu0 0.0
  %v1299 = vand.u32 %v202, 4294901760
  %1300 = vmatpush1.msra.mxu0 %v1299
  %1301 = vmatprep.subr.mxu0 0.0
  %v1302 = vand.u32 %v201, 4294901760
  %1303 = vmatpush1.msra.mxu0 %v1302
  %1304 = vmatprep.subr.mxu0 0.0
  %v1305 = vand.u32 %v200, 4294901760
  %1306 = vmatpush1.msra.mxu0 %v1305
  %1307 = vmatprep.subr.mxu0 0.0
  %v1308 = vand.u32 %v199, 4294901760
  %1309 = vmatpush1.msra.mxu0 %v1308
  %1310 = vmatprep.subr.mxu0 0.0
  %v1311 = vand.u32 %v198, 4294901760
  %1312 = vmatpush1.msra.mxu0 %v1311
  %1313 = vmatprep.subr.mxu0 0.0
  %1314 = vmatpush2.msra.mxu0 0.0
  %1315 = vmatprep.subr.mxu0 0.0
  %1316 = vmatpush2.msra.mxu0 0.0
  %1317 = vmatprep.subr.mxu0 0.0
  %1318 = vmatpush2.msra.mxu0 0.0
  %1319 = vmatprep.subr.mxu0 0.0
  %1320 = vmatpush2.msra.mxu0 0.0
  %1321 = vmatprep.subr.mxu0 0.0
  %1322 = vmatpush2.msra.mxu0 0.0
  %1323 = vmatprep.subr.mxu0 0.0
  %1324 = vmatpush2.msra.mxu0 0.0
  %1325 = vmatprep.subr.mxu0 0.0
  %1326 = vmatpush2.msra.mxu0 0.0
  %1327 = vmatprep.subr.mxu0 0.0
  %1328 = vmatpush2.msra.mxu0 0.0
  %1329 = vmatprep.subr.mxu0 0.0
  %1330 = vmatpush2.msra.mxu0 0.0
  %1331 = vmatprep.subr.mxu0 0.0
  %1332 = vmatpush2.msra.mxu0 0.0
  %1333 = vmatprep.subr.mxu0 0.0
  %1334 = vmatpush2.msra.mxu0 0.0
  %1335 = vmatprep.subr.mxu0 0.0
  %1336 = vmatpush2.msra.mxu0 0.0
  %1337 = vmatprep.subr.mxu0 0.0
  %1338 = vmatpush2.msra.mxu0 0.0
  %1339 = vmatprep.subr.mxu0 0.0
  %1340 = vmatpush2.msra.mxu0 0.0
  %1341 = vmatprep.subr.mxu0 0.0
  %v1342 = vand.u32 %v215, 4294901760
  %1343 = vmatpush2.msra.mxu0 %v1342
  %1344 = vmatprep.subr.mxu0 0.0
  %v1345 = vand.u32 %v214, 4294901760
  %1346 = vmatpush2.msra.mxu0 %v1345
  %v1347 = vand.u32 %v224, 4294901760
  %v1348 = vsub.f32 %v224, %v1347
  %v1349 = vand.u32 %v1348, 4294901760
  %v1350 = vsub.f32 %v1348, %v1349
  %v1351 = vand.u32 %v1350, 4294901760
  %1352 = vmatprep.mubr.f32.mxu0 %v1351
  %v1353 = vand.u32 %v152, 4294901760
  %v1354 = vsub.f32 %v152, %v1353
  %v1355 = vand.u32 %v1354, 4294901760
  %v1356 = vsub.f32 %v1354, %v1355
  %v1357 = vand.u32 %v1356, 4294901760
  %1358 = vmatmul.mubr.f32.gmra.mxu0 %v1357
  %v1359 = vpop.f32.mrf.mxu0
  %v1360 = vadd.f32 %v1241, %v1359
  %v1361 = vpop.f32.mrf.mxu0
  %v1362 = vand.u32 %v227, 4294901760
  %v1363 = vsub.f32 %v227, %v1362
  %v1364 = vand.u32 %v1363, 4294901760
  %v1365 = vsub.f32 %v1363, %v1364
  %v1366 = vand.u32 %v1365, 4294901760
  %1367 = vmatprep.mubr.f32.mxu0 %v1366
  %v1368 = vand.u32 %v156, 4294901760
  %v1369 = vsub.f32 %v156, %v1368
  %v1370 = vand.u32 %v1369, 4294901760
  %v1371 = vsub.f32 %v1369, %v1370
  %v1372 = vand.u32 %v1371, 4294901760
  %1373 = vmatmul.mubr.f32.gmra.mxu0 %v1372
  %v1374 = vpop.f32.mrf.mxu0
  %v1375 = vadd.f32 %v1248, %v1374
  %v1376 = vpop.f32.mrf.mxu0
  %v1377 = vand.u32 %v230, 4294901760
  %v1378 = vsub.f32 %v230, %v1377
  %v1379 = vand.u32 %v1378, 4294901760
  %v1380 = vsub.f32 %v1378, %v1379
  %v1381 = vand.u32 %v1380, 4294901760
  %1382 = vmatprep.mubr.f32.mxu0 %v1381
  %v1383 = vand.u32 %v160, 4294901760
  %v1384 = vsub.f32 %v160, %v1383
  %v1385 = vand.u32 %v1384, 4294901760
  %v1386 = vsub.f32 %v1384, %v1385
  %v1387 = vand.u32 %v1386, 4294901760
  %1388 = vmatmul.mubr.f32.gmra.mxu0 %v1387
  %v1389 = vpop.f32.mrf.mxu0
  %v1390 = vadd.f32 %v1255, %v1389
  %v1391 = vpop.f32.mrf.mxu0
  %v1392 = vand.u32 %v233, 4294901760
  %v1393 = vsub.f32 %v233, %v1392
  %v1394 = vand.u32 %v1393, 4294901760
  %v1395 = vsub.f32 %v1393, %v1394
  %v1396 = vand.u32 %v1395, 4294901760
  %1397 = vmatprep.mubr.f32.mxu0 %v1396
  %v1398 = vand.u32 %v164, 4294901760
  %v1399 = vsub.f32 %v164, %v1398
  %v1400 = vand.u32 %v1399, 4294901760
  %v1401 = vsub.f32 %v1399, %v1400
  %v1402 = vand.u32 %v1401, 4294901760
  %1403 = vmatmul.mubr.f32.gmra.mxu0 %v1402
  %v1404 = vpop.f32.mrf.mxu0
  %v1405 = vadd.f32 %v1262, %v1404
  %v1406 = vpop.f32.mrf.mxu0
  %1407 = vdwg.mxu0
  %1408 = vmatprep.subr.mxu0 0.0
  %v1409 = vand.u32 %v213, 4294901760
  %v1410 = vsub.f32 %v213, %v1409
  %v1411 = vand.u32 %v1410, 4294901760
  %v1412 = vsub.f32 %v1410, %v1411
  %v1413 = vand.u32 %v1412, 4294901760
  %1414 = vmatpush1.msra.mxu0 %v1413
  %1415 = vmatprep.subr.mxu0 0.0
  %v1416 = vand.u32 %v212, 4294901760
  %v1417 = vsub.f32 %v212, %v1416
  %v1418 = vand.u32 %v1417, 4294901760
  %v1419 = vsub.f32 %v1417, %v1418
  %v1420 = vand.u32 %v1419, 4294901760
  %1421 = vmatpush1.msra.mxu0 %v1420
  %1422 = vmatprep.subr.mxu0 0.0
  %v1423 = vand.u32 %v211, 4294901760
  %v1424 = vsub.f32 %v211, %v1423
  %v1425 = vand.u32 %v1424, 4294901760
  %v1426 = vsub.f32 %v1424, %v1425
  %v1427 = vand.u32 %v1426, 4294901760
  %1428 = vmatpush1.msra.mxu0 %v1427
  %1429 = vmatprep.subr.mxu0 0.0
  %v1430 = vand.u32 %v210, 4294901760
  %v1431 = vsub.f32 %v210, %v1430
  %v1432 = vand.u32 %v1431, 4294901760
  %v1433 = vsub.f32 %v1431, %v1432
  %v1434 = vand.u32 %v1433, 4294901760
  %1435 = vmatpush1.msra.mxu0 %v1434
  %1436 = vmatprep.subr.mxu0 0.0
  %v1437 = vand.u32 %v209, 4294901760
  %v1438 = vsub.f32 %v209, %v1437
  %v1439 = vand.u32 %v1438, 4294901760
  %v1440 = vsub.f32 %v1438, %v1439
  %v1441 = vand.u32 %v1440, 4294901760
  %1442 = vmatpush1.msra.mxu0 %v1441
  %1443 = vmatprep.subr.mxu0 0.0
  %v1444 = vand.u32 %v208, 4294901760
  %v1445 = vsub.f32 %v208, %v1444
  %v1446 = vand.u32 %v1445, 4294901760
  %v1447 = vsub.f32 %v1445, %v1446
  %v1448 = vand.u32 %v1447, 4294901760
  %1449 = vmatpush1.msra.mxu0 %v1448
  %1450 = vmatprep.subr.mxu0 0.0
  %v1451 = vand.u32 %v207, 4294901760
  %v1452 = vsub.f32 %v207, %v1451
  %v1453 = vand.u32 %v1452, 4294901760
  %v1454 = vsub.f32 %v1452, %v1453
  %v1455 = vand.u32 %v1454, 4294901760
  %1456 = vmatpush1.msra.mxu0 %v1455
  %1457 = vmatprep.subr.mxu0 0.0
  %v1458 = vand.u32 %v206, 4294901760
  %v1459 = vsub.f32 %v206, %v1458
  %v1460 = vand.u32 %v1459, 4294901760
  %v1461 = vsub.f32 %v1459, %v1460
  %v1462 = vand.u32 %v1461, 4294901760
  %1463 = vmatpush1.msra.mxu0 %v1462
  %1464 = vmatprep.subr.mxu0 0.0
  %v1465 = vand.u32 %v205, 4294901760
  %v1466 = vsub.f32 %v205, %v1465
  %v1467 = vand.u32 %v1466, 4294901760
  %v1468 = vsub.f32 %v1466, %v1467
  %v1469 = vand.u32 %v1468, 4294901760
  %1470 = vmatpush1.msra.mxu0 %v1469
  %1471 = vmatprep.subr.mxu0 0.0
  %v1472 = vand.u32 %v204, 4294901760
  %v1473 = vsub.f32 %v204, %v1472
  %v1474 = vand.u32 %v1473, 4294901760
  %v1475 = vsub.f32 %v1473, %v1474
  %v1476 = vand.u32 %v1475, 4294901760
  %1477 = vmatpush1.msra.mxu0 %v1476
  %1478 = vmatprep.subr.mxu0 0.0
  %v1479 = vand.u32 %v203, 4294901760
  %v1480 = vsub.f32 %v203, %v1479
  %v1481 = vand.u32 %v1480, 4294901760
  %v1482 = vsub.f32 %v1480, %v1481
  %v1483 = vand.u32 %v1482, 4294901760
  %1484 = vmatpush1.msra.mxu0 %v1483
  %1485 = vmatprep.subr.mxu0 0.0
  %v1486 = vand.u32 %v202, 4294901760
  %v1487 = vsub.f32 %v202, %v1486
  %v1488 = vand.u32 %v1487, 4294901760
  %v1489 = vsub.f32 %v1487, %v1488
  %v1490 = vand.u32 %v1489, 4294901760
  %1491 = vmatpush1.msra.mxu0 %v1490
  %1492 = vmatprep.subr.mxu0 0.0
  %v1493 = vand.u32 %v201, 4294901760
  %v1494 = vsub.f32 %v201, %v1493
  %v1495 = vand.u32 %v1494, 4294901760
  %v1496 = vsub.f32 %v1494, %v1495
  %v1497 = vand.u32 %v1496, 4294901760
  %1498 = vmatpush1.msra.mxu0 %v1497
  %1499 = vmatprep.subr.mxu0 0.0
  %v1500 = vand.u32 %v200, 4294901760
  %v1501 = vsub.f32 %v200, %v1500
  %v1502 = vand.u32 %v1501, 4294901760
  %v1503 = vsub.f32 %v1501, %v1502
  %v1504 = vand.u32 %v1503, 4294901760
  %1505 = vmatpush1.msra.mxu0 %v1504
  %1506 = vmatprep.subr.mxu0 0.0
  %v1507 = vand.u32 %v199, 4294901760
  %v1508 = vsub.f32 %v199, %v1507
  %v1509 = vand.u32 %v1508, 4294901760
  %v1510 = vsub.f32 %v1508, %v1509
  %v1511 = vand.u32 %v1510, 4294901760
  %1512 = vmatpush1.msra.mxu0 %v1511
  %1513 = vmatprep.subr.mxu0 0.0
  %v1514 = vand.u32 %v198, 4294901760
  %v1515 = vsub.f32 %v198, %v1514
  %v1516 = vand.u32 %v1515, 4294901760
  %v1517 = vsub.f32 %v1515, %v1516
  %v1518 = vand.u32 %v1517, 4294901760
  %1519 = vmatpush1.msra.mxu0 %v1518
  %1520 = vmatprep.subr.mxu0 0.0
  %1521 = vmatpush2.msra.mxu0 0.0
  %1522 = vmatprep.subr.mxu0 0.0
  %1523 = vmatpush2.msra.mxu0 0.0
  %1524 = vmatprep.subr.mxu0 0.0
  %1525 = vmatpush2.msra.mxu0 0.0
  %1526 = vmatprep.subr.mxu0 0.0
  %1527 = vmatpush2.msra.mxu0 0.0
  %1528 = vmatprep.subr.mxu0 0.0
  %1529 = vmatpush2.msra.mxu0 0.0
  %1530 = vmatprep.subr.mxu0 0.0
  %1531 = vmatpush2.msra.mxu0 0.0
  %1532 = vmatprep.subr.mxu0 0.0
  %1533 = vmatpush2.msra.mxu0 0.0
  %1534 = vmatprep.subr.mxu0 0.0
  %1535 = vmatpush2.msra.mxu0 0.0
  %1536 = vmatprep.subr.mxu0 0.0
  %1537 = vmatpush2.msra.mxu0 0.0
  %1538 = vmatprep.subr.mxu0 0.0
  %1539 = vmatpush2.msra.mxu0 0.0
  %1540 = vmatprep.subr.mxu0 0.0
  %1541 = vmatpush2.msra.mxu0 0.0
  %1542 = vmatprep.subr.mxu0 0.0
  %1543 = vmatpush2.msra.mxu0 0.0
  %1544 = vmatprep.subr.mxu0 0.0
  %1545 = vmatpush2.msra.mxu0 0.0
  %1546 = vmatprep.subr.mxu0 0.0
  %1547 = vmatpush2.msra.mxu0 0.0
  %1548 = vmatprep.subr.mxu0 0.0
  %v1549 = vand.u32 %v215, 4294901760
  %v1550 = vsub.f32 %v215, %v1549
  %v1551 = vand.u32 %v1550, 4294901760
  %v1552 = vsub.f32 %v1550, %v1551
  %v1553 = vand.u32 %v1552, 4294901760
  %1554 = vmatpush2.msra.mxu0 %v1553
  %1555 = vmatprep.subr.mxu0 0.0
  %v1556 = vand.u32 %v214, 4294901760
  %v1557 = vsub.f32 %v214, %v1556
  %v1558 = vand.u32 %v1557, 4294901760
  %v1559 = vsub.f32 %v1557, %v1558
  %v1560 = vand.u32 %v1559, 4294901760
  %1561 = vmatpush2.msra.mxu0 %v1560
  %v1562 = vand.u32 %v224, 4294901760
  %1563 = vmatprep.mubr.f32.mxu0 %v1562
  %v1564 = vand.u32 %v152, 4294901760
  %1565 = vmatmul.mubr.f32.gmra.mxu0 %v1564
  %v1566 = vpop.f32.mrf.mxu0
  %v1567 = vadd.f32 %v1360, %v1566
  %v1568 = vpop.f32.mrf.mxu0
  %v1569 = vand.u32 %v227, 4294901760
  %1570 = vmatprep.mubr.f32.mxu0 %v1569
  %v1571 = vand.u32 %v156, 4294901760
  %1572 = vmatmul.mubr.f32.gmra.mxu0 %v1571
  %v1573 = vpop.f32.mrf.mxu0
  %v1574 = vadd.f32 %v1375, %v1573
  %v1575 = vpop.f32.mrf.mxu0
  %v1576 = vand.u32 %v230, 4294901760
  %1577 = vmatprep.mubr.f32.mxu0 %v1576
  %v1578 = vand.u32 %v160, 4294901760
  %1579 = vmatmul.mubr.f32.gmra.mxu0 %v1578
  %v1580 = vpop.f32.mrf.mxu0
  %v1581 = vadd.f32 %v1390, %v1580
  %v1582 = vpop.f32.mrf.mxu0
  %v1583 = vand.u32 %v233, 4294901760
  %1584 = vmatprep.mubr.f32.mxu0 %v1583
  %v1585 = vand.u32 %v164, 4294901760
  %1586 = vmatmul.mubr.f32.gmra.mxu0 %v1585
  %v1587 = vpop.f32.mrf.mxu0
  %v1588 = vadd.f32 %v1405, %v1587
  %v1589 = vpop.f32.mrf.mxu0
  %1590 = vdwg.mxu0
  %1591 = vmatprep.subr.mxu0 0.0
  %v1592 = vand.u32 %v213, 4294901760
  %v1593 = vsub.f32 %v213, %v1592
  %1594 = vmatpush1.msra.mxu0 %v1593
  %1595 = vmatprep.subr.mxu0 0.0
  %v1596 = vand.u32 %v212, 4294901760
  %v1597 = vsub.f32 %v212, %v1596
  %1598 = vmatpush1.msra.mxu0 %v1597
  %1599 = vmatprep.subr.mxu0 0.0
  %v1600 = vand.u32 %v211, 4294901760
  %v1601 = vsub.f32 %v211, %v1600
  %1602 = vmatpush1.msra.mxu0 %v1601
  %1603 = vmatprep.subr.mxu0 0.0
  %v1604 = vand.u32 %v210, 4294901760
  %v1605 = vsub.f32 %v210, %v1604
  %1606 = vmatpush1.msra.mxu0 %v1605
  %1607 = vmatprep.subr.mxu0 0.0
  %v1608 = vand.u32 %v209, 4294901760
  %v1609 = vsub.f32 %v209, %v1608
  %1610 = vmatpush1.msra.mxu0 %v1609
  %1611 = vmatprep.subr.mxu0 0.0
  %v1612 = vand.u32 %v208, 4294901760
  %v1613 = vsub.f32 %v208, %v1612
  %1614 = vmatpush1.msra.mxu0 %v1613
  %1615 = vmatprep.subr.mxu0 0.0
  %v1616 = vand.u32 %v207, 4294901760
  %v1617 = vsub.f32 %v207, %v1616
  %1618 = vmatpush1.msra.mxu0 %v1617
  %1619 = vmatprep.subr.mxu0 0.0
  %v1620 = vand.u32 %v206, 4294901760
  %v1621 = vsub.f32 %v206, %v1620
  %1622 = vmatpush1.msra.mxu0 %v1621
  %1623 = vmatprep.subr.mxu0 0.0
  %v1624 = vand.u32 %v205, 4294901760
  %v1625 = vsub.f32 %v205, %v1624
  %1626 = vmatpush1.msra.mxu0 %v1625
  %1627 = vmatprep.subr.mxu0 0.0
  %v1628 = vand.u32 %v204, 4294901760
  %v1629 = vsub.f32 %v204, %v1628
  %1630 = vmatpush1.msra.mxu0 %v1629
  %1631 = vmatprep.subr.mxu0 0.0
  %v1632 = vand.u32 %v203, 4294901760
  %v1633 = vsub.f32 %v203, %v1632
  %1634 = vmatpush1.msra.mxu0 %v1633
  %1635 = vmatprep.subr.mxu0 0.0
  %v1636 = vand.u32 %v202, 4294901760
  %v1637 = vsub.f32 %v202, %v1636
  %1638 = vmatpush1.msra.mxu0 %v1637
  %1639 = vmatprep.subr.mxu0 0.0
  %v1640 = vand.u32 %v201, 4294901760
  %v1641 = vsub.f32 %v201, %v1640
  %1642 = vmatpush1.msra.mxu0 %v1641
  %1643 = vmatprep.subr.mxu0 0.0
  %v1644 = vand.u32 %v200, 4294901760
  %v1645 = vsub.f32 %v200, %v1644
  %1646 = vmatpush1.msra.mxu0 %v1645
  %1647 = vmatprep.subr.mxu0 0.0
  %v1648 = vand.u32 %v199, 4294901760
  %v1649 = vsub.f32 %v199, %v1648
  %1650 = vmatpush1.msra.mxu0 %v1649
  %1651 = vmatprep.subr.mxu0 0.0
  %v1652 = vand.u32 %v198, 4294901760
  %v1653 = vsub.f32 %v198, %v1652
  %1654 = vmatpush1.msra.mxu0 %v1653
  %1655 = vmatprep.subr.mxu0 0.0
  %1656 = vmatpush2.msra.mxu0 0.0
  %1657 = vmatprep.subr.mxu0 0.0
  %1658 = vmatpush2.msra.mxu0 0.0
  %1659 = vmatprep.subr.mxu0 0.0
  %1660 = vmatpush2.msra.mxu0 0.0
  %1661 = vmatprep.subr.mxu0 0.0
  %1662 = vmatpush2.msra.mxu0 0.0
  %1663 = vmatprep.subr.mxu0 0.0
  %1664 = vmatpush2.msra.mxu0 0.0
  %1665 = vmatprep.subr.mxu0 0.0
  %1666 = vmatpush2.msra.mxu0 0.0
  %1667 = vmatprep.subr.mxu0 0.0
  %1668 = vmatpush2.msra.mxu0 0.0
  %1669 = vmatprep.subr.mxu0 0.0
  %1670 = vmatpush2.msra.mxu0 0.0
  %1671 = vmatprep.subr.mxu0 0.0
  %1672 = vmatpush2.msra.mxu0 0.0
  %1673 = vmatprep.subr.mxu0 0.0
  %1674 = vmatpush2.msra.mxu0 0.0
  %1675 = vmatprep.subr.mxu0 0.0
  %1676 = vmatpush2.msra.mxu0 0.0
  %1677 = vmatprep.subr.mxu0 0.0
  %1678 = vmatpush2.msra.mxu0 0.0
  %1679 = vmatprep.subr.mxu0 0.0
  %1680 = vmatpush2.msra.mxu0 0.0
  %1681 = vmatprep.subr.mxu0 0.0
  %1682 = vmatpush2.msra.mxu0 0.0
  %1683 = vmatprep.subr.mxu0 0.0
  %v1684 = vand.u32 %v215, 4294901760
  %v1685 = vsub.f32 %v215, %v1684
  %1686 = vmatpush2.msra.mxu0 %v1685
  %1687 = vmatprep.subr.mxu0 0.0
  %v1688 = vand.u32 %v214, 4294901760
  %v1689 = vsub.f32 %v214, %v1688
  %1690 = vmatpush2.msra.mxu0 %v1689
  %v1691 = vand.u32 %v224, 4294901760
  %v1692 = vsub.f32 %v224, %v1691
  %1693 = vmatprep.mubr.f32.mxu0 %v1692
  %v1694 = vand.u32 %v152, 4294901760
  %v1695 = vsub.f32 %v152, %v1694
  %1696 = vmatmul.mubr.f32.gmra.mxu0 %v1695
  %v1697 = vpop.f32.mrf.mxu0
  %v1698 = vadd.f32 %v1567, %v1697
  %v1699 = vpop.f32.mrf.mxu0
  %v1700 = vand.u32 %v227, 4294901760
  %v1701 = vsub.f32 %v227, %v1700
  %1702 = vmatprep.mubr.f32.mxu0 %v1701
  %v1703 = vand.u32 %v156, 4294901760
  %v1704 = vsub.f32 %v156, %v1703
  %1705 = vmatmul.mubr.f32.gmra.mxu0 %v1704
  %v1706 = vpop.f32.mrf.mxu0
  %v1707 = vadd.f32 %v1574, %v1706
  %v1708 = vpop.f32.mrf.mxu0
  %v1709 = vand.u32 %v230, 4294901760
  %v1710 = vsub.f32 %v230, %v1709
  %1711 = vmatprep.mubr.f32.mxu0 %v1710
  %v1712 = vand.u32 %v160, 4294901760
  %v1713 = vsub.f32 %v160, %v1712
  %1714 = vmatmul.mubr.f32.gmra.mxu0 %v1713
  %v1715 = vpop.f32.mrf.mxu0
  %v1716 = vadd.f32 %v1581, %v1715
  %v1717 = vpop.f32.mrf.mxu0
  %v1718 = vand.u32 %v233, 4294901760
  %v1719 = vsub.f32 %v233, %v1718
  %1720 = vmatprep.mubr.f32.mxu0 %v1719
  %v1721 = vand.u32 %v164, 4294901760
  %v1722 = vsub.f32 %v164, %v1721
  %1723 = vmatmul.mubr.f32.gmra.mxu0 %v1722
  %v1724 = vpop.f32.mrf.mxu0
  %v1725 = vadd.f32 %v1588, %v1724
  %v1726 = vpop.f32.mrf.mxu0
  %1727 = vdwg.mxu0
  %1728 = vmatprep.subr.mxu0 0.0
  %v1729 = vand.u32 %v213, 4294901760
  %1730 = vmatpush1.msra.mxu0 %v1729
  %1731 = vmatprep.subr.mxu0 0.0
  %v1732 = vand.u32 %v212, 4294901760
  %1733 = vmatpush1.msra.mxu0 %v1732
  %1734 = vmatprep.subr.mxu0 0.0
  %v1735 = vand.u32 %v211, 4294901760
  %1736 = vmatpush1.msra.mxu0 %v1735
  %1737 = vmatprep.subr.mxu0 0.0
  %v1738 = vand.u32 %v210, 4294901760
  %1739 = vmatpush1.msra.mxu0 %v1738
  %1740 = vmatprep.subr.mxu0 0.0
  %v1741 = vand.u32 %v209, 4294901760
  %1742 = vmatpush1.msra.mxu0 %v1741
  %1743 = vmatprep.subr.mxu0 0.0
  %v1744 = vand.u32 %v208, 4294901760
  %1745 = vmatpush1.msra.mxu0 %v1744
  %1746 = vmatprep.subr.mxu0 0.0
  %v1747 = vand.u32 %v207, 4294901760
  %1748 = vmatpush1.msra.mxu0 %v1747
  %1749 = vmatprep.subr.mxu0 0.0
  %v1750 = vand.u32 %v206, 4294901760
  %1751 = vmatpush1.msra.mxu0 %v1750
  %1752 = vmatprep.subr.mxu0 0.0
  %v1753 = vand.u32 %v205, 4294901760
  %1754 = vmatpush1.msra.mxu0 %v1753
  %1755 = vmatprep.subr.mxu0 0.0
  %v1756 = vand.u32 %v204, 4294901760
  %1757 = vmatpush1.msra.mxu0 %v1756
  %1758 = vmatprep.subr.mxu0 0.0
  %v1759 = vand.u32 %v203, 4294901760
  %1760 = vmatpush1.msra.mxu0 %v1759
  %1761 = vmatprep.subr.mxu0 0.0
  %v1762 = vand.u32 %v202, 4294901760
  %1763 = vmatpush1.msra.mxu0 %v1762
  %1764 = vmatprep.subr.mxu0 0.0
  %v1765 = vand.u32 %v201, 4294901760
  %1766 = vmatpush1.msra.mxu0 %v1765
  %1767 = vmatprep.subr.mxu0 0.0
  %v1768 = vand.u32 %v200, 4294901760
  %1769 = vmatpush1.msra.mxu0 %v1768
  %1770 = vmatprep.subr.mxu0 0.0
  %v1771 = vand.u32 %v199, 4294901760
  %1772 = vmatpush1.msra.mxu0 %v1771
  %1773 = vmatprep.subr.mxu0 0.0
  %v1774 = vand.u32 %v198, 4294901760
  %1775 = vmatpush1.msra.mxu0 %v1774
  %1776 = vmatprep.subr.mxu0 0.0
  %1777 = vmatpush2.msra.mxu0 0.0
  %1778 = vmatprep.subr.mxu0 0.0
  %1779 = vmatpush2.msra.mxu0 0.0
  %1780 = vmatprep.subr.mxu0 0.0
  %1781 = vmatpush2.msra.mxu0 0.0
  %1782 = vmatprep.subr.mxu0 0.0
  %1783 = vmatpush2.msra.mxu0 0.0
  %1784 = vmatprep.subr.mxu0 0.0
  %1785 = vmatpush2.msra.mxu0 0.0
  %1786 = vmatprep.subr.mxu0 0.0
  %1787 = vmatpush2.msra.mxu0 0.0
  %1788 = vmatprep.subr.mxu0 0.0
  %1789 = vmatpush2.msra.mxu0 0.0
  %1790 = vmatprep.subr.mxu0 0.0
  %1791 = vmatpush2.msra.mxu0 0.0
  %1792 = vmatprep.subr.mxu0 0.0
  %1793 = vmatpush2.msra.mxu0 0.0
  %1794 = vmatprep.subr.mxu0 0.0
  %1795 = vmatpush2.msra.mxu0 0.0
  %1796 = vmatprep.subr.mxu0 0.0
  %1797 = vmatpush2.msra.mxu0 0.0
  %1798 = vmatprep.subr.mxu0 0.0
  %1799 = vmatpush2.msra.mxu0 0.0
  %1800 = vmatprep.subr.mxu0 0.0
  %1801 = vmatpush2.msra.mxu0 0.0
  %1802 = vmatprep.subr.mxu0 0.0
  %1803 = vmatpush2.msra.mxu0 0.0
  %1804 = vmatprep.subr.mxu0 0.0
  %v1805 = vand.u32 %v215, 4294901760
  %1806 = vmatpush2.msra.mxu0 %v1805
  %1807 = vmatprep.subr.mxu0 0.0
  %v1808 = vand.u32 %v214, 4294901760
  %1809 = vmatpush2.msra.mxu0 %v1808
  %v1810 = vand.u32 %v224, 4294901760
  %v1811 = vsub.f32 %v224, %v1810
  %v1812 = vand.u32 %v1811, 4294901760
  %1813 = vmatprep.mubr.f32.mxu0 %v1812
  %v1814 = vand.u32 %v152, 4294901760
  %v1815 = vsub.f32 %v152, %v1814
  %v1816 = vand.u32 %v1815, 4294901760
  %1817 = vmatmul.mubr.f32.gmra.mxu0 %v1816
  %v1818 = vpop.f32.mrf.mxu0
  %v1819 = vadd.f32 %v1698, %v1818
  %v1820 = vpop.f32.mrf.mxu0
  %v1821 = vand.u32 %v227, 4294901760
  %v1822 = vsub.f32 %v227, %v1821
  %v1823 = vand.u32 %v1822, 4294901760
  %1824 = vmatprep.mubr.f32.mxu0 %v1823
  %v1825 = vand.u32 %v156, 4294901760
  %v1826 = vsub.f32 %v156, %v1825
  %v1827 = vand.u32 %v1826, 4294901760
  %1828 = vmatmul.mubr.f32.gmra.mxu0 %v1827
  %v1829 = vpop.f32.mrf.mxu0
  %v1830 = vadd.f32 %v1707, %v1829
  %v1831 = vpop.f32.mrf.mxu0
  %v1832 = vand.u32 %v230, 4294901760
  %v1833 = vsub.f32 %v230, %v1832
  %v1834 = vand.u32 %v1833, 4294901760
  %1835 = vmatprep.mubr.f32.mxu0 %v1834
  %v1836 = vand.u32 %v160, 4294901760
  %v1837 = vsub.f32 %v160, %v1836
  %v1838 = vand.u32 %v1837, 4294901760
  %1839 = vmatmul.mubr.f32.gmra.mxu0 %v1838
  %v1840 = vpop.f32.mrf.mxu0
  %v1841 = vadd.f32 %v1716, %v1840
  %v1842 = vpop.f32.mrf.mxu0
  %v1843 = vand.u32 %v233, 4294901760
  %v1844 = vsub.f32 %v233, %v1843
  %v1845 = vand.u32 %v1844, 4294901760
  %1846 = vmatprep.mubr.f32.mxu0 %v1845
  %v1847 = vand.u32 %v164, 4294901760
  %v1848 = vsub.f32 %v164, %v1847
  %v1849 = vand.u32 %v1848, 4294901760
  %1850 = vmatmul.mubr.f32.gmra.mxu0 %v1849
  %v1851 = vpop.f32.mrf.mxu0
  %v1852 = vadd.f32 %v1725, %v1851
  %v1853 = vpop.f32.mrf.mxu0
  %1854 = vdwg.mxu0
  %1855 = vmatprep.subr.mxu0 0.0
  %v1856 = vand.u32 %v213, 4294901760
  %v1857 = vsub.f32 %v213, %v1856
  %v1858 = vand.u32 %v1857, 4294901760
  %1859 = vmatpush1.msra.mxu0 %v1858
  %1860 = vmatprep.subr.mxu0 0.0
  %v1861 = vand.u32 %v212, 4294901760
  %v1862 = vsub.f32 %v212, %v1861
  %v1863 = vand.u32 %v1862, 4294901760
  %1864 = vmatpush1.msra.mxu0 %v1863
  %1865 = vmatprep.subr.mxu0 0.0
  %v1866 = vand.u32 %v211, 4294901760
  %v1867 = vsub.f32 %v211, %v1866
  %v1868 = vand.u32 %v1867, 4294901760
  %1869 = vmatpush1.msra.mxu0 %v1868
  %1870 = vmatprep.subr.mxu0 0.0
  %v1871 = vand.u32 %v210, 4294901760
  %v1872 = vsub.f32 %v210, %v1871
  %v1873 = vand.u32 %v1872, 4294901760
  %1874 = vmatpush1.msra.mxu0 %v1873
  %1875 = vmatprep.subr.mxu0 0.0
  %v1876 = vand.u32 %v209, 4294901760
  %v1877 = vsub.f32 %v209, %v1876
  %v1878 = vand.u32 %v1877, 4294901760
  %1879 = vmatpush1.msra.mxu0 %v1878
  %1880 = vmatprep.subr.mxu0 0.0
  %v1881 = vand.u32 %v208, 4294901760
  %v1882 = vsub.f32 %v208, %v1881
  %v1883 = vand.u32 %v1882, 4294901760
  %1884 = vmatpush1.msra.mxu0 %v1883
  %1885 = vmatprep.subr.mxu0 0.0
  %v1886 = vand.u32 %v207, 4294901760
  %v1887 = vsub.f32 %v207, %v1886
  %v1888 = vand.u32 %v1887, 4294901760
  %1889 = vmatpush1.msra.mxu0 %v1888
  %1890 = vmatprep.subr.mxu0 0.0
  %v1891 = vand.u32 %v206, 4294901760
  %v1892 = vsub.f32 %v206, %v1891
  %v1893 = vand.u32 %v1892, 4294901760
  %1894 = vmatpush1.msra.mxu0 %v1893
  %1895 = vmatprep.subr.mxu0 0.0
  %v1896 = vand.u32 %v205, 4294901760
  %v1897 = vsub.f32 %v205, %v1896
  %v1898 = vand.u32 %v1897, 4294901760
  %1899 = vmatpush1.msra.mxu0 %v1898
  %1900 = vmatprep.subr.mxu0 0.0
  %v1901 = vand.u32 %v204, 4294901760
  %v1902 = vsub.f32 %v204, %v1901
  %v1903 = vand.u32 %v1902, 4294901760
  %1904 = vmatpush1.msra.mxu0 %v1903
  %1905 = vmatprep.subr.mxu0 0.0
  %v1906 = vand.u32 %v203, 4294901760
  %v1907 = vsub.f32 %v203, %v1906
  %v1908 = vand.u32 %v1907, 4294901760
  %1909 = vmatpush1.msra.mxu0 %v1908
  %1910 = vmatprep.subr.mxu0 0.0
  %v1911 = vand.u32 %v202, 4294901760
  %v1912 = vsub.f32 %v202, %v1911
  %v1913 = vand.u32 %v1912, 4294901760
  %1914 = vmatpush1.msra.mxu0 %v1913
  %1915 = vmatprep.subr.mxu0 0.0
  %v1916 = vand.u32 %v201, 4294901760
  %v1917 = vsub.f32 %v201, %v1916
  %v1918 = vand.u32 %v1917, 4294901760
  %1919 = vmatpush1.msra.mxu0 %v1918
  %1920 = vmatprep.subr.mxu0 0.0
  %v1921 = vand.u32 %v200, 4294901760
  %v1922 = vsub.f32 %v200, %v1921
  %v1923 = vand.u32 %v1922, 4294901760
  %1924 = vmatpush1.msra.mxu0 %v1923
  %1925 = vmatprep.subr.mxu0 0.0
  %v1926 = vand.u32 %v199, 4294901760
  %v1927 = vsub.f32 %v199, %v1926
  %v1928 = vand.u32 %v1927, 4294901760
  %1929 = vmatpush1.msra.mxu0 %v1928
  %1930 = vmatprep.subr.mxu0 0.0
  %v1931 = vand.u32 %v198, 4294901760
  %v1932 = vsub.f32 %v198, %v1931
  %v1933 = vand.u32 %v1932, 4294901760
  %1934 = vmatpush1.msra.mxu0 %v1933
  %1935 = vmatprep.subr.mxu0 0.0
  %1936 = vmatpush2.msra.mxu0 0.0
  %1937 = vmatprep.subr.mxu0 0.0
  %1938 = vmatpush2.msra.mxu0 0.0
  %1939 = vmatprep.subr.mxu0 0.0
  %1940 = vmatpush2.msra.mxu0 0.0
  %1941 = vmatprep.subr.mxu0 0.0
  %1942 = vmatpush2.msra.mxu0 0.0
  %1943 = vmatprep.subr.mxu0 0.0
  %1944 = vmatpush2.msra.mxu0 0.0
  %1945 = vmatprep.subr.mxu0 0.0
  %1946 = vmatpush2.msra.mxu0 0.0
  %1947 = vmatprep.subr.mxu0 0.0
  %1948 = vmatpush2.msra.mxu0 0.0
  %1949 = vmatprep.subr.mxu0 0.0
  %1950 = vmatpush2.msra.mxu0 0.0
  %1951 = vmatprep.subr.mxu0 0.0
  %1952 = vmatpush2.msra.mxu0 0.0
  %1953 = vmatprep.subr.mxu0 0.0
  %1954 = vmatpush2.msra.mxu0 0.0
  %1955 = vmatprep.subr.mxu0 0.0
  %1956 = vmatpush2.msra.mxu0 0.0
  %1957 = vmatprep.subr.mxu0 0.0
  %1958 = vmatpush2.msra.mxu0 0.0
  %1959 = vmatprep.subr.mxu0 0.0
  %1960 = vmatpush2.msra.mxu0 0.0
  %1961 = vmatprep.subr.mxu0 0.0
  %1962 = vmatpush2.msra.mxu0 0.0
  %1963 = vmatprep.subr.mxu0 0.0
  %v1964 = vand.u32 %v215, 4294901760
  %v1965 = vsub.f32 %v215, %v1964
  %v1966 = vand.u32 %v1965, 4294901760
  %1967 = vmatpush2.msra.mxu0 %v1966
  %1968 = vmatprep.subr.mxu0 0.0
  %v1969 = vand.u32 %v214, 4294901760
  %v1970 = vsub.f32 %v214, %v1969
  %v1971 = vand.u32 %v1970, 4294901760
  %1972 = vmatpush2.msra.mxu0 %v1971
  %v1973 = vand.u32 %v224, 4294901760
  %1974 = vmatprep.mubr.f32.mxu0 %v1973
  %v1975 = vand.u32 %v152, 4294901760
  %1976 = vmatmul.mubr.f32.gmra.mxu0 %v1975
  %v1977 = vpop.f32.mrf.mxu0
  %v1978 = vadd.f32 %v1819, %v1977
  %v1979 = vpop.f32.mrf.mxu0
  %v1980 = vand.u32 %v227, 4294901760
  %1981 = vmatprep.mubr.f32.mxu0 %v1980
  %v1982 = vand.u32 %v156, 4294901760
  %1983 = vmatmul.mubr.f32.gmra.mxu0 %v1982
  %v1984 = vpop.f32.mrf.mxu0
  %v1985 = vadd.f32 %v1830, %v1984
  %v1986 = vpop.f32.mrf.mxu0
  %v1987 = vand.u32 %v230, 4294901760
  %1988 = vmatprep.mubr.f32.mxu0 %v1987
  %v1989 = vand.u32 %v160, 4294901760
  %1990 = vmatmul.mubr.f32.gmra.mxu0 %v1989
  %v1991 = vpop.f32.mrf.mxu0
  %v1992 = vadd.f32 %v1841, %v1991
  %v1993 = vpop.f32.mrf.mxu0
  %v1994 = vand.u32 %v233, 4294901760
  %1995 = vmatprep.mubr.f32.mxu0 %v1994
  %v1996 = vand.u32 %v164, 4294901760
  %1997 = vmatmul.mubr.f32.gmra.mxu0 %v1996
  %v1998 = vpop.f32.mrf.mxu0
  %v1999 = vadd.f32 %v1852, %v1998
  %v2000 = vpop.f32.mrf.mxu0
  %2001 = vdwg.mxu0
  %2002 = vmatprep.subr.mxu0 0.0
  %v2003 = vand.u32 %v213, 4294901760
  %2004 = vmatpush1.msra.mxu0 %v2003
  %2005 = vmatprep.subr.mxu0 0.0
  %v2006 = vand.u32 %v212, 4294901760
  %2007 = vmatpush1.msra.mxu0 %v2006
  %2008 = vmatprep.subr.mxu0 0.0
  %v2009 = vand.u32 %v211, 4294901760
  %2010 = vmatpush1.msra.mxu0 %v2009
  %2011 = vmatprep.subr.mxu0 0.0
  %v2012 = vand.u32 %v210, 4294901760
  %2013 = vmatpush1.msra.mxu0 %v2012
  %2014 = vmatprep.subr.mxu0 0.0
  %v2015 = vand.u32 %v209, 4294901760
  %2016 = vmatpush1.msra.mxu0 %v2015
  %2017 = vmatprep.subr.mxu0 0.0
  %v2018 = vand.u32 %v208, 4294901760
  %2019 = vmatpush1.msra.mxu0 %v2018
  %2020 = vmatprep.subr.mxu0 0.0
  %v2021 = vand.u32 %v207, 4294901760
  %2022 = vmatpush1.msra.mxu0 %v2021
  %2023 = vmatprep.subr.mxu0 0.0
  %v2024 = vand.u32 %v206, 4294901760
  %2025 = vmatpush1.msra.mxu0 %v2024
  %2026 = vmatprep.subr.mxu0 0.0
  %v2027 = vand.u32 %v205, 4294901760
  %2028 = vmatpush1.msra.mxu0 %v2027
  %2029 = vmatprep.subr.mxu0 0.0
  %v2030 = vand.u32 %v204, 4294901760
  %2031 = vmatpush1.msra.mxu0 %v2030
  %2032 = vmatprep.subr.mxu0 0.0
  %v2033 = vand.u32 %v203, 4294901760
  %2034 = vmatpush1.msra.mxu0 %v2033
  %2035 = vmatprep.subr.mxu0 0.0
  %v2036 = vand.u32 %v202, 4294901760
  %2037 = vmatpush1.msra.mxu0 %v2036
  %2038 = vmatprep.subr.mxu0 0.0
  %v2039 = vand.u32 %v201, 4294901760
  %2040 = vmatpush1.msra.mxu0 %v2039
  %2041 = vmatprep.subr.mxu0 0.0
  %v2042 = vand.u32 %v200, 4294901760
  %2043 = vmatpush1.msra.mxu0 %v2042
  %2044 = vmatprep.subr.mxu0 0.0
  %v2045 = vand.u32 %v199, 4294901760
  %2046 = vmatpush1.msra.mxu0 %v2045
  %2047 = vmatprep.subr.mxu0 0.0
  %v2048 = vand.u32 %v198, 4294901760
  %2049 = vmatpush1.msra.mxu0 %v2048
  %2050 = vmatprep.subr.mxu0 0.0
  %2051 = vmatpush2.msra.mxu0 0.0
  %2052 = vmatprep.subr.mxu0 0.0
  %2053 = vmatpush2.msra.mxu0 0.0
  %2054 = vmatprep.subr.mxu0 0.0
  %2055 = vmatpush2.msra.mxu0 0.0
  %2056 = vmatprep.subr.mxu0 0.0
  %2057 = vmatpush2.msra.mxu0 0.0
  %2058 = vmatprep.subr.mxu0 0.0
  %2059 = vmatpush2.msra.mxu0 0.0
  %2060 = vmatprep.subr.mxu0 0.0
  %2061 = vmatpush2.msra.mxu0 0.0
  %2062 = vmatprep.subr.mxu0 0.0
  %2063 = vmatpush2.msra.mxu0 0.0
  %2064 = vmatprep.subr.mxu0 0.0
  %2065 = vmatpush2.msra.mxu0 0.0
  %2066 = vmatprep.subr.mxu0 0.0
  %2067 = vmatpush2.msra.mxu0 0.0
  %2068 = vmatprep.subr.mxu0 0.0
  %2069 = vmatpush2.msra.mxu0 0.0
  %2070 = vmatprep.subr.mxu0 0.0
  %2071 = vmatpush2.msra.mxu0 0.0
  %2072 = vmatprep.subr.mxu0 0.0
  %2073 = vmatpush2.msra.mxu0 0.0
  %2074 = vmatprep.subr.mxu0 0.0
  %2075 = vmatpush2.msra.mxu0 0.0
  %2076 = vmatprep.subr.mxu0 0.0
  %2077 = vmatpush2.msra.mxu0 0.0
  %2078 = vmatprep.subr.mxu0 0.0
  %v2079 = vand.u32 %v215, 4294901760
  %2080 = vmatpush2.msra.mxu0 %v2079
  %2081 = vmatprep.subr.mxu0 0.0
  %v2082 = vand.u32 %v214, 4294901760
  %2083 = vmatpush2.msra.mxu0 %v2082
  %v2084 = vand.u32 %v224, 4294901760
  %2085 = vmatprep.mubr.f32.mxu0 %v2084
  %v2086 = vand.u32 %v152, 4294901760
  %2087 = vmatmul.mubr.f32.gmra.mxu0 %v2086
  %v2088 = vpop.f32.mrf.mxu0
  %v2089 = vadd.f32 %v1978, %v2088
  %v2090 = vpop.f32.mrf.mxu0
  %v2091 = vand.u32 %v227, 4294901760
  %2092 = vmatprep.mubr.f32.mxu0 %v2091
  %v2093 = vand.u32 %v156, 4294901760
  %2094 = vmatmul.mubr.f32.gmra.mxu0 %v2093
  %v2095 = vpop.f32.mrf.mxu0
  %v2096 = vadd.f32 %v1985, %v2095
  %v2097 = vpop.f32.mrf.mxu0
  %v2098 = vand.u32 %v230, 4294901760
  %2099 = vmatprep.mubr.f32.mxu0 %v2098
  %v2100 = vand.u32 %v160, 4294901760
  %2101 = vmatmul.mubr.f32.gmra.mxu0 %v2100
  %v2102 = vpop.f32.mrf.mxu0
  %v2103 = vadd.f32 %v1992, %v2102
  %v2104 = vpop.f32.mrf.mxu0
  %v2105 = vand.u32 %v233, 4294901760
  %2106 = vmatprep.mubr.f32.mxu0 %v2105
  %v2107 = vand.u32 %v164, 4294901760
  %2108 = vmatmul.mubr.f32.gmra.mxu0 %v2107
  %v2109 = vpop.f32.mrf.mxu0
  %v2110 = vadd.f32 %v1999, %v2109
  %v2111 = vpop.f32.mrf.mxu0
  %2112 = vdwg.mxu0
  %v2113 = vtanh.pop %v2089
  %v2114 = vtanh.pop %v2096
  %v2115 = vtanh.pop %v2103
  %v2116 = vtanh.pop %v2110
  %vm2117 = vcmask 64512
  %2118 = vst.msk [vmem:[#allocation2] sm:$0xff] %vm2117, 0.0
  %2119 = vst.msk [vmem:[#allocation2 + $0x10] sm:$0xff] %vm2117, 0.0
  %2120 = vst.msk [vmem:[#allocation2 + $0x20] sm:$0xff] %vm2117, 0.0
  %2121 = vst.msk [vmem:[#allocation2 + $0x30] sm:$0xff] %vm2117, 0.0
  %2122 = vst.msk [vmem:[#allocation2 + $0x40] sm:$0xff] %vm2117, 0.0
  %2123 = vst.msk [vmem:[#allocation2 + $0x50] sm:$0xff] %vm2117, 0.0
  %vm2124 = vcmask 58368
  %2125 = vst.msk [vmem:[#allocation2 + $0x60] sm:$0x3] %vm2124, 0.0
  %vm2126 = vcmask 130112
  %2127 = vst.msk [vmem:[#allocation2 + $0x8] sm:$0xff] %vm2126, 0.0
  %2128 = vst.msk [vmem:[#allocation2 + $0x18] sm:$0xff] %vm2126, 0.0
  %2129 = vst.msk [vmem:[#allocation2 + $0x28] sm:$0xff] %vm2126, 0.0
  %2130 = vst.msk [vmem:[#allocation2 + $0x38] sm:$0xff] %vm2126, 0.0
  %2131 = vst.msk [vmem:[#allocation2 + $0x48] sm:$0xff] %vm2126, 0.0
  %2132 = vst.msk [vmem:[#allocation2 + $0x58] sm:$0xff] %vm2126, 0.0
  %vm2133 = vcmask 123968
  %2134 = vst.msk [vmem:[#allocation2 + $0x68] sm:$0x3] %vm2133, 0.0
  %v2135 = vlaneseq
  %vm2136 = vcmp.ge.s32.totalorder %v2135, 0
  %vm2137 = vcmp.lt.s32.totalorder %v2135, 144
  %vm2138 = vmand %vm2136, %vm2137
  %s2139 = scalar_lea.vmem [#allocation2], 7
  %2140 = vst.msk [vmem:[%s2139] ss:$8 sm:$0x3] %vm2138, 0.0
  %2141 = vst.msk [vmem:[%s2139] ss:$8 sm:$0x0] %vm2138, 0.0
  %s2142 = scalar_lea.vmem [#allocation2], 48
  %2143 = vst.msk [vmem:[%s2142] ss:$8 sm:$0x3] %vm2138, 0.0
  %2144 = vst.msk [vmem:[%s2142] ss:$8 sm:$0x0] %vm2138, 0.0
  %2147 = vrot.lane.b32.xlu0 %v2113, 8
  %v2148 = vpop.permute.xlu0 %2147
  %2149 = vrot.lane.b32.xlu0 %v2114, 8
  %v2150 = vpop.permute.xlu0 %2149
  %vm2153 = vcmask 1047616
  %2154 = vst.msk [vmem:[#allocation2 + $0x10] sm:$0xff] %vm2153, %v2148
  %2155 = vst.msk [vmem:[#allocation2 + $0x18] sm:$0xff] %vm2117, %v2148
  %2156 = vst.msk [vmem:[#allocation2 + $0x20] sm:$0xff] %vm2153, %v2150
  %2157 = vst.msk [vmem:[#allocation2 + $0x28] sm:$0xff] %vm2117, %v2150
  %s2158 = scalar_lea.vmem [#allocation2], 64
  %2159 = vst.msk [vmem:[%s2158] ss:$8 sm:$0x3] %vm2138, 0.0
  %2160 = vst.msk [vmem:[%s2158] ss:$8 sm:$0x0] %vm2138, 0.0
  %s2161 = scalar_lea.vmem [#allocation2], 97
  %2162 = vst.msk [vmem:[%s2161] ss:$8 sm:$0x3] %vm2138, 0.0
  %2163 = vst.msk [vmem:[%s2161] ss:$8 sm:$0x0] %vm2138, 0.0
  %vm2166 = vcmask 1040384
  %v2167 = vrot.slane %v2115, 7
  %v2168 = vrot.slane %v2116, 7
  %v2169 = vsel %vm2166, %v2167, %v2168
  %2170 = vrot.lane.b32.xlu0 %v2167, 8
  %v2171 = vpop.permute.xlu0 %2170
  %2172 = vrot.lane.b32.xlu0 %v2169, 8
  %v2173 = vpop.permute.xlu0 %2172
  %2174 = vrot.lane.b32.xlu0 %v2168, 8
  %v2175 = vpop.permute.xlu0 %2174
  %vm2179 = vcmask 1047617
  %2180 = vst.msk [vmem:[#allocation2 + $0x40] sm:$0xfe] %vm2179, %v2171
  %vm2181 = vcmask 64513
  %2182 = vst.msk [vmem:[#allocation2 + $0x48] sm:$0xfe] %vm2181, %v2171
  %2183 = vst.msk [vmem:[#allocation2 + $0x50] sm:$0xff] %vm2153, %v2173
  %2184 = vst.msk [vmem:[#allocation2 + $0x58] sm:$0xff] %vm2117, %v2173
  %vm2185 = vcmask 1040448
  %2186 = vst.msk [vmem:[#allocation2 + $0x60] sm:$0x1] %vm2185, %v2175
  %vm2187 = vcmask 57344
  %2188 = vst.msk [vmem:[#allocation2 + $0x68] sm:$0x1] %vm2187, %v2175
  %v2189 = vld [vmem:[#allocation2] sm:$0x80]
  %v2190 = vld [vmem:[#allocation2 + $0x8] sm:$0x80]
  %v2191 = vld [vmem:[#allocation2 + $0x10] sm:$0xff]
  %v2192 = vld [vmem:[#allocation2 + $0x18] sm:$0xff]
  %v2193 = vld [vmem:[#allocation2 + $0x20] sm:$0x7f]
  %v2194 = vld [vmem:[#allocation2 + $0x28] sm:$0x7f]
  %v2201 = vrot.slane %v2189, 7
  %v2202 = vrot.slane %v2191, 7
  %v2203 = vsel %vm2166, %v2201, %v2202
  %v2204 = vrot.slane %v2190, 7
  %v2205 = vrot.slane %v2192, 7
  %v2206 = vsel %vm2166, %v2204, %v2205
  %v2207 = vrot.slane %v2193, 7
  %v2208 = vsel %vm2166, %v2202, %v2207
  %v2209 = vrot.slane %v2194, 7
  %v2210 = vsel %vm2166, %v2205, %v2209
  %2215 = vst [vmem:[#allocation5] sm:$0xff] %v2203
  %2216 = vst.msk [vmem:[#allocation5 + $0x8] sm:$0xff] %vm88, %v2206
  %2217 = vst [vmem:[#allocation5 + $0x20] sm:$0xff] %v2208
  %2218 = vst.msk [vmem:[#allocation5 + $0x28] sm:$0xff] %vm88, %v2210
  %v2219 = vld [vmem:[#allocation2 + $0x10] sm:$0xff]
  %v2220 = vld [vmem:[#allocation2 + $0x18] sm:$0xff]
  %v2221 = vld [vmem:[#allocation2 + $0x20] sm:$0xff]
  %v2222 = vld [vmem:[#allocation2 + $0x28] sm:$0xff]
  %2227 = vrot.lane.b32.xlu0 %v2219, 16
  %v2228 = vpop.permute.xlu0 %2227
  %2229 = vrot.lane.b32.xlu0 %v2220, 16
  %v2230 = vpop.permute.xlu0 %2229
  %2231 = vrot.lane.b32.xlu0 %v2221, 16
  %v2232 = vpop.permute.xlu0 %2231
  %2233 = vrot.lane.b32.xlu0 %v2222, 16
  %v2234 = vpop.permute.xlu0 %2233
  %v2235 = vsel %vm88, %v2228, %v2230
  %v2236 = vsel %vm88, %v2232, %v2234
  %vm2241 = vcmask 1047680
  %2242 = vst.msk [vmem:[#allocation5 + $0x8] sm:$0xff] %vm2241, %v2228
  %2243 = vst.msk [vmem:[#allocation5 + $0x10] sm:$0xff] %vm43, %v2235
  %2244 = vst.msk [vmem:[#allocation5 + $0x28] sm:$0xff] %vm2241, %v2232
  %2245 = vst.msk [vmem:[#allocation5 + $0x30] sm:$0xff] %vm43, %v2236
  %v2246 = vld [vmem:[#allocation2 + $0x10] sm:$0xfe]
  %v2247 = vld [vmem:[#allocation2 + $0x18] sm:$0xfe]
  %v2248 = vld [vmem:[#allocation2 + $0x20] sm:$0xff]
  %v2249 = vld [vmem:[#allocation2 + $0x28] sm:$0xff]
  %v2250 = vld [vmem:[#allocation2 + $0x30] sm:$0x1]
  %v2251 = vld [vmem:[#allocation2 + $0x38] sm:$0x1]
  %vm2258 = vcmask 1046528
  %v2259 = vrot.slane %v2246, 1
  %v2260 = vrot.slane %v2248, 1
  %v2261 = vsel %vm2258, %v2259, %v2260
  %v2262 = vrot.slane %v2247, 1
  %v2263 = vrot.slane %v2249, 1
  %v2264 = vsel %vm2258, %v2262, %v2263
  %v2265 = vrot.slane %v2250, 1
  %v2266 = vsel %vm2258, %v2260, %v2265
  %v2267 = vrot.slane %v2251, 1
  %v2268 = vsel %vm2258, %v2263, %v2267
  %2269 = vrot.lane.b32.xlu0 %v2261, 32
  %v2270 = vpop.permute.xlu0 %2269
  %2271 = vrot.lane.b32.xlu0 %v2264, 32
  %v2272 = vpop.permute.xlu0 %2271
  %2273 = vrot.lane.b32.xlu0 %v2266, 32
  %v2274 = vpop.permute.xlu0 %2273
  %2275 = vrot.lane.b32.xlu0 %v2268, 32
  %v2276 = vpop.permute.xlu0 %2275
  %v2277 = vsel %vm43, %v2270, %v2272
  %v2278 = vsel %vm43, %v2274, %v2276
  %vm2283 = vcmask 1047808
  %2284 = vst.msk [vmem:[#allocation5 + $0x10] sm:$0xff] %vm2283, %v2270
  %vm2285 = vcmask 392192
  %2286 = vst.msk [vmem:[#allocation5 + $0x18] sm:$0xff] %vm2285, %v2277
  %2287 = vst.msk [vmem:[#allocation5 + $0x30] sm:$0xff] %vm2283, %v2274
  %2288 = vst.msk [vmem:[#allocation5 + $0x38] sm:$0xff] %vm2285, %v2278
  %v2289 = vld [vmem:[#allocation2 + $0x40] sm:$0xff]
  %v2290 = vld [vmem:[#allocation2 + $0x48] sm:$0xff]
  %v2291 = vld [vmem:[#allocation2 + $0x50] sm:$0xff]
  %v2292 = vld [vmem:[#allocation2 + $0x58] sm:$0xff]
  %2293 = vst [vmem:[#allocation5 + $0x40] sm:$0xff] %v2289
  %2294 = vst.msk [vmem:[#allocation5 + $0x48] sm:$0xff] %vm88, %v2290
  %2295 = vst [vmem:[#allocation5 + $0x60] sm:$0xff] %v2291
  %2296 = vst.msk [vmem:[#allocation5 + $0x68] sm:$0xff] %vm88, %v2292
  %v2297 = vld [vmem:[#allocation2 + $0x40] sm:$0xfe]
  %v2298 = vld [vmem:[#allocation2 + $0x48] sm:$0xfe]
  %v2299 = vld [vmem:[#allocation2 + $0x50] sm:$0xff]
  %v2300 = vld [vmem:[#allocation2 + $0x58] sm:$0xff]
  %v2301 = vld [vmem:[#allocation2 + $0x60] sm:$0x1]
  %v2302 = vld [vmem:[#allocation2 + $0x68] sm:$0x1]
  %v2309 = vrot.slane %v2297, 1
  %v2310 = vrot.slane %v2299, 1
  %v2311 = vsel %vm2258, %v2309, %v2310
  %v2312 = vrot.slane %v2298, 1
  %v2313 = vrot.slane %v2300, 1
  %v2314 = vsel %vm2258, %v2312, %v2313
  %v2315 = vrot.slane %v2301, 1
  %v2316 = vsel %vm2258, %v2310, %v2315
  %v2317 = vrot.slane %v2302, 1
  %v2318 = vsel %vm2258, %v2313, %v2317
  %2319 = vrot.lane.b32.xlu0 %v2311, 16
  %v2320 = vpop.permute.xlu0 %2319
  %2321 = vrot.lane.b32.xlu0 %v2314, 16
  %v2322 = vpop.permute.xlu0 %2321
  %2323 = vrot.lane.b32.xlu0 %v2316, 16
  %v2324 = vpop.permute.xlu0 %2323
  %2325 = vrot.lane.b32.xlu0 %v2318, 16
  %v2326 = vpop.permute.xlu0 %2325
  %v2327 = vsel %vm88, %v2320, %v2322
  %v2328 = vsel %vm88, %v2324, %v2326
  %2333 = vst.msk [vmem:[#allocation5 + $0x48] sm:$0xff] %vm2241, %v2320
  %2334 = vst.msk [vmem:[#allocation5 + $0x50] sm:$0xff] %vm43, %v2327
  %2335 = vst.msk [vmem:[#allocation5 + $0x68] sm:$0xff] %vm2241, %v2324
  %2336 = vst.msk [vmem:[#allocation5 + $0x70] sm:$0xff] %vm43, %v2328
  %v2337 = vld [vmem:[#allocation2 + $0x40] sm:$0xfc]
  %v2338 = vld [vmem:[#allocation2 + $0x48] sm:$0xfc]
  %v2339 = vld [vmem:[#allocation2 + $0x50] sm:$0xff]
  %v2340 = vld [vmem:[#allocation2 + $0x58] sm:$0xff]
  %v2341 = vld [vmem:[#allocation2 + $0x60] sm:$0x3]
  %v2342 = vld [vmem:[#allocation2 + $0x68] sm:$0x3]
  %vm2349 = vcmask 1045504
  %v2350 = vrot.slane %v2337, 2
  %v2351 = vrot.slane %v2339, 2
  %v2352 = vsel %vm2349, %v2350, %v2351
  %v2353 = vrot.slane %v2338, 2
  %v2354 = vrot.slane %v2340, 2
  %v2355 = vsel %vm2349, %v2353, %v2354
  %v2356 = vrot.slane %v2341, 2
  %v2357 = vsel %vm2349, %v2351, %v2356
  %v2358 = vrot.slane %v2342, 2
  %v2359 = vsel %vm2349, %v2354, %v2358
  %2360 = vrot.lane.b32.xlu0 %v2352, 32
  %v2361 = vpop.permute.xlu0 %2360
  %2362 = vrot.lane.b32.xlu0 %v2355, 32
  %v2363 = vpop.permute.xlu0 %2362
  %2364 = vrot.lane.b32.xlu0 %v2357, 32
  %v2365 = vpop.permute.xlu0 %2364
  %2366 = vrot.lane.b32.xlu0 %v2359, 32
  %v2367 = vpop.permute.xlu0 %2366
  %v2368 = vsel %vm43, %v2361, %v2363
  %v2369 = vsel %vm43, %v2365, %v2367
  %2374 = vst.msk [vmem:[#allocation5 + $0x50] sm:$0xff] %vm2283, %v2361
  %2375 = vst.msk [vmem:[#allocation5 + $0x58] sm:$0xff] %vm2285, %v2368
  %2376 = vst.msk [vmem:[#allocation5 + $0x70] sm:$0xff] %vm2283, %v2365
  %2377 = vst.msk [vmem:[#allocation5 + $0x78] sm:$0xff] %vm2285, %v2369
  %v2378 = vld [vmem:[#allocation5] sm:$0xff]
  %v2379 = vld [vmem:[#allocation5 + $0x8] sm:$0xff]
  %v2380 = vld [vmem:[#allocation5 + $0x10] sm:$0xff]
  %v2381 = vld [vmem:[#allocation5 + $0x18] sm:$0xff]
  %v2382 = vld [vmem:[#allocation5 + $0x20] sm:$0xff]
  %v2383 = vld [vmem:[#allocation5 + $0x28] sm:$0xff]
  %v2384 = vld [vmem:[#allocation5 + $0x30] sm:$0xff]
  %v2385 = vld [vmem:[#allocation5 + $0x38] sm:$0xff]
  %v2386 = vld [vmem:[#allocation5 + $0x40] sm:$0xff]
  %v2387 = vld [vmem:[#allocation5 + $0x48] sm:$0xff]
  %v2388 = vld [vmem:[#allocation5 + $0x50] sm:$0xff]
  %v2389 = vld [vmem:[#allocation5 + $0x58] sm:$0xff]
  %v2390 = vld [vmem:[#allocation5 + $0x60] sm:$0xff]
  %v2391 = vld [vmem:[#allocation5 + $0x68] sm:$0xff]
  %v2392 = vld [vmem:[#allocation5 + $0x70] sm:$0xff]
  %v2393 = vld [vmem:[#allocation5 + $0x78] sm:$0xff]
  %v2394 = vld [vmem:[%s3] sm:$0xff]
  %v2395 = vld [vmem:[%s3 + $0x8] sm:$0xff]
  %v2396 = vld [vmem:[%s3 + $0x10] sm:$0xff]
  %v2397 = vld [vmem:[%s3 + $0x18] sm:$0xff]
  %v2398 = vld [vmem:[%s3 + $0x20] sm:$0xff]
  %v2399 = vld [vmem:[%s3 + $0x28] sm:$0xff]
  %v2400 = vld [vmem:[%s3 + $0x30] sm:$0xff]
  %v2401 = vld [vmem:[%s3 + $0x38] sm:$0xff]
  %v2402 = vld [vmem:[%s3 + $0x40] sm:$0xff]
  %v2403 = vld [vmem:[%s3 + $0x48] sm:$0xff]
  %v2404 = vld [vmem:[%s3 + $0x50] sm:$0xff]
  %v2405 = vld [vmem:[%s3 + $0x58] sm:$0xff]
  %v2406 = vld [vmem:[%s3 + $0x60] sm:$0xff]
  %v2407 = vld [vmem:[%s3 + $0x68] sm:$0xff]
  %v2408 = vld [vmem:[%s3 + $0x70] sm:$0xff]
  %v2409 = vld [vmem:[%s3 + $0x78] sm:$0xff]
  %v2410 = vld [vmem:[%s3 + $0x80] sm:$0xff]
  %v2411 = vld [vmem:[%s3 + $0x88] sm:$0xff]
  %v2412 = vld [vmem:[%s3 + $0x90] sm:$0xff]
  %v2413 = vld [vmem:[%s3 + $0x98] sm:$0xff]
  %v2414 = vld [vmem:[%s3 + $0xa0] sm:$0xff]
  %v2415 = vld [vmem:[%s3 + $0xa8] sm:$0xff]
  %v2416 = vld [vmem:[%s3 + $0xb0] sm:$0xff]
  %v2417 = vld [vmem:[%s3 + $0xb8] sm:$0xff]
  %v2418 = vld [vmem:[%s3 + $0xc0] sm:$0xff]
  %v2419 = vld [vmem:[%s3 + $0xc8] sm:$0xff]
  %v2420 = vld [vmem:[%s3 + $0xd0] sm:$0xff]
  %v2421 = vld [vmem:[%s3 + $0xd8] sm:$0xff]
  %v2422 = vld [vmem:[%s3 + $0xe0] sm:$0xff]
  %v2423 = vld [vmem:[%s3 + $0xe8] sm:$0xff]
  %v2424 = vld [vmem:[%s3 + $0xf0] sm:$0xff]
  %v2425 = vld [vmem:[%s3 + $0xf8] sm:$0xff]
  %v2426 = vld [vmem:[%s3 + $0x100] sm:$0xff]
  %v2427 = vld [vmem:[%s3 + $0x108] sm:$0xff]
  %v2428 = vld [vmem:[%s3 + $0x110] sm:$0xff]
  %v2429 = vld [vmem:[%s3 + $0x118] sm:$0xff]
  %v2430 = vld [vmem:[%s3 + $0x120] sm:$0xff]
  %v2431 = vld [vmem:[%s3 + $0x128] sm:$0xff]
  %v2432 = vld [vmem:[%s3 + $0x130] sm:$0xff]
  %v2433 = vld [vmem:[%s3 + $0x138] sm:$0xff]
  %v2434 = vld [vmem:[%s3 + $0x140] sm:$0xff]
  %v2435 = vld [vmem:[%s3 + $0x148] sm:$0xff]
  %v2436 = vld [vmem:[%s3 + $0x150] sm:$0xff]
  %v2437 = vld [vmem:[%s3 + $0x158] sm:$0xff]
  %v2438 = vld [vmem:[%s3 + $0x160] sm:$0xff]
  %v2439 = vld [vmem:[%s3 + $0x168] sm:$0xff]
  %v2440 = vld [vmem:[%s3 + $0x170] sm:$0xff]
  %v2441 = vld [vmem:[%s3 + $0x178] sm:$0xff]
  %v2442 = vld [vmem:[%s3 + $0x180] sm:$0xff]
  %v2443 = vld [vmem:[%s3 + $0x188] sm:$0xff]
  %v2444 = vld [vmem:[%s3 + $0x190] sm:$0xff]
  %v2445 = vld [vmem:[%s3 + $0x198] sm:$0xff]
  %v2446 = vld [vmem:[%s3 + $0x1a0] sm:$0xff]
  %v2447 = vld [vmem:[%s3 + $0x1a8] sm:$0xff]
  %v2448 = vld [vmem:[%s4] sm:$0x1]
  %v2450 = vlaneseq
  %v2451 = vshrl.u32 %v2450, 7
  %v2452 = vsub.s32 0, %v2451
  %v2453 = vrot.slane %v2448, %v2452
  %v2456 = vsel %vm2285, %v2381, 0
  %v2459 = vsel %vm2285, %v2385, 0
  %v2462 = vsel %vm2285, %v2389, 0
  %v2465 = vsel %vm2285, %v2393, 0
  %2467 = vmatprep.subr.mxu0 0.0
  %v2468 = vand.u32 %v2409, 4294901760
  %2469 = vmatpush1.msra.mxu0 %v2468
  %2470 = vmatprep.subr.mxu0 0.0
  %v2471 = vand.u32 %v2408, 4294901760
  %2472 = vmatpush1.msra.mxu0 %v2471
  %2473 = vmatprep.subr.mxu0 0.0
  %v2474 = vand.u32 %v2407, 4294901760
  %2475 = vmatpush1.msra.mxu0 %v2474
  %2476 = vmatprep.subr.mxu0 0.0
  %v2477 = vand.u32 %v2406, 4294901760
  %2478 = vmatpush1.msra.mxu0 %v2477
  %2479 = vmatprep.subr.mxu0 0.0
  %v2480 = vand.u32 %v2405, 4294901760
  %2481 = vmatpush1.msra.mxu0 %v2480
  %2482 = vmatprep.subr.mxu0 0.0
  %v2483 = vand.u32 %v2404, 4294901760
  %2484 = vmatpush1.msra.mxu0 %v2483
  %2485 = vmatprep.subr.mxu0 0.0
  %v2486 = vand.u32 %v2403, 4294901760
  %2487 = vmatpush1.msra.mxu0 %v2486
  %2488 = vmatprep.subr.mxu0 0.0
  %v2489 = vand.u32 %v2402, 4294901760
  %2490 = vmatpush1.msra.mxu0 %v2489
  %2491 = vmatprep.subr.mxu0 0.0
  %v2492 = vand.u32 %v2401, 4294901760
  %2493 = vmatpush1.msra.mxu0 %v2492
  %2494 = vmatprep.subr.mxu0 0.0
  %v2495 = vand.u32 %v2400, 4294901760
  %2496 = vmatpush1.msra.mxu0 %v2495
  %2497 = vmatprep.subr.mxu0 0.0
  %v2498 = vand.u32 %v2399, 4294901760
  %2499 = vmatpush1.msra.mxu0 %v2498
  %2500 = vmatprep.subr.mxu0 0.0
  %v2501 = vand.u32 %v2398, 4294901760
  %2502 = vmatpush1.msra.mxu0 %v2501
  %2503 = vmatprep.subr.mxu0 0.0
  %v2504 = vand.u32 %v2397, 4294901760
  %2505 = vmatpush1.msra.mxu0 %v2504
  %2506 = vmatprep.subr.mxu0 0.0
  %v2507 = vand.u32 %v2396, 4294901760
  %2508 = vmatpush1.msra.mxu0 %v2507
  %2509 = vmatprep.subr.mxu0 0.0
  %v2510 = vand.u32 %v2395, 4294901760
  %2511 = vmatpush1.msra.mxu0 %v2510
  %2512 = vmatprep.subr.mxu0 0.0
  %v2513 = vand.u32 %v2394, 4294901760
  %2514 = vmatpush1.msra.mxu0 %v2513
  %2515 = vmatprep.subr.mxu0 0.0
  %v2516 = vand.u32 %v2425, 4294901760
  %2517 = vmatpush2.msra.mxu0 %v2516
  %2518 = vmatprep.subr.mxu0 0.0
  %v2519 = vand.u32 %v2424, 4294901760
  %2520 = vmatpush2.msra.mxu0 %v2519
  %2521 = vmatprep.subr.mxu0 0.0
  %v2522 = vand.u32 %v2423, 4294901760
  %2523 = vmatpush2.msra.mxu0 %v2522
  %2524 = vmatprep.subr.mxu0 0.0
  %v2525 = vand.u32 %v2422, 4294901760
  %2526 = vmatpush2.msra.mxu0 %v2525
  %2527 = vmatprep.subr.mxu0 0.0
  %v2528 = vand.u32 %v2421, 4294901760
  %2529 = vmatpush2.msra.mxu0 %v2528
  %2530 = vmatprep.subr.mxu0 0.0
  %v2531 = vand.u32 %v2420, 4294901760
  %2532 = vmatpush2.msra.mxu0 %v2531
  %2533 = vmatprep.subr.mxu0 0.0
  %v2534 = vand.u32 %v2419, 4294901760
  %2535 = vmatpush2.msra.mxu0 %v2534
  %2536 = vmatprep.subr.mxu0 0.0
  %v2537 = vand.u32 %v2418, 4294901760
  %2538 = vmatpush2.msra.mxu0 %v2537
  %2539 = vmatprep.subr.mxu0 0.0
  %v2540 = vand.u32 %v2417, 4294901760
  %2541 = vmatpush2.msra.mxu0 %v2540
  %2542 = vmatprep.subr.mxu0 0.0
  %v2543 = vand.u32 %v2416, 4294901760
  %2544 = vmatpush2.msra.mxu0 %v2543
  %2545 = vmatprep.subr.mxu0 0.0
  %v2546 = vand.u32 %v2415, 4294901760
  %2547 = vmatpush2.msra.mxu0 %v2546
  %2548 = vmatprep.subr.mxu0 0.0
  %v2549 = vand.u32 %v2414, 4294901760
  %2550 = vmatpush2.msra.mxu0 %v2549
  %2551 = vmatprep.subr.mxu0 0.0
  %v2552 = vand.u32 %v2413, 4294901760
  %2553 = vmatpush2.msra.mxu0 %v2552
  %2554 = vmatprep.subr.mxu0 0.0
  %v2555 = vand.u32 %v2412, 4294901760
  %2556 = vmatpush2.msra.mxu0 %v2555
  %2557 = vmatprep.subr.mxu0 0.0
  %v2558 = vand.u32 %v2411, 4294901760
  %2559 = vmatpush2.msra.mxu0 %v2558
  %2560 = vmatprep.subr.mxu0 0.0
  %v2561 = vand.u32 %v2410, 4294901760
  %2562 = vmatpush2.msra.mxu0 %v2561
  %v2563 = vand.u32 %v2379, 4294901760
  %v2564 = vsub.f32 %v2379, %v2563
  %v2565 = vand.u32 %v2564, 4294901760
  %v2566 = vsub.f32 %v2564, %v2565
  %v2567 = vand.u32 %v2566, 4294901760
  %2568 = vmatprep.mubr.f32.mxu0 %v2567
  %v2569 = vand.u32 %v2378, 4294901760
  %v2570 = vsub.f32 %v2378, %v2569
  %v2571 = vand.u32 %v2570, 4294901760
  %v2572 = vsub.f32 %v2570, %v2571
  %v2573 = vand.u32 %v2572, 4294901760
  %2574 = vmatmul.mubr.f32.gmra.mxu0 %v2573
  %v2575 = vpop.f32.mrf.mxu0
  %v2576 = vadd.f32 %v2453, %v2575
  %v2577 = vpop.f32.mrf.mxu0
  %v2578 = vand.u32 %v2383, 4294901760
  %v2579 = vsub.f32 %v2383, %v2578
  %v2580 = vand.u32 %v2579, 4294901760
  %v2581 = vsub.f32 %v2579, %v2580
  %v2582 = vand.u32 %v2581, 4294901760
  %2583 = vmatprep.mubr.f32.mxu0 %v2582
  %v2584 = vand.u32 %v2382, 4294901760
  %v2585 = vsub.f32 %v2382, %v2584
  %v2586 = vand.u32 %v2585, 4294901760
  %v2587 = vsub.f32 %v2585, %v2586
  %v2588 = vand.u32 %v2587, 4294901760
  %2589 = vmatmul.mubr.f32.gmra.mxu0 %v2588
  %v2590 = vpop.f32.mrf.mxu0
  %v2591 = vadd.f32 %v2453, %v2590
  %v2592 = vpop.f32.mrf.mxu0
  %v2593 = vand.u32 %v2387, 4294901760
  %v2594 = vsub.f32 %v2387, %v2593
  %v2595 = vand.u32 %v2594, 4294901760
  %v2596 = vsub.f32 %v2594, %v2595
  %v2597 = vand.u32 %v2596, 4294901760
  %2598 = vmatprep.mubr.f32.mxu0 %v2597
  %v2599 = vand.u32 %v2386, 4294901760
  %v2600 = vsub.f32 %v2386, %v2599
  %v2601 = vand.u32 %v2600, 4294901760
  %v2602 = vsub.f32 %v2600, %v2601
  %v2603 = vand.u32 %v2602, 4294901760
  %2604 = vmatmul.mubr.f32.gmra.mxu0 %v2603
  %v2605 = vpop.f32.mrf.mxu0
  %v2606 = vadd.f32 %v2453, %v2605
  %v2607 = vpop.f32.mrf.mxu0
  %v2608 = vand.u32 %v2391, 4294901760
  %v2609 = vsub.f32 %v2391, %v2608
  %v2610 = vand.u32 %v2609, 4294901760
  %v2611 = vsub.f32 %v2609, %v2610
  %v2612 = vand.u32 %v2611, 4294901760
  %2613 = vmatprep.mubr.f32.mxu0 %v2612
  %v2614 = vand.u32 %v2390, 4294901760
  %v2615 = vsub.f32 %v2390, %v2614
  %v2616 = vand.u32 %v2615, 4294901760
  %v2617 = vsub.f32 %v2615, %v2616
  %v2618 = vand.u32 %v2617, 4294901760
  %2619 = vmatmul.mubr.f32.gmra.mxu0 %v2618
  %v2620 = vpop.f32.mrf.mxu0
  %v2621 = vadd.f32 %v2453, %v2620
  %v2622 = vpop.f32.mrf.mxu0
  %2623 = vdwg.mxu0
  %2624 = vmatprep.subr.mxu0 0.0
  %v2625 = vand.u32 %v2409, 4294901760
  %v2626 = vsub.f32 %v2409, %v2625
  %v2627 = vand.u32 %v2626, 4294901760
  %v2628 = vsub.f32 %v2626, %v2627
  %v2629 = vand.u32 %v2628, 4294901760
  %2630 = vmatpush1.msra.mxu0 %v2629
  %2631 = vmatprep.subr.mxu0 0.0
  %v2632 = vand.u32 %v2408, 4294901760
  %v2633 = vsub.f32 %v2408, %v2632
  %v2634 = vand.u32 %v2633, 4294901760
  %v2635 = vsub.f32 %v2633, %v2634
  %v2636 = vand.u32 %v2635, 4294901760
  %2637 = vmatpush1.msra.mxu0 %v2636
  %2638 = vmatprep.subr.mxu0 0.0
  %v2639 = vand.u32 %v2407, 4294901760
  %v2640 = vsub.f32 %v2407, %v2639
  %v2641 = vand.u32 %v2640, 4294901760
  %v2642 = vsub.f32 %v2640, %v2641
  %v2643 = vand.u32 %v2642, 4294901760
  %2644 = vmatpush1.msra.mxu0 %v2643
  %2645 = vmatprep.subr.mxu0 0.0
  %v2646 = vand.u32 %v2406, 4294901760
  %v2647 = vsub.f32 %v2406, %v2646
  %v2648 = vand.u32 %v2647, 4294901760
  %v2649 = vsub.f32 %v2647, %v2648
  %v2650 = vand.u32 %v2649, 4294901760
  %2651 = vmatpush1.msra.mxu0 %v2650
  %2652 = vmatprep.subr.mxu0 0.0
  %v2653 = vand.u32 %v2405, 4294901760
  %v2654 = vsub.f32 %v2405, %v2653
  %v2655 = vand.u32 %v2654, 4294901760
  %v2656 = vsub.f32 %v2654, %v2655
  %v2657 = vand.u32 %v2656, 4294901760
  %2658 = vmatpush1.msra.mxu0 %v2657
  %2659 = vmatprep.subr.mxu0 0.0
  %v2660 = vand.u32 %v2404, 4294901760
  %v2661 = vsub.f32 %v2404, %v2660
  %v2662 = vand.u32 %v2661, 4294901760
  %v2663 = vsub.f32 %v2661, %v2662
  %v2664 = vand.u32 %v2663, 4294901760
  %2665 = vmatpush1.msra.mxu0 %v2664
  %2666 = vmatprep.subr.mxu0 0.0
  %v2667 = vand.u32 %v2403, 4294901760
  %v2668 = vsub.f32 %v2403, %v2667
  %v2669 = vand.u32 %v2668, 4294901760
  %v2670 = vsub.f32 %v2668, %v2669
  %v2671 = vand.u32 %v2670, 4294901760
  %2672 = vmatpush1.msra.mxu0 %v2671
  %2673 = vmatprep.subr.mxu0 0.0
  %v2674 = vand.u32 %v2402, 4294901760
  %v2675 = vsub.f32 %v2402, %v2674
  %v2676 = vand.u32 %v2675, 4294901760
  %v2677 = vsub.f32 %v2675, %v2676
  %v2678 = vand.u32 %v2677, 4294901760
  %2679 = vmatpush1.msra.mxu0 %v2678
  %2680 = vmatprep.subr.mxu0 0.0
  %v2681 = vand.u32 %v2401, 4294901760
  %v2682 = vsub.f32 %v2401, %v2681
  %v2683 = vand.u32 %v2682, 4294901760
  %v2684 = vsub.f32 %v2682, %v2683
  %v2685 = vand.u32 %v2684, 4294901760
  %2686 = vmatpush1.msra.mxu0 %v2685
  %2687 = vmatprep.subr.mxu0 0.0
  %v2688 = vand.u32 %v2400, 4294901760
  %v2689 = vsub.f32 %v2400, %v2688
  %v2690 = vand.u32 %v2689, 4294901760
  %v2691 = vsub.f32 %v2689, %v2690
  %v2692 = vand.u32 %v2691, 4294901760
  %2693 = vmatpush1.msra.mxu0 %v2692
  %2694 = vmatprep.subr.mxu0 0.0
  %v2695 = vand.u32 %v2399, 4294901760
  %v2696 = vsub.f32 %v2399, %v2695
  %v2697 = vand.u32 %v2696, 4294901760
  %v2698 = vsub.f32 %v2696, %v2697
  %v2699 = vand.u32 %v2698, 4294901760
  %2700 = vmatpush1.msra.mxu0 %v2699
  %2701 = vmatprep.subr.mxu0 0.0
  %v2702 = vand.u32 %v2398, 4294901760
  %v2703 = vsub.f32 %v2398, %v2702
  %v2704 = vand.u32 %v2703, 4294901760
  %v2705 = vsub.f32 %v2703, %v2704
  %v2706 = vand.u32 %v2705, 4294901760
  %2707 = vmatpush1.msra.mxu0 %v2706
  %2708 = vmatprep.subr.mxu0 0.0
  %v2709 = vand.u32 %v2397, 4294901760
  %v2710 = vsub.f32 %v2397, %v2709
  %v2711 = vand.u32 %v2710, 4294901760
  %v2712 = vsub.f32 %v2710, %v2711
  %v2713 = vand.u32 %v2712, 4294901760
  %2714 = vmatpush1.msra.mxu0 %v2713
  %2715 = vmatprep.subr.mxu0 0.0
  %v2716 = vand.u32 %v2396, 4294901760
  %v2717 = vsub.f32 %v2396, %v2716
  %v2718 = vand.u32 %v2717, 4294901760
  %v2719 = vsub.f32 %v2717, %v2718
  %v2720 = vand.u32 %v2719, 4294901760
  %2721 = vmatpush1.msra.mxu0 %v2720
  %2722 = vmatprep.subr.mxu0 0.0
  %v2723 = vand.u32 %v2395, 4294901760
  %v2724 = vsub.f32 %v2395, %v2723
  %v2725 = vand.u32 %v2724, 4294901760
  %v2726 = vsub.f32 %v2724, %v2725
  %v2727 = vand.u32 %v2726, 4294901760
  %2728 = vmatpush1.msra.mxu0 %v2727
  %2729 = vmatprep.subr.mxu0 0.0
  %v2730 = vand.u32 %v2394, 4294901760
  %v2731 = vsub.f32 %v2394, %v2730
  %v2732 = vand.u32 %v2731, 4294901760
  %v2733 = vsub.f32 %v2731, %v2732
  %v2734 = vand.u32 %v2733, 4294901760
  %2735 = vmatpush1.msra.mxu0 %v2734
  %2736 = vmatprep.subr.mxu0 0.0
  %v2737 = vand.u32 %v2425, 4294901760
  %v2738 = vsub.f32 %v2425, %v2737
  %v2739 = vand.u32 %v2738, 4294901760
  %v2740 = vsub.f32 %v2738, %v2739
  %v2741 = vand.u32 %v2740, 4294901760
  %2742 = vmatpush2.msra.mxu0 %v2741
  %2743 = vmatprep.subr.mxu0 0.0
  %v2744 = vand.u32 %v2424, 4294901760
  %v2745 = vsub.f32 %v2424, %v2744
  %v2746 = vand.u32 %v2745, 4294901760
  %v2747 = vsub.f32 %v2745, %v2746
  %v2748 = vand.u32 %v2747, 4294901760
  %2749 = vmatpush2.msra.mxu0 %v2748
  %2750 = vmatprep.subr.mxu0 0.0
  %v2751 = vand.u32 %v2423, 4294901760
  %v2752 = vsub.f32 %v2423, %v2751
  %v2753 = vand.u32 %v2752, 4294901760
  %v2754 = vsub.f32 %v2752, %v2753
  %v2755 = vand.u32 %v2754, 4294901760
  %2756 = vmatpush2.msra.mxu0 %v2755
  %2757 = vmatprep.subr.mxu0 0.0
  %v2758 = vand.u32 %v2422, 4294901760
  %v2759 = vsub.f32 %v2422, %v2758
  %v2760 = vand.u32 %v2759, 4294901760
  %v2761 = vsub.f32 %v2759, %v2760
  %v2762 = vand.u32 %v2761, 4294901760
  %2763 = vmatpush2.msra.mxu0 %v2762
  %2764 = vmatprep.subr.mxu0 0.0
  %v2765 = vand.u32 %v2421, 4294901760
  %v2766 = vsub.f32 %v2421, %v2765
  %v2767 = vand.u32 %v2766, 4294901760
  %v2768 = vsub.f32 %v2766, %v2767
  %v2769 = vand.u32 %v2768, 4294901760
  %2770 = vmatpush2.msra.mxu0 %v2769
  %2771 = vmatprep.subr.mxu0 0.0
  %v2772 = vand.u32 %v2420, 4294901760
  %v2773 = vsub.f32 %v2420, %v2772
  %v2774 = vand.u32 %v2773, 4294901760
  %v2775 = vsub.f32 %v2773, %v2774
  %v2776 = vand.u32 %v2775, 4294901760
  %2777 = vmatpush2.msra.mxu0 %v2776
  %2778 = vmatprep.subr.mxu0 0.0
  %v2779 = vand.u32 %v2419, 4294901760
  %v2780 = vsub.f32 %v2419, %v2779
  %v2781 = vand.u32 %v2780, 4294901760
  %v2782 = vsub.f32 %v2780, %v2781
  %v2783 = vand.u32 %v2782, 4294901760
  %2784 = vmatpush2.msra.mxu0 %v2783
  %2785 = vmatprep.subr.mxu0 0.0
  %v2786 = vand.u32 %v2418, 4294901760
  %v2787 = vsub.f32 %v2418, %v2786
  %v2788 = vand.u32 %v2787, 4294901760
  %v2789 = vsub.f32 %v2787, %v2788
  %v2790 = vand.u32 %v2789, 4294901760
  %2791 = vmatpush2.msra.mxu0 %v2790
  %2792 = vmatprep.subr.mxu0 0.0
  %v2793 = vand.u32 %v2417, 4294901760
  %v2794 = vsub.f32 %v2417, %v2793
  %v2795 = vand.u32 %v2794, 4294901760
  %v2796 = vsub.f32 %v2794, %v2795
  %v2797 = vand.u32 %v2796, 4294901760
  %2798 = vmatpush2.msra.mxu0 %v2797
  %2799 = vmatprep.subr.mxu0 0.0
  %v2800 = vand.u32 %v2416, 4294901760
  %v2801 = vsub.f32 %v2416, %v2800
  %v2802 = vand.u32 %v2801, 4294901760
  %v2803 = vsub.f32 %v2801, %v2802
  %v2804 = vand.u32 %v2803, 4294901760
  %2805 = vmatpush2.msra.mxu0 %v2804
  %2806 = vmatprep.subr.mxu0 0.0
  %v2807 = vand.u32 %v2415, 4294901760
  %v2808 = vsub.f32 %v2415, %v2807
  %v2809 = vand.u32 %v2808, 4294901760
  %v2810 = vsub.f32 %v2808, %v2809
  %v2811 = vand.u32 %v2810, 4294901760
  %2812 = vmatpush2.msra.mxu0 %v2811
  %2813 = vmatprep.subr.mxu0 0.0
  %v2814 = vand.u32 %v2414, 4294901760
  %v2815 = vsub.f32 %v2414, %v2814
  %v2816 = vand.u32 %v2815, 4294901760
  %v2817 = vsub.f32 %v2815, %v2816
  %v2818 = vand.u32 %v2817, 4294901760
  %2819 = vmatpush2.msra.mxu0 %v2818
  %2820 = vmatprep.subr.mxu0 0.0
  %v2821 = vand.u32 %v2413, 4294901760
  %v2822 = vsub.f32 %v2413, %v2821
  %v2823 = vand.u32 %v2822, 4294901760
  %v2824 = vsub.f32 %v2822, %v2823
  %v2825 = vand.u32 %v2824, 4294901760
  %2826 = vmatpush2.msra.mxu0 %v2825
  %2827 = vmatprep.subr.mxu0 0.0
  %v2828 = vand.u32 %v2412, 4294901760
  %v2829 = vsub.f32 %v2412, %v2828
  %v2830 = vand.u32 %v2829, 4294901760
  %v2831 = vsub.f32 %v2829, %v2830
  %v2832 = vand.u32 %v2831, 4294901760
  %2833 = vmatpush2.msra.mxu0 %v2832
  %2834 = vmatprep.subr.mxu0 0.0
  %v2835 = vand.u32 %v2411, 4294901760
  %v2836 = vsub.f32 %v2411, %v2835
  %v2837 = vand.u32 %v2836, 4294901760
  %v2838 = vsub.f32 %v2836, %v2837
  %v2839 = vand.u32 %v2838, 4294901760
  %2840 = vmatpush2.msra.mxu0 %v2839
  %2841 = vmatprep.subr.mxu0 0.0
  %v2842 = vand.u32 %v2410, 4294901760
  %v2843 = vsub.f32 %v2410, %v2842
  %v2844 = vand.u32 %v2843, 4294901760
  %v2845 = vsub.f32 %v2843, %v2844
  %v2846 = vand.u32 %v2845, 4294901760
  %2847 = vmatpush2.msra.mxu0 %v2846
  %v2848 = vand.u32 %v2379, 4294901760
  %2849 = vmatprep.mubr.f32.mxu0 %v2848
  %v2850 = vand.u32 %v2378, 4294901760
  %2851 = vmatmul.mubr.f32.gmra.mxu0 %v2850
  %v2852 = vpop.f32.mrf.mxu0
  %v2853 = vadd.f32 %v2576, %v2852
  %v2854 = vpop.f32.mrf.mxu0
  %v2855 = vand.u32 %v2383, 4294901760
  %2856 = vmatprep.mubr.f32.mxu0 %v2855
  %v2857 = vand.u32 %v2382, 4294901760
  %2858 = vmatmul.mubr.f32.gmra.mxu0 %v2857
  %v2859 = vpop.f32.mrf.mxu0
  %v2860 = vadd.f32 %v2591, %v2859
  %v2861 = vpop.f32.mrf.mxu0
  %v2862 = vand.u32 %v2387, 4294901760
  %2863 = vmatprep.mubr.f32.mxu0 %v2862
  %v2864 = vand.u32 %v2386, 4294901760
  %2865 = vmatmul.mubr.f32.gmra.mxu0 %v2864
  %v2866 = vpop.f32.mrf.mxu0
  %v2867 = vadd.f32 %v2606, %v2866
  %v2868 = vpop.f32.mrf.mxu0
  %v2869 = vand.u32 %v2391, 4294901760
  %2870 = vmatprep.mubr.f32.mxu0 %v2869
  %v2871 = vand.u32 %v2390, 4294901760
  %2872 = vmatmul.mubr.f32.gmra.mxu0 %v2871
  %v2873 = vpop.f32.mrf.mxu0
  %v2874 = vadd.f32 %v2621, %v2873
  %v2875 = vpop.f32.mrf.mxu0
  %2876 = vdwg.mxu0
  %2877 = vmatprep.subr.mxu0 0.0
  %v2878 = vand.u32 %v2409, 4294901760
  %v2879 = vsub.f32 %v2409, %v2878
  %2880 = vmatpush1.msra.mxu0 %v2879
  %2881 = vmatprep.subr.mxu0 0.0
  %v2882 = vand.u32 %v2408, 4294901760
  %v2883 = vsub.f32 %v2408, %v2882
  %2884 = vmatpush1.msra.mxu0 %v2883
  %2885 = vmatprep.subr.mxu0 0.0
  %v2886 = vand.u32 %v2407, 4294901760
  %v2887 = vsub.f32 %v2407, %v2886
  %2888 = vmatpush1.msra.mxu0 %v2887
  %2889 = vmatprep.subr.mxu0 0.0
  %v2890 = vand.u32 %v2406, 4294901760
  %v2891 = vsub.f32 %v2406, %v2890
  %2892 = vmatpush1.msra.mxu0 %v2891
  %2893 = vmatprep.subr.mxu0 0.0
  %v2894 = vand.u32 %v2405, 4294901760
  %v2895 = vsub.f32 %v2405, %v2894
  %2896 = vmatpush1.msra.mxu0 %v2895
  %2897 = vmatprep.subr.mxu0 0.0
  %v2898 = vand.u32 %v2404, 4294901760
  %v2899 = vsub.f32 %v2404, %v2898
  %2900 = vmatpush1.msra.mxu0 %v2899
  %2901 = vmatprep.subr.mxu0 0.0
  %v2902 = vand.u32 %v2403, 4294901760
  %v2903 = vsub.f32 %v2403, %v2902
  %2904 = vmatpush1.msra.mxu0 %v2903
  %2905 = vmatprep.subr.mxu0 0.0
  %v2906 = vand.u32 %v2402, 4294901760
  %v2907 = vsub.f32 %v2402, %v2906
  %2908 = vmatpush1.msra.mxu0 %v2907
  %2909 = vmatprep.subr.mxu0 0.0
  %v2910 = vand.u32 %v2401, 4294901760
  %v2911 = vsub.f32 %v2401, %v2910
  %2912 = vmatpush1.msra.mxu0 %v2911
  %2913 = vmatprep.subr.mxu0 0.0
  %v2914 = vand.u32 %v2400, 4294901760
  %v2915 = vsub.f32 %v2400, %v2914
  %2916 = vmatpush1.msra.mxu0 %v2915
  %2917 = vmatprep.subr.mxu0 0.0
  %v2918 = vand.u32 %v2399, 4294901760
  %v2919 = vsub.f32 %v2399, %v2918
  %2920 = vmatpush1.msra.mxu0 %v2919
  %2921 = vmatprep.subr.mxu0 0.0
  %v2922 = vand.u32 %v2398, 4294901760
  %v2923 = vsub.f32 %v2398, %v2922
  %2924 = vmatpush1.msra.mxu0 %v2923
  %2925 = vmatprep.subr.mxu0 0.0
  %v2926 = vand.u32 %v2397, 4294901760
  %v2927 = vsub.f32 %v2397, %v2926
  %2928 = vmatpush1.msra.mxu0 %v2927
  %2929 = vmatprep.subr.mxu0 0.0
  %v2930 = vand.u32 %v2396, 4294901760
  %v2931 = vsub.f32 %v2396, %v2930
  %2932 = vmatpush1.msra.mxu0 %v2931
  %2933 = vmatprep.subr.mxu0 0.0
  %v2934 = vand.u32 %v2395, 4294901760
  %v2935 = vsub.f32 %v2395, %v2934
  %2936 = vmatpush1.msra.mxu0 %v2935
  %2937 = vmatprep.subr.mxu0 0.0
  %v2938 = vand.u32 %v2394, 4294901760
  %v2939 = vsub.f32 %v2394, %v2938
  %2940 = vmatpush1.msra.mxu0 %v2939
  %2941 = vmatprep.subr.mxu0 0.0
  %v2942 = vand.u32 %v2425, 4294901760
  %v2943 = vsub.f32 %v2425, %v2942
  %2944 = vmatpush2.msra.mxu0 %v2943
  %2945 = vmatprep.subr.mxu0 0.0
  %v2946 = vand.u32 %v2424, 4294901760
  %v2947 = vsub.f32 %v2424, %v2946
  %2948 = vmatpush2.msra.mxu0 %v2947
  %2949 = vmatprep.subr.mxu0 0.0
  %v2950 = vand.u32 %v2423, 4294901760
  %v2951 = vsub.f32 %v2423, %v2950
  %2952 = vmatpush2.msra.mxu0 %v2951
  %2953 = vmatprep.subr.mxu0 0.0
  %v2954 = vand.u32 %v2422, 4294901760
  %v2955 = vsub.f32 %v2422, %v2954
  %2956 = vmatpush2.msra.mxu0 %v2955
  %2957 = vmatprep.subr.mxu0 0.0
  %v2958 = vand.u32 %v2421, 4294901760
  %v2959 = vsub.f32 %v2421, %v2958
  %2960 = vmatpush2.msra.mxu0 %v2959
  %2961 = vmatprep.subr.mxu0 0.0
  %v2962 = vand.u32 %v2420, 4294901760
  %v2963 = vsub.f32 %v2420, %v2962
  %2964 = vmatpush2.msra.mxu0 %v2963
  %2965 = vmatprep.subr.mxu0 0.0
  %v2966 = vand.u32 %v2419, 4294901760
  %v2967 = vsub.f32 %v2419, %v2966
  %2968 = vmatpush2.msra.mxu0 %v2967
  %2969 = vmatprep.subr.mxu0 0.0
  %v2970 = vand.u32 %v2418, 4294901760
  %v2971 = vsub.f32 %v2418, %v2970
  %2972 = vmatpush2.msra.mxu0 %v2971
  %2973 = vmatprep.subr.mxu0 0.0
  %v2974 = vand.u32 %v2417, 4294901760
  %v2975 = vsub.f32 %v2417, %v2974
  %2976 = vmatpush2.msra.mxu0 %v2975
  %2977 = vmatprep.subr.mxu0 0.0
  %v2978 = vand.u32 %v2416, 4294901760
  %v2979 = vsub.f32 %v2416, %v2978
  %2980 = vmatpush2.msra.mxu0 %v2979
  %2981 = vmatprep.subr.mxu0 0.0
  %v2982 = vand.u32 %v2415, 4294901760
  %v2983 = vsub.f32 %v2415, %v2982
  %2984 = vmatpush2.msra.mxu0 %v2983
  %2985 = vmatprep.subr.mxu0 0.0
  %v2986 = vand.u32 %v2414, 4294901760
  %v2987 = vsub.f32 %v2414, %v2986
  %2988 = vmatpush2.msra.mxu0 %v2987
  %2989 = vmatprep.subr.mxu0 0.0
  %v2990 = vand.u32 %v2413, 4294901760
  %v2991 = vsub.f32 %v2413, %v2990
  %2992 = vmatpush2.msra.mxu0 %v2991
  %2993 = vmatprep.subr.mxu0 0.0
  %v2994 = vand.u32 %v2412, 4294901760
  %v2995 = vsub.f32 %v2412, %v2994
  %2996 = vmatpush2.msra.mxu0 %v2995
  %2997 = vmatprep.subr.mxu0 0.0
  %v2998 = vand.u32 %v2411, 4294901760
  %v2999 = vsub.f32 %v2411, %v2998
  %3000 = vmatpush2.msra.mxu0 %v2999
  %3001 = vmatprep.subr.mxu0 0.0
  %v3002 = vand.u32 %v2410, 4294901760
  %v3003 = vsub.f32 %v2410, %v3002
  %3004 = vmatpush2.msra.mxu0 %v3003
  %v3005 = vand.u32 %v2379, 4294901760
  %v3006 = vsub.f32 %v2379, %v3005
  %3007 = vmatprep.mubr.f32.mxu0 %v3006
  %v3008 = vand.u32 %v2378, 4294901760
  %v3009 = vsub.f32 %v2378, %v3008
  %3010 = vmatmul.mubr.f32.gmra.mxu0 %v3009
  %v3011 = vpop.f32.mrf.mxu0
  %v3012 = vadd.f32 %v2853, %v3011
  %v3013 = vpop.f32.mrf.mxu0
  %v3014 = vand.u32 %v2383, 4294901760
  %v3015 = vsub.f32 %v2383, %v3014
  %3016 = vmatprep.mubr.f32.mxu0 %v3015
  %v3017 = vand.u32 %v2382, 4294901760
  %v3018 = vsub.f32 %v2382, %v3017
  %3019 = vmatmul.mubr.f32.gmra.mxu0 %v3018
  %v3020 = vpop.f32.mrf.mxu0
  %v3021 = vadd.f32 %v2860, %v3020
  %v3022 = vpop.f32.mrf.mxu0
  %v3023 = vand.u32 %v2387, 4294901760
  %v3024 = vsub.f32 %v2387, %v3023
  %3025 = vmatprep.mubr.f32.mxu0 %v3024
  %v3026 = vand.u32 %v2386, 4294901760
  %v3027 = vsub.f32 %v2386, %v3026
  %3028 = vmatmul.mubr.f32.gmra.mxu0 %v3027
  %v3029 = vpop.f32.mrf.mxu0
  %v3030 = vadd.f32 %v2867, %v3029
  %v3031 = vpop.f32.mrf.mxu0
  %v3032 = vand.u32 %v2391, 4294901760
  %v3033 = vsub.f32 %v2391, %v3032
  %3034 = vmatprep.mubr.f32.mxu0 %v3033
  %v3035 = vand.u32 %v2390, 4294901760
  %v3036 = vsub.f32 %v2390, %v3035
  %3037 = vmatmul.mubr.f32.gmra.mxu0 %v3036
  %v3038 = vpop.f32.mrf.mxu0
  %v3039 = vadd.f32 %v2874, %v3038
  %v3040 = vpop.f32.mrf.mxu0
  %3041 = vdwg.mxu0
  %3042 = vmatprep.subr.mxu0 0.0
  %v3043 = vand.u32 %v2409, 4294901760
  %3044 = vmatpush1.msra.mxu0 %v3043
  %3045 = vmatprep.subr.mxu0 0.0
  %v3046 = vand.u32 %v2408, 4294901760
  %3047 = vmatpush1.msra.mxu0 %v3046
  %3048 = vmatprep.subr.mxu0 0.0
  %v3049 = vand.u32 %v2407, 4294901760
  %3050 = vmatpush1.msra.mxu0 %v3049
  %3051 = vmatprep.subr.mxu0 0.0
  %v3052 = vand.u32 %v2406, 4294901760
  %3053 = vmatpush1.msra.mxu0 %v3052
  %3054 = vmatprep.subr.mxu0 0.0
  %v3055 = vand.u32 %v2405, 4294901760
  %3056 = vmatpush1.msra.mxu0 %v3055
  %3057 = vmatprep.subr.mxu0 0.0
  %v3058 = vand.u32 %v2404, 4294901760
  %3059 = vmatpush1.msra.mxu0 %v3058
  %3060 = vmatprep.subr.mxu0 0.0
  %v3061 = vand.u32 %v2403, 4294901760
  %3062 = vmatpush1.msra.mxu0 %v3061
  %3063 = vmatprep.subr.mxu0 0.0
  %v3064 = vand.u32 %v2402, 4294901760
  %3065 = vmatpush1.msra.mxu0 %v3064
  %3066 = vmatprep.subr.mxu0 0.0
  %v3067 = vand.u32 %v2401, 4294901760
  %3068 = vmatpush1.msra.mxu0 %v3067
  %3069 = vmatprep.subr.mxu0 0.0
  %v3070 = vand.u32 %v2400, 4294901760
  %3071 = vmatpush1.msra.mxu0 %v3070
  %3072 = vmatprep.subr.mxu0 0.0
  %v3073 = vand.u32 %v2399, 4294901760
  %3074 = vmatpush1.msra.mxu0 %v3073
  %3075 = vmatprep.subr.mxu0 0.0
  %v3076 = vand.u32 %v2398, 4294901760
  %3077 = vmatpush1.msra.mxu0 %v3076
  %3078 = vmatprep.subr.mxu0 0.0
  %v3079 = vand.u32 %v2397, 4294901760
  %3080 = vmatpush1.msra.mxu0 %v3079
  %3081 = vmatprep.subr.mxu0 0.0
  %v3082 = vand.u32 %v2396, 4294901760
  %3083 = vmatpush1.msra.mxu0 %v3082
  %3084 = vmatprep.subr.mxu0 0.0
  %v3085 = vand.u32 %v2395, 4294901760
  %3086 = vmatpush1.msra.mxu0 %v3085
  %3087 = vmatprep.subr.mxu0 0.0
  %v3088 = vand.u32 %v2394, 4294901760
  %3089 = vmatpush1.msra.mxu0 %v3088
  %3090 = vmatprep.subr.mxu0 0.0
  %v3091 = vand.u32 %v2425, 4294901760
  %3092 = vmatpush2.msra.mxu0 %v3091
  %3093 = vmatprep.subr.mxu0 0.0
  %v3094 = vand.u32 %v2424, 4294901760
  %3095 = vmatpush2.msra.mxu0 %v3094
  %3096 = vmatprep.subr.mxu0 0.0
  %v3097 = vand.u32 %v2423, 4294901760
  %3098 = vmatpush2.msra.mxu0 %v3097
  %3099 = vmatprep.subr.mxu0 0.0
  %v3100 = vand.u32 %v2422, 4294901760
  %3101 = vmatpush2.msra.mxu0 %v3100
  %3102 = vmatprep.subr.mxu0 0.0
  %v3103 = vand.u32 %v2421, 4294901760
  %3104 = vmatpush2.msra.mxu0 %v3103
  %3105 = vmatprep.subr.mxu0 0.0
  %v3106 = vand.u32 %v2420, 4294901760
  %3107 = vmatpush2.msra.mxu0 %v3106
  %3108 = vmatprep.subr.mxu0 0.0
  %v3109 = vand.u32 %v2419, 4294901760
  %3110 = vmatpush2.msra.mxu0 %v3109
  %3111 = vmatprep.subr.mxu0 0.0
  %v3112 = vand.u32 %v2418, 4294901760
  %3113 = vmatpush2.msra.mxu0 %v3112
  %3114 = vmatprep.subr.mxu0 0.0
  %v3115 = vand.u32 %v2417, 4294901760
  %3116 = vmatpush2.msra.mxu0 %v3115
  %3117 = vmatprep.subr.mxu0 0.0
  %v3118 = vand.u32 %v2416, 4294901760
  %3119 = vmatpush2.msra.mxu0 %v3118
  %3120 = vmatprep.subr.mxu0 0.0
  %v3121 = vand.u32 %v2415, 4294901760
  %3122 = vmatpush2.msra.mxu0 %v3121
  %3123 = vmatprep.subr.mxu0 0.0
  %v3124 = vand.u32 %v2414, 4294901760
  %3125 = vmatpush2.msra.mxu0 %v3124
  %3126 = vmatprep.subr.mxu0 0.0
  %v3127 = vand.u32 %v2413, 4294901760
  %3128 = vmatpush2.msra.mxu0 %v3127
  %3129 = vmatprep.subr.mxu0 0.0
  %v3130 = vand.u32 %v2412, 4294901760
  %3131 = vmatpush2.msra.mxu0 %v3130
  %3132 = vmatprep.subr.mxu0 0.0
  %v3133 = vand.u32 %v2411, 4294901760
  %3134 = vmatpush2.msra.mxu0 %v3133
  %3135 = vmatprep.subr.mxu0 0.0
  %v3136 = vand.u32 %v2410, 4294901760
  %3137 = vmatpush2.msra.mxu0 %v3136
  %v3138 = vand.u32 %v2379, 4294901760
  %v3139 = vsub.f32 %v2379, %v3138
  %v3140 = vand.u32 %v3139, 4294901760
  %3141 = vmatprep.mubr.f32.mxu0 %v3140
  %v3142 = vand.u32 %v2378, 4294901760
  %v3143 = vsub.f32 %v2378, %v3142
  %v3144 = vand.u32 %v3143, 4294901760
  %3145 = vmatmul.mubr.f32.gmra.mxu0 %v3144
  %v3146 = vpop.f32.mrf.mxu0
  %v3147 = vadd.f32 %v3012, %v3146
  %v3148 = vpop.f32.mrf.mxu0
  %v3149 = vand.u32 %v2383, 4294901760
  %v3150 = vsub.f32 %v2383, %v3149
  %v3151 = vand.u32 %v3150, 4294901760
  %3152 = vmatprep.mubr.f32.mxu0 %v3151
  %v3153 = vand.u32 %v2382, 4294901760
  %v3154 = vsub.f32 %v2382, %v3153
  %v3155 = vand.u32 %v3154, 4294901760
  %3156 = vmatmul.mubr.f32.gmra.mxu0 %v3155
  %v3157 = vpop.f32.mrf.mxu0
  %v3158 = vadd.f32 %v3021, %v3157
  %v3159 = vpop.f32.mrf.mxu0
  %v3160 = vand.u32 %v2387, 4294901760
  %v3161 = vsub.f32 %v2387, %v3160
  %v3162 = vand.u32 %v3161, 4294901760
  %3163 = vmatprep.mubr.f32.mxu0 %v3162
  %v3164 = vand.u32 %v2386, 4294901760
  %v3165 = vsub.f32 %v2386, %v3164
  %v3166 = vand.u32 %v3165, 4294901760
  %3167 = vmatmul.mubr.f32.gmra.mxu0 %v3166
  %v3168 = vpop.f32.mrf.mxu0
  %v3169 = vadd.f32 %v3030, %v3168
  %v3170 = vpop.f32.mrf.mxu0
  %v3171 = vand.u32 %v2391, 4294901760
  %v3172 = vsub.f32 %v2391, %v3171
  %v3173 = vand.u32 %v3172, 4294901760
  %3174 = vmatprep.mubr.f32.mxu0 %v3173
  %v3175 = vand.u32 %v2390, 4294901760
  %v3176 = vsub.f32 %v2390, %v3175
  %v3177 = vand.u32 %v3176, 4294901760
  %3178 = vmatmul.mubr.f32.gmra.mxu0 %v3177
  %v3179 = vpop.f32.mrf.mxu0
  %v3180 = vadd.f32 %v3039, %v3179
  %v3181 = vpop.f32.mrf.mxu0
  %3182 = vdwg.mxu0
  %3183 = vmatprep.subr.mxu0 0.0
  %v3184 = vand.u32 %v2409, 4294901760
  %v3185 = vsub.f32 %v2409, %v3184
  %v3186 = vand.u32 %v3185, 4294901760
  %3187 = vmatpush1.msra.mxu0 %v3186
  %3188 = vmatprep.subr.mxu0 0.0
  %v3189 = vand.u32 %v2408, 4294901760
  %v3190 = vsub.f32 %v2408, %v3189
  %v3191 = vand.u32 %v3190, 4294901760
  %3192 = vmatpush1.msra.mxu0 %v3191
  %3193 = vmatprep.subr.mxu0 0.0
  %v3194 = vand.u32 %v2407, 4294901760
  %v3195 = vsub.f32 %v2407, %v3194
  %v3196 = vand.u32 %v3195, 4294901760
  %3197 = vmatpush1.msra.mxu0 %v3196
  %3198 = vmatprep.subr.mxu0 0.0
  %v3199 = vand.u32 %v2406, 4294901760
  %v3200 = vsub.f32 %v2406, %v3199
  %v3201 = vand.u32 %v3200, 4294901760
  %3202 = vmatpush1.msra.mxu0 %v3201
  %3203 = vmatprep.subr.mxu0 0.0
  %v3204 = vand.u32 %v2405, 4294901760
  %v3205 = vsub.f32 %v2405, %v3204
  %v3206 = vand.u32 %v3205, 4294901760
  %3207 = vmatpush1.msra.mxu0 %v3206
  %3208 = vmatprep.subr.mxu0 0.0
  %v3209 = vand.u32 %v2404, 4294901760
  %v3210 = vsub.f32 %v2404, %v3209
  %v3211 = vand.u32 %v3210, 4294901760
  %3212 = vmatpush1.msra.mxu0 %v3211
  %3213 = vmatprep.subr.mxu0 0.0
  %v3214 = vand.u32 %v2403, 4294901760
  %v3215 = vsub.f32 %v2403, %v3214
  %v3216 = vand.u32 %v3215, 4294901760
  %3217 = vmatpush1.msra.mxu0 %v3216
  %3218 = vmatprep.subr.mxu0 0.0
  %v3219 = vand.u32 %v2402, 4294901760
  %v3220 = vsub.f32 %v2402, %v3219
  %v3221 = vand.u32 %v3220, 4294901760
  %3222 = vmatpush1.msra.mxu0 %v3221
  %3223 = vmatprep.subr.mxu0 0.0
  %v3224 = vand.u32 %v2401, 4294901760
  %v3225 = vsub.f32 %v2401, %v3224
  %v3226 = vand.u32 %v3225, 4294901760
  %3227 = vmatpush1.msra.mxu0 %v3226
  %3228 = vmatprep.subr.mxu0 0.0
  %v3229 = vand.u32 %v2400, 4294901760
  %v3230 = vsub.f32 %v2400, %v3229
  %v3231 = vand.u32 %v3230, 4294901760
  %3232 = vmatpush1.msra.mxu0 %v3231
  %3233 = vmatprep.subr.mxu0 0.0
  %v3234 = vand.u32 %v2399, 4294901760
  %v3235 = vsub.f32 %v2399, %v3234
  %v3236 = vand.u32 %v3235, 4294901760
  %3237 = vmatpush1.msra.mxu0 %v3236
  %3238 = vmatprep.subr.mxu0 0.0
  %v3239 = vand.u32 %v2398, 4294901760
  %v3240 = vsub.f32 %v2398, %v3239
  %v3241 = vand.u32 %v3240, 4294901760
  %3242 = vmatpush1.msra.mxu0 %v3241
  %3243 = vmatprep.subr.mxu0 0.0
  %v3244 = vand.u32 %v2397, 4294901760
  %v3245 = vsub.f32 %v2397, %v3244
  %v3246 = vand.u32 %v3245, 4294901760
  %3247 = vmatpush1.msra.mxu0 %v3246
  %3248 = vmatprep.subr.mxu0 0.0
  %v3249 = vand.u32 %v2396, 4294901760
  %v3250 = vsub.f32 %v2396, %v3249
  %v3251 = vand.u32 %v3250, 4294901760
  %3252 = vmatpush1.msra.mxu0 %v3251
  %3253 = vmatprep.subr.mxu0 0.0
  %v3254 = vand.u32 %v2395, 4294901760
  %v3255 = vsub.f32 %v2395, %v3254
  %v3256 = vand.u32 %v3255, 4294901760
  %3257 = vmatpush1.msra.mxu0 %v3256
  %3258 = vmatprep.subr.mxu0 0.0
  %v3259 = vand.u32 %v2394, 4294901760
  %v3260 = vsub.f32 %v2394, %v3259
  %v3261 = vand.u32 %v3260, 4294901760
  %3262 = vmatpush1.msra.mxu0 %v3261
  %3263 = vmatprep.subr.mxu0 0.0
  %v3264 = vand.u32 %v2425, 4294901760
  %v3265 = vsub.f32 %v2425, %v3264
  %v3266 = vand.u32 %v3265, 4294901760
  %3267 = vmatpush2.msra.mxu0 %v3266
  %3268 = vmatprep.subr.mxu0 0.0
  %v3269 = vand.u32 %v2424, 4294901760
  %v3270 = vsub.f32 %v2424, %v3269
  %v3271 = vand.u32 %v3270, 4294901760
  %3272 = vmatpush2.msra.mxu0 %v3271
  %3273 = vmatprep.subr.mxu0 0.0
  %v3274 = vand.u32 %v2423, 4294901760
  %v3275 = vsub.f32 %v2423, %v3274
  %v3276 = vand.u32 %v3275, 4294901760
  %3277 = vmatpush2.msra.mxu0 %v3276
  %3278 = vmatprep.subr.mxu0 0.0
  %v3279 = vand.u32 %v2422, 4294901760
  %v3280 = vsub.f32 %v2422, %v3279
  %v3281 = vand.u32 %v3280, 4294901760
  %3282 = vmatpush2.msra.mxu0 %v3281
  %3283 = vmatprep.subr.mxu0 0.0
  %v3284 = vand.u32 %v2421, 4294901760
  %v3285 = vsub.f32 %v2421, %v3284
  %v3286 = vand.u32 %v3285, 4294901760
  %3287 = vmatpush2.msra.mxu0 %v3286
  %3288 = vmatprep.subr.mxu0 0.0
  %v3289 = vand.u32 %v2420, 4294901760
  %v3290 = vsub.f32 %v2420, %v3289
  %v3291 = vand.u32 %v3290, 4294901760
  %3292 = vmatpush2.msra.mxu0 %v3291
  %3293 = vmatprep.subr.mxu0 0.0
  %v3294 = vand.u32 %v2419, 4294901760
  %v3295 = vsub.f32 %v2419, %v3294
  %v3296 = vand.u32 %v3295, 4294901760
  %3297 = vmatpush2.msra.mxu0 %v3296
  %3298 = vmatprep.subr.mxu0 0.0
  %v3299 = vand.u32 %v2418, 4294901760
  %v3300 = vsub.f32 %v2418, %v3299
  %v3301 = vand.u32 %v3300, 4294901760
  %3302 = vmatpush2.msra.mxu0 %v3301
  %3303 = vmatprep.subr.mxu0 0.0
  %v3304 = vand.u32 %v2417, 4294901760
  %v3305 = vsub.f32 %v2417, %v3304
  %v3306 = vand.u32 %v3305, 4294901760
  %3307 = vmatpush2.msra.mxu0 %v3306
  %3308 = vmatprep.subr.mxu0 0.0
  %v3309 = vand.u32 %v2416, 4294901760
  %v3310 = vsub.f32 %v2416, %v3309
  %v3311 = vand.u32 %v3310, 4294901760
  %3312 = vmatpush2.msra.mxu0 %v3311
  %3313 = vmatprep.subr.mxu0 0.0
  %v3314 = vand.u32 %v2415, 4294901760
  %v3315 = vsub.f32 %v2415, %v3314
  %v3316 = vand.u32 %v3315, 4294901760
  %3317 = vmatpush2.msra.mxu0 %v3316
  %3318 = vmatprep.subr.mxu0 0.0
  %v3319 = vand.u32 %v2414, 4294901760
  %v3320 = vsub.f32 %v2414, %v3319
  %v3321 = vand.u32 %v3320, 4294901760
  %3322 = vmatpush2.msra.mxu0 %v3321
  %3323 = vmatprep.subr.mxu0 0.0
  %v3324 = vand.u32 %v2413, 4294901760
  %v3325 = vsub.f32 %v2413, %v3324
  %v3326 = vand.u32 %v3325, 4294901760
  %3327 = vmatpush2.msra.mxu0 %v3326
  %3328 = vmatprep.subr.mxu0 0.0
  %v3329 = vand.u32 %v2412, 4294901760
  %v3330 = vsub.f32 %v2412, %v3329
  %v3331 = vand.u32 %v3330, 4294901760
  %3332 = vmatpush2.msra.mxu0 %v3331
  %3333 = vmatprep.subr.mxu0 0.0
  %v3334 = vand.u32 %v2411, 4294901760
  %v3335 = vsub.f32 %v2411, %v3334
  %v3336 = vand.u32 %v3335, 4294901760
  %3337 = vmatpush2.msra.mxu0 %v3336
  %3338 = vmatprep.subr.mxu0 0.0
  %v3339 = vand.u32 %v2410, 4294901760
  %v3340 = vsub.f32 %v2410, %v3339
  %v3341 = vand.u32 %v3340, 4294901760
  %3342 = vmatpush2.msra.mxu0 %v3341
  %v3343 = vand.u32 %v2379, 4294901760
  %3344 = vmatprep.mubr.f32.mxu0 %v3343
  %v3345 = vand.u32 %v2378, 4294901760
  %3346 = vmatmul.mubr.f32.gmra.mxu0 %v3345
  %v3347 = vpop.f32.mrf.mxu0
  %v3348 = vadd.f32 %v3147, %v3347
  %v3349 = vpop.f32.mrf.mxu0
  %v3350 = vand.u32 %v2383, 4294901760
  %3351 = vmatprep.mubr.f32.mxu0 %v3350
  %v3352 = vand.u32 %v2382, 4294901760
  %3353 = vmatmul.mubr.f32.gmra.mxu0 %v3352
  %v3354 = vpop.f32.mrf.mxu0
  %v3355 = vadd.f32 %v3158, %v3354
  %v3356 = vpop.f32.mrf.mxu0
  %v3357 = vand.u32 %v2387, 4294901760
  %3358 = vmatprep.mubr.f32.mxu0 %v3357
  %v3359 = vand.u32 %v2386, 4294901760
  %3360 = vmatmul.mubr.f32.gmra.mxu0 %v3359
  %v3361 = vpop.f32.mrf.mxu0
  %v3362 = vadd.f32 %v3169, %v3361
  %v3363 = vpop.f32.mrf.mxu0
  %v3364 = vand.u32 %v2391, 4294901760
  %3365 = vmatprep.mubr.f32.mxu0 %v3364
  %v3366 = vand.u32 %v2390, 4294901760
  %3367 = vmatmul.mubr.f32.gmra.mxu0 %v3366
  %v3368 = vpop.f32.mrf.mxu0
  %v3369 = vadd.f32 %v3180, %v3368
  %v3370 = vpop.f32.mrf.mxu0
  %3371 = vdwg.mxu0
  %3372 = vmatprep.subr.mxu0 0.0
  %v3373 = vand.u32 %v2409, 4294901760
  %3374 = vmatpush1.msra.mxu0 %v3373
  %3375 = vmatprep.subr.mxu0 0.0
  %v3376 = vand.u32 %v2408, 4294901760
  %3377 = vmatpush1.msra.mxu0 %v3376
  %3378 = vmatprep.subr.mxu0 0.0
  %v3379 = vand.u32 %v2407, 4294901760
  %3380 = vmatpush1.msra.mxu0 %v3379
  %3381 = vmatprep.subr.mxu0 0.0
  %v3382 = vand.u32 %v2406, 4294901760
  %3383 = vmatpush1.msra.mxu0 %v3382
  %3384 = vmatprep.subr.mxu0 0.0
  %v3385 = vand.u32 %v2405, 4294901760
  %3386 = vmatpush1.msra.mxu0 %v3385
  %3387 = vmatprep.subr.mxu0 0.0
  %v3388 = vand.u32 %v2404, 4294901760
  %3389 = vmatpush1.msra.mxu0 %v3388
  %3390 = vmatprep.subr.mxu0 0.0
  %v3391 = vand.u32 %v2403, 4294901760
  %3392 = vmatpush1.msra.mxu0 %v3391
  %3393 = vmatprep.subr.mxu0 0.0
  %v3394 = vand.u32 %v2402, 4294901760
  %3395 = vmatpush1.msra.mxu0 %v3394
  %3396 = vmatprep.subr.mxu0 0.0
  %v3397 = vand.u32 %v2401, 4294901760
  %3398 = vmatpush1.msra.mxu0 %v3397
  %3399 = vmatprep.subr.mxu0 0.0
  %v3400 = vand.u32 %v2400, 4294901760
  %3401 = vmatpush1.msra.mxu0 %v3400
  %3402 = vmatprep.subr.mxu0 0.0
  %v3403 = vand.u32 %v2399, 4294901760
  %3404 = vmatpush1.msra.mxu0 %v3403
  %3405 = vmatprep.subr.mxu0 0.0
  %v3406 = vand.u32 %v2398, 4294901760
  %3407 = vmatpush1.msra.mxu0 %v3406
  %3408 = vmatprep.subr.mxu0 0.0
  %v3409 = vand.u32 %v2397, 4294901760
  %3410 = vmatpush1.msra.mxu0 %v3409
  %3411 = vmatprep.subr.mxu0 0.0
  %v3412 = vand.u32 %v2396, 4294901760
  %3413 = vmatpush1.msra.mxu0 %v3412
  %3414 = vmatprep.subr.mxu0 0.0
  %v3415 = vand.u32 %v2395, 4294901760
  %3416 = vmatpush1.msra.mxu0 %v3415
  %3417 = vmatprep.subr.mxu0 0.0
  %v3418 = vand.u32 %v2394, 4294901760
  %3419 = vmatpush1.msra.mxu0 %v3418
  %3420 = vmatprep.subr.mxu0 0.0
  %v3421 = vand.u32 %v2425, 4294901760
  %3422 = vmatpush2.msra.mxu0 %v3421
  %3423 = vmatprep.subr.mxu0 0.0
  %v3424 = vand.u32 %v2424, 4294901760
  %3425 = vmatpush2.msra.mxu0 %v3424
  %3426 = vmatprep.subr.mxu0 0.0
  %v3427 = vand.u32 %v2423, 4294901760
  %3428 = vmatpush2.msra.mxu0 %v3427
  %3429 = vmatprep.subr.mxu0 0.0
  %v3430 = vand.u32 %v2422, 4294901760
  %3431 = vmatpush2.msra.mxu0 %v3430
  %3432 = vmatprep.subr.mxu0 0.0
  %v3433 = vand.u32 %v2421, 4294901760
  %3434 = vmatpush2.msra.mxu0 %v3433
  %3435 = vmatprep.subr.mxu0 0.0
  %v3436 = vand.u32 %v2420, 4294901760
  %3437 = vmatpush2.msra.mxu0 %v3436
  %3438 = vmatprep.subr.mxu0 0.0
  %v3439 = vand.u32 %v2419, 4294901760
  %3440 = vmatpush2.msra.mxu0 %v3439
  %3441 = vmatprep.subr.mxu0 0.0
  %v3442 = vand.u32 %v2418, 4294901760
  %3443 = vmatpush2.msra.mxu0 %v3442
  %3444 = vmatprep.subr.mxu0 0.0
  %v3445 = vand.u32 %v2417, 4294901760
  %3446 = vmatpush2.msra.mxu0 %v3445
  %3447 = vmatprep.subr.mxu0 0.0
  %v3448 = vand.u32 %v2416, 4294901760
  %3449 = vmatpush2.msra.mxu0 %v3448
  %3450 = vmatprep.subr.mxu0 0.0
  %v3451 = vand.u32 %v2415, 4294901760
  %3452 = vmatpush2.msra.mxu0 %v3451
  %3453 = vmatprep.subr.mxu0 0.0
  %v3454 = vand.u32 %v2414, 4294901760
  %3455 = vmatpush2.msra.mxu0 %v3454
  %3456 = vmatprep.subr.mxu0 0.0
  %v3457 = vand.u32 %v2413, 4294901760
  %3458 = vmatpush2.msra.mxu0 %v3457
  %3459 = vmatprep.subr.mxu0 0.0
  %v3460 = vand.u32 %v2412, 4294901760
  %3461 = vmatpush2.msra.mxu0 %v3460
  %3462 = vmatprep.subr.mxu0 0.0
  %v3463 = vand.u32 %v2411, 4294901760
  %3464 = vmatpush2.msra.mxu0 %v3463
  %3465 = vmatprep.subr.mxu0 0.0
  %v3466 = vand.u32 %v2410, 4294901760
  %3467 = vmatpush2.msra.mxu0 %v3466
  %v3468 = vand.u32 %v2379, 4294901760
  %3469 = vmatprep.mubr.f32.mxu0 %v3468
  %v3470 = vand.u32 %v2378, 4294901760
  %3471 = vmatmul.mubr.f32.gmra.mxu0 %v3470
  %v3472 = vpop.f32.mrf.mxu0
  %v3473 = vadd.f32 %v3348, %v3472
  %v3474 = vpop.f32.mrf.mxu0
  %v3475 = vand.u32 %v2383, 4294901760
  %3476 = vmatprep.mubr.f32.mxu0 %v3475
  %v3477 = vand.u32 %v2382, 4294901760
  %3478 = vmatmul.mubr.f32.gmra.mxu0 %v3477
  %v3479 = vpop.f32.mrf.mxu0
  %v3480 = vadd.f32 %v3355, %v3479
  %v3481 = vpop.f32.mrf.mxu0
  %v3482 = vand.u32 %v2387, 4294901760
  %3483 = vmatprep.mubr.f32.mxu0 %v3482
  %v3484 = vand.u32 %v2386, 4294901760
  %3485 = vmatmul.mubr.f32.gmra.mxu0 %v3484
  %v3486 = vpop.f32.mrf.mxu0
  %v3487 = vadd.f32 %v3362, %v3486
  %v3488 = vpop.f32.mrf.mxu0
  %v3489 = vand.u32 %v2391, 4294901760
  %3490 = vmatprep.mubr.f32.mxu0 %v3489
  %v3491 = vand.u32 %v2390, 4294901760
  %3492 = vmatmul.mubr.f32.gmra.mxu0 %v3491
  %v3493 = vpop.f32.mrf.mxu0
  %v3494 = vadd.f32 %v3369, %v3493
  %v3495 = vpop.f32.mrf.mxu0
  %3496 = vdwg.mxu0
  %3497 = vmatprep.subr.mxu0 0.0
  %v3498 = vand.u32 %v2441, 4294901760
  %3499 = vmatpush1.msra.mxu0 %v3498
  %3500 = vmatprep.subr.mxu0 0.0
  %v3501 = vand.u32 %v2440, 4294901760
  %3502 = vmatpush1.msra.mxu0 %v3501
  %3503 = vmatprep.subr.mxu0 0.0
  %v3504 = vand.u32 %v2439, 4294901760
  %3505 = vmatpush1.msra.mxu0 %v3504
  %3506 = vmatprep.subr.mxu0 0.0
  %v3507 = vand.u32 %v2438, 4294901760
  %3508 = vmatpush1.msra.mxu0 %v3507
  %3509 = vmatprep.subr.mxu0 0.0
  %v3510 = vand.u32 %v2437, 4294901760
  %3511 = vmatpush1.msra.mxu0 %v3510
  %3512 = vmatprep.subr.mxu0 0.0
  %v3513 = vand.u32 %v2436, 4294901760
  %3514 = vmatpush1.msra.mxu0 %v3513
  %3515 = vmatprep.subr.mxu0 0.0
  %v3516 = vand.u32 %v2435, 4294901760
  %3517 = vmatpush1.msra.mxu0 %v3516
  %3518 = vmatprep.subr.mxu0 0.0
  %v3519 = vand.u32 %v2434, 4294901760
  %3520 = vmatpush1.msra.mxu0 %v3519
  %3521 = vmatprep.subr.mxu0 0.0
  %v3522 = vand.u32 %v2433, 4294901760
  %3523 = vmatpush1.msra.mxu0 %v3522
  %3524 = vmatprep.subr.mxu0 0.0
  %v3525 = vand.u32 %v2432, 4294901760
  %3526 = vmatpush1.msra.mxu0 %v3525
  %3527 = vmatprep.subr.mxu0 0.0
  %v3528 = vand.u32 %v2431, 4294901760
  %3529 = vmatpush1.msra.mxu0 %v3528
  %3530 = vmatprep.subr.mxu0 0.0
  %v3531 = vand.u32 %v2430, 4294901760
  %3532 = vmatpush1.msra.mxu0 %v3531
  %3533 = vmatprep.subr.mxu0 0.0
  %v3534 = vand.u32 %v2429, 4294901760
  %3535 = vmatpush1.msra.mxu0 %v3534
  %3536 = vmatprep.subr.mxu0 0.0
  %v3537 = vand.u32 %v2428, 4294901760
  %3538 = vmatpush1.msra.mxu0 %v3537
  %3539 = vmatprep.subr.mxu0 0.0
  %v3540 = vand.u32 %v2427, 4294901760
  %3541 = vmatpush1.msra.mxu0 %v3540
  %3542 = vmatprep.subr.mxu0 0.0
  %v3543 = vand.u32 %v2426, 4294901760
  %3544 = vmatpush1.msra.mxu0 %v3543
  %3545 = vmatprep.subr.mxu0 0.0
  %3546 = vmatpush2.msra.mxu0 0.0
  %3547 = vmatprep.subr.mxu0 0.0
  %3548 = vmatpush2.msra.mxu0 0.0
  %3549 = vmatprep.subr.mxu0 0.0
  %3550 = vmatpush2.msra.mxu0 0.0
  %3551 = vmatprep.subr.mxu0 0.0
  %3552 = vmatpush2.msra.mxu0 0.0
  %3553 = vmatprep.subr.mxu0 0.0
  %3554 = vmatpush2.msra.mxu0 0.0
  %3555 = vmatprep.subr.mxu0 0.0
  %3556 = vmatpush2.msra.mxu0 0.0
  %3557 = vmatprep.subr.mxu0 0.0
  %3558 = vmatpush2.msra.mxu0 0.0
  %3559 = vmatprep.subr.mxu0 0.0
  %3560 = vmatpush2.msra.mxu0 0.0
  %3561 = vmatprep.subr.mxu0 0.0
  %3562 = vmatpush2.msra.mxu0 0.0
  %3563 = vmatprep.subr.mxu0 0.0
  %3564 = vmatpush2.msra.mxu0 0.0
  %3565 = vmatprep.subr.mxu0 0.0
  %v3566 = vand.u32 %v2447, 4294901760
  %3567 = vmatpush2.msra.mxu0 %v3566
  %3568 = vmatprep.subr.mxu0 0.0
  %v3569 = vand.u32 %v2446, 4294901760
  %3570 = vmatpush2.msra.mxu0 %v3569
  %3571 = vmatprep.subr.mxu0 0.0
  %v3572 = vand.u32 %v2445, 4294901760
  %3573 = vmatpush2.msra.mxu0 %v3572
  %3574 = vmatprep.subr.mxu0 0.0
  %v3575 = vand.u32 %v2444, 4294901760
  %3576 = vmatpush2.msra.mxu0 %v3575
  %3577 = vmatprep.subr.mxu0 0.0
  %v3578 = vand.u32 %v2443, 4294901760
  %3579 = vmatpush2.msra.mxu0 %v3578
  %3580 = vmatprep.subr.mxu0 0.0
  %v3581 = vand.u32 %v2442, 4294901760
  %3582 = vmatpush2.msra.mxu0 %v3581
  %v3583 = vand.u32 %v2456, 4294901760
  %v3584 = vsub.f32 %v2456, %v3583
  %v3585 = vand.u32 %v3584, 4294901760
  %v3586 = vsub.f32 %v3584, %v3585
  %v3587 = vand.u32 %v3586, 4294901760
  %3588 = vmatprep.mubr.f32.mxu0 %v3587
  %v3589 = vand.u32 %v2380, 4294901760
  %v3590 = vsub.f32 %v2380, %v3589
  %v3591 = vand.u32 %v3590, 4294901760
  %v3592 = vsub.f32 %v3590, %v3591
  %v3593 = vand.u32 %v3592, 4294901760
  %3594 = vmatmul.mubr.f32.gmra.mxu0 %v3593
  %v3595 = vpop.f32.mrf.mxu0
  %v3596 = vadd.f32 %v3473, %v3595
  %v3597 = vpop.f32.mrf.mxu0
  %v3598 = vand.u32 %v2459, 4294901760
  %v3599 = vsub.f32 %v2459, %v3598
  %v3600 = vand.u32 %v3599, 4294901760
  %v3601 = vsub.f32 %v3599, %v3600
  %v3602 = vand.u32 %v3601, 4294901760
  %3603 = vmatprep.mubr.f32.mxu0 %v3602
  %v3604 = vand.u32 %v2384, 4294901760
  %v3605 = vsub.f32 %v2384, %v3604
  %v3606 = vand.u32 %v3605, 4294901760
  %v3607 = vsub.f32 %v3605, %v3606
  %v3608 = vand.u32 %v3607, 4294901760
  %3609 = vmatmul.mubr.f32.gmra.mxu0 %v3608
  %v3610 = vpop.f32.mrf.mxu0
  %v3611 = vadd.f32 %v3480, %v3610
  %v3612 = vpop.f32.mrf.mxu0
  %v3613 = vand.u32 %v2462, 4294901760
  %v3614 = vsub.f32 %v2462, %v3613
  %v3615 = vand.u32 %v3614, 4294901760
  %v3616 = vsub.f32 %v3614, %v3615
  %v3617 = vand.u32 %v3616, 4294901760
  %3618 = vmatprep.mubr.f32.mxu0 %v3617
  %v3619 = vand.u32 %v2388, 4294901760
  %v3620 = vsub.f32 %v2388, %v3619
  %v3621 = vand.u32 %v3620, 4294901760
  %v3622 = vsub.f32 %v3620, %v3621
  %v3623 = vand.u32 %v3622, 4294901760
  %3624 = vmatmul.mubr.f32.gmra.mxu0 %v3623
  %v3625 = vpop.f32.mrf.mxu0
  %v3626 = vadd.f32 %v3487, %v3625
  %v3627 = vpop.f32.mrf.mxu0
  %v3628 = vand.u32 %v2465, 4294901760
  %v3629 = vsub.f32 %v2465, %v3628
  %v3630 = vand.u32 %v3629, 4294901760
  %v3631 = vsub.f32 %v3629, %v3630
  %v3632 = vand.u32 %v3631, 4294901760
  %3633 = vmatprep.mubr.f32.mxu0 %v3632
  %v3634 = vand.u32 %v2392, 4294901760
  %v3635 = vsub.f32 %v2392, %v3634
  %v3636 = vand.u32 %v3635, 4294901760
  %v3637 = vsub.f32 %v3635, %v3636
  %v3638 = vand.u32 %v3637, 4294901760
  %3639 = vmatmul.mubr.f32.gmra.mxu0 %v3638
  %v3640 = vpop.f32.mrf.mxu0
  %v3641 = vadd.f32 %v3494, %v3640
  %v3642 = vpop.f32.mrf.mxu0
  %3643 = vdwg.mxu0
  %3644 = vmatprep.subr.mxu0 0.0
  %v3645 = vand.u32 %v2441, 4294901760
  %v3646 = vsub.f32 %v2441, %v3645
  %v3647 = vand.u32 %v3646, 4294901760
  %v3648 = vsub.f32 %v3646, %v3647
  %v3649 = vand.u32 %v3648, 4294901760
  %3650 = vmatpush1.msra.mxu0 %v3649
  %3651 = vmatprep.subr.mxu0 0.0
  %v3652 = vand.u32 %v2440, 4294901760
  %v3653 = vsub.f32 %v2440, %v3652
  %v3654 = vand.u32 %v3653, 4294901760
  %v3655 = vsub.f32 %v3653, %v3654
  %v3656 = vand.u32 %v3655, 4294901760
  %3657 = vmatpush1.msra.mxu0 %v3656
  %3658 = vmatprep.subr.mxu0 0.0
  %v3659 = vand.u32 %v2439, 4294901760
  %v3660 = vsub.f32 %v2439, %v3659
  %v3661 = vand.u32 %v3660, 4294901760
  %v3662 = vsub.f32 %v3660, %v3661
  %v3663 = vand.u32 %v3662, 4294901760
  %3664 = vmatpush1.msra.mxu0 %v3663
  %3665 = vmatprep.subr.mxu0 0.0
  %v3666 = vand.u32 %v2438, 4294901760
  %v3667 = vsub.f32 %v2438, %v3666
  %v3668 = vand.u32 %v3667, 4294901760
  %v3669 = vsub.f32 %v3667, %v3668
  %v3670 = vand.u32 %v3669, 4294901760
  %3671 = vmatpush1.msra.mxu0 %v3670
  %3672 = vmatprep.subr.mxu0 0.0
  %v3673 = vand.u32 %v2437, 4294901760
  %v3674 = vsub.f32 %v2437, %v3673
  %v3675 = vand.u32 %v3674, 4294901760
  %v3676 = vsub.f32 %v3674, %v3675
  %v3677 = vand.u32 %v3676, 4294901760
  %3678 = vmatpush1.msra.mxu0 %v3677
  %3679 = vmatprep.subr.mxu0 0.0
  %v3680 = vand.u32 %v2436, 4294901760
  %v3681 = vsub.f32 %v2436, %v3680
  %v3682 = vand.u32 %v3681, 4294901760
  %v3683 = vsub.f32 %v3681, %v3682
  %v3684 = vand.u32 %v3683, 4294901760
  %3685 = vmatpush1.msra.mxu0 %v3684
  %3686 = vmatprep.subr.mxu0 0.0
  %v3687 = vand.u32 %v2435, 4294901760
  %v3688 = vsub.f32 %v2435, %v3687
  %v3689 = vand.u32 %v3688, 4294901760
  %v3690 = vsub.f32 %v3688, %v3689
  %v3691 = vand.u32 %v3690, 4294901760
  %3692 = vmatpush1.msra.mxu0 %v3691
  %3693 = vmatprep.subr.mxu0 0.0
  %v3694 = vand.u32 %v2434, 4294901760
  %v3695 = vsub.f32 %v2434, %v3694
  %v3696 = vand.u32 %v3695, 4294901760
  %v3697 = vsub.f32 %v3695, %v3696
  %v3698 = vand.u32 %v3697, 4294901760
  %3699 = vmatpush1.msra.mxu0 %v3698
  %3700 = vmatprep.subr.mxu0 0.0
  %v3701 = vand.u32 %v2433, 4294901760
  %v3702 = vsub.f32 %v2433, %v3701
  %v3703 = vand.u32 %v3702, 4294901760
  %v3704 = vsub.f32 %v3702, %v3703
  %v3705 = vand.u32 %v3704, 4294901760
  %3706 = vmatpush1.msra.mxu0 %v3705
  %3707 = vmatprep.subr.mxu0 0.0
  %v3708 = vand.u32 %v2432, 4294901760
  %v3709 = vsub.f32 %v2432, %v3708
  %v3710 = vand.u32 %v3709, 4294901760
  %v3711 = vsub.f32 %v3709, %v3710
  %v3712 = vand.u32 %v3711, 4294901760
  %3713 = vmatpush1.msra.mxu0 %v3712
  %3714 = vmatprep.subr.mxu0 0.0
  %v3715 = vand.u32 %v2431, 4294901760
  %v3716 = vsub.f32 %v2431, %v3715
  %v3717 = vand.u32 %v3716, 4294901760
  %v3718 = vsub.f32 %v3716, %v3717
  %v3719 = vand.u32 %v3718, 4294901760
  %3720 = vmatpush1.msra.mxu0 %v3719
  %3721 = vmatprep.subr.mxu0 0.0
  %v3722 = vand.u32 %v2430, 4294901760
  %v3723 = vsub.f32 %v2430, %v3722
  %v3724 = vand.u32 %v3723, 4294901760
  %v3725 = vsub.f32 %v3723, %v3724
  %v3726 = vand.u32 %v3725, 4294901760
  %3727 = vmatpush1.msra.mxu0 %v3726
  %3728 = vmatprep.subr.mxu0 0.0
  %v3729 = vand.u32 %v2429, 4294901760
  %v3730 = vsub.f32 %v2429, %v3729
  %v3731 = vand.u32 %v3730, 4294901760
  %v3732 = vsub.f32 %v3730, %v3731
  %v3733 = vand.u32 %v3732, 4294901760
  %3734 = vmatpush1.msra.mxu0 %v3733
  %3735 = vmatprep.subr.mxu0 0.0
  %v3736 = vand.u32 %v2428, 4294901760
  %v3737 = vsub.f32 %v2428, %v3736
  %v3738 = vand.u32 %v3737, 4294901760
  %v3739 = vsub.f32 %v3737, %v3738
  %v3740 = vand.u32 %v3739, 4294901760
  %3741 = vmatpush1.msra.mxu0 %v3740
  %3742 = vmatprep.subr.mxu0 0.0
  %v3743 = vand.u32 %v2427, 4294901760
  %v3744 = vsub.f32 %v2427, %v3743
  %v3745 = vand.u32 %v3744, 4294901760
  %v3746 = vsub.f32 %v3744, %v3745
  %v3747 = vand.u32 %v3746, 4294901760
  %3748 = vmatpush1.msra.mxu0 %v3747
  %3749 = vmatprep.subr.mxu0 0.0
  %v3750 = vand.u32 %v2426, 4294901760
  %v3751 = vsub.f32 %v2426, %v3750
  %v3752 = vand.u32 %v3751, 4294901760
  %v3753 = vsub.f32 %v3751, %v3752
  %v3754 = vand.u32 %v3753, 4294901760
  %3755 = vmatpush1.msra.mxu0 %v3754
  %3756 = vmatprep.subr.mxu0 0.0
  %3757 = vmatpush2.msra.mxu0 0.0
  %3758 = vmatprep.subr.mxu0 0.0
  %3759 = vmatpush2.msra.mxu0 0.0
  %3760 = vmatprep.subr.mxu0 0.0
  %3761 = vmatpush2.msra.mxu0 0.0
  %3762 = vmatprep.subr.mxu0 0.0
  %3763 = vmatpush2.msra.mxu0 0.0
  %3764 = vmatprep.subr.mxu0 0.0
  %3765 = vmatpush2.msra.mxu0 0.0
  %3766 = vmatprep.subr.mxu0 0.0
  %3767 = vmatpush2.msra.mxu0 0.0
  %3768 = vmatprep.subr.mxu0 0.0
  %3769 = vmatpush2.msra.mxu0 0.0
  %3770 = vmatprep.subr.mxu0 0.0
  %3771 = vmatpush2.msra.mxu0 0.0
  %3772 = vmatprep.subr.mxu0 0.0
  %3773 = vmatpush2.msra.mxu0 0.0
  %3774 = vmatprep.subr.mxu0 0.0
  %3775 = vmatpush2.msra.mxu0 0.0
  %3776 = vmatprep.subr.mxu0 0.0
  %v3777 = vand.u32 %v2447, 4294901760
  %v3778 = vsub.f32 %v2447, %v3777
  %v3779 = vand.u32 %v3778, 4294901760
  %v3780 = vsub.f32 %v3778, %v3779
  %v3781 = vand.u32 %v3780, 4294901760
  %3782 = vmatpush2.msra.mxu0 %v3781
  %3783 = vmatprep.subr.mxu0 0.0
  %v3784 = vand.u32 %v2446, 4294901760
  %v3785 = vsub.f32 %v2446, %v3784
  %v3786 = vand.u32 %v3785, 4294901760
  %v3787 = vsub.f32 %v3785, %v3786
  %v3788 = vand.u32 %v3787, 4294901760
  %3789 = vmatpush2.msra.mxu0 %v3788
  %3790 = vmatprep.subr.mxu0 0.0
  %v3791 = vand.u32 %v2445, 4294901760
  %v3792 = vsub.f32 %v2445, %v3791
  %v3793 = vand.u32 %v3792, 4294901760
  %v3794 = vsub.f32 %v3792, %v3793
  %v3795 = vand.u32 %v3794, 4294901760
  %3796 = vmatpush2.msra.mxu0 %v3795
  %3797 = vmatprep.subr.mxu0 0.0
  %v3798 = vand.u32 %v2444, 4294901760
  %v3799 = vsub.f32 %v2444, %v3798
  %v3800 = vand.u32 %v3799, 4294901760
  %v3801 = vsub.f32 %v3799, %v3800
  %v3802 = vand.u32 %v3801, 4294901760
  %3803 = vmatpush2.msra.mxu0 %v3802
  %3804 = vmatprep.subr.mxu0 0.0
  %v3805 = vand.u32 %v2443, 4294901760
  %v3806 = vsub.f32 %v2443, %v3805
  %v3807 = vand.u32 %v3806, 4294901760
  %v3808 = vsub.f32 %v3806, %v3807
  %v3809 = vand.u32 %v3808, 4294901760
  %3810 = vmatpush2.msra.mxu0 %v3809
  %3811 = vmatprep.subr.mxu0 0.0
  %v3812 = vand.u32 %v2442, 4294901760
  %v3813 = vsub.f32 %v2442, %v3812
  %v3814 = vand.u32 %v3813, 4294901760
  %v3815 = vsub.f32 %v3813, %v3814
  %v3816 = vand.u32 %v3815, 4294901760
  %3817 = vmatpush2.msra.mxu0 %v3816
  %v3818 = vand.u32 %v2456, 4294901760
  %3819 = vmatprep.mubr.f32.mxu0 %v3818
  %v3820 = vand.u32 %v2380, 4294901760
  %3821 = vmatmul.mubr.f32.gmra.mxu0 %v3820
  %v3822 = vpop.f32.mrf.mxu0
  %v3823 = vadd.f32 %v3596, %v3822
  %v3824 = vpop.f32.mrf.mxu0
  %v3825 = vand.u32 %v2459, 4294901760
  %3826 = vmatprep.mubr.f32.mxu0 %v3825
  %v3827 = vand.u32 %v2384, 4294901760
  %3828 = vmatmul.mubr.f32.gmra.mxu0 %v3827
  %v3829 = vpop.f32.mrf.mxu0
  %v3830 = vadd.f32 %v3611, %v3829
  %v3831 = vpop.f32.mrf.mxu0
  %v3832 = vand.u32 %v2462, 4294901760
  %3833 = vmatprep.mubr.f32.mxu0 %v3832
  %v3834 = vand.u32 %v2388, 4294901760
  %3835 = vmatmul.mubr.f32.gmra.mxu0 %v3834
  %v3836 = vpop.f32.mrf.mxu0
  %v3837 = vadd.f32 %v3626, %v3836
  %v3838 = vpop.f32.mrf.mxu0
  %v3839 = vand.u32 %v2465, 4294901760
  %3840 = vmatprep.mubr.f32.mxu0 %v3839
  %v3841 = vand.u32 %v2392, 4294901760
  %3842 = vmatmul.mubr.f32.gmra.mxu0 %v3841
  %v3843 = vpop.f32.mrf.mxu0
  %v3844 = vadd.f32 %v3641, %v3843
  %v3845 = vpop.f32.mrf.mxu0
  %3846 = vdwg.mxu0
  %3847 = vmatprep.subr.mxu0 0.0
  %v3848 = vand.u32 %v2441, 4294901760
  %v3849 = vsub.f32 %v2441, %v3848
  %3850 = vmatpush1.msra.mxu0 %v3849
  %3851 = vmatprep.subr.mxu0 0.0
  %v3852 = vand.u32 %v2440, 4294901760
  %v3853 = vsub.f32 %v2440, %v3852
  %3854 = vmatpush1.msra.mxu0 %v3853
  %3855 = vmatprep.subr.mxu0 0.0
  %v3856 = vand.u32 %v2439, 4294901760
  %v3857 = vsub.f32 %v2439, %v3856
  %3858 = vmatpush1.msra.mxu0 %v3857
  %3859 = vmatprep.subr.mxu0 0.0
  %v3860 = vand.u32 %v2438, 4294901760
  %v3861 = vsub.f32 %v2438, %v3860
  %3862 = vmatpush1.msra.mxu0 %v3861
  %3863 = vmatprep.subr.mxu0 0.0
  %v3864 = vand.u32 %v2437, 4294901760
  %v3865 = vsub.f32 %v2437, %v3864
  %3866 = vmatpush1.msra.mxu0 %v3865
  %3867 = vmatprep.subr.mxu0 0.0
  %v3868 = vand.u32 %v2436, 4294901760
  %v3869 = vsub.f32 %v2436, %v3868
  %3870 = vmatpush1.msra.mxu0 %v3869
  %3871 = vmatprep.subr.mxu0 0.0
  %v3872 = vand.u32 %v2435, 4294901760
  %v3873 = vsub.f32 %v2435, %v3872
  %3874 = vmatpush1.msra.mxu0 %v3873
  %3875 = vmatprep.subr.mxu0 0.0
  %v3876 = vand.u32 %v2434, 4294901760
  %v3877 = vsub.f32 %v2434, %v3876
  %3878 = vmatpush1.msra.mxu0 %v3877
  %3879 = vmatprep.subr.mxu0 0.0
  %v3880 = vand.u32 %v2433, 4294901760
  %v3881 = vsub.f32 %v2433, %v3880
  %3882 = vmatpush1.msra.mxu0 %v3881
  %3883 = vmatprep.subr.mxu0 0.0
  %v3884 = vand.u32 %v2432, 4294901760
  %v3885 = vsub.f32 %v2432, %v3884
  %3886 = vmatpush1.msra.mxu0 %v3885
  %3887 = vmatprep.subr.mxu0 0.0
  %v3888 = vand.u32 %v2431, 4294901760
  %v3889 = vsub.f32 %v2431, %v3888
  %3890 = vmatpush1.msra.mxu0 %v3889
  %3891 = vmatprep.subr.mxu0 0.0
  %v3892 = vand.u32 %v2430, 4294901760
  %v3893 = vsub.f32 %v2430, %v3892
  %3894 = vmatpush1.msra.mxu0 %v3893
  %3895 = vmatprep.subr.mxu0 0.0
  %v3896 = vand.u32 %v2429, 4294901760
  %v3897 = vsub.f32 %v2429, %v3896
  %3898 = vmatpush1.msra.mxu0 %v3897
  %3899 = vmatprep.subr.mxu0 0.0
  %v3900 = vand.u32 %v2428, 4294901760
  %v3901 = vsub.f32 %v2428, %v3900
  %3902 = vmatpush1.msra.mxu0 %v3901
  %3903 = vmatprep.subr.mxu0 0.0
  %v3904 = vand.u32 %v2427, 4294901760
  %v3905 = vsub.f32 %v2427, %v3904
  %3906 = vmatpush1.msra.mxu0 %v3905
  %3907 = vmatprep.subr.mxu0 0.0
  %v3908 = vand.u32 %v2426, 4294901760
  %v3909 = vsub.f32 %v2426, %v3908
  %3910 = vmatpush1.msra.mxu0 %v3909
  %3911 = vmatprep.subr.mxu0 0.0
  %3912 = vmatpush2.msra.mxu0 0.0
  %3913 = vmatprep.subr.mxu0 0.0
  %3914 = vmatpush2.msra.mxu0 0.0
  %3915 = vmatprep.subr.mxu0 0.0
  %3916 = vmatpush2.msra.mxu0 0.0
  %3917 = vmatprep.subr.mxu0 0.0
  %3918 = vmatpush2.msra.mxu0 0.0
  %3919 = vmatprep.subr.mxu0 0.0
  %3920 = vmatpush2.msra.mxu0 0.0
  %3921 = vmatprep.subr.mxu0 0.0
  %3922 = vmatpush2.msra.mxu0 0.0
  %3923 = vmatprep.subr.mxu0 0.0
  %3924 = vmatpush2.msra.mxu0 0.0
  %3925 = vmatprep.subr.mxu0 0.0
  %3926 = vmatpush2.msra.mxu0 0.0
  %3927 = vmatprep.subr.mxu0 0.0
  %3928 = vmatpush2.msra.mxu0 0.0
  %3929 = vmatprep.subr.mxu0 0.0
  %3930 = vmatpush2.msra.mxu0 0.0
  %3931 = vmatprep.subr.mxu0 0.0
  %v3932 = vand.u32 %v2447, 4294901760
  %v3933 = vsub.f32 %v2447, %v3932
  %3934 = vmatpush2.msra.mxu0 %v3933
  %3935 = vmatprep.subr.mxu0 0.0
  %v3936 = vand.u32 %v2446, 4294901760
  %v3937 = vsub.f32 %v2446, %v3936
  %3938 = vmatpush2.msra.mxu0 %v3937
  %3939 = vmatprep.subr.mxu0 0.0
  %v3940 = vand.u32 %v2445, 4294901760
  %v3941 = vsub.f32 %v2445, %v3940
  %3942 = vmatpush2.msra.mxu0 %v3941
  %3943 = vmatprep.subr.mxu0 0.0
  %v3944 = vand.u32 %v2444, 4294901760
  %v3945 = vsub.f32 %v2444, %v3944
  %3946 = vmatpush2.msra.mxu0 %v3945
  %3947 = vmatprep.subr.mxu0 0.0
  %v3948 = vand.u32 %v2443, 4294901760
  %v3949 = vsub.f32 %v2443, %v3948
  %3950 = vmatpush2.msra.mxu0 %v3949
  %3951 = vmatprep.subr.mxu0 0.0
  %v3952 = vand.u32 %v2442, 4294901760
  %v3953 = vsub.f32 %v2442, %v3952
  %3954 = vmatpush2.msra.mxu0 %v3953
  %v3955 = vand.u32 %v2456, 4294901760
  %v3956 = vsub.f32 %v2456, %v3955
  %3957 = vmatprep.mubr.f32.mxu0 %v3956
  %v3958 = vand.u32 %v2380, 4294901760
  %v3959 = vsub.f32 %v2380, %v3958
  %3960 = vmatmul.mubr.f32.gmra.mxu0 %v3959
  %v3961 = vpop.f32.mrf.mxu0
  %v3962 = vadd.f32 %v3823, %v3961
  %v3963 = vpop.f32.mrf.mxu0
  %v3964 = vand.u32 %v2459, 4294901760
  %v3965 = vsub.f32 %v2459, %v3964
  %3966 = vmatprep.mubr.f32.mxu0 %v3965
  %v3967 = vand.u32 %v2384, 4294901760
  %v3968 = vsub.f32 %v2384, %v3967
  %3969 = vmatmul.mubr.f32.gmra.mxu0 %v3968
  %v3970 = vpop.f32.mrf.mxu0
  %v3971 = vadd.f32 %v3830, %v3970
  %v3972 = vpop.f32.mrf.mxu0
  %v3973 = vand.u32 %v2462, 4294901760
  %v3974 = vsub.f32 %v2462, %v3973
  %3975 = vmatprep.mubr.f32.mxu0 %v3974
  %v3976 = vand.u32 %v2388, 4294901760
  %v3977 = vsub.f32 %v2388, %v3976
  %3978 = vmatmul.mubr.f32.gmra.mxu0 %v3977
  %v3979 = vpop.f32.mrf.mxu0
  %v3980 = vadd.f32 %v3837, %v3979
  %v3981 = vpop.f32.mrf.mxu0
  %v3982 = vand.u32 %v2465, 4294901760
  %v3983 = vsub.f32 %v2465, %v3982
  %3984 = vmatprep.mubr.f32.mxu0 %v3983
  %v3985 = vand.u32 %v2392, 4294901760
  %v3986 = vsub.f32 %v2392, %v3985
  %3987 = vmatmul.mubr.f32.gmra.mxu0 %v3986
  %v3988 = vpop.f32.mrf.mxu0
  %v3989 = vadd.f32 %v3844, %v3988
  %v3990 = vpop.f32.mrf.mxu0
  %3991 = vdwg.mxu0
  %3992 = vmatprep.subr.mxu0 0.0
  %v3993 = vand.u32 %v2441, 4294901760
  %3994 = vmatpush1.msra.mxu0 %v3993
  %3995 = vmatprep.subr.mxu0 0.0
  %v3996 = vand.u32 %v2440, 4294901760
  %3997 = vmatpush1.msra.mxu0 %v3996
  %3998 = vmatprep.subr.mxu0 0.0
  %v3999 = vand.u32 %v2439, 4294901760
  %4000 = vmatpush1.msra.mxu0 %v3999
  %4001 = vmatprep.subr.mxu0 0.0
  %v4002 = vand.u32 %v2438, 4294901760
  %4003 = vmatpush1.msra.mxu0 %v4002
  %4004 = vmatprep.subr.mxu0 0.0
  %v4005 = vand.u32 %v2437, 4294901760
  %4006 = vmatpush1.msra.mxu0 %v4005
  %4007 = vmatprep.subr.mxu0 0.0
  %v4008 = vand.u32 %v2436, 4294901760
  %4009 = vmatpush1.msra.mxu0 %v4008
  %4010 = vmatprep.subr.mxu0 0.0
  %v4011 = vand.u32 %v2435, 4294901760
  %4012 = vmatpush1.msra.mxu0 %v4011
  %4013 = vmatprep.subr.mxu0 0.0
  %v4014 = vand.u32 %v2434, 4294901760
  %4015 = vmatpush1.msra.mxu0 %v4014
  %4016 = vmatprep.subr.mxu0 0.0
  %v4017 = vand.u32 %v2433, 4294901760
  %4018 = vmatpush1.msra.mxu0 %v4017
  %4019 = vmatprep.subr.mxu0 0.0
  %v4020 = vand.u32 %v2432, 4294901760
  %4021 = vmatpush1.msra.mxu0 %v4020
  %4022 = vmatprep.subr.mxu0 0.0
  %v4023 = vand.u32 %v2431, 4294901760
  %4024 = vmatpush1.msra.mxu0 %v4023
  %4025 = vmatprep.subr.mxu0 0.0
  %v4026 = vand.u32 %v2430, 4294901760
  %4027 = vmatpush1.msra.mxu0 %v4026
  %4028 = vmatprep.subr.mxu0 0.0
  %v4029 = vand.u32 %v2429, 4294901760
  %4030 = vmatpush1.msra.mxu0 %v4029
  %4031 = vmatprep.subr.mxu0 0.0
  %v4032 = vand.u32 %v2428, 4294901760
  %4033 = vmatpush1.msra.mxu0 %v4032
  %4034 = vmatprep.subr.mxu0 0.0
  %v4035 = vand.u32 %v2427, 4294901760
  %4036 = vmatpush1.msra.mxu0 %v4035
  %4037 = vmatprep.subr.mxu0 0.0
  %v4038 = vand.u32 %v2426, 4294901760
  %4039 = vmatpush1.msra.mxu0 %v4038
  %4040 = vmatprep.subr.mxu0 0.0
  %4041 = vmatpush2.msra.mxu0 0.0
  %4042 = vmatprep.subr.mxu0 0.0
  %4043 = vmatpush2.msra.mxu0 0.0
  %4044 = vmatprep.subr.mxu0 0.0
  %4045 = vmatpush2.msra.mxu0 0.0
  %4046 = vmatprep.subr.mxu0 0.0
  %4047 = vmatpush2.msra.mxu0 0.0
  %4048 = vmatprep.subr.mxu0 0.0
  %4049 = vmatpush2.msra.mxu0 0.0
  %4050 = vmatprep.subr.mxu0 0.0
  %4051 = vmatpush2.msra.mxu0 0.0
  %4052 = vmatprep.subr.mxu0 0.0
  %4053 = vmatpush2.msra.mxu0 0.0
  %4054 = vmatprep.subr.mxu0 0.0
  %4055 = vmatpush2.msra.mxu0 0.0
  %4056 = vmatprep.subr.mxu0 0.0
  %4057 = vmatpush2.msra.mxu0 0.0
  %4058 = vmatprep.subr.mxu0 0.0
  %4059 = vmatpush2.msra.mxu0 0.0
  %4060 = vmatprep.subr.mxu0 0.0
  %v4061 = vand.u32 %v2447, 4294901760
  %4062 = vmatpush2.msra.mxu0 %v4061
  %4063 = vmatprep.subr.mxu0 0.0
  %v4064 = vand.u32 %v2446, 4294901760
  %4065 = vmatpush2.msra.mxu0 %v4064
  %4066 = vmatprep.subr.mxu0 0.0
  %v4067 = vand.u32 %v2445, 4294901760
  %4068 = vmatpush2.msra.mxu0 %v4067
  %4069 = vmatprep.subr.mxu0 0.0
  %v4070 = vand.u32 %v2444, 4294901760
  %4071 = vmatpush2.msra.mxu0 %v4070
  %4072 = vmatprep.subr.mxu0 0.0
  %v4073 = vand.u32 %v2443, 4294901760
  %4074 = vmatpush2.msra.mxu0 %v4073
  %4075 = vmatprep.subr.mxu0 0.0
  %v4076 = vand.u32 %v2442, 4294901760
  %4077 = vmatpush2.msra.mxu0 %v4076
  %v4078 = vand.u32 %v2456, 4294901760
  %v4079 = vsub.f32 %v2456, %v4078
  %v4080 = vand.u32 %v4079, 4294901760
  %4081 = vmatprep.mubr.f32.mxu0 %v4080
  %v4082 = vand.u32 %v2380, 4294901760
  %v4083 = vsub.f32 %v2380, %v4082
  %v4084 = vand.u32 %v4083, 4294901760
  %4085 = vmatmul.mubr.f32.gmra.mxu0 %v4084
  %v4086 = vpop.f32.mrf.mxu0
  %v4087 = vadd.f32 %v3962, %v4086
  %v4088 = vpop.f32.mrf.mxu0
  %v4089 = vand.u32 %v2459, 4294901760
  %v4090 = vsub.f32 %v2459, %v4089
  %v4091 = vand.u32 %v4090, 4294901760
  %4092 = vmatprep.mubr.f32.mxu0 %v4091
  %v4093 = vand.u32 %v2384, 4294901760
  %v4094 = vsub.f32 %v2384, %v4093
  %v4095 = vand.u32 %v4094, 4294901760
  %4096 = vmatmul.mubr.f32.gmra.mxu0 %v4095
  %v4097 = vpop.f32.mrf.mxu0
  %v4098 = vadd.f32 %v3971, %v4097
  %v4099 = vpop.f32.mrf.mxu0
  %v4100 = vand.u32 %v2462, 4294901760
  %v4101 = vsub.f32 %v2462, %v4100
  %v4102 = vand.u32 %v4101, 4294901760
  %4103 = vmatprep.mubr.f32.mxu0 %v4102
  %v4104 = vand.u32 %v2388, 4294901760
  %v4105 = vsub.f32 %v2388, %v4104
  %v4106 = vand.u32 %v4105, 4294901760
  %4107 = vmatmul.mubr.f32.gmra.mxu0 %v4106
  %v4108 = vpop.f32.mrf.mxu0
  %v4109 = vadd.f32 %v3980, %v4108
  %v4110 = vpop.f32.mrf.mxu0
  %v4111 = vand.u32 %v2465, 4294901760
  %v4112 = vsub.f32 %v2465, %v4111
  %v4113 = vand.u32 %v4112, 4294901760
  %4114 = vmatprep.mubr.f32.mxu0 %v4113
  %v4115 = vand.u32 %v2392, 4294901760
  %v4116 = vsub.f32 %v2392, %v4115
  %v4117 = vand.u32 %v4116, 4294901760
  %4118 = vmatmul.mubr.f32.gmra.mxu0 %v4117
  %v4119 = vpop.f32.mrf.mxu0
  %v4120 = vadd.f32 %v3989, %v4119
  %v4121 = vpop.f32.mrf.mxu0
  %4122 = vdwg.mxu0
  %4123 = vmatprep.subr.mxu0 0.0
  %v4124 = vand.u32 %v2441, 4294901760
  %v4125 = vsub.f32 %v2441, %v4124
  %v4126 = vand.u32 %v4125, 4294901760
  %4127 = vmatpush1.msra.mxu0 %v4126
  %4128 = vmatprep.subr.mxu0 0.0
  %v4129 = vand.u32 %v2440, 4294901760
  %v4130 = vsub.f32 %v2440, %v4129
  %v4131 = vand.u32 %v4130, 4294901760
  %4132 = vmatpush1.msra.mxu0 %v4131
  %4133 = vmatprep.subr.mxu0 0.0
  %v4134 = vand.u32 %v2439, 4294901760
  %v4135 = vsub.f32 %v2439, %v4134
  %v4136 = vand.u32 %v4135, 4294901760
  %4137 = vmatpush1.msra.mxu0 %v4136
  %4138 = vmatprep.subr.mxu0 0.0
  %v4139 = vand.u32 %v2438, 4294901760
  %v4140 = vsub.f32 %v2438, %v4139
  %v4141 = vand.u32 %v4140, 4294901760
  %4142 = vmatpush1.msra.mxu0 %v4141
  %4143 = vmatprep.subr.mxu0 0.0
  %v4144 = vand.u32 %v2437, 4294901760
  %v4145 = vsub.f32 %v2437, %v4144
  %v4146 = vand.u32 %v4145, 4294901760
  %4147 = vmatpush1.msra.mxu0 %v4146
  %4148 = vmatprep.subr.mxu0 0.0
  %v4149 = vand.u32 %v2436, 4294901760
  %v4150 = vsub.f32 %v2436, %v4149
  %v4151 = vand.u32 %v4150, 4294901760
  %4152 = vmatpush1.msra.mxu0 %v4151
  %4153 = vmatprep.subr.mxu0 0.0
  %v4154 = vand.u32 %v2435, 4294901760
  %v4155 = vsub.f32 %v2435, %v4154
  %v4156 = vand.u32 %v4155, 4294901760
  %4157 = vmatpush1.msra.mxu0 %v4156
  %4158 = vmatprep.subr.mxu0 0.0
  %v4159 = vand.u32 %v2434, 4294901760
  %v4160 = vsub.f32 %v2434, %v4159
  %v4161 = vand.u32 %v4160, 4294901760
  %4162 = vmatpush1.msra.mxu0 %v4161
  %4163 = vmatprep.subr.mxu0 0.0
  %v4164 = vand.u32 %v2433, 4294901760
  %v4165 = vsub.f32 %v2433, %v4164
  %v4166 = vand.u32 %v4165, 4294901760
  %4167 = vmatpush1.msra.mxu0 %v4166
  %4168 = vmatprep.subr.mxu0 0.0
  %v4169 = vand.u32 %v2432, 4294901760
  %v4170 = vsub.f32 %v2432, %v4169
  %v4171 = vand.u32 %v4170, 4294901760
  %4172 = vmatpush1.msra.mxu0 %v4171
  %4173 = vmatprep.subr.mxu0 0.0
  %v4174 = vand.u32 %v2431, 4294901760
  %v4175 = vsub.f32 %v2431, %v4174
  %v4176 = vand.u32 %v4175, 4294901760
  %4177 = vmatpush1.msra.mxu0 %v4176
  %4178 = vmatprep.subr.mxu0 0.0
  %v4179 = vand.u32 %v2430, 4294901760
  %v4180 = vsub.f32 %v2430, %v4179
  %v4181 = vand.u32 %v4180, 4294901760
  %4182 = vmatpush1.msra.mxu0 %v4181
  %4183 = vmatprep.subr.mxu0 0.0
  %v4184 = vand.u32 %v2429, 4294901760
  %v4185 = vsub.f32 %v2429, %v4184
  %v4186 = vand.u32 %v4185, 4294901760
  %4187 = vmatpush1.msra.mxu0 %v4186
  %4188 = vmatprep.subr.mxu0 0.0
  %v4189 = vand.u32 %v2428, 4294901760
  %v4190 = vsub.f32 %v2428, %v4189
  %v4191 = vand.u32 %v4190, 4294901760
  %4192 = vmatpush1.msra.mxu0 %v4191
  %4193 = vmatprep.subr.mxu0 0.0
  %v4194 = vand.u32 %v2427, 4294901760
  %v4195 = vsub.f32 %v2427, %v4194
  %v4196 = vand.u32 %v4195, 4294901760
  %4197 = vmatpush1.msra.mxu0 %v4196
  %4198 = vmatprep.subr.mxu0 0.0
  %v4199 = vand.u32 %v2426, 4294901760
  %v4200 = vsub.f32 %v2426, %v4199
  %v4201 = vand.u32 %v4200, 4294901760
  %4202 = vmatpush1.msra.mxu0 %v4201
  %4203 = vmatprep.subr.mxu0 0.0
  %4204 = vmatpush2.msra.mxu0 0.0
  %4205 = vmatprep.subr.mxu0 0.0
  %4206 = vmatpush2.msra.mxu0 0.0
  %4207 = vmatprep.subr.mxu0 0.0
  %4208 = vmatpush2.msra.mxu0 0.0
  %4209 = vmatprep.subr.mxu0 0.0
  %4210 = vmatpush2.msra.mxu0 0.0
  %4211 = vmatprep.subr.mxu0 0.0
  %4212 = vmatpush2.msra.mxu0 0.0
  %4213 = vmatprep.subr.mxu0 0.0
  %4214 = vmatpush2.msra.mxu0 0.0
  %4215 = vmatprep.subr.mxu0 0.0
  %4216 = vmatpush2.msra.mxu0 0.0
  %4217 = vmatprep.subr.mxu0 0.0
  %4218 = vmatpush2.msra.mxu0 0.0
  %4219 = vmatprep.subr.mxu0 0.0
  %4220 = vmatpush2.msra.mxu0 0.0
  %4221 = vmatprep.subr.mxu0 0.0
  %4222 = vmatpush2.msra.mxu0 0.0
  %4223 = vmatprep.subr.mxu0 0.0
  %v4224 = vand.u32 %v2447, 4294901760
  %v4225 = vsub.f32 %v2447, %v4224
  %v4226 = vand.u32 %v4225, 4294901760
  %4227 = vmatpush2.msra.mxu0 %v4226
  %4228 = vmatprep.subr.mxu0 0.0
  %v4229 = vand.u32 %v2446, 4294901760
  %v4230 = vsub.f32 %v2446, %v4229
  %v4231 = vand.u32 %v4230, 4294901760
  %4232 = vmatpush2.msra.mxu0 %v4231
  %4233 = vmatprep.subr.mxu0 0.0
  %v4234 = vand.u32 %v2445, 4294901760
  %v4235 = vsub.f32 %v2445, %v4234
  %v4236 = vand.u32 %v4235, 4294901760
  %4237 = vmatpush2.msra.mxu0 %v4236
  %4238 = vmatprep.subr.mxu0 0.0
  %v4239 = vand.u32 %v2444, 4294901760
  %v4240 = vsub.f32 %v2444, %v4239
  %v4241 = vand.u32 %v4240, 4294901760
  %4242 = vmatpush2.msra.mxu0 %v4241
  %4243 = vmatprep.subr.mxu0 0.0
  %v4244 = vand.u32 %v2443, 4294901760
  %v4245 = vsub.f32 %v2443, %v4244
  %v4246 = vand.u32 %v4245, 4294901760
  %4247 = vmatpush2.msra.mxu0 %v4246
  %4248 = vmatprep.subr.mxu0 0.0
  %v4249 = vand.u32 %v2442, 4294901760
  %v4250 = vsub.f32 %v2442, %v4249
  %v4251 = vand.u32 %v4250, 4294901760
  %4252 = vmatpush2.msra.mxu0 %v4251
  %v4253 = vand.u32 %v2456, 4294901760
  %4254 = vmatprep.mubr.f32.mxu0 %v4253
  %v4255 = vand.u32 %v2380, 4294901760
  %4256 = vmatmul.mubr.f32.gmra.mxu0 %v4255
  %v4257 = vpop.f32.mrf.mxu0
  %v4258 = vadd.f32 %v4087, %v4257
  %v4259 = vpop.f32.mrf.mxu0
  %v4260 = vand.u32 %v2459, 4294901760
  %4261 = vmatprep.mubr.f32.mxu0 %v4260
  %v4262 = vand.u32 %v2384, 4294901760
  %4263 = vmatmul.mubr.f32.gmra.mxu0 %v4262
  %v4264 = vpop.f32.mrf.mxu0
  %v4265 = vadd.f32 %v4098, %v4264
  %v4266 = vpop.f32.mrf.mxu0
  %v4267 = vand.u32 %v2462, 4294901760
  %4268 = vmatprep.mubr.f32.mxu0 %v4267
  %v4269 = vand.u32 %v2388, 4294901760
  %4270 = vmatmul.mubr.f32.gmra.mxu0 %v4269
  %v4271 = vpop.f32.mrf.mxu0
  %v4272 = vadd.f32 %v4109, %v4271
  %v4273 = vpop.f32.mrf.mxu0
  %v4274 = vand.u32 %v2465, 4294901760
  %4275 = vmatprep.mubr.f32.mxu0 %v4274
  %v4276 = vand.u32 %v2392, 4294901760
  %4277 = vmatmul.mubr.f32.gmra.mxu0 %v4276
  %v4278 = vpop.f32.mrf.mxu0
  %v4279 = vadd.f32 %v4120, %v4278
  %v4280 = vpop.f32.mrf.mxu0
  %4281 = vdwg.mxu0
  %4282 = vmatprep.subr.mxu0 0.0
  %v4283 = vand.u32 %v2441, 4294901760
  %4284 = vmatpush1.msra.mxu0 %v4283
  %4285 = vmatprep.subr.mxu0 0.0
  %v4286 = vand.u32 %v2440, 4294901760
  %4287 = vmatpush1.msra.mxu0 %v4286
  %4288 = vmatprep.subr.mxu0 0.0
  %v4289 = vand.u32 %v2439, 4294901760
  %4290 = vmatpush1.msra.mxu0 %v4289
  %4291 = vmatprep.subr.mxu0 0.0
  %v4292 = vand.u32 %v2438, 4294901760
  %4293 = vmatpush1.msra.mxu0 %v4292
  %4294 = vmatprep.subr.mxu0 0.0
  %v4295 = vand.u32 %v2437, 4294901760
  %4296 = vmatpush1.msra.mxu0 %v4295
  %4297 = vmatprep.subr.mxu0 0.0
  %v4298 = vand.u32 %v2436, 4294901760
  %4299 = vmatpush1.msra.mxu0 %v4298
  %4300 = vmatprep.subr.mxu0 0.0
  %v4301 = vand.u32 %v2435, 4294901760
  %4302 = vmatpush1.msra.mxu0 %v4301
  %4303 = vmatprep.subr.mxu0 0.0
  %v4304 = vand.u32 %v2434, 4294901760
  %4305 = vmatpush1.msra.mxu0 %v4304
  %4306 = vmatprep.subr.mxu0 0.0
  %v4307 = vand.u32 %v2433, 4294901760
  %4308 = vmatpush1.msra.mxu0 %v4307
  %4309 = vmatprep.subr.mxu0 0.0
  %v4310 = vand.u32 %v2432, 4294901760
  %4311 = vmatpush1.msra.mxu0 %v4310
  %4312 = vmatprep.subr.mxu0 0.0
  %v4313 = vand.u32 %v2431, 4294901760
  %4314 = vmatpush1.msra.mxu0 %v4313
  %4315 = vmatprep.subr.mxu0 0.0
  %v4316 = vand.u32 %v2430, 4294901760
  %4317 = vmatpush1.msra.mxu0 %v4316
  %4318 = vmatprep.subr.mxu0 0.0
  %v4319 = vand.u32 %v2429, 4294901760
  %4320 = vmatpush1.msra.mxu0 %v4319
  %4321 = vmatprep.subr.mxu0 0.0
  %v4322 = vand.u32 %v2428, 4294901760
  %4323 = vmatpush1.msra.mxu0 %v4322
  %4324 = vmatprep.subr.mxu0 0.0
  %v4325 = vand.u32 %v2427, 4294901760
  %4326 = vmatpush1.msra.mxu0 %v4325
  %4327 = vmatprep.subr.mxu0 0.0
  %v4328 = vand.u32 %v2426, 4294901760
  %4329 = vmatpush1.msra.mxu0 %v4328
  %4330 = vmatprep.subr.mxu0 0.0
  %4331 = vmatpush2.msra.mxu0 0.0
  %4332 = vmatprep.subr.mxu0 0.0
  %4333 = vmatpush2.msra.mxu0 0.0
  %4334 = vmatprep.subr.mxu0 0.0
  %4335 = vmatpush2.msra.mxu0 0.0
  %4336 = vmatprep.subr.mxu0 0.0
  %4337 = vmatpush2.msra.mxu0 0.0
  %4338 = vmatprep.subr.mxu0 0.0
  %4339 = vmatpush2.msra.mxu0 0.0
  %4340 = vmatprep.subr.mxu0 0.0
  %4341 = vmatpush2.msra.mxu0 0.0
  %4342 = vmatprep.subr.mxu0 0.0
  %4343 = vmatpush2.msra.mxu0 0.0
  %4344 = vmatprep.subr.mxu0 0.0
  %4345 = vmatpush2.msra.mxu0 0.0
  %4346 = vmatprep.subr.mxu0 0.0
  %4347 = vmatpush2.msra.mxu0 0.0
  %4348 = vmatprep.subr.mxu0 0.0
  %4349 = vmatpush2.msra.mxu0 0.0
  %4350 = vmatprep.subr.mxu0 0.0
  %v4351 = vand.u32 %v2447, 4294901760
  %4352 = vmatpush2.msra.mxu0 %v4351
  %4353 = vmatprep.subr.mxu0 0.0
  %v4354 = vand.u32 %v2446, 4294901760
  %4355 = vmatpush2.msra.mxu0 %v4354
  %4356 = vmatprep.subr.mxu0 0.0
  %v4357 = vand.u32 %v2445, 4294901760
  %4358 = vmatpush2.msra.mxu0 %v4357
  %4359 = vmatprep.subr.mxu0 0.0
  %v4360 = vand.u32 %v2444, 4294901760
  %4361 = vmatpush2.msra.mxu0 %v4360
  %4362 = vmatprep.subr.mxu0 0.0
  %v4363 = vand.u32 %v2443, 4294901760
  %4364 = vmatpush2.msra.mxu0 %v4363
  %4365 = vmatprep.subr.mxu0 0.0
  %v4366 = vand.u32 %v2442, 4294901760
  %4367 = vmatpush2.msra.mxu0 %v4366
  %v4368 = vand.u32 %v2456, 4294901760
  %4369 = vmatprep.mubr.f32.mxu0 %v4368
  %v4370 = vand.u32 %v2380, 4294901760
  %4371 = vmatmul.mubr.f32.gmra.mxu0 %v4370
  %v4372 = vpop.f32.mrf.mxu0
  %v4373 = vadd.f32 %v4258, %v4372
  %v4374 = vpop.f32.mrf.mxu0
  %v4375 = vand.u32 %v2459, 4294901760
  %4376 = vmatprep.mubr.f32.mxu0 %v4375
  %v4377 = vand.u32 %v2384, 4294901760
  %4378 = vmatmul.mubr.f32.gmra.mxu0 %v4377
  %v4379 = vpop.f32.mrf.mxu0
  %v4380 = vadd.f32 %v4265, %v4379
  %v4381 = vpop.f32.mrf.mxu0
  %v4382 = vand.u32 %v2462, 4294901760
  %4383 = vmatprep.mubr.f32.mxu0 %v4382
  %v4384 = vand.u32 %v2388, 4294901760
  %4385 = vmatmul.mubr.f32.gmra.mxu0 %v4384
  %v4386 = vpop.f32.mrf.mxu0
  %v4387 = vadd.f32 %v4272, %v4386
  %v4388 = vpop.f32.mrf.mxu0
  %v4389 = vand.u32 %v2465, 4294901760
  %4390 = vmatprep.mubr.f32.mxu0 %v4389
  %v4391 = vand.u32 %v2392, 4294901760
  %4392 = vmatmul.mubr.f32.gmra.mxu0 %v4391
  %v4393 = vpop.f32.mrf.mxu0
  %v4394 = vadd.f32 %v4279, %v4393
  %v4395 = vpop.f32.mrf.mxu0
  %4396 = vdwg.mxu0
  %v4397 = vtanh.pop %v4373
  %v4398 = vtanh.pop %v4380
  %v4399 = vtanh.pop %v4387
  %v4400 = vtanh.pop %v4394
  %vm4401 = vcmask 31744
  %4402 = vst.msk [vmem:[#allocation3] sm:$0xff] %vm4401, 0.0
  %4403 = vst.msk [vmem:[#allocation3 + $0x8] sm:$0xff] %vm4401, 0.0
  %4404 = vst.msk [vmem:[#allocation3 + $0x10] sm:$0xff] %vm4401, 0.0
  %4405 = vst.msk [vmem:[#allocation3 + $0x18] sm:$0xff] %vm4401, 0.0
  %4406 = vst.msk [vmem:[#allocation3 + $0x20] sm:$0xff] %vm4401, 0.0
  %4407 = vst.msk [vmem:[#allocation3 + $0x28] sm:$0xff] %vm4401, 0.0
  %vm4408 = vcmask 25600
  %4409 = vst.msk [vmem:[#allocation3 + $0x30] sm:$0x3] %vm4408, 0.0
  %vm4410 = vcmask 589344
  %4411 = vst.msk [vmem:[#allocation3] sm:$0xff] %vm4410, 0.0
  %4412 = vst.msk [vmem:[#allocation3 + $0x8] sm:$0xff] %vm4410, 0.0
  %4413 = vst.msk [vmem:[#allocation3 + $0x10] sm:$0xff] %vm4410, 0.0
  %4414 = vst.msk [vmem:[#allocation3 + $0x18] sm:$0xff] %vm4410, 0.0
  %4415 = vst.msk [vmem:[#allocation3 + $0x20] sm:$0xff] %vm4410, 0.0
  %4416 = vst.msk [vmem:[#allocation3 + $0x28] sm:$0xff] %vm4410, 0.0
  %vm4417 = vcmask 583200
  %4418 = vst.msk [vmem:[#allocation3 + $0x30] sm:$0x3] %vm4417, 0.0
  %vm4419 = vcmask 581632
  %4420 = vst.msk [vmem:[#allocation3 + $0x7] sm:$0x1] %vm4419, 0.0
  %4421 = vst.msk [vmem:[#allocation3 + $0x18] sm:$0x1] %vm4419, 0.0
  %4424 = vrot.lane.b32.xlu0 %v4397, 4
  %v4425 = vpop.permute.xlu0 %4424
  %4426 = vrot.lane.b32.xlu0 %v4398, 4
  %v4427 = vpop.permute.xlu0 %4426
  %vm4430 = vcmask 556064
  %4431 = vst.msk [vmem:[#allocation3 + $0x8] sm:$0xff] %vm4430, %v4425
  %4432 = vst.msk [vmem:[#allocation3 + $0x10] sm:$0xff] %vm4430, %v4427
  %4433 = vst.msk [vmem:[#allocation3 + $0x20] sm:$0x1] %vm4419, 0.0
  %4434 = vst.msk [vmem:[#allocation3 + $0x31] sm:$0x1] %vm4419, 0.0
  %4437 = vrot.lane.b32.xlu0 %v4399, 4
  %v4438 = vpop.permute.xlu0 %4437
  %4439 = vrot.lane.b32.xlu0 %v4400, 4
  %v4440 = vpop.permute.xlu0 %4439
  %4443 = vst.msk [vmem:[#allocation3 + $0x21] sm:$0xff] %vm4430, %v4438
  %4444 = vst.msk [vmem:[#allocation3 + $0x29] sm:$0xff] %vm4430, %v4440
  %v4445 = vld [vmem:[#allocation3 + $0x7] sm:$0xff]
  %v4446 = vld [vmem:[#allocation3 + $0xf] sm:$0xff]
  %vm4447 = vcmask 588800
  %4448 = vst.msk [vmem:[#allocation6] sm:$0xff] %vm4447, %v4445
  %4449 = vst.msk [vmem:[#allocation6 + $0x10] sm:$0xff] %vm4447, %v4446
  %v4450 = vld [vmem:[#allocation3 + $0x8] sm:$0xff]
  %v4451 = vld [vmem:[#allocation3 + $0x10] sm:$0xff]
  %4454 = vrot.lane.b32.xlu0 %v4450, 72
  %v4455 = vpop.permute.xlu0 %4454
  %4456 = vrot.lane.b32.xlu0 %v4451, 72
  %v4457 = vpop.permute.xlu0 %4456
  %vm4460 = vcmask 1048128
  %4461 = vst.msk [vmem:[#allocation6] sm:$0xff] %vm4460, %v4455
  %4462 = vst.msk [vmem:[#allocation6 + $0x8] sm:$0xff] %vm88, %v4455
  %4463 = vst.msk [vmem:[#allocation6 + $0x10] sm:$0xff] %vm4460, %v4457
  %4464 = vst.msk [vmem:[#allocation6 + $0x18] sm:$0xff] %vm88, %v4457
  %v4465 = vld [vmem:[#allocation3 + $0x9] sm:$0xff]
  %v4466 = vld [vmem:[#allocation3 + $0x11] sm:$0xff]
  %4469 = vrot.lane.b32.xlu0 %v4465, 16
  %v4470 = vpop.permute.xlu0 %4469
  %4471 = vrot.lane.b32.xlu0 %v4466, 16
  %v4472 = vpop.permute.xlu0 %4471
  %vm4475 = vcmask 720000
  %4476 = vst.msk [vmem:[#allocation6 + $0x8] sm:$0xff] %vm4475, %v4470
  %4477 = vst.msk [vmem:[#allocation6 + $0x18] sm:$0xff] %vm4475, %v4472
  %v4478 = vld [vmem:[#allocation3 + $0x20] sm:$0xff]
  %v4479 = vld [vmem:[#allocation3 + $0x28] sm:$0xff]
  %4480 = vst.msk [vmem:[#allocation6 + $0x20] sm:$0xff] %vm4447, %v4478
  %4481 = vst.msk [vmem:[#allocation6 + $0x30] sm:$0xff] %vm4447, %v4479
  %v4482 = vld [vmem:[#allocation3 + $0x21] sm:$0xff]
  %v4483 = vld [vmem:[#allocation3 + $0x29] sm:$0xff]
  %4486 = vrot.lane.b32.xlu0 %v4482, 72
  %v4487 = vpop.permute.xlu0 %4486
  %4488 = vrot.lane.b32.xlu0 %v4483, 72
  %v4489 = vpop.permute.xlu0 %4488
  %4492 = vst.msk [vmem:[#allocation6 + $0x20] sm:$0xff] %vm4460, %v4487
  %4493 = vst.msk [vmem:[#allocation6 + $0x28] sm:$0xff] %vm88, %v4487
  %4494 = vst.msk [vmem:[#allocation6 + $0x30] sm:$0xff] %vm4460, %v4489
  %4495 = vst.msk [vmem:[#allocation6 + $0x38] sm:$0xff] %vm88, %v4489
  %v4496 = vld [vmem:[#allocation3 + $0x22] sm:$0xff]
  %v4497 = vld [vmem:[#allocation3 + $0x2a] sm:$0xff]
  %4500 = vrot.lane.b32.xlu0 %v4496, 16
  %v4501 = vpop.permute.xlu0 %4500
  %4502 = vrot.lane.b32.xlu0 %v4497, 16
  %v4503 = vpop.permute.xlu0 %4502
  %4506 = vst.msk [vmem:[#allocation6 + $0x28] sm:$0xff] %vm4475, %v4501
  %4507 = vst.msk [vmem:[#allocation6 + $0x38] sm:$0xff] %vm4475, %v4503
  %v4508 = vld [vmem:[#allocation6] sm:$0xff]
  %v4509 = vld [vmem:[#allocation6 + $0x8] sm:$0xff]
  %v4510 = vld [vmem:[#allocation6 + $0x10] sm:$0xff]
  %v4511 = vld [vmem:[#allocation6 + $0x18] sm:$0xff]
  %v4512 = vld [vmem:[#allocation6 + $0x20] sm:$0xff]
  %v4513 = vld [vmem:[#allocation6 + $0x28] sm:$0xff]
  %v4514 = vld [vmem:[#allocation6 + $0x30] sm:$0xff]
  %v4515 = vld [vmem:[#allocation6 + $0x38] sm:$0xff]
  %v4516 = vld [vmem:[%s5] sm:$0xff]
  %v4517 = vld [vmem:[%s5 + $0x8] sm:$0xff]
  %v4518 = vld [vmem:[%s5 + $0x10] sm:$0xff]
  %v4519 = vld [vmem:[%s5 + $0x18] sm:$0xff]
  %v4520 = vld [vmem:[%s5 + $0x20] sm:$0xff]
  %v4521 = vld [vmem:[%s5 + $0x28] sm:$0xff]
  %v4522 = vld [vmem:[%s5 + $0x30] sm:$0xff]
  %v4523 = vld [vmem:[%s5 + $0x38] sm:$0xff]
  %v4524 = vld [vmem:[%s5 + $0x40] sm:$0xff]
  %v4525 = vld [vmem:[%s5 + $0x48] sm:$0xff]
  %v4526 = vld [vmem:[%s5 + $0x50] sm:$0xff]
  %v4527 = vld [vmem:[%s5 + $0x58] sm:$0xff]
  %v4528 = vld [vmem:[%s5 + $0x60] sm:$0xff]
  %v4529 = vld [vmem:[%s5 + $0x68] sm:$0xff]
  %v4530 = vld [vmem:[%s5 + $0x70] sm:$0xff]
  %v4531 = vld [vmem:[%s5 + $0x78] sm:$0xff]
  %v4532 = vld [vmem:[%s5 + $0x80] sm:$0xff]
  %v4533 = vld [vmem:[%s5 + $0x88] sm:$0xff]
  %v4534 = vld [vmem:[%s5 + $0x90] sm:$0xff]
  %v4535 = vld [vmem:[%s5 + $0x98] sm:$0xff]
  %v4536 = vld [vmem:[%s5 + $0xa0] sm:$0xff]
  %v4537 = vld [vmem:[%s5 + $0xa8] sm:$0xff]
  %v4538 = vld [vmem:[%s5 + $0xb0] sm:$0xff]
  %v4539 = vld [vmem:[%s5 + $0xb8] sm:$0xff]
  %v4540 = vld [vmem:[%s5 + $0xc0] sm:$0xff]
  %v4541 = vld [vmem:[%s5 + $0xc8] sm:$0xff]
  %v4542 = vld [vmem:[%s5 + $0xd0] sm:$0xff]
  %v4543 = vld [vmem:[%s5 + $0xd8] sm:$0xff]
  %v4544 = vld [vmem:[%s5 + $0xe0] sm:$0xff]
  %v4545 = vld [vmem:[%s5 + $0xe8] sm:$0xff]
  %v4546 = vld [vmem:[%s5 + $0xf0] sm:$0xff]
  %v4547 = vld [vmem:[%s5 + $0xf8] sm:$0xff]
  %v4548 = vld [vmem:[%s5 + $0x100] sm:$0xff]
  %v4549 = vld [vmem:[%s5 + $0x108] sm:$0xff]
  %v4550 = vld [vmem:[%s5 + $0x110] sm:$0xff]
  %v4551 = vld [vmem:[%s5 + $0x118] sm:$0xff]
  %v4552 = vld [vmem:[%s5 + $0x120] sm:$0xff]
  %v4553 = vld [vmem:[%s5 + $0x128] sm:$0xff]
  %v4554 = vld [vmem:[%s5 + $0x130] sm:$0xff]
  %v4555 = vld [vmem:[%s5 + $0x138] sm:$0xff]
  %v4556 = vld [vmem:[%s5 + $0x140] sm:$0xff]
  %v4557 = vld [vmem:[%s5 + $0x148] sm:$0xff]
  %v4558 = vld [vmem:[%s5 + $0x150] sm:$0xff]
  %v4559 = vld [vmem:[%s5 + $0x158] sm:$0xff]
  %v4560 = vld [vmem:[%s5 + $0x160] sm:$0xff]
  %v4561 = vld [vmem:[%s5 + $0x168] sm:$0xff]
  %v4562 = vld [vmem:[%s5 + $0x170] sm:$0xff]
  %v4563 = vld [vmem:[%s5 + $0x178] sm:$0xff]
  %v4564 = vld [vmem:[%s5 + $0x180] sm:$0xff]
  %v4565 = vld [vmem:[%s5 + $0x188] sm:$0xff]
  %v4566 = vld [vmem:[%s5 + $0x190] sm:$0xff]
  %v4567 = vld [vmem:[%s5 + $0x198] sm:$0xff]
  %v4568 = vld [vmem:[%s5 + $0x1a0] sm:$0xff]
  %v4569 = vld [vmem:[%s5 + $0x1a8] sm:$0xff]
  %v4570 = vld [vmem:[%s6] sm:$0x3]
  %v4572 = vlaneseq
  %v4573 = vshrl.u32 %v4572, 7
  %v4574 = vsub.s32 0, %v4573
  %v4575 = vrot.slane %v4570, %v4574
  %v4576 = vlaneseq
  %v4577 = vshrl.u32 %v4576, 7
  %v4578 = vsub.s32 1, %v4577
  %v4579 = vrot.slane %v4570, %v4578
  %vm4582 = vcmask 719872
  %v4584 = vsel %vm4582, %v4509, 0
  %v4587 = vsel %vm4582, %v4511, 0
  %v4590 = vsel %vm4582, %v4513, 0
  %v4593 = vsel %vm4582, %v4515, 0
  %v4595 = vand.u32 %v4547, 4294901760
  %4596 = vmatprep.subr.mxu0 %v4595
  %v4597 = vand.u32 %v4546, 4294901760
  %4598 = vmatpush1.msra.mxu0 %v4597
  %v4599 = vand.u32 %v4545, 4294901760
  %4600 = vmatprep.subr.mxu0 %v4599
  %v4601 = vand.u32 %v4544, 4294901760
  %4602 = vmatpush1.msra.mxu0 %v4601
  %v4603 = vand.u32 %v4543, 4294901760
  %4604 = vmatprep.subr.mxu0 %v4603
  %v4605 = vand.u32 %v4542, 4294901760
  %4606 = vmatpush1.msra.mxu0 %v4605
  %v4607 = vand.u32 %v4541, 4294901760
  %4608 = vmatprep.subr.mxu0 %v4607
  %v4609 = vand.u32 %v4540, 4294901760
  %4610 = vmatpush1.msra.mxu0 %v4609
  %v4611 = vand.u32 %v4539, 4294901760
  %4612 = vmatprep.subr.mxu0 %v4611
  %v4613 = vand.u32 %v4538, 4294901760
  %4614 = vmatpush1.msra.mxu0 %v4613
  %v4615 = vand.u32 %v4537, 4294901760
  %4616 = vmatprep.subr.mxu0 %v4615
  %v4617 = vand.u32 %v4536, 4294901760
  %4618 = vmatpush1.msra.mxu0 %v4617
  %v4619 = vand.u32 %v4535, 4294901760
  %4620 = vmatprep.subr.mxu0 %v4619
  %v4621 = vand.u32 %v4534, 4294901760
  %4622 = vmatpush1.msra.mxu0 %v4621
  %v4623 = vand.u32 %v4533, 4294901760
  %4624 = vmatprep.subr.mxu0 %v4623
  %v4625 = vand.u32 %v4532, 4294901760
  %4626 = vmatpush1.msra.mxu0 %v4625
  %v4627 = vand.u32 %v4531, 4294901760
  %4628 = vmatprep.subr.mxu0 %v4627
  %v4629 = vand.u32 %v4530, 4294901760
  %4630 = vmatpush1.msra.mxu0 %v4629
  %v4631 = vand.u32 %v4529, 4294901760
  %4632 = vmatprep.subr.mxu0 %v4631
  %v4633 = vand.u32 %v4528, 4294901760
  %4634 = vmatpush1.msra.mxu0 %v4633
  %v4635 = vand.u32 %v4527, 4294901760
  %4636 = vmatprep.subr.mxu0 %v4635
  %v4637 = vand.u32 %v4526, 4294901760
  %4638 = vmatpush1.msra.mxu0 %v4637
  %v4639 = vand.u32 %v4525, 4294901760
  %4640 = vmatprep.subr.mxu0 %v4639
  %v4641 = vand.u32 %v4524, 4294901760
  %4642 = vmatpush1.msra.mxu0 %v4641
  %v4643 = vand.u32 %v4523, 4294901760
  %4644 = vmatprep.subr.mxu0 %v4643
  %v4645 = vand.u32 %v4522, 4294901760
  %4646 = vmatpush1.msra.mxu0 %v4645
  %v4647 = vand.u32 %v4521, 4294901760
  %4648 = vmatprep.subr.mxu0 %v4647
  %v4649 = vand.u32 %v4520, 4294901760
  %4650 = vmatpush1.msra.mxu0 %v4649
  %v4651 = vand.u32 %v4519, 4294901760
  %4652 = vmatprep.subr.mxu0 %v4651
  %v4653 = vand.u32 %v4518, 4294901760
  %4654 = vmatpush1.msra.mxu0 %v4653
  %v4655 = vand.u32 %v4517, 4294901760
  %4656 = vmatprep.subr.mxu0 %v4655
  %v4657 = vand.u32 %v4516, 4294901760
  %4658 = vmatpush1.msra.mxu0 %v4657
  %4659 = vmatprep.subr.mxu0 0.0
  %4660 = vmatpush2.msra.mxu0 0.0
  %4661 = vmatprep.subr.mxu0 0.0
  %4662 = vmatpush2.msra.mxu0 0.0
  %4663 = vmatprep.subr.mxu0 0.0
  %4664 = vmatpush2.msra.mxu0 0.0
  %4665 = vmatprep.subr.mxu0 0.0
  %4666 = vmatpush2.msra.mxu0 0.0
  %4667 = vmatprep.subr.mxu0 0.0
  %4668 = vmatpush2.msra.mxu0 0.0
  %v4669 = vand.u32 %v4569, 4294901760
  %4670 = vmatprep.subr.mxu0 %v4669
  %v4671 = vand.u32 %v4568, 4294901760
  %4672 = vmatpush2.msra.mxu0 %v4671
  %v4673 = vand.u32 %v4567, 4294901760
  %4674 = vmatprep.subr.mxu0 %v4673
  %v4675 = vand.u32 %v4566, 4294901760
  %4676 = vmatpush2.msra.mxu0 %v4675
  %v4677 = vand.u32 %v4565, 4294901760
  %4678 = vmatprep.subr.mxu0 %v4677
  %v4679 = vand.u32 %v4564, 4294901760
  %4680 = vmatpush2.msra.mxu0 %v4679
  %v4681 = vand.u32 %v4563, 4294901760
  %4682 = vmatprep.subr.mxu0 %v4681
  %v4683 = vand.u32 %v4562, 4294901760
  %4684 = vmatpush2.msra.mxu0 %v4683
  %v4685 = vand.u32 %v4561, 4294901760
  %4686 = vmatprep.subr.mxu0 %v4685
  %v4687 = vand.u32 %v4560, 4294901760
  %4688 = vmatpush2.msra.mxu0 %v4687
  %v4689 = vand.u32 %v4559, 4294901760
  %4690 = vmatprep.subr.mxu0 %v4689
  %v4691 = vand.u32 %v4558, 4294901760
  %4692 = vmatpush2.msra.mxu0 %v4691
  %v4693 = vand.u32 %v4557, 4294901760
  %4694 = vmatprep.subr.mxu0 %v4693
  %v4695 = vand.u32 %v4556, 4294901760
  %4696 = vmatpush2.msra.mxu0 %v4695
  %v4697 = vand.u32 %v4555, 4294901760
  %4698 = vmatprep.subr.mxu0 %v4697
  %v4699 = vand.u32 %v4554, 4294901760
  %4700 = vmatpush2.msra.mxu0 %v4699
  %v4701 = vand.u32 %v4553, 4294901760
  %4702 = vmatprep.subr.mxu0 %v4701
  %v4703 = vand.u32 %v4552, 4294901760
  %4704 = vmatpush2.msra.mxu0 %v4703
  %v4705 = vand.u32 %v4551, 4294901760
  %4706 = vmatprep.subr.mxu0 %v4705
  %v4707 = vand.u32 %v4550, 4294901760
  %4708 = vmatpush2.msra.mxu0 %v4707
  %v4709 = vand.u32 %v4549, 4294901760
  %4710 = vmatprep.subr.mxu0 %v4709
  %v4711 = vand.u32 %v4548, 4294901760
  %4712 = vmatpush2.msra.mxu0 %v4711
  %v4713 = vand.u32 %v4584, 4294901760
  %v4714 = vsub.f32 %v4584, %v4713
  %v4715 = vand.u32 %v4714, 4294901760
  %v4716 = vsub.f32 %v4714, %v4715
  %v4717 = vand.u32 %v4716, 4294901760
  %4718 = vmatprep.mubr.f32.mxu0 %v4717
  %v4719 = vand.u32 %v4508, 4294901760
  %v4720 = vsub.f32 %v4508, %v4719
  %v4721 = vand.u32 %v4720, 4294901760
  %v4722 = vsub.f32 %v4720, %v4721
  %v4723 = vand.u32 %v4722, 4294901760
  %4724 = vmatmul.mubr.f32.gmra.mxu0 %v4723
  %v4725 = vpop.f32.mrf.mxu0
  %v4726 = vadd.f32 %v4575, %v4725
  %v4727 = vpop.f32.mrf.mxu0
  %v4728 = vadd.f32 %v4579, %v4727
  %v4729 = vand.u32 %v4587, 4294901760
  %v4730 = vsub.f32 %v4587, %v4729
  %v4731 = vand.u32 %v4730, 4294901760
  %v4732 = vsub.f32 %v4730, %v4731
  %v4733 = vand.u32 %v4732, 4294901760
  %4734 = vmatprep.mubr.f32.mxu0 %v4733
  %v4735 = vand.u32 %v4510, 4294901760
  %v4736 = vsub.f32 %v4510, %v4735
  %v4737 = vand.u32 %v4736, 4294901760
  %v4738 = vsub.f32 %v4736, %v4737
  %v4739 = vand.u32 %v4738, 4294901760
  %4740 = vmatmul.mubr.f32.gmra.mxu0 %v4739
  %v4741 = vpop.f32.mrf.mxu0
  %v4742 = vadd.f32 %v4575, %v4741
  %v4743 = vpop.f32.mrf.mxu0
  %v4744 = vadd.f32 %v4579, %v4743
  %v4745 = vand.u32 %v4590, 4294901760
  %v4746 = vsub.f32 %v4590, %v4745
  %v4747 = vand.u32 %v4746, 4294901760
  %v4748 = vsub.f32 %v4746, %v4747
  %v4749 = vand.u32 %v4748, 4294901760
  %4750 = vmatprep.mubr.f32.mxu0 %v4749
  %v4751 = vand.u32 %v4512, 4294901760
  %v4752 = vsub.f32 %v4512, %v4751
  %v4753 = vand.u32 %v4752, 4294901760
  %v4754 = vsub.f32 %v4752, %v4753
  %v4755 = vand.u32 %v4754, 4294901760
  %4756 = vmatmul.mubr.f32.gmra.mxu0 %v4755
  %v4757 = vpop.f32.mrf.mxu0
  %v4758 = vadd.f32 %v4575, %v4757
  %v4759 = vpop.f32.mrf.mxu0
  %v4760 = vadd.f32 %v4579, %v4759
  %v4761 = vand.u32 %v4593, 4294901760
  %v4762 = vsub.f32 %v4593, %v4761
  %v4763 = vand.u32 %v4762, 4294901760
  %v4764 = vsub.f32 %v4762, %v4763
  %v4765 = vand.u32 %v4764, 4294901760
  %4766 = vmatprep.mubr.f32.mxu0 %v4765
  %v4767 = vand.u32 %v4514, 4294901760
  %v4768 = vsub.f32 %v4514, %v4767
  %v4769 = vand.u32 %v4768, 4294901760
  %v4770 = vsub.f32 %v4768, %v4769
  %v4771 = vand.u32 %v4770, 4294901760
  %4772 = vmatmul.mubr.f32.gmra.mxu0 %v4771
  %v4773 = vpop.f32.mrf.mxu0
  %v4774 = vadd.f32 %v4575, %v4773
  %v4775 = vpop.f32.mrf.mxu0
  %v4776 = vadd.f32 %v4579, %v4775
  %4777 = vdwg.mxu0
  %v4778 = vand.u32 %v4547, 4294901760
  %v4779 = vsub.f32 %v4547, %v4778
  %v4780 = vand.u32 %v4779, 4294901760
  %v4781 = vsub.f32 %v4779, %v4780
  %v4782 = vand.u32 %v4781, 4294901760
  %4783 = vmatprep.subr.mxu0 %v4782
  %v4784 = vand.u32 %v4546, 4294901760
  %v4785 = vsub.f32 %v4546, %v4784
  %v4786 = vand.u32 %v4785, 4294901760
  %v4787 = vsub.f32 %v4785, %v4786
  %v4788 = vand.u32 %v4787, 4294901760
  %4789 = vmatpush1.msra.mxu0 %v4788
  %v4790 = vand.u32 %v4545, 4294901760
  %v4791 = vsub.f32 %v4545, %v4790
  %v4792 = vand.u32 %v4791, 4294901760
  %v4793 = vsub.f32 %v4791, %v4792
  %v4794 = vand.u32 %v4793, 4294901760
  %4795 = vmatprep.subr.mxu0 %v4794
  %v4796 = vand.u32 %v4544, 4294901760
  %v4797 = vsub.f32 %v4544, %v4796
  %v4798 = vand.u32 %v4797, 4294901760
  %v4799 = vsub.f32 %v4797, %v4798
  %v4800 = vand.u32 %v4799, 4294901760
  %4801 = vmatpush1.msra.mxu0 %v4800
  %v4802 = vand.u32 %v4543, 4294901760
  %v4803 = vsub.f32 %v4543, %v4802
  %v4804 = vand.u32 %v4803, 4294901760
  %v4805 = vsub.f32 %v4803, %v4804
  %v4806 = vand.u32 %v4805, 4294901760
  %4807 = vmatprep.subr.mxu0 %v4806
  %v4808 = vand.u32 %v4542, 4294901760
  %v4809 = vsub.f32 %v4542, %v4808
  %v4810 = vand.u32 %v4809, 4294901760
  %v4811 = vsub.f32 %v4809, %v4810
  %v4812 = vand.u32 %v4811, 4294901760
  %4813 = vmatpush1.msra.mxu0 %v4812
  %v4814 = vand.u32 %v4541, 4294901760
  %v4815 = vsub.f32 %v4541, %v4814
  %v4816 = vand.u32 %v4815, 4294901760
  %v4817 = vsub.f32 %v4815, %v4816
  %v4818 = vand.u32 %v4817, 4294901760
  %4819 = vmatprep.subr.mxu0 %v4818
  %v4820 = vand.u32 %v4540, 4294901760
  %v4821 = vsub.f32 %v4540, %v4820
  %v4822 = vand.u32 %v4821, 4294901760
  %v4823 = vsub.f32 %v4821, %v4822
  %v4824 = vand.u32 %v4823, 4294901760
  %4825 = vmatpush1.msra.mxu0 %v4824
  %v4826 = vand.u32 %v4539, 4294901760
  %v4827 = vsub.f32 %v4539, %v4826
  %v4828 = vand.u32 %v4827, 4294901760
  %v4829 = vsub.f32 %v4827, %v4828
  %v4830 = vand.u32 %v4829, 4294901760
  %4831 = vmatprep.subr.mxu0 %v4830
  %v4832 = vand.u32 %v4538, 4294901760
  %v4833 = vsub.f32 %v4538, %v4832
  %v4834 = vand.u32 %v4833, 4294901760
  %v4835 = vsub.f32 %v4833, %v4834
  %v4836 = vand.u32 %v4835, 4294901760
  %4837 = vmatpush1.msra.mxu0 %v4836
  %v4838 = vand.u32 %v4537, 4294901760
  %v4839 = vsub.f32 %v4537, %v4838
  %v4840 = vand.u32 %v4839, 4294901760
  %v4841 = vsub.f32 %v4839, %v4840
  %v4842 = vand.u32 %v4841, 4294901760
  %4843 = vmatprep.subr.mxu0 %v4842
  %v4844 = vand.u32 %v4536, 4294901760
  %v4845 = vsub.f32 %v4536, %v4844
  %v4846 = vand.u32 %v4845, 4294901760
  %v4847 = vsub.f32 %v4845, %v4846
  %v4848 = vand.u32 %v4847, 4294901760
  %4849 = vmatpush1.msra.mxu0 %v4848
  %v4850 = vand.u32 %v4535, 4294901760
  %v4851 = vsub.f32 %v4535, %v4850
  %v4852 = vand.u32 %v4851, 4294901760
  %v4853 = vsub.f32 %v4851, %v4852
  %v4854 = vand.u32 %v4853, 4294901760
  %4855 = vmatprep.subr.mxu0 %v4854
  %v4856 = vand.u32 %v4534, 4294901760
  %v4857 = vsub.f32 %v4534, %v4856
  %v4858 = vand.u32 %v4857, 4294901760
  %v4859 = vsub.f32 %v4857, %v4858
  %v4860 = vand.u32 %v4859, 4294901760
  %4861 = vmatpush1.msra.mxu0 %v4860
  %v4862 = vand.u32 %v4533, 4294901760
  %v4863 = vsub.f32 %v4533, %v4862
  %v4864 = vand.u32 %v4863, 4294901760
  %v4865 = vsub.f32 %v4863, %v4864
  %v4866 = vand.u32 %v4865, 4294901760
  %4867 = vmatprep.subr.mxu0 %v4866
  %v4868 = vand.u32 %v4532, 4294901760
  %v4869 = vsub.f32 %v4532, %v4868
  %v4870 = vand.u32 %v4869, 4294901760
  %v4871 = vsub.f32 %v4869, %v4870
  %v4872 = vand.u32 %v4871, 4294901760
  %4873 = vmatpush1.msra.mxu0 %v4872
  %v4874 = vand.u32 %v4531, 4294901760
  %v4875 = vsub.f32 %v4531, %v4874
  %v4876 = vand.u32 %v4875, 4294901760
  %v4877 = vsub.f32 %v4875, %v4876
  %v4878 = vand.u32 %v4877, 4294901760
  %4879 = vmatprep.subr.mxu0 %v4878
  %v4880 = vand.u32 %v4530, 4294901760
  %v4881 = vsub.f32 %v4530, %v4880
  %v4882 = vand.u32 %v4881, 4294901760
  %v4883 = vsub.f32 %v4881, %v4882
  %v4884 = vand.u32 %v4883, 4294901760
  %4885 = vmatpush1.msra.mxu0 %v4884
  %v4886 = vand.u32 %v4529, 4294901760
  %v4887 = vsub.f32 %v4529, %v4886
  %v4888 = vand.u32 %v4887, 4294901760
  %v4889 = vsub.f32 %v4887, %v4888
  %v4890 = vand.u32 %v4889, 4294901760
  %4891 = vmatprep.subr.mxu0 %v4890
  %v4892 = vand.u32 %v4528, 4294901760
  %v4893 = vsub.f32 %v4528, %v4892
  %v4894 = vand.u32 %v4893, 4294901760
  %v4895 = vsub.f32 %v4893, %v4894
  %v4896 = vand.u32 %v4895, 4294901760
  %4897 = vmatpush1.msra.mxu0 %v4896
  %v4898 = vand.u32 %v4527, 4294901760
  %v4899 = vsub.f32 %v4527, %v4898
  %v4900 = vand.u32 %v4899, 4294901760
  %v4901 = vsub.f32 %v4899, %v4900
  %v4902 = vand.u32 %v4901, 4294901760
  %4903 = vmatprep.subr.mxu0 %v4902
  %v4904 = vand.u32 %v4526, 4294901760
  %v4905 = vsub.f32 %v4526, %v4904
  %v4906 = vand.u32 %v4905, 4294901760
  %v4907 = vsub.f32 %v4905, %v4906
  %v4908 = vand.u32 %v4907, 4294901760
  %4909 = vmatpush1.msra.mxu0 %v4908
  %v4910 = vand.u32 %v4525, 4294901760
  %v4911 = vsub.f32 %v4525, %v4910
  %v4912 = vand.u32 %v4911, 4294901760
  %v4913 = vsub.f32 %v4911, %v4912
  %v4914 = vand.u32 %v4913, 4294901760
  %4915 = vmatprep.subr.mxu0 %v4914
  %v4916 = vand.u32 %v4524, 4294901760
  %v4917 = vsub.f32 %v4524, %v4916
  %v4918 = vand.u32 %v4917, 4294901760
  %v4919 = vsub.f32 %v4917, %v4918
  %v4920 = vand.u32 %v4919, 4294901760
  %4921 = vmatpush1.msra.mxu0 %v4920
  %v4922 = vand.u32 %v4523, 4294901760
  %v4923 = vsub.f32 %v4523, %v4922
  %v4924 = vand.u32 %v4923, 4294901760
  %v4925 = vsub.f32 %v4923, %v4924
  %v4926 = vand.u32 %v4925, 4294901760
  %4927 = vmatprep.subr.mxu0 %v4926
  %v4928 = vand.u32 %v4522, 4294901760
  %v4929 = vsub.f32 %v4522, %v4928
  %v4930 = vand.u32 %v4929, 4294901760
  %v4931 = vsub.f32 %v4929, %v4930
  %v4932 = vand.u32 %v4931, 4294901760
  %4933 = vmatpush1.msra.mxu0 %v4932
  %v4934 = vand.u32 %v4521, 4294901760
  %v4935 = vsub.f32 %v4521, %v4934
  %v4936 = vand.u32 %v4935, 4294901760
  %v4937 = vsub.f32 %v4935, %v4936
  %v4938 = vand.u32 %v4937, 4294901760
  %4939 = vmatprep.subr.mxu0 %v4938
  %v4940 = vand.u32 %v4520, 4294901760
  %v4941 = vsub.f32 %v4520, %v4940
  %v4942 = vand.u32 %v4941, 4294901760
  %v4943 = vsub.f32 %v4941, %v4942
  %v4944 = vand.u32 %v4943, 4294901760
  %4945 = vmatpush1.msra.mxu0 %v4944
  %v4946 = vand.u32 %v4519, 4294901760
  %v4947 = vsub.f32 %v4519, %v4946
  %v4948 = vand.u32 %v4947, 4294901760
  %v4949 = vsub.f32 %v4947, %v4948
  %v4950 = vand.u32 %v4949, 4294901760
  %4951 = vmatprep.subr.mxu0 %v4950
  %v4952 = vand.u32 %v4518, 4294901760
  %v4953 = vsub.f32 %v4518, %v4952
  %v4954 = vand.u32 %v4953, 4294901760
  %v4955 = vsub.f32 %v4953, %v4954
  %v4956 = vand.u32 %v4955, 4294901760
  %4957 = vmatpush1.msra.mxu0 %v4956
  %v4958 = vand.u32 %v4517, 4294901760
  %v4959 = vsub.f32 %v4517, %v4958
  %v4960 = vand.u32 %v4959, 4294901760
  %v4961 = vsub.f32 %v4959, %v4960
  %v4962 = vand.u32 %v4961, 4294901760
  %4963 = vmatprep.subr.mxu0 %v4962
  %v4964 = vand.u32 %v4516, 4294901760
  %v4965 = vsub.f32 %v4516, %v4964
  %v4966 = vand.u32 %v4965, 4294901760
  %v4967 = vsub.f32 %v4965, %v4966
  %v4968 = vand.u32 %v4967, 4294901760
  %4969 = vmatpush1.msra.mxu0 %v4968
  %4970 = vmatprep.subr.mxu0 0.0
  %4971 = vmatpush2.msra.mxu0 0.0
  %4972 = vmatprep.subr.mxu0 0.0
  %4973 = vmatpush2.msra.mxu0 0.0
  %4974 = vmatprep.subr.mxu0 0.0
  %4975 = vmatpush2.msra.mxu0 0.0
  %4976 = vmatprep.subr.mxu0 0.0
  %4977 = vmatpush2.msra.mxu0 0.0
  %4978 = vmatprep.subr.mxu0 0.0
  %4979 = vmatpush2.msra.mxu0 0.0
  %v4980 = vand.u32 %v4569, 4294901760
  %v4981 = vsub.f32 %v4569, %v4980
  %v4982 = vand.u32 %v4981, 4294901760
  %v4983 = vsub.f32 %v4981, %v4982
  %v4984 = vand.u32 %v4983, 4294901760
  %4985 = vmatprep.subr.mxu0 %v4984
  %v4986 = vand.u32 %v4568, 4294901760
  %v4987 = vsub.f32 %v4568, %v4986
  %v4988 = vand.u32 %v4987, 4294901760
  %v4989 = vsub.f32 %v4987, %v4988
  %v4990 = vand.u32 %v4989, 4294901760
  %4991 = vmatpush2.msra.mxu0 %v4990
  %v4992 = vand.u32 %v4567, 4294901760
  %v4993 = vsub.f32 %v4567, %v4992
  %v4994 = vand.u32 %v4993, 4294901760
  %v4995 = vsub.f32 %v4993, %v4994
  %v4996 = vand.u32 %v4995, 4294901760
  %4997 = vmatprep.subr.mxu0 %v4996
  %v4998 = vand.u32 %v4566, 4294901760
  %v4999 = vsub.f32 %v4566, %v4998
  %v5000 = vand.u32 %v4999, 4294901760
  %v5001 = vsub.f32 %v4999, %v5000
  %v5002 = vand.u32 %v5001, 4294901760
  %5003 = vmatpush2.msra.mxu0 %v5002
  %v5004 = vand.u32 %v4565, 4294901760
  %v5005 = vsub.f32 %v4565, %v5004
  %v5006 = vand.u32 %v5005, 4294901760
  %v5007 = vsub.f32 %v5005, %v5006
  %v5008 = vand.u32 %v5007, 4294901760
  %5009 = vmatprep.subr.mxu0 %v5008
  %v5010 = vand.u32 %v4564, 4294901760
  %v5011 = vsub.f32 %v4564, %v5010
  %v5012 = vand.u32 %v5011, 4294901760
  %v5013 = vsub.f32 %v5011, %v5012
  %v5014 = vand.u32 %v5013, 4294901760
  %5015 = vmatpush2.msra.mxu0 %v5014
  %v5016 = vand.u32 %v4563, 4294901760
  %v5017 = vsub.f32 %v4563, %v5016
  %v5018 = vand.u32 %v5017, 4294901760
  %v5019 = vsub.f32 %v5017, %v5018
  %v5020 = vand.u32 %v5019, 4294901760
  %5021 = vmatprep.subr.mxu0 %v5020
  %v5022 = vand.u32 %v4562, 4294901760
  %v5023 = vsub.f32 %v4562, %v5022
  %v5024 = vand.u32 %v5023, 4294901760
  %v5025 = vsub.f32 %v5023, %v5024
  %v5026 = vand.u32 %v5025, 4294901760
  %5027 = vmatpush2.msra.mxu0 %v5026
  %v5028 = vand.u32 %v4561, 4294901760
  %v5029 = vsub.f32 %v4561, %v5028
  %v5030 = vand.u32 %v5029, 4294901760
  %v5031 = vsub.f32 %v5029, %v5030
  %v5032 = vand.u32 %v5031, 4294901760
  %5033 = vmatprep.subr.mxu0 %v5032
  %v5034 = vand.u32 %v4560, 4294901760
  %v5035 = vsub.f32 %v4560, %v5034
  %v5036 = vand.u32 %v5035, 4294901760
  %v5037 = vsub.f32 %v5035, %v5036
  %v5038 = vand.u32 %v5037, 4294901760
  %5039 = vmatpush2.msra.mxu0 %v5038
  %v5040 = vand.u32 %v4559, 4294901760
  %v5041 = vsub.f32 %v4559, %v5040
  %v5042 = vand.u32 %v5041, 4294901760
  %v5043 = vsub.f32 %v5041, %v5042
  %v5044 = vand.u32 %v5043, 4294901760
  %5045 = vmatprep.subr.mxu0 %v5044
  %v5046 = vand.u32 %v4558, 4294901760
  %v5047 = vsub.f32 %v4558, %v5046
  %v5048 = vand.u32 %v5047, 4294901760
  %v5049 = vsub.f32 %v5047, %v5048
  %v5050 = vand.u32 %v5049, 4294901760
  %5051 = vmatpush2.msra.mxu0 %v5050
  %v5052 = vand.u32 %v4557, 4294901760
  %v5053 = vsub.f32 %v4557, %v5052
  %v5054 = vand.u32 %v5053, 4294901760
  %v5055 = vsub.f32 %v5053, %v5054
  %v5056 = vand.u32 %v5055, 4294901760
  %5057 = vmatprep.subr.mxu0 %v5056
  %v5058 = vand.u32 %v4556, 4294901760
  %v5059 = vsub.f32 %v4556, %v5058
  %v5060 = vand.u32 %v5059, 4294901760
  %v5061 = vsub.f32 %v5059, %v5060
  %v5062 = vand.u32 %v5061, 4294901760
  %5063 = vmatpush2.msra.mxu0 %v5062
  %v5064 = vand.u32 %v4555, 4294901760
  %v5065 = vsub.f32 %v4555, %v5064
  %v5066 = vand.u32 %v5065, 4294901760
  %v5067 = vsub.f32 %v5065, %v5066
  %v5068 = vand.u32 %v5067, 4294901760
  %5069 = vmatprep.subr.mxu0 %v5068
  %v5070 = vand.u32 %v4554, 4294901760
  %v5071 = vsub.f32 %v4554, %v5070
  %v5072 = vand.u32 %v5071, 4294901760
  %v5073 = vsub.f32 %v5071, %v5072
  %v5074 = vand.u32 %v5073, 4294901760
  %5075 = vmatpush2.msra.mxu0 %v5074
  %v5076 = vand.u32 %v4553, 4294901760
  %v5077 = vsub.f32 %v4553, %v5076
  %v5078 = vand.u32 %v5077, 4294901760
  %v5079 = vsub.f32 %v5077, %v5078
  %v5080 = vand.u32 %v5079, 4294901760
  %5081 = vmatprep.subr.mxu0 %v5080
  %v5082 = vand.u32 %v4552, 4294901760
  %v5083 = vsub.f32 %v4552, %v5082
  %v5084 = vand.u32 %v5083, 4294901760
  %v5085 = vsub.f32 %v5083, %v5084
  %v5086 = vand.u32 %v5085, 4294901760
  %5087 = vmatpush2.msra.mxu0 %v5086
  %v5088 = vand.u32 %v4551, 4294901760
  %v5089 = vsub.f32 %v4551, %v5088
  %v5090 = vand.u32 %v5089, 4294901760
  %v5091 = vsub.f32 %v5089, %v5090
  %v5092 = vand.u32 %v5091, 4294901760
  %5093 = vmatprep.subr.mxu0 %v5092
  %v5094 = vand.u32 %v4550, 4294901760
  %v5095 = vsub.f32 %v4550, %v5094
  %v5096 = vand.u32 %v5095, 4294901760
  %v5097 = vsub.f32 %v5095, %v5096
  %v5098 = vand.u32 %v5097, 4294901760
  %5099 = vmatpush2.msra.mxu0 %v5098
  %v5100 = vand.u32 %v4549, 4294901760
  %v5101 = vsub.f32 %v4549, %v5100
  %v5102 = vand.u32 %v5101, 4294901760
  %v5103 = vsub.f32 %v5101, %v5102
  %v5104 = vand.u32 %v5103, 4294901760
  %5105 = vmatprep.subr.mxu0 %v5104
  %v5106 = vand.u32 %v4548, 4294901760
  %v5107 = vsub.f32 %v4548, %v5106
  %v5108 = vand.u32 %v5107, 4294901760
  %v5109 = vsub.f32 %v5107, %v5108
  %v5110 = vand.u32 %v5109, 4294901760
  %5111 = vmatpush2.msra.mxu0 %v5110
  %v5112 = vand.u32 %v4584, 4294901760
  %5113 = vmatprep.mubr.f32.mxu0 %v5112
  %v5114 = vand.u32 %v4508, 4294901760
  %5115 = vmatmul.mubr.f32.gmra.mxu0 %v5114
  %v5116 = vpop.f32.mrf.mxu0
  %v5117 = vadd.f32 %v4726, %v5116
  %v5118 = vpop.f32.mrf.mxu0
  %v5119 = vadd.f32 %v4728, %v5118
  %v5120 = vand.u32 %v4587, 4294901760
  %5121 = vmatprep.mubr.f32.mxu0 %v5120
  %v5122 = vand.u32 %v4510, 4294901760
  %5123 = vmatmul.mubr.f32.gmra.mxu0 %v5122
  %v5124 = vpop.f32.mrf.mxu0
  %v5125 = vadd.f32 %v4742, %v5124
  %v5126 = vpop.f32.mrf.mxu0
  %v5127 = vadd.f32 %v4744, %v5126
  %v5128 = vand.u32 %v4590, 4294901760
  %5129 = vmatprep.mubr.f32.mxu0 %v5128
  %v5130 = vand.u32 %v4512, 4294901760
  %5131 = vmatmul.mubr.f32.gmra.mxu0 %v5130
  %v5132 = vpop.f32.mrf.mxu0
  %v5133 = vadd.f32 %v4758, %v5132
  %v5134 = vpop.f32.mrf.mxu0
  %v5135 = vadd.f32 %v4760, %v5134
  %v5136 = vand.u32 %v4593, 4294901760
  %5137 = vmatprep.mubr.f32.mxu0 %v5136
  %v5138 = vand.u32 %v4514, 4294901760
  %5139 = vmatmul.mubr.f32.gmra.mxu0 %v5138
  %v5140 = vpop.f32.mrf.mxu0
  %v5141 = vadd.f32 %v4774, %v5140
  %v5142 = vpop.f32.mrf.mxu0
  %v5143 = vadd.f32 %v4776, %v5142
  %5144 = vdwg.mxu0
  %v5145 = vand.u32 %v4547, 4294901760
  %v5146 = vsub.f32 %v4547, %v5145
  %5147 = vmatprep.subr.mxu0 %v5146
  %v5148 = vand.u32 %v4546, 4294901760
  %v5149 = vsub.f32 %v4546, %v5148
  %5150 = vmatpush1.msra.mxu0 %v5149
  %v5151 = vand.u32 %v4545, 4294901760
  %v5152 = vsub.f32 %v4545, %v5151
  %5153 = vmatprep.subr.mxu0 %v5152
  %v5154 = vand.u32 %v4544, 4294901760
  %v5155 = vsub.f32 %v4544, %v5154
  %5156 = vmatpush1.msra.mxu0 %v5155
  %v5157 = vand.u32 %v4543, 4294901760
  %v5158 = vsub.f32 %v4543, %v5157
  %5159 = vmatprep.subr.mxu0 %v5158
  %v5160 = vand.u32 %v4542, 4294901760
  %v5161 = vsub.f32 %v4542, %v5160
  %5162 = vmatpush1.msra.mxu0 %v5161
  %v5163 = vand.u32 %v4541, 4294901760
  %v5164 = vsub.f32 %v4541, %v5163
  %5165 = vmatprep.subr.mxu0 %v5164
  %v5166 = vand.u32 %v4540, 4294901760
  %v5167 = vsub.f32 %v4540, %v5166
  %5168 = vmatpush1.msra.mxu0 %v5167
  %v5169 = vand.u32 %v4539, 4294901760
  %v5170 = vsub.f32 %v4539, %v5169
  %5171 = vmatprep.subr.mxu0 %v5170
  %v5172 = vand.u32 %v4538, 4294901760
  %v5173 = vsub.f32 %v4538, %v5172
  %5174 = vmatpush1.msra.mxu0 %v5173
  %v5175 = vand.u32 %v4537, 4294901760
  %v5176 = vsub.f32 %v4537, %v5175
  %5177 = vmatprep.subr.mxu0 %v5176
  %v5178 = vand.u32 %v4536, 4294901760
  %v5179 = vsub.f32 %v4536, %v5178
  %5180 = vmatpush1.msra.mxu0 %v5179
  %v5181 = vand.u32 %v4535, 4294901760
  %v5182 = vsub.f32 %v4535, %v5181
  %5183 = vmatprep.subr.mxu0 %v5182
  %v5184 = vand.u32 %v4534, 4294901760
  %v5185 = vsub.f32 %v4534, %v5184
  %5186 = vmatpush1.msra.mxu0 %v5185
  %v5187 = vand.u32 %v4533, 4294901760
  %v5188 = vsub.f32 %v4533, %v5187
  %5189 = vmatprep.subr.mxu0 %v5188
  %v5190 = vand.u32 %v4532, 4294901760
  %v5191 = vsub.f32 %v4532, %v5190
  %5192 = vmatpush1.msra.mxu0 %v5191
  %v5193 = vand.u32 %v4531, 4294901760
  %v5194 = vsub.f32 %v4531, %v5193
  %5195 = vmatprep.subr.mxu0 %v5194
  %v5196 = vand.u32 %v4530, 4294901760
  %v5197 = vsub.f32 %v4530, %v5196
  %5198 = vmatpush1.msra.mxu0 %v5197
  %v5199 = vand.u32 %v4529, 4294901760
  %v5200 = vsub.f32 %v4529, %v5199
  %5201 = vmatprep.subr.mxu0 %v5200
  %v5202 = vand.u32 %v4528, 4294901760
  %v5203 = vsub.f32 %v4528, %v5202
  %5204 = vmatpush1.msra.mxu0 %v5203
  %v5205 = vand.u32 %v4527, 4294901760
  %v5206 = vsub.f32 %v4527, %v5205
  %5207 = vmatprep.subr.mxu0 %v5206
  %v5208 = vand.u32 %v4526, 4294901760
  %v5209 = vsub.f32 %v4526, %v5208
  %5210 = vmatpush1.msra.mxu0 %v5209
  %v5211 = vand.u32 %v4525, 4294901760
  %v5212 = vsub.f32 %v4525, %v5211
  %5213 = vmatprep.subr.mxu0 %v5212
  %v5214 = vand.u32 %v4524, 4294901760
  %v5215 = vsub.f32 %v4524, %v5214
  %5216 = vmatpush1.msra.mxu0 %v5215
  %v5217 = vand.u32 %v4523, 4294901760
  %v5218 = vsub.f32 %v4523, %v5217
  %5219 = vmatprep.subr.mxu0 %v5218
  %v5220 = vand.u32 %v4522, 4294901760
  %v5221 = vsub.f32 %v4522, %v5220
  %5222 = vmatpush1.msra.mxu0 %v5221
  %v5223 = vand.u32 %v4521, 4294901760
  %v5224 = vsub.f32 %v4521, %v5223
  %5225 = vmatprep.subr.mxu0 %v5224
  %v5226 = vand.u32 %v4520, 4294901760
  %v5227 = vsub.f32 %v4520, %v5226
  %5228 = vmatpush1.msra.mxu0 %v5227
  %v5229 = vand.u32 %v4519, 4294901760
  %v5230 = vsub.f32 %v4519, %v5229
  %5231 = vmatprep.subr.mxu0 %v5230
  %v5232 = vand.u32 %v4518, 4294901760
  %v5233 = vsub.f32 %v4518, %v5232
  %5234 = vmatpush1.msra.mxu0 %v5233
  %v5235 = vand.u32 %v4517, 4294901760
  %v5236 = vsub.f32 %v4517, %v5235
  %5237 = vmatprep.subr.mxu0 %v5236
  %v5238 = vand.u32 %v4516, 4294901760
  %v5239 = vsub.f32 %v4516, %v5238
  %5240 = vmatpush1.msra.mxu0 %v5239
  %5241 = vmatprep.subr.mxu0 0.0
  %5242 = vmatpush2.msra.mxu0 0.0
  %5243 = vmatprep.subr.mxu0 0.0
  %5244 = vmatpush2.msra.mxu0 0.0
  %5245 = vmatprep.subr.mxu0 0.0
  %5246 = vmatpush2.msra.mxu0 0.0
  %5247 = vmatprep.subr.mxu0 0.0
  %5248 = vmatpush2.msra.mxu0 0.0
  %5249 = vmatprep.subr.mxu0 0.0
  %5250 = vmatpush2.msra.mxu0 0.0
  %v5251 = vand.u32 %v4569, 4294901760
  %v5252 = vsub.f32 %v4569, %v5251
  %5253 = vmatprep.subr.mxu0 %v5252
  %v5254 = vand.u32 %v4568, 4294901760
  %v5255 = vsub.f32 %v4568, %v5254
  %5256 = vmatpush2.msra.mxu0 %v5255
  %v5257 = vand.u32 %v4567, 4294901760
  %v5258 = vsub.f32 %v4567, %v5257
  %5259 = vmatprep.subr.mxu0 %v5258
  %v5260 = vand.u32 %v4566, 4294901760
  %v5261 = vsub.f32 %v4566, %v5260
  %5262 = vmatpush2.msra.mxu0 %v5261
  %v5263 = vand.u32 %v4565, 4294901760
  %v5264 = vsub.f32 %v4565, %v5263
  %5265 = vmatprep.subr.mxu0 %v5264
  %v5266 = vand.u32 %v4564, 4294901760
  %v5267 = vsub.f32 %v4564, %v5266
  %5268 = vmatpush2.msra.mxu0 %v5267
  %v5269 = vand.u32 %v4563, 4294901760
  %v5270 = vsub.f32 %v4563, %v5269
  %5271 = vmatprep.subr.mxu0 %v5270
  %v5272 = vand.u32 %v4562, 4294901760
  %v5273 = vsub.f32 %v4562, %v5272
  %5274 = vmatpush2.msra.mxu0 %v5273
  %v5275 = vand.u32 %v4561, 4294901760
  %v5276 = vsub.f32 %v4561, %v5275
  %5277 = vmatprep.subr.mxu0 %v5276
  %v5278 = vand.u32 %v4560, 4294901760
  %v5279 = vsub.f32 %v4560, %v5278
  %5280 = vmatpush2.msra.mxu0 %v5279
  %v5281 = vand.u32 %v4559, 4294901760
  %v5282 = vsub.f32 %v4559, %v5281
  %5283 = vmatprep.subr.mxu0 %v5282
  %v5284 = vand.u32 %v4558, 4294901760
  %v5285 = vsub.f32 %v4558, %v5284
  %5286 = vmatpush2.msra.mxu0 %v5285
  %v5287 = vand.u32 %v4557, 4294901760
  %v5288 = vsub.f32 %v4557, %v5287
  %5289 = vmatprep.subr.mxu0 %v5288
  %v5290 = vand.u32 %v4556, 4294901760
  %v5291 = vsub.f32 %v4556, %v5290
  %5292 = vmatpush2.msra.mxu0 %v5291
  %v5293 = vand.u32 %v4555, 4294901760
  %v5294 = vsub.f32 %v4555, %v5293
  %5295 = vmatprep.subr.mxu0 %v5294
  %v5296 = vand.u32 %v4554, 4294901760
  %v5297 = vsub.f32 %v4554, %v5296
  %5298 = vmatpush2.msra.mxu0 %v5297
  %v5299 = vand.u32 %v4553, 4294901760
  %v5300 = vsub.f32 %v4553, %v5299
  %5301 = vmatprep.subr.mxu0 %v5300
  %v5302 = vand.u32 %v4552, 4294901760
  %v5303 = vsub.f32 %v4552, %v5302
  %5304 = vmatpush2.msra.mxu0 %v5303
  %v5305 = vand.u32 %v4551, 4294901760
  %v5306 = vsub.f32 %v4551, %v5305
  %5307 = vmatprep.subr.mxu0 %v5306
  %v5308 = vand.u32 %v4550, 4294901760
  %v5309 = vsub.f32 %v4550, %v5308
  %5310 = vmatpush2.msra.mxu0 %v5309
  %v5311 = vand.u32 %v4549, 4294901760
  %v5312 = vsub.f32 %v4549, %v5311
  %5313 = vmatprep.subr.mxu0 %v5312
  %v5314 = vand.u32 %v4548, 4294901760
  %v5315 = vsub.f32 %v4548, %v5314
  %5316 = vmatpush2.msra.mxu0 %v5315
  %v5317 = vand.u32 %v4584, 4294901760
  %v5318 = vsub.f32 %v4584, %v5317
  %5319 = vmatprep.mubr.f32.mxu0 %v5318
  %v5320 = vand.u32 %v4508, 4294901760
  %v5321 = vsub.f32 %v4508, %v5320
  %5322 = vmatmul.mubr.f32.gmra.mxu0 %v5321
  %v5323 = vpop.f32.mrf.mxu0
  %v5324 = vadd.f32 %v5117, %v5323
  %v5325 = vpop.f32.mrf.mxu0
  %v5326 = vadd.f32 %v5119, %v5325
  %v5327 = vand.u32 %v4587, 4294901760
  %v5328 = vsub.f32 %v4587, %v5327
  %5329 = vmatprep.mubr.f32.mxu0 %v5328
  %v5330 = vand.u32 %v4510, 4294901760
  %v5331 = vsub.f32 %v4510, %v5330
  %5332 = vmatmul.mubr.f32.gmra.mxu0 %v5331
  %v5333 = vpop.f32.mrf.mxu0
  %v5334 = vadd.f32 %v5125, %v5333
  %v5335 = vpop.f32.mrf.mxu0
  %v5336 = vadd.f32 %v5127, %v5335
  %v5337 = vand.u32 %v4590, 4294901760
  %v5338 = vsub.f32 %v4590, %v5337
  %5339 = vmatprep.mubr.f32.mxu0 %v5338
  %v5340 = vand.u32 %v4512, 4294901760
  %v5341 = vsub.f32 %v4512, %v5340
  %5342 = vmatmul.mubr.f32.gmra.mxu0 %v5341
  %v5343 = vpop.f32.mrf.mxu0
  %v5344 = vadd.f32 %v5133, %v5343
  %v5345 = vpop.f32.mrf.mxu0
  %v5346 = vadd.f32 %v5135, %v5345
  %v5347 = vand.u32 %v4593, 4294901760
  %v5348 = vsub.f32 %v4593, %v5347
  %5349 = vmatprep.mubr.f32.mxu0 %v5348
  %v5350 = vand.u32 %v4514, 4294901760
  %v5351 = vsub.f32 %v4514, %v5350
  %5352 = vmatmul.mubr.f32.gmra.mxu0 %v5351
  %v5353 = vpop.f32.mrf.mxu0
  %v5354 = vadd.f32 %v5141, %v5353
  %v5355 = vpop.f32.mrf.mxu0
  %v5356 = vadd.f32 %v5143, %v5355
  %5357 = vdwg.mxu0
  %v5358 = vand.u32 %v4547, 4294901760
  %5359 = vmatprep.subr.mxu0 %v5358
  %v5360 = vand.u32 %v4546, 4294901760
  %5361 = vmatpush1.msra.mxu0 %v5360
  %v5362 = vand.u32 %v4545, 4294901760
  %5363 = vmatprep.subr.mxu0 %v5362
  %v5364 = vand.u32 %v4544, 4294901760
  %5365 = vmatpush1.msra.mxu0 %v5364
  %v5366 = vand.u32 %v4543, 4294901760
  %5367 = vmatprep.subr.mxu0 %v5366
  %v5368 = vand.u32 %v4542, 4294901760
  %5369 = vmatpush1.msra.mxu0 %v5368
  %v5370 = vand.u32 %v4541, 4294901760
  %5371 = vmatprep.subr.mxu0 %v5370
  %v5372 = vand.u32 %v4540, 4294901760
  %5373 = vmatpush1.msra.mxu0 %v5372
  %v5374 = vand.u32 %v4539, 4294901760
  %5375 = vmatprep.subr.mxu0 %v5374
  %v5376 = vand.u32 %v4538, 4294901760
  %5377 = vmatpush1.msra.mxu0 %v5376
  %v5378 = vand.u32 %v4537, 4294901760
  %5379 = vmatprep.subr.mxu0 %v5378
  %v5380 = vand.u32 %v4536, 4294901760
  %5381 = vmatpush1.msra.mxu0 %v5380
  %v5382 = vand.u32 %v4535, 4294901760
  %5383 = vmatprep.subr.mxu0 %v5382
  %v5384 = vand.u32 %v4534, 4294901760
  %5385 = vmatpush1.msra.mxu0 %v5384
  %v5386 = vand.u32 %v4533, 4294901760
  %5387 = vmatprep.subr.mxu0 %v5386
  %v5388 = vand.u32 %v4532, 4294901760
  %5389 = vmatpush1.msra.mxu0 %v5388
  %v5390 = vand.u32 %v4531, 4294901760
  %5391 = vmatprep.subr.mxu0 %v5390
  %v5392 = vand.u32 %v4530, 4294901760
  %5393 = vmatpush1.msra.mxu0 %v5392
  %v5394 = vand.u32 %v4529, 4294901760
  %5395 = vmatprep.subr.mxu0 %v5394
  %v5396 = vand.u32 %v4528, 4294901760
  %5397 = vmatpush1.msra.mxu0 %v5396
  %v5398 = vand.u32 %v4527, 4294901760
  %5399 = vmatprep.subr.mxu0 %v5398
  %v5400 = vand.u32 %v4526, 4294901760
  %5401 = vmatpush1.msra.mxu0 %v5400
  %v5402 = vand.u32 %v4525, 4294901760
  %5403 = vmatprep.subr.mxu0 %v5402
  %v5404 = vand.u32 %v4524, 4294901760
  %5405 = vmatpush1.msra.mxu0 %v5404
  %v5406 = vand.u32 %v4523, 4294901760
  %5407 = vmatprep.subr.mxu0 %v5406
  %v5408 = vand.u32 %v4522, 4294901760
  %5409 = vmatpush1.msra.mxu0 %v5408
  %v5410 = vand.u32 %v4521, 4294901760
  %5411 = vmatprep.subr.mxu0 %v5410
  %v5412 = vand.u32 %v4520, 4294901760
  %5413 = vmatpush1.msra.mxu0 %v5412
  %v5414 = vand.u32 %v4519, 4294901760
  %5415 = vmatprep.subr.mxu0 %v5414
  %v5416 = vand.u32 %v4518, 4294901760
  %5417 = vmatpush1.msra.mxu0 %v5416
  %v5418 = vand.u32 %v4517, 4294901760
  %5419 = vmatprep.subr.mxu0 %v5418
  %v5420 = vand.u32 %v4516, 4294901760
  %5421 = vmatpush1.msra.mxu0 %v5420
  %5422 = vmatprep.subr.mxu0 0.0
  %5423 = vmatpush2.msra.mxu0 0.0
  %5424 = vmatprep.subr.mxu0 0.0
  %5425 = vmatpush2.msra.mxu0 0.0
  %5426 = vmatprep.subr.mxu0 0.0
  %5427 = vmatpush2.msra.mxu0 0.0
  %5428 = vmatprep.subr.mxu0 0.0
  %5429 = vmatpush2.msra.mxu0 0.0
  %5430 = vmatprep.subr.mxu0 0.0
  %5431 = vmatpush2.msra.mxu0 0.0
  %v5432 = vand.u32 %v4569, 4294901760
  %5433 = vmatprep.subr.mxu0 %v5432
  %v5434 = vand.u32 %v4568, 4294901760
  %5435 = vmatpush2.msra.mxu0 %v5434
  %v5436 = vand.u32 %v4567, 4294901760
  %5437 = vmatprep.subr.mxu0 %v5436
  %v5438 = vand.u32 %v4566, 4294901760
  %5439 = vmatpush2.msra.mxu0 %v5438
  %v5440 = vand.u32 %v4565, 4294901760
  %5441 = vmatprep.subr.mxu0 %v5440
  %v5442 = vand.u32 %v4564, 4294901760
  %5443 = vmatpush2.msra.mxu0 %v5442
  %v5444 = vand.u32 %v4563, 4294901760
  %5445 = vmatprep.subr.mxu0 %v5444
  %v5446 = vand.u32 %v4562, 4294901760
  %5447 = vmatpush2.msra.mxu0 %v5446
  %v5448 = vand.u32 %v4561, 4294901760
  %5449 = vmatprep.subr.mxu0 %v5448
  %v5450 = vand.u32 %v4560, 4294901760
  %5451 = vmatpush2.msra.mxu0 %v5450
  %v5452 = vand.u32 %v4559, 4294901760
  %5453 = vmatprep.subr.mxu0 %v5452
  %v5454 = vand.u32 %v4558, 4294901760
  %5455 = vmatpush2.msra.mxu0 %v5454
  %v5456 = vand.u32 %v4557, 4294901760
  %5457 = vmatprep.subr.mxu0 %v5456
  %v5458 = vand.u32 %v4556, 4294901760
  %5459 = vmatpush2.msra.mxu0 %v5458
  %v5460 = vand.u32 %v4555, 4294901760
  %5461 = vmatprep.subr.mxu0 %v5460
  %v5462 = vand.u32 %v4554, 4294901760
  %5463 = vmatpush2.msra.mxu0 %v5462
  %v5464 = vand.u32 %v4553, 4294901760
  %5465 = vmatprep.subr.mxu0 %v5464
  %v5466 = vand.u32 %v4552, 4294901760
  %5467 = vmatpush2.msra.mxu0 %v5466
  %v5468 = vand.u32 %v4551, 4294901760
  %5469 = vmatprep.subr.mxu0 %v5468
  %v5470 = vand.u32 %v4550, 4294901760
  %5471 = vmatpush2.msra.mxu0 %v5470
  %v5472 = vand.u32 %v4549, 4294901760
  %5473 = vmatprep.subr.mxu0 %v5472
  %v5474 = vand.u32 %v4548, 4294901760
  %5475 = vmatpush2.msra.mxu0 %v5474
  %v5476 = vand.u32 %v4584, 4294901760
  %v5477 = vsub.f32 %v4584, %v5476
  %v5478 = vand.u32 %v5477, 4294901760
  %5479 = vmatprep.mubr.f32.mxu0 %v5478
  %v5480 = vand.u32 %v4508, 4294901760
  %v5481 = vsub.f32 %v4508, %v5480
  %v5482 = vand.u32 %v5481, 4294901760
  %5483 = vmatmul.mubr.f32.gmra.mxu0 %v5482
  %v5484 = vpop.f32.mrf.mxu0
  %v5485 = vadd.f32 %v5324, %v5484
  %v5486 = vpop.f32.mrf.mxu0
  %v5487 = vadd.f32 %v5326, %v5486
  %v5488 = vand.u32 %v4587, 4294901760
  %v5489 = vsub.f32 %v4587, %v5488
  %v5490 = vand.u32 %v5489, 4294901760
  %5491 = vmatprep.mubr.f32.mxu0 %v5490
  %v5492 = vand.u32 %v4510, 4294901760
  %v5493 = vsub.f32 %v4510, %v5492
  %v5494 = vand.u32 %v5493, 4294901760
  %5495 = vmatmul.mubr.f32.gmra.mxu0 %v5494
  %v5496 = vpop.f32.mrf.mxu0
  %v5497 = vadd.f32 %v5334, %v5496
  %v5498 = vpop.f32.mrf.mxu0
  %v5499 = vadd.f32 %v5336, %v5498
  %v5500 = vand.u32 %v4590, 4294901760
  %v5501 = vsub.f32 %v4590, %v5500
  %v5502 = vand.u32 %v5501, 4294901760
  %5503 = vmatprep.mubr.f32.mxu0 %v5502
  %v5504 = vand.u32 %v4512, 4294901760
  %v5505 = vsub.f32 %v4512, %v5504
  %v5506 = vand.u32 %v5505, 4294901760
  %5507 = vmatmul.mubr.f32.gmra.mxu0 %v5506
  %v5508 = vpop.f32.mrf.mxu0
  %v5509 = vadd.f32 %v5344, %v5508
  %v5510 = vpop.f32.mrf.mxu0
  %v5511 = vadd.f32 %v5346, %v5510
  %v5512 = vand.u32 %v4593, 4294901760
  %v5513 = vsub.f32 %v4593, %v5512
  %v5514 = vand.u32 %v5513, 4294901760
  %5515 = vmatprep.mubr.f32.mxu0 %v5514
  %v5516 = vand.u32 %v4514, 4294901760
  %v5517 = vsub.f32 %v4514, %v5516
  %v5518 = vand.u32 %v5517, 4294901760
  %5519 = vmatmul.mubr.f32.gmra.mxu0 %v5518
  %v5520 = vpop.f32.mrf.mxu0
  %v5521 = vadd.f32 %v5354, %v5520
  %v5522 = vpop.f32.mrf.mxu0
  %v5523 = vadd.f32 %v5356, %v5522
  %5524 = vdwg.mxu0
  %v5525 = vand.u32 %v4547, 4294901760
  %v5526 = vsub.f32 %v4547, %v5525
  %v5527 = vand.u32 %v5526, 4294901760
  %5528 = vmatprep.subr.mxu0 %v5527
  %v5529 = vand.u32 %v4546, 4294901760
  %v5530 = vsub.f32 %v4546, %v5529
  %v5531 = vand.u32 %v5530, 4294901760
  %5532 = vmatpush1.msra.mxu0 %v5531
  %v5533 = vand.u32 %v4545, 4294901760
  %v5534 = vsub.f32 %v4545, %v5533
  %v5535 = vand.u32 %v5534, 4294901760
  %5536 = vmatprep.subr.mxu0 %v5535
  %v5537 = vand.u32 %v4544, 4294901760
  %v5538 = vsub.f32 %v4544, %v5537
  %v5539 = vand.u32 %v5538, 4294901760
  %5540 = vmatpush1.msra.mxu0 %v5539
  %v5541 = vand.u32 %v4543, 4294901760
  %v5542 = vsub.f32 %v4543, %v5541
  %v5543 = vand.u32 %v5542, 4294901760
  %5544 = vmatprep.subr.mxu0 %v5543
  %v5545 = vand.u32 %v4542, 4294901760
  %v5546 = vsub.f32 %v4542, %v5545
  %v5547 = vand.u32 %v5546, 4294901760
  %5548 = vmatpush1.msra.mxu0 %v5547
  %v5549 = vand.u32 %v4541, 4294901760
  %v5550 = vsub.f32 %v4541, %v5549
  %v5551 = vand.u32 %v5550, 4294901760
  %5552 = vmatprep.subr.mxu0 %v5551
  %v5553 = vand.u32 %v4540, 4294901760
  %v5554 = vsub.f32 %v4540, %v5553
  %v5555 = vand.u32 %v5554, 4294901760
  %5556 = vmatpush1.msra.mxu0 %v5555
  %v5557 = vand.u32 %v4539, 4294901760
  %v5558 = vsub.f32 %v4539, %v5557
  %v5559 = vand.u32 %v5558, 4294901760
  %5560 = vmatprep.subr.mxu0 %v5559
  %v5561 = vand.u32 %v4538, 4294901760
  %v5562 = vsub.f32 %v4538, %v5561
  %v5563 = vand.u32 %v5562, 4294901760
  %5564 = vmatpush1.msra.mxu0 %v5563
  %v5565 = vand.u32 %v4537, 4294901760
  %v5566 = vsub.f32 %v4537, %v5565
  %v5567 = vand.u32 %v5566, 4294901760
  %5568 = vmatprep.subr.mxu0 %v5567
  %v5569 = vand.u32 %v4536, 4294901760
  %v5570 = vsub.f32 %v4536, %v5569
  %v5571 = vand.u32 %v5570, 4294901760
  %5572 = vmatpush1.msra.mxu0 %v5571
  %v5573 = vand.u32 %v4535, 4294901760
  %v5574 = vsub.f32 %v4535, %v5573
  %v5575 = vand.u32 %v5574, 4294901760
  %5576 = vmatprep.subr.mxu0 %v5575
  %v5577 = vand.u32 %v4534, 4294901760
  %v5578 = vsub.f32 %v4534, %v5577
  %v5579 = vand.u32 %v5578, 4294901760
  %5580 = vmatpush1.msra.mxu0 %v5579
  %v5581 = vand.u32 %v4533, 4294901760
  %v5582 = vsub.f32 %v4533, %v5581
  %v5583 = vand.u32 %v5582, 4294901760
  %5584 = vmatprep.subr.mxu0 %v5583
  %v5585 = vand.u32 %v4532, 4294901760
  %v5586 = vsub.f32 %v4532, %v5585
  %v5587 = vand.u32 %v5586, 4294901760
  %5588 = vmatpush1.msra.mxu0 %v5587
  %v5589 = vand.u32 %v4531, 4294901760
  %v5590 = vsub.f32 %v4531, %v5589
  %v5591 = vand.u32 %v5590, 4294901760
  %5592 = vmatprep.subr.mxu0 %v5591
  %v5593 = vand.u32 %v4530, 4294901760
  %v5594 = vsub.f32 %v4530, %v5593
  %v5595 = vand.u32 %v5594, 4294901760
  %5596 = vmatpush1.msra.mxu0 %v5595
  %v5597 = vand.u32 %v4529, 4294901760
  %v5598 = vsub.f32 %v4529, %v5597
  %v5599 = vand.u32 %v5598, 4294901760
  %5600 = vmatprep.subr.mxu0 %v5599
  %v5601 = vand.u32 %v4528, 4294901760
  %v5602 = vsub.f32 %v4528, %v5601
  %v5603 = vand.u32 %v5602, 4294901760
  %5604 = vmatpush1.msra.mxu0 %v5603
  %v5605 = vand.u32 %v4527, 4294901760
  %v5606 = vsub.f32 %v4527, %v5605
  %v5607 = vand.u32 %v5606, 4294901760
  %5608 = vmatprep.subr.mxu0 %v5607
  %v5609 = vand.u32 %v4526, 4294901760
  %v5610 = vsub.f32 %v4526, %v5609
  %v5611 = vand.u32 %v5610, 4294901760
  %5612 = vmatpush1.msra.mxu0 %v5611
  %v5613 = vand.u32 %v4525, 4294901760
  %v5614 = vsub.f32 %v4525, %v5613
  %v5615 = vand.u32 %v5614, 4294901760
  %5616 = vmatprep.subr.mxu0 %v5615
  %v5617 = vand.u32 %v4524, 4294901760
  %v5618 = vsub.f32 %v4524, %v5617
  %v5619 = vand.u32 %v5618, 4294901760
  %5620 = vmatpush1.msra.mxu0 %v5619
  %v5621 = vand.u32 %v4523, 4294901760
  %v5622 = vsub.f32 %v4523, %v5621
  %v5623 = vand.u32 %v5622, 4294901760
  %5624 = vmatprep.subr.mxu0 %v5623
  %v5625 = vand.u32 %v4522, 4294901760
  %v5626 = vsub.f32 %v4522, %v5625
  %v5627 = vand.u32 %v5626, 4294901760
  %5628 = vmatpush1.msra.mxu0 %v5627
  %v5629 = vand.u32 %v4521, 4294901760
  %v5630 = vsub.f32 %v4521, %v5629
  %v5631 = vand.u32 %v5630, 4294901760
  %5632 = vmatprep.subr.mxu0 %v5631
  %v5633 = vand.u32 %v4520, 4294901760
  %v5634 = vsub.f32 %v4520, %v5633
  %v5635 = vand.u32 %v5634, 4294901760
  %5636 = vmatpush1.msra.mxu0 %v5635
  %v5637 = vand.u32 %v4519, 4294901760
  %v5638 = vsub.f32 %v4519, %v5637
  %v5639 = vand.u32 %v5638, 4294901760
  %5640 = vmatprep.subr.mxu0 %v5639
  %v5641 = vand.u32 %v4518, 4294901760
  %v5642 = vsub.f32 %v4518, %v5641
  %v5643 = vand.u32 %v5642, 4294901760
  %5644 = vmatpush1.msra.mxu0 %v5643
  %v5645 = vand.u32 %v4517, 4294901760
  %v5646 = vsub.f32 %v4517, %v5645
  %v5647 = vand.u32 %v5646, 4294901760
  %5648 = vmatprep.subr.mxu0 %v5647
  %v5649 = vand.u32 %v4516, 4294901760
  %v5650 = vsub.f32 %v4516, %v5649
  %v5651 = vand.u32 %v5650, 4294901760
  %5652 = vmatpush1.msra.mxu0 %v5651
  %5653 = vmatprep.subr.mxu0 0.0
  %5654 = vmatpush2.msra.mxu0 0.0
  %5655 = vmatprep.subr.mxu0 0.0
  %5656 = vmatpush2.msra.mxu0 0.0
  %5657 = vmatprep.subr.mxu0 0.0
  %5658 = vmatpush2.msra.mxu0 0.0
  %5659 = vmatprep.subr.mxu0 0.0
  %5660 = vmatpush2.msra.mxu0 0.0
  %5661 = vmatprep.subr.mxu0 0.0
  %5662 = vmatpush2.msra.mxu0 0.0
  %v5663 = vand.u32 %v4569, 4294901760
  %v5664 = vsub.f32 %v4569, %v5663
  %v5665 = vand.u32 %v5664, 4294901760
  %5666 = vmatprep.subr.mxu0 %v5665
  %v5667 = vand.u32 %v4568, 4294901760
  %v5668 = vsub.f32 %v4568, %v5667
  %v5669 = vand.u32 %v5668, 4294901760
  %5670 = vmatpush2.msra.mxu0 %v5669
  %v5671 = vand.u32 %v4567, 4294901760
  %v5672 = vsub.f32 %v4567, %v5671
  %v5673 = vand.u32 %v5672, 4294901760
  %5674 = vmatprep.subr.mxu0 %v5673
  %v5675 = vand.u32 %v4566, 4294901760
  %v5676 = vsub.f32 %v4566, %v5675
  %v5677 = vand.u32 %v5676, 4294901760
  %5678 = vmatpush2.msra.mxu0 %v5677
  %v5679 = vand.u32 %v4565, 4294901760
  %v5680 = vsub.f32 %v4565, %v5679
  %v5681 = vand.u32 %v5680, 4294901760
  %5682 = vmatprep.subr.mxu0 %v5681
  %v5683 = vand.u32 %v4564, 4294901760
  %v5684 = vsub.f32 %v4564, %v5683
  %v5685 = vand.u32 %v5684, 4294901760
  %5686 = vmatpush2.msra.mxu0 %v5685
  %v5687 = vand.u32 %v4563, 4294901760
  %v5688 = vsub.f32 %v4563, %v5687
  %v5689 = vand.u32 %v5688, 4294901760
  %5690 = vmatprep.subr.mxu0 %v5689
  %v5691 = vand.u32 %v4562, 4294901760
  %v5692 = vsub.f32 %v4562, %v5691
  %v5693 = vand.u32 %v5692, 4294901760
  %5694 = vmatpush2.msra.mxu0 %v5693
  %v5695 = vand.u32 %v4561, 4294901760
  %v5696 = vsub.f32 %v4561, %v5695
  %v5697 = vand.u32 %v5696, 4294901760
  %5698 = vmatprep.subr.mxu0 %v5697
  %v5699 = vand.u32 %v4560, 4294901760
  %v5700 = vsub.f32 %v4560, %v5699
  %v5701 = vand.u32 %v5700, 4294901760
  %5702 = vmatpush2.msra.mxu0 %v5701
  %v5703 = vand.u32 %v4559, 4294901760
  %v5704 = vsub.f32 %v4559, %v5703
  %v5705 = vand.u32 %v5704, 4294901760
  %5706 = vmatprep.subr.mxu0 %v5705
  %v5707 = vand.u32 %v4558, 4294901760
  %v5708 = vsub.f32 %v4558, %v5707
  %v5709 = vand.u32 %v5708, 4294901760
  %5710 = vmatpush2.msra.mxu0 %v5709
  %v5711 = vand.u32 %v4557, 4294901760
  %v5712 = vsub.f32 %v4557, %v5711
  %v5713 = vand.u32 %v5712, 4294901760
  %5714 = vmatprep.subr.mxu0 %v5713
  %v5715 = vand.u32 %v4556, 4294901760
  %v5716 = vsub.f32 %v4556, %v5715
  %v5717 = vand.u32 %v5716, 4294901760
  %5718 = vmatpush2.msra.mxu0 %v5717
  %v5719 = vand.u32 %v4555, 4294901760
  %v5720 = vsub.f32 %v4555, %v5719
  %v5721 = vand.u32 %v5720, 4294901760
  %5722 = vmatprep.subr.mxu0 %v5721
  %v5723 = vand.u32 %v4554, 4294901760
  %v5724 = vsub.f32 %v4554, %v5723
  %v5725 = vand.u32 %v5724, 4294901760
  %5726 = vmatpush2.msra.mxu0 %v5725
  %v5727 = vand.u32 %v4553, 4294901760
  %v5728 = vsub.f32 %v4553, %v5727
  %v5729 = vand.u32 %v5728, 4294901760
  %5730 = vmatprep.subr.mxu0 %v5729
  %v5731 = vand.u32 %v4552, 4294901760
  %v5732 = vsub.f32 %v4552, %v5731
  %v5733 = vand.u32 %v5732, 4294901760
  %5734 = vmatpush2.msra.mxu0 %v5733
  %v5735 = vand.u32 %v4551, 4294901760
  %v5736 = vsub.f32 %v4551, %v5735
  %v5737 = vand.u32 %v5736, 4294901760
  %5738 = vmatprep.subr.mxu0 %v5737
  %v5739 = vand.u32 %v4550, 4294901760
  %v5740 = vsub.f32 %v4550, %v5739
  %v5741 = vand.u32 %v5740, 4294901760
  %5742 = vmatpush2.msra.mxu0 %v5741
  %v5743 = vand.u32 %v4549, 4294901760
  %v5744 = vsub.f32 %v4549, %v5743
  %v5745 = vand.u32 %v5744, 4294901760
  %5746 = vmatprep.subr.mxu0 %v5745
  %v5747 = vand.u32 %v4548, 4294901760
  %v5748 = vsub.f32 %v4548, %v5747
  %v5749 = vand.u32 %v5748, 4294901760
  %5750 = vmatpush2.msra.mxu0 %v5749
  %v5751 = vand.u32 %v4584, 4294901760
  %5752 = vmatprep.mubr.f32.mxu0 %v5751
  %v5753 = vand.u32 %v4508, 4294901760
  %5754 = vmatmul.mubr.f32.gmra.mxu0 %v5753
  %v5755 = vpop.f32.mrf.mxu0
  %v5756 = vadd.f32 %v5485, %v5755
  %v5757 = vpop.f32.mrf.mxu0
  %v5758 = vadd.f32 %v5487, %v5757
  %v5759 = vand.u32 %v4587, 4294901760
  %5760 = vmatprep.mubr.f32.mxu0 %v5759
  %v5761 = vand.u32 %v4510, 4294901760
  %5762 = vmatmul.mubr.f32.gmra.mxu0 %v5761
  %v5763 = vpop.f32.mrf.mxu0
  %v5764 = vadd.f32 %v5497, %v5763
  %v5765 = vpop.f32.mrf.mxu0
  %v5766 = vadd.f32 %v5499, %v5765
  %v5767 = vand.u32 %v4590, 4294901760
  %5768 = vmatprep.mubr.f32.mxu0 %v5767
  %v5769 = vand.u32 %v4512, 4294901760
  %5770 = vmatmul.mubr.f32.gmra.mxu0 %v5769
  %v5771 = vpop.f32.mrf.mxu0
  %v5772 = vadd.f32 %v5509, %v5771
  %v5773 = vpop.f32.mrf.mxu0
  %v5774 = vadd.f32 %v5511, %v5773
  %v5775 = vand.u32 %v4593, 4294901760
  %5776 = vmatprep.mubr.f32.mxu0 %v5775
  %v5777 = vand.u32 %v4514, 4294901760
  %5778 = vmatmul.mubr.f32.gmra.mxu0 %v5777
  %v5779 = vpop.f32.mrf.mxu0
  %v5780 = vadd.f32 %v5521, %v5779
  %v5781 = vpop.f32.mrf.mxu0
  %v5782 = vadd.f32 %v5523, %v5781
  %5783 = vdwg.mxu0
  %v5784 = vand.u32 %v4547, 4294901760
  %5785 = vmatprep.subr.mxu0 %v5784
  %v5786 = vand.u32 %v4546, 4294901760
  %5787 = vmatpush1.msra.mxu0 %v5786
  %v5788 = vand.u32 %v4545, 4294901760
  %5789 = vmatprep.subr.mxu0 %v5788
  %v5790 = vand.u32 %v4544, 4294901760
  %5791 = vmatpush1.msra.mxu0 %v5790
  %v5792 = vand.u32 %v4543, 4294901760
  %5793 = vmatprep.subr.mxu0 %v5792
  %v5794 = vand.u32 %v4542, 4294901760
  %5795 = vmatpush1.msra.mxu0 %v5794
  %v5796 = vand.u32 %v4541, 4294901760
  %5797 = vmatprep.subr.mxu0 %v5796
  %v5798 = vand.u32 %v4540, 4294901760
  %5799 = vmatpush1.msra.mxu0 %v5798
  %v5800 = vand.u32 %v4539, 4294901760
  %5801 = vmatprep.subr.mxu0 %v5800
  %v5802 = vand.u32 %v4538, 4294901760
  %5803 = vmatpush1.msra.mxu0 %v5802
  %v5804 = vand.u32 %v4537, 4294901760
  %5805 = vmatprep.subr.mxu0 %v5804
  %v5806 = vand.u32 %v4536, 4294901760
  %5807 = vmatpush1.msra.mxu0 %v5806
  %v5808 = vand.u32 %v4535, 4294901760
  %5809 = vmatprep.subr.mxu0 %v5808
  %v5810 = vand.u32 %v4534, 4294901760
  %5811 = vmatpush1.msra.mxu0 %v5810
  %v5812 = vand.u32 %v4533, 4294901760
  %5813 = vmatprep.subr.mxu0 %v5812
  %v5814 = vand.u32 %v4532, 4294901760
  %5815 = vmatpush1.msra.mxu0 %v5814
  %v5816 = vand.u32 %v4531, 4294901760
  %5817 = vmatprep.subr.mxu0 %v5816
  %v5818 = vand.u32 %v4530, 4294901760
  %5819 = vmatpush1.msra.mxu0 %v5818
  %v5820 = vand.u32 %v4529, 4294901760
  %5821 = vmatprep.subr.mxu0 %v5820
  %v5822 = vand.u32 %v4528, 4294901760
  %5823 = vmatpush1.msra.mxu0 %v5822
  %v5824 = vand.u32 %v4527, 4294901760
  %5825 = vmatprep.subr.mxu0 %v5824
  %v5826 = vand.u32 %v4526, 4294901760
  %5827 = vmatpush1.msra.mxu0 %v5826
  %v5828 = vand.u32 %v4525, 4294901760
  %5829 = vmatprep.subr.mxu0 %v5828
  %v5830 = vand.u32 %v4524, 4294901760
  %5831 = vmatpush1.msra.mxu0 %v5830
  %v5832 = vand.u32 %v4523, 4294901760
  %5833 = vmatprep.subr.mxu0 %v5832
  %v5834 = vand.u32 %v4522, 4294901760
  %5835 = vmatpush1.msra.mxu0 %v5834
  %v5836 = vand.u32 %v4521, 4294901760
  %5837 = vmatprep.subr.mxu0 %v5836
  %v5838 = vand.u32 %v4520, 4294901760
  %5839 = vmatpush1.msra.mxu0 %v5838
  %v5840 = vand.u32 %v4519, 4294901760
  %5841 = vmatprep.subr.mxu0 %v5840
  %v5842 = vand.u32 %v4518, 4294901760
  %5843 = vmatpush1.msra.mxu0 %v5842
  %v5844 = vand.u32 %v4517, 4294901760
  %5845 = vmatprep.subr.mxu0 %v5844
  %v5846 = vand.u32 %v4516, 4294901760
  %5847 = vmatpush1.msra.mxu0 %v5846
  %5848 = vmatprep.subr.mxu0 0.0
  %5849 = vmatpush2.msra.mxu0 0.0
  %5850 = vmatprep.subr.mxu0 0.0
  %5851 = vmatpush2.msra.mxu0 0.0
  %5852 = vmatprep.subr.mxu0 0.0
  %5853 = vmatpush2.msra.mxu0 0.0
  %5854 = vmatprep.subr.mxu0 0.0
  %5855 = vmatpush2.msra.mxu0 0.0
  %5856 = vmatprep.subr.mxu0 0.0
  %5857 = vmatpush2.msra.mxu0 0.0
  %v5858 = vand.u32 %v4569, 4294901760
  %5859 = vmatprep.subr.mxu0 %v5858
  %v5860 = vand.u32 %v4568, 4294901760
  %5861 = vmatpush2.msra.mxu0 %v5860
  %v5862 = vand.u32 %v4567, 4294901760
  %5863 = vmatprep.subr.mxu0 %v5862
  %v5864 = vand.u32 %v4566, 4294901760
  %5865 = vmatpush2.msra.mxu0 %v5864
  %v5866 = vand.u32 %v4565, 4294901760
  %5867 = vmatprep.subr.mxu0 %v5866
  %v5868 = vand.u32 %v4564, 4294901760
  %5869 = vmatpush2.msra.mxu0 %v5868
  %v5870 = vand.u32 %v4563, 4294901760
  %5871 = vmatprep.subr.mxu0 %v5870
  %v5872 = vand.u32 %v4562, 4294901760
  %5873 = vmatpush2.msra.mxu0 %v5872
  %v5874 = vand.u32 %v4561, 4294901760
  %5875 = vmatprep.subr.mxu0 %v5874
  %v5876 = vand.u32 %v4560, 4294901760
  %5877 = vmatpush2.msra.mxu0 %v5876
  %v5878 = vand.u32 %v4559, 4294901760
  %5879 = vmatprep.subr.mxu0 %v5878
  %v5880 = vand.u32 %v4558, 4294901760
  %5881 = vmatpush2.msra.mxu0 %v5880
  %v5882 = vand.u32 %v4557, 4294901760
  %5883 = vmatprep.subr.mxu0 %v5882
  %v5884 = vand.u32 %v4556, 4294901760
  %5885 = vmatpush2.msra.mxu0 %v5884
  %v5886 = vand.u32 %v4555, 4294901760
  %5887 = vmatprep.subr.mxu0 %v5886
  %v5888 = vand.u32 %v4554, 4294901760
  %5889 = vmatpush2.msra.mxu0 %v5888
  %v5890 = vand.u32 %v4553, 4294901760
  %5891 = vmatprep.subr.mxu0 %v5890
  %v5892 = vand.u32 %v4552, 4294901760
  %5893 = vmatpush2.msra.mxu0 %v5892
  %v5894 = vand.u32 %v4551, 4294901760
  %5895 = vmatprep.subr.mxu0 %v5894
  %v5896 = vand.u32 %v4550, 4294901760
  %5897 = vmatpush2.msra.mxu0 %v5896
  %v5898 = vand.u32 %v4549, 4294901760
  %5899 = vmatprep.subr.mxu0 %v5898
  %v5900 = vand.u32 %v4548, 4294901760
  %5901 = vmatpush2.msra.mxu0 %v5900
  %v5902 = vand.u32 %v4584, 4294901760
  %5903 = vmatprep.mubr.f32.mxu0 %v5902
  %v5904 = vand.u32 %v4508, 4294901760
  %5905 = vmatmul.mubr.f32.gmra.mxu0 %v5904
  %v5906 = vpop.f32.mrf.mxu0
  %v5907 = vadd.f32 %v5756, %v5906
  %v5908 = vpop.f32.mrf.mxu0
  %v5909 = vadd.f32 %v5758, %v5908
  %v5910 = vand.u32 %v4587, 4294901760
  %5911 = vmatprep.mubr.f32.mxu0 %v5910
  %v5912 = vand.u32 %v4510, 4294901760
  %5913 = vmatmul.mubr.f32.gmra.mxu0 %v5912
  %v5914 = vpop.f32.mrf.mxu0
  %v5915 = vadd.f32 %v5764, %v5914
  %v5916 = vpop.f32.mrf.mxu0
  %v5917 = vadd.f32 %v5766, %v5916
  %v5918 = vand.u32 %v4590, 4294901760
  %5919 = vmatprep.mubr.f32.mxu0 %v5918
  %v5920 = vand.u32 %v4512, 4294901760
  %5921 = vmatmul.mubr.f32.gmra.mxu0 %v5920
  %v5922 = vpop.f32.mrf.mxu0
  %v5923 = vadd.f32 %v5772, %v5922
  %v5924 = vpop.f32.mrf.mxu0
  %v5925 = vadd.f32 %v5774, %v5924
  %v5926 = vand.u32 %v4593, 4294901760
  %5927 = vmatprep.mubr.f32.mxu0 %v5926
  %v5928 = vand.u32 %v4514, 4294901760
  %5929 = vmatmul.mubr.f32.gmra.mxu0 %v5928
  %v5930 = vpop.f32.mrf.mxu0
  %v5931 = vadd.f32 %v5780, %v5930
  %v5932 = vpop.f32.mrf.mxu0
  %v5933 = vadd.f32 %v5782, %v5932
  %5934 = vdwg.mxu0
  %5935 = vst [vmem:[%s7] sm:$0xff] %v5907
  %5936 = vst [vmem:[%s7 + $0x8] sm:$0xff] %v5909
  %5937 = vst [vmem:[%s7 + $0x10] sm:$0xff] %v5915
  %5938 = vst [vmem:[%s7 + $0x18] sm:$0xff] %v5917
  %5939 = vst [vmem:[%s7 + $0x20] sm:$0xff] %v5923
  %5940 = vst [vmem:[%s7 + $0x28] sm:$0xff] %v5925
  %5941 = vst [vmem:[%s7 + $0x30] sm:$0xff] %v5931
  %5942 = vst [vmem:[%s7 + $0x38] sm:$0xff] %v5933
  // Predicated region
  $region30: #{subpixel_forward.1} parent=0 // pred_check
    _
  $region31: #{subpixel_forward.1} parent=0 // pred_check_branch
    %5944 = sbr.rel (0) target = $region33
  $region32: #{subpixel_forward.1} parent=0 // pred_region
    _
  $region33: #{subpixel_forward.1} parent=0 // pred_fallthru
    _
  // Predicated region
  $region34: #{subpixel_forward.1} parent=0 // pred_check
    _
  $region35: #{subpixel_forward.1} parent=0 // pred_check_branch
    %5946 = sbr.rel (0) target = $region37
  $region36: #{subpixel_forward.1} parent=0 // pred_region
    _
  $region37: #{subpixel_forward.1} parent=0 // pred_fallthru
    _

</llo_original>
